<compile_context>
chip_gen: v6e
topology: v6e:2x2x1
jax: 0.10.0
libtpu: 0.0.40
codegen_flags: <defaults>
</compile_context>

<pallas_src>
from functools import partial

import jax
import jax.numpy as jnp
from jax.experimental import pallas as pl
from jax.experimental.pallas import tpu as pltpu

EPS = 1e-5

_TAPS = [(dy, dx) for dy in range(3) for dx in range(3)]


def _conv3x3(src_ref, w_ref, H, W):
    """3x3 'SAME' conv as 9 accumulating MXU matmuls over shifted views.

    src_ref: (N, H+2, W+2, C) zero-padded activation (f32 in VMEM)
    w_ref:   (9, C, Cout) bf16 weights (one tap per leading index)
    returns: (N*H*W, Cout) f32 accumulator
    """
    N, _, _, C = src_ref.shape
    NHW = N * H * W
    acc = None
    for t, (dy, dx) in enumerate(_TAPS):
        xs = src_ref[:, dy:dy + H, dx:dx + W, :].reshape(NHW, C).astype(jnp.bfloat16)
        p = jnp.dot(xs, w_ref[t], preferred_element_type=jnp.float32)
        acc = p if acc is None else acc + p
    return acc


def _bn_scale_shift(acc, g, be, inv_nhw, axis):
    """Per-channel (scale, shift) from training-mode batch stats (two-pass var)."""
    m = jnp.sum(acc, axis=axis, keepdims=True) * inv_nhw
    d = acc - m
    v = jnp.sum(d * d, axis=axis, keepdims=True) * inv_nhw
    scale = g * jax.lax.rsqrt(v + EPS)
    return scale, be - m * scale


def _residual_block_kernel(has_side, cm, vpu_side,
                           xpad_ref, w1_ref, g1_ref, be1_ref,
                           w2_ref, g2_ref, be2_ref, *rest):
    if has_side:
        ws_ref, bs_ref, out_ref, y1p_ref = rest
    else:
        out_ref, y1p_ref = rest

    N, Hp2, Wp2, Cin = xpad_ref.shape
    H, W = Hp2 - 2, Wp2 - 2
    Cout = y1p_ref.shape[-1]
    NHW = N * H * W
    inv_nhw = 1.0 / NHW
    ax = 1 if cm else 0   # stats-reduction axis in the layout used for the stats

    # ---- conv1: shifted-accumulate, bf16 MXU, f32 acc (bias cancelled by BN1 mean)
    acc1 = _conv3x3(xpad_ref, w1_ref, H, W)                       # (NHW, Cout) f32

    # ---- BN1 + ReLU.  For skinny Cout, the stats run on the channel-major
    # transpose (dense lanes); the normalize is a single folded scale+shift pass
    # applied in NHW-major because conv2 consumes that layout.
    s1, t1 = _bn_scale_shift(acc1.T if cm else acc1,
                             g1_ref[...], be1_ref[...], inv_nhw, ax)
    if cm:
        s1, t1 = s1.T, t1.T                                       # (1, Cout) rows
    y1 = jnp.maximum(acc1 * s1 + t1, 0.0)                         # (NHW, Cout)

    # ---- zero-pad y1 into the conv2 scratch: zero ONLY the 1-px halo
    zrow = jnp.zeros((N, 1, Wp2, Cout), jnp.float32)
    zcol = jnp.zeros((N, Hp2, 1, Cout), jnp.float32)
    y1p_ref[:, 0:1, :, :] = zrow
    y1p_ref[:, H + 1:H + 2, :, :] = zrow
    y1p_ref[:, :, 0:1, :] = zcol
    y1p_ref[:, :, W + 1:W + 2, :] = zcol
    y1p_ref[:, 1:H + 1, 1:W + 1, :] = y1.reshape(N, H, W, Cout)

    # ---- conv2 + BN2 (no ReLU yet; conv bias again cancelled by BN2 mean)
    acc2 = _conv3x3(y1p_ref, w2_ref, H, W)                        # (NHW, Cout) f32
    if cm:
        acc2 = acc2.T                                             # (Cout, NHW) dense
    s2, t2 = _bn_scale_shift(acc2, g2_ref[...], be2_ref[...], inv_nhw, ax)
    y2 = acc2 * s2 + t2

    # ---- shortcut (kept in f32; the PyTorch side conv has no BN -> bias kept)
    x_in = xpad_ref[:, 1:H + 1, 1:W + 1, :].reshape(NHW, Cin)
    if not has_side:
        side = x_in.T if cm else x_in                             # identity shortcut
    elif vpu_side:
        # tiny-Cin 1x1 conv as Cin VPU broadcast mul-adds, channel-major (dense)
        x_cm = x_in.T                                             # (Cin, NHW) f32
        wsv = ws_ref[...]                                         # (Cout, Cin) f32
        side = wsv[:, 0:1] * x_cm[0:1, :] + bs_ref[...]
        for ci in range(1, Cin):
            side = side + wsv[:, ci:ci + 1] * x_cm[ci:ci + 1, :]
    else:
        side = jnp.dot(x_in.astype(jnp.bfloat16), ws_ref[...],
                       preferred_element_type=jnp.float32)
        side = (side.T if cm else side) + bs_ref[...]

    # ---- residual add + final ReLU; lane-dense store:
    #      channel-major (Cout, NHW) if Cout < 128, NHW-major (NHW, Cout) otherwise.
    out_ref[...] = jnp.maximum(side + y2, 0.0)


def residual_block(x_nchw, params):
    """x_nchw: (N, Cin, H, W) float32 -> (N, Cout, H, W) float32."""
    (w1, b1, g1, be1, w2, b2, g2, be2, ws, bs) = params
    del b1, b2  # cancelled exactly by training-mode BN (batch-mean subtraction)
    N, Cin, H, W = x_nchw.shape
    Cout = w1.shape[0]
    has_side = (Cin != Cout)
    cm = Cout < 128                         # channel-major math/store for skinny Cout
    vpu_side = has_side and cm and (Cin < 32)

    # NHWC + 1-px zero pad; only the padded tensor is shipped (shortcut reads its
    # interior in-kernel, so no duplicated input HBM traffic).
    x_pad = jnp.pad(jnp.transpose(x_nchw, (0, 2, 3, 1)).astype(jnp.float32),
                    ((0, 0), (1, 1), (1, 1), (0, 0)))

    # PyTorch conv weights (Cout, Cin, kH, kW) -> per-tap (9, Cin, Cout) bf16 (MXU)
    w1k = jnp.transpose(w1, (2, 3, 1, 0)).reshape(9, Cin, Cout).astype(jnp.bfloat16)
    w2k = jnp.transpose(w2, (2, 3, 1, 0)).reshape(9, Cout, Cout).astype(jnp.bfloat16)
    vec = (lambda v: v.reshape(Cout, 1).astype(jnp.float32)) if cm else \
          (lambda v: v.reshape(1, Cout).astype(jnp.float32))

    args = [x_pad, w1k, vec(g1), vec(be1), w2k, vec(g2), vec(be2)]
    if has_side:
        if vpu_side:
            wsk = ws[:, :, 0, 0].astype(jnp.float32)              # (Cout, Cin), VPU
        else:
            wsk = jnp.transpose(ws[:, :, 0, 0], (1, 0)).astype(jnp.bfloat16)  # (Cin, Cout)
        args += [wsk, vec(bs)]

    out_shape = (Cout, N * H * W) if cm else (N * H * W, Cout)
    out = pl.pallas_call(
        partial(_residual_block_kernel, has_side, cm, vpu_side),
        out_shape=jax.ShapeDtypeStruct(out_shape, jnp.float32),
        in_specs=[pl.BlockSpec(memory_space=pltpu.MemorySpace.VMEM)] * len(args),
        out_specs=pl.BlockSpec(memory_space=pltpu.MemorySpace.VMEM),
        scratch_shapes=[
            pltpu.VMEM((N, H + 2, W + 2, Cout), jnp.float32),     # padded ReLU(BN1)
        ],
        # 48 MiB: safe on v7x (64 MiB physical) while well above the v5e 16 MiB default.
        compiler_params=pltpu.CompilerParams(vmem_limit_bytes=48 * 1024 * 1024),
    )(*args)

    if cm:  # (Cout, N*H*W) channel-major slab -> (N, Cout, H, W)
        return jnp.transpose(out.reshape(Cout, N, H, W), (1, 0, 2, 3))
    return jnp.transpose(out.reshape(N, H, W, Cout), (0, 3, 1, 2))


def ref_forward(x, params):
    """Pure-JAX f32 reference matching the PyTorch module (training-mode BN)."""
    (w1, b1, g1, be1, w2, b2, g2, be2, ws, bs) = params

    def conv(x, w, b):
        y = jax.lax.conv_general_dilated(
            x, w, (1, 1), 'SAME', dimension_numbers=('NCHW', 'OIHW', 'NCHW'))
        return y + b[None, :, None, None]

    def bn(y, g, be):
        m = jnp.mean(y, axis=(0, 2, 3), keepdims=True)
        v = jnp.mean((y - m) ** 2, axis=(0, 2, 3), keepdims=True)
        return g[None, :, None, None] * (y - m) * jax.lax.rsqrt(v + EPS) \
            + be[None, :, None, None]

    y = jax.nn.relu(bn(conv(x, w1, b1), g1, be1))
    y = bn(conv(y, w2, b2), g2, be2)
    if x.shape[1] != w1.shape[0]:
        x = conv(x, ws, bs)
    return jax.nn.relu(x + y)


def _make_params(key, cin, cout):
    ks = jax.random.split(key, 10)
    w1 = 0.1 * jax.random.normal(ks[0], (cout, cin, 3, 3), jnp.float32)
    b1 = 0.1 * jax.random.normal(ks[1], (cout,), jnp.float32)
    g1 = 1.0 + 0.1 * jax.random.normal(ks[2], (cout,), jnp.float32)
    be1 = 0.1 * jax.random.normal(ks[3], (cout,), jnp.float32)
    w2 = 0.1 * jax.random.normal(ks[4], (cout, cout, 3, 3), jnp.float32)
    b2 = 0.1 * jax.random.normal(ks[5], (cout,), jnp.float32)
    g2 = 1.0 + 0.1 * jax.random.normal(ks[6], (cout,), jnp.float32)
    be2 = 0.1 * jax.random.normal(ks[7], (cout,), jnp.float32)
    ws = 0.1 * jax.random.normal(ks[8], (cout, cin, 1, 1), jnp.float32)
    bs = 0.1 * jax.random.normal(ks[9], (cout,), jnp.float32)
    return (w1, b1, g1, be1, w2, b2, g2, be2, ws, bs)


if __name__ == "__main__":
    N, H, W = 2, 16, 16
    root = jax.random.PRNGKey(0)
    kp1, kp2, kx1, kx2 = jax.random.split(root, 4)

    # Tolerance reflects bf16 MXU operands (f32 accumulation); real bugs are >> 0.1.
    RTOL = ATOL = 3e-2

    # Case 1: Cin != Cout -> 1x1 shortcut conv path (tiny-Cin VPU shortcut)
    Cin, Cout = 4, 8
    params1 = _make_params(kp1, Cin, Cout)
    x1 = jax.random.normal(kx1, (N, Cin, H, W), jnp.float32)
    out1 = jax.block_until_ready(residual_block(x1, params1))
    ref1 = ref_forward(x1, params1)
    assert out1.shape == (N, Cout, H, W)
    err1 = float(jnp.max(jnp.abs(out1 - ref1)))
    assert jnp.allclose(out1, ref1, rtol=RTOL, atol=ATOL), f"max abs err {err1}"

    # Case 2: Cin == Cout -> identity shortcut (no side conv in the kernel)
    Cin2 = Cout2 = 8
    params2 = _make_params(kp2, Cin2, Cout2)
    x2 = jax.random.normal(kx2, (N, Cin2, H, W), jnp.float32)
    out2 = jax.block_until_ready(residual_block(x2, params2))
    ref2 = ref_forward(x2, params2)
    assert out2.shape == (N, Cout2, H, W)
    err2 = float(jnp.max(jnp.abs(out2 - ref2)))
    assert jnp.allclose(out2, ref2, rtol=RTOL, atol=ATOL), f"max abs err {err2}"

    print("KERNEL_OK")
</pallas_src>

<mosaic_0001>
module attributes {stable_mosaic.version = 11 : i64} {
  func.func @_residual_block_kernel(%arg0: memref<2x18x18x4xf32, #tpu.memory_space<vmem>>, %arg1: memref<9x4x8xbf16, #tpu.memory_space<vmem>>, %arg2: memref<8x1xf32, #tpu.memory_space<vmem>>, %arg3: memref<8x1xf32, #tpu.memory_space<vmem>>, %arg4: memref<9x8x8xbf16, #tpu.memory_space<vmem>>, %arg5: memref<8x1xf32, #tpu.memory_space<vmem>>, %arg6: memref<8x1xf32, #tpu.memory_space<vmem>>, %arg7: memref<8x4xf32, #tpu.memory_space<vmem>>, %arg8: memref<8x1xf32, #tpu.memory_space<vmem>>, %arg9: memref<8x512xf32, #tpu.memory_space<vmem>>, %arg10: memref<2x18x18x8xf32, #tpu.memory_space<vmem>>) attributes {dimension_semantics = [], scalar_prefetch = 0 : i64, scratch_operands = 1 : i64, tpu.core_type = #tpu.core_type<tc>} {
    %c0 = arith.constant 0 : index
    %c0_0 = arith.constant 0 : index
    %c0_1 = arith.constant 0 : index
    %c0_2 = arith.constant 0 : index
    %0 = vector.load %arg0[%c0, %c0_0, %c0_1, %c0_2] : memref<2x18x18x4xf32, #tpu.memory_space<vmem>>, vector<2x16x16x4xf32>
    %1 = vector.shape_cast %0 : vector<2x16x16x4xf32> to vector<512x4xf32>
    %2 = arith.truncf %1 : vector<512x4xf32> to vector<512x4xbf16>
    %c0_3 = arith.constant 0 : index
    %c0_4 = arith.constant 0 : index
    %c0_5 = arith.constant 0 : index
    %3 = vector.load %arg1[%c0_3, %c0_4, %c0_5] : memref<9x4x8xbf16, #tpu.memory_space<vmem>>, vector<1x4x8xbf16>
    %4 = vector.shape_cast %3 : vector<1x4x8xbf16> to vector<4x8xbf16>
    %cst = arith.constant dense<0.000000e+00> : vector<512x8xf32>
    %5 = tpu.matmul %2, %4, %cst {dimension_numbers = #tpu.dot_dimension_numbers<[1], [0], [0], [1], [0, 0, 1, 1], [], []>} : vector<512x4xbf16>, vector<4x8xbf16>, vector<512x8xf32> -> vector<512x8xf32>
    %c0_6 = arith.constant 0 : index
    %c0_7 = arith.constant 0 : index
    %c1 = arith.constant 1 : index
    %c0_8 = arith.constant 0 : index
    %6 = vector.load %arg0[%c0_6, %c0_7, %c1, %c0_8] : memref<2x18x18x4xf32, #tpu.memory_space<vmem>>, vector<2x16x16x4xf32>
    %7 = vector.shape_cast %6 : vector<2x16x16x4xf32> to vector<512x4xf32>
    %8 = arith.truncf %7 : vector<512x4xf32> to vector<512x4xbf16>
    %c1_9 = arith.constant 1 : index
    %c0_10 = arith.constant 0 : index
    %c0_11 = arith.constant 0 : index
    %9 = vector.load %arg1[%c1_9, %c0_10, %c0_11] : memref<9x4x8xbf16, #tpu.memory_space<vmem>>, vector<1x4x8xbf16>
    %10 = vector.shape_cast %9 : vector<1x4x8xbf16> to vector<4x8xbf16>
    %cst_12 = arith.constant dense<0.000000e+00> : vector<512x8xf32>
    %11 = tpu.matmul %8, %10, %cst_12 {dimension_numbers = #tpu.dot_dimension_numbers<[1], [0], [0], [1], [0, 0, 1, 1], [], []>} : vector<512x4xbf16>, vector<4x8xbf16>, vector<512x8xf32> -> vector<512x8xf32>
    %12 = arith.addf %5, %11 : vector<512x8xf32>
    %c0_13 = arith.constant 0 : index
    %c0_14 = arith.constant 0 : index
    %c2 = arith.constant 2 : index
    %c0_15 = arith.constant 0 : index
    %13 = vector.load %arg0[%c0_13, %c0_14, %c2, %c0_15] : memref<2x18x18x4xf32, #tpu.memory_space<vmem>>, vector<2x16x16x4xf32>
    %14 = vector.shape_cast %13 : vector<2x16x16x4xf32> to vector<512x4xf32>
    %15 = arith.truncf %14 : vector<512x4xf32> to vector<512x4xbf16>
    %c2_16 = arith.constant 2 : index
    %c0_17 = arith.constant 0 : index
    %c0_18 = arith.constant 0 : index
    %16 = vector.load %arg1[%c2_16, %c0_17, %c0_18] : memref<9x4x8xbf16, #tpu.memory_space<vmem>>, vector<1x4x8xbf16>
    %17 = vector.shape_cast %16 : vector<1x4x8xbf16> to vector<4x8xbf16>
    %cst_19 = arith.constant dense<0.000000e+00> : vector<512x8xf32>
    %18 = tpu.matmul %15, %17, %cst_19 {dimension_numbers = #tpu.dot_dimension_numbers<[1], [0], [0], [1], [0, 0, 1, 1], [], []>} : vector<512x4xbf16>, vector<4x8xbf16>, vector<512x8xf32> -> vector<512x8xf32>
    %19 = arith.addf %12, %18 : vector<512x8xf32>
    %c0_20 = arith.constant 0 : index
    %c1_21 = arith.constant 1 : index
    %c0_22 = arith.constant 0 : index
    %c0_23 = arith.constant 0 : index
    %20 = vector.load %arg0[%c0_20, %c1_21, %c0_22, %c0_23] : memref<2x18x18x4xf32, #tpu.memory_space<vmem>>, vector<2x16x16x4xf32>
    %21 = vector.shape_cast %20 : vector<2x16x16x4xf32> to vector<512x4xf32>
    %22 = arith.truncf %21 : vector<512x4xf32> to vector<512x4xbf16>
    %c3 = arith.constant 3 : index
    %c0_24 = arith.constant 0 : index
    %c0_25 = arith.constant 0 : index
    %23 = vector.load %arg1[%c3, %c0_24, %c0_25] : memref<9x4x8xbf16, #tpu.memory_space<vmem>>, vector<1x4x8xbf16>
    %24 = vector.shape_cast %23 : vector<1x4x8xbf16> to vector<4x8xbf16>
    %cst_26 = arith.constant dense<0.000000e+00> : vector<512x8xf32>
    %25 = tpu.matmul %22, %24, %cst_26 {dimension_numbers = #tpu.dot_dimension_numbers<[1], [0], [0], [1], [0, 0, 1, 1], [], []>} : vector<512x4xbf16>, vector<4x8xbf16>, vector<512x8xf32> -> vector<512x8xf32>
    %26 = arith.addf %19, %25 : vector<512x8xf32>
    %c0_27 = arith.constant 0 : index
    %c1_28 = arith.constant 1 : index
    %c1_29 = arith.constant 1 : index
    %c0_30 = arith.constant 0 : index
    %27 = vector.load %arg0[%c0_27, %c1_28, %c1_29, %c0_30] : memref<2x18x18x4xf32, #tpu.memory_space<vmem>>, vector<2x16x16x4xf32>
    %28 = vector.shape_cast %27 : vector<2x16x16x4xf32> to vector<512x4xf32>
    %29 = arith.truncf %28 : vector<512x4xf32> to vector<512x4xbf16>
    %c4 = arith.constant 4 : index
    %c0_31 = arith.constant 0 : index
    %c0_32 = arith.constant 0 : index
    %30 = vector.load %arg1[%c4, %c0_31, %c0_32] : memref<9x4x8xbf16, #tpu.memory_space<vmem>>, vector<1x4x8xbf16>
    %31 = vector.shape_cast %30 : vector<1x4x8xbf16> to vector<4x8xbf16>
    %cst_33 = arith.constant dense<0.000000e+00> : vector<512x8xf32>
    %32 = tpu.matmul %29, %31, %cst_33 {dimension_numbers = #tpu.dot_dimension_numbers<[1], [0], [0], [1], [0, 0, 1, 1], [], []>} : vector<512x4xbf16>, vector<4x8xbf16>, vector<512x8xf32> -> vector<512x8xf32>
    %33 = arith.addf %26, %32 : vector<512x8xf32>
    %c0_34 = arith.constant 0 : index
    %c1_35 = arith.constant 1 : index
    %c2_36 = arith.constant 2 : index
    %c0_37 = arith.constant 0 : index
    %34 = vector.load %arg0[%c0_34, %c1_35, %c2_36, %c0_37] : memref<2x18x18x4xf32, #tpu.memory_space<vmem>>, vector<2x16x16x4xf32>
    %35 = vector.shape_cast %34 : vector<2x16x16x4xf32> to vector<512x4xf32>
    %36 = arith.truncf %35 : vector<512x4xf32> to vector<512x4xbf16>
    %c5 = arith.constant 5 : index
    %c0_38 = arith.constant 0 : index
    %c0_39 = arith.constant 0 : index
    %37 = vector.load %arg1[%c5, %c0_38, %c0_39] : memref<9x4x8xbf16, #tpu.memory_space<vmem>>, vector<1x4x8xbf16>
    %38 = vector.shape_cast %37 : vector<1x4x8xbf16> to vector<4x8xbf16>
    %cst_40 = arith.constant dense<0.000000e+00> : vector<512x8xf32>
    %39 = tpu.matmul %36, %38, %cst_40 {dimension_numbers = #tpu.dot_dimension_numbers<[1], [0], [0], [1], [0, 0, 1, 1], [], []>} : vector<512x4xbf16>, vector<4x8xbf16>, vector<512x8xf32> -> vector<512x8xf32>
    %40 = arith.addf %33, %39 : vector<512x8xf32>
    %c0_41 = arith.constant 0 : index
    %c2_42 = arith.constant 2 : index
    %c0_43 = arith.constant 0 : index
    %c0_44 = arith.constant 0 : index
    %41 = vector.load %arg0[%c0_41, %c2_42, %c0_43, %c0_44] : memref<2x18x18x4xf32, #tpu.memory_space<vmem>>, vector<2x16x16x4xf32>
    %42 = vector.shape_cast %41 : vector<2x16x16x4xf32> to vector<512x4xf32>
    %43 = arith.truncf %42 : vector<512x4xf32> to vector<512x4xbf16>
    %c6 = arith.constant 6 : index
    %c0_45 = arith.constant 0 : index
    %c0_46 = arith.constant 0 : index
    %44 = vector.load %arg1[%c6, %c0_45, %c0_46] : memref<9x4x8xbf16, #tpu.memory_space<vmem>>, vector<1x4x8xbf16>
    %45 = vector.shape_cast %44 : vector<1x4x8xbf16> to vector<4x8xbf16>
    %cst_47 = arith.constant dense<0.000000e+00> : vector<512x8xf32>
    %46 = tpu.matmul %43, %45, %cst_47 {dimension_numbers = #tpu.dot_dimension_numbers<[1], [0], [0], [1], [0, 0, 1, 1], [], []>} : vector<512x4xbf16>, vector<4x8xbf16>, vector<512x8xf32> -> vector<512x8xf32>
    %47 = arith.addf %40, %46 : vector<512x8xf32>
    %c0_48 = arith.constant 0 : index
    %c2_49 = arith.constant 2 : index
    %c1_50 = arith.constant 1 : index
    %c0_51 = arith.constant 0 : index
    %48 = vector.load %arg0[%c0_48, %c2_49, %c1_50, %c0_51] : memref<2x18x18x4xf32, #tpu.memory_space<vmem>>, vector<2x16x16x4xf32>
    %49 = vector.shape_cast %48 : vector<2x16x16x4xf32> to vector<512x4xf32>
    %50 = arith.truncf %49 : vector<512x4xf32> to vector<512x4xbf16>
    %c7 = arith.constant 7 : index
    %c0_52 = arith.constant 0 : index
    %c0_53 = arith.constant 0 : index
    %51 = vector.load %arg1[%c7, %c0_52, %c0_53] : memref<9x4x8xbf16, #tpu.memory_space<vmem>>, vector<1x4x8xbf16>
    %52 = vector.shape_cast %51 : vector<1x4x8xbf16> to vector<4x8xbf16>
    %cst_54 = arith.constant dense<0.000000e+00> : vector<512x8xf32>
    %53 = tpu.matmul %50, %52, %cst_54 {dimension_numbers = #tpu.dot_dimension_numbers<[1], [0], [0], [1], [0, 0, 1, 1], [], []>} : vector<512x4xbf16>, vector<4x8xbf16>, vector<512x8xf32> -> vector<512x8xf32>
    %54 = arith.addf %47, %53 : vector<512x8xf32>
    %c0_55 = arith.constant 0 : index
    %c2_56 = arith.constant 2 : index
    %c2_57 = arith.constant 2 : index
    %c0_58 = arith.constant 0 : index
    %55 = vector.load %arg0[%c0_55, %c2_56, %c2_57, %c0_58] : memref<2x18x18x4xf32, #tpu.memory_space<vmem>>, vector<2x16x16x4xf32>
    %56 = vector.shape_cast %55 : vector<2x16x16x4xf32> to vector<512x4xf32>
    %57 = arith.truncf %56 : vector<512x4xf32> to vector<512x4xbf16>
    %c8 = arith.constant 8 : index
    %c0_59 = arith.constant 0 : index
    %c0_60 = arith.constant 0 : index
    %58 = vector.load %arg1[%c8, %c0_59, %c0_60] : memref<9x4x8xbf16, #tpu.memory_space<vmem>>, vector<1x4x8xbf16>
    %59 = vector.shape_cast %58 : vector<1x4x8xbf16> to vector<4x8xbf16>
    %cst_61 = arith.constant dense<0.000000e+00> : vector<512x8xf32>
    %60 = tpu.matmul %57, %59, %cst_61 {dimension_numbers = #tpu.dot_dimension_numbers<[1], [0], [0], [1], [0, 0, 1, 1], [], []>} : vector<512x4xbf16>, vector<4x8xbf16>, vector<512x8xf32> -> vector<512x8xf32>
    %61 = arith.addf %54, %60 : vector<512x8xf32>
    %62 = tpu.transpose %61, [1, 0] : vector<512x8xf32> -> vector<8x512xf32>
    %c0_62 = arith.constant 0 : index
    %c0_63 = arith.constant 0 : index
    %63 = vector.load %arg2[%c0_62, %c0_63] : memref<8x1xf32, #tpu.memory_space<vmem>>, vector<8x1xf32>
    %c0_64 = arith.constant 0 : index
    %c0_65 = arith.constant 0 : index
    %64 = vector.load %arg3[%c0_64, %c0_65] : memref<8x1xf32, #tpu.memory_space<vmem>>, vector<8x1xf32>
    %cst_66 = arith.constant dense<0.000000e+00> : vector<8xf32>
    %65 = vector.multi_reduction <add>, %62, %cst_66 [1] : vector<8x512xf32> to vector<8xf32>
    %66 = vector.shape_cast %65 : vector<8xf32> to vector<8x1xf32>
    %cst_67 = arith.constant 0.001953125 : f32
    %67 = vector.broadcast %cst_67 : f32 to vector<8x1xf32>
    %68 = arith.mulf %66, %67 : vector<8x1xf32>
    %69 = vector.broadcast %68 : vector<8x1xf32> to vector<8x512xf32>
    %70 = arith.subf %62, %69 : vector<8x512xf32>
    %71 = arith.mulf %70, %70 : vector<8x512xf32>
    %cst_68 = arith.constant dense<0.000000e+00> : vector<8xf32>
    %72 = vector.multi_reduction <add>, %71, %cst_68 [1] : vector<8x512xf32> to vector<8xf32>
    %73 = vector.shape_cast %72 : vector<8xf32> to vector<8x1xf32>
    %cst_69 = arith.constant 0.001953125 : f32
    %74 = vector.broadcast %cst_69 : f32 to vector<8x1xf32>
    %75 = arith.mulf %73, %74 : vector<8x1xf32>
    %cst_70 = arith.constant 9.99999974E-6 : f32
    %76 = vector.broadcast %cst_70 : f32 to vector<8x1xf32>
    %77 = arith.addf %75, %76 : vector<8x1xf32>
    %78 = math.rsqrt %77 : vector<8x1xf32>
    %79 = arith.mulf %63, %78 : vector<8x1xf32>
    %80 = arith.mulf %68, %79 : vector<8x1xf32>
    %81 = arith.subf %64, %80 : vector<8x1xf32>
    %82 = tpu.transpose %79, [1, 0] : vector<8x1xf32> -> vector<1x8xf32>
    %83 = tpu.transpose %81, [1, 0] : vector<8x1xf32> -> vector<1x8xf32>
    %84 = vector.broadcast %82 : vector<1x8xf32> to vector<512x8xf32>
    %85 = arith.mulf %61, %84 : vector<512x8xf32>
    %86 = vector.broadcast %83 : vector<1x8xf32> to vector<512x8xf32>
    %87 = arith.addf %85, %86 : vector<512x8xf32>
    %cst_71 = arith.constant 0.000000e+00 : f32
    %88 = vector.broadcast %cst_71 : f32 to vector<512x8xf32>
    %89 = arith.maximumf %87, %88 : vector<512x8xf32>
    %cst_72 = arith.constant 0.000000e+00 : f32
    %90 = vector.broadcast %cst_72 : f32 to vector<2x1x18x8xf32>
    %cst_73 = arith.constant 0.000000e+00 : f32
    %91 = vector.broadcast %cst_73 : f32 to vector<2x18x1x8xf32>
    %c0_74 = arith.constant 0 : index
    %c0_75 = arith.constant 0 : index
    %c0_76 = arith.constant 0 : index
    %c0_77 = arith.constant 0 : index
    %92 = vector.load %arg10[%c0_74, %c0_75, %c0_76, %c0_77] : memref<2x18x18x8xf32, #tpu.memory_space<vmem>>, vector<2x1x18x8xf32>
    tpu.vector_store %arg10[%c0_74, %c0_75, %c0_76, %c0_77], %90 {strides = array<i32>} : memref<2x18x18x8xf32, #tpu.memory_space<vmem>>, vector<2x1x18x8xf32>,
    %c0_78 = arith.constant 0 : index
    %c17 = arith.constant 17 : index
    %c0_79 = arith.constant 0 : index
    %c0_80 = arith.constant 0 : index
    %93 = vector.load %arg10[%c0_78, %c17, %c0_79, %c0_80] : memref<2x18x18x8xf32, #tpu.memory_space<vmem>>, vector<2x1x18x8xf32>
    tpu.vector_store %arg10[%c0_78, %c17, %c0_79, %c0_80], %90 {strides = array<i32>} : memref<2x18x18x8xf32, #tpu.memory_space<vmem>>, vector<2x1x18x8xf32>,
    %c0_81 = arith.constant 0 : index
    %c0_82 = arith.constant 0 : index
    %c0_83 = arith.constant 0 : index
    %c0_84 = arith.constant 0 : index
    %94 = vector.load %arg10[%c0_81, %c0_82, %c0_83, %c0_84] : memref<2x18x18x8xf32, #tpu.memory_space<vmem>>, vector<2x18x1x8xf32>
    tpu.vector_store %arg10[%c0_81, %c0_82, %c0_83, %c0_84], %91 {strides = array<i32>} : memref<2x18x18x8xf32, #tpu.memory_space<vmem>>, vector<2x18x1x8xf32>,
    %c0_85 = arith.constant 0 : index
    %c0_86 = arith.constant 0 : index
    %c17_87 = arith.constant 17 : index
    %c0_88 = arith.constant 0 : index
    %95 = vector.load %arg10[%c0_85, %c0_86, %c17_87, %c0_88] : memref<2x18x18x8xf32, #tpu.memory_space<vmem>>, vector<2x18x1x8xf32>
    tpu.vector_store %arg10[%c0_85, %c0_86, %c17_87, %c0_88], %91 {strides = array<i32>} : memref<2x18x18x8xf32, #tpu.memory_space<vmem>>, vector<2x18x1x8xf32>,
    %96 = vector.shape_cast %89 : vector<512x8xf32> to vector<2x16x16x8xf32>
    %c0_89 = arith.constant 0 : index
    %c1_90 = arith.constant 1 : index
    %c1_91 = arith.constant 1 : index
    %c0_92 = arith.constant 0 : index
    %97 = vector.load %arg10[%c0_89, %c1_90, %c1_91, %c0_92] : memref<2x18x18x8xf32, #tpu.memory_space<vmem>>, vector<2x16x16x8xf32>
    tpu.vector_store %arg10[%c0_89, %c1_90, %c1_91, %c0_92], %96 {strides = array<i32>} : memref<2x18x18x8xf32, #tpu.memory_space<vmem>>, vector<2x16x16x8xf32>,
    %c0_93 = arith.constant 0 : index
    %c0_94 = arith.constant 0 : index
    %c0_95 = arith.constant 0 : index
    %c0_96 = arith.constant 0 : index
    %98 = vector.load %arg10[%c0_93, %c0_94, %c0_95, %c0_96] : memref<2x18x18x8xf32, #tpu.memory_space<vmem>>, vector<2x16x16x8xf32>
    %99 = vector.shape_cast %98 : vector<2x16x16x8xf32> to vector<512x8xf32>
    %100 = arith.truncf %99 : vector<512x8xf32> to vector<512x8xbf16>
    %c0_97 = arith.constant 0 : index
    %c0_98 = arith.constant 0 : index
    %c0_99 = arith.constant 0 : index
    %101 = vector.load %arg4[%c0_97, %c0_98, %c0_99] : memref<9x8x8xbf16, #tpu.memory_space<vmem>>, vector<1x8x8xbf16>
    %102 = vector.shape_cast %101 : vector<1x8x8xbf16> to vector<8x8xbf16>
    %cst_100 = arith.constant dense<0.000000e+00> : vector<512x8xf32>
    %103 = tpu.matmul %100, %102, %cst_100 {dimension_numbers = #tpu.dot_dimension_numbers<[1], [0], [0], [1], [0, 0, 1, 1], [], []>} : vector<512x8xbf16>, vector<8x8xbf16>, vector<512x8xf32> -> vector<512x8xf32>
    %c0_101 = arith.constant 0 : index
    %c0_102 = arith.constant 0 : index
    %c1_103 = arith.constant 1 : index
    %c0_104 = arith.constant 0 : index
    %104 = vector.load %arg10[%c0_101, %c0_102, %c1_103, %c0_104] : memref<2x18x18x8xf32, #tpu.memory_space<vmem>>, vector<2x16x16x8xf32>
    %105 = vector.shape_cast %104 : vector<2x16x16x8xf32> to vector<512x8xf32>
    %106 = arith.truncf %105 : vector<512x8xf32> to vector<512x8xbf16>
    %c1_105 = arith.constant 1 : index
    %c0_106 = arith.constant 0 : index
    %c0_107 = arith.constant 0 : index
    %107 = vector.load %arg4[%c1_105, %c0_106, %c0_107] : memref<9x8x8xbf16, #tpu.memory_space<vmem>>, vector<1x8x8xbf16>
    %108 = vector.shape_cast %107 : vector<1x8x8xbf16> to vector<8x8xbf16>
    %cst_108 = arith.constant dense<0.000000e+00> : vector<512x8xf32>
    %109 = tpu.matmul %106, %108, %cst_108 {dimension_numbers = #tpu.dot_dimension_numbers<[1], [0], [0], [1], [0, 0, 1, 1], [], []>} : vector<512x8xbf16>, vector<8x8xbf16>, vector<512x8xf32> -> vector<512x8xf32>
    %110 = arith.addf %103, %109 : vector<512x8xf32>
    %c0_109 = arith.constant 0 : index
    %c0_110 = arith.constant 0 : index
    %c2_111 = arith.constant 2 : index
    %c0_112 = arith.constant 0 : index
    %111 = vector.load %arg10[%c0_109, %c0_110, %c2_111, %c0_112] : memref<2x18x18x8xf32, #tpu.memory_space<vmem>>, vector<2x16x16x8xf32>
    %112 = vector.shape_cast %111 : vector<2x16x16x8xf32> to vector<512x8xf32>
    %113 = arith.truncf %112 : vector<512x8xf32> to vector<512x8xbf16>
    %c2_113 = arith.constant 2 : index
    %c0_114 = arith.constant 0 : index
    %c0_115 = arith.constant 0 : index
    %114 = vector.load %arg4[%c2_113, %c0_114, %c0_115] : memref<9x8x8xbf16, #tpu.memory_space<vmem>>, vector<1x8x8xbf16>
    %115 = vector.shape_cast %114 : vector<1x8x8xbf16> to vector<8x8xbf16>
    %cst_116 = arith.constant dense<0.000000e+00> : vector<512x8xf32>
    %116 = tpu.matmul %113, %115, %cst_116 {dimension_numbers = #tpu.dot_dimension_numbers<[1], [0], [0], [1], [0, 0, 1, 1], [], []>} : vector<512x8xbf16>, vector<8x8xbf16>, vector<512x8xf32> -> vector<512x8xf32>
    %117 = arith.addf %110, %116 : vector<512x8xf32>
    %c0_117 = arith.constant 0 : index
    %c1_118 = arith.constant 1 : index
    %c0_119 = arith.constant 0 : index
    %c0_120 = arith.constant 0 : index
    %118 = vector.load %arg10[%c0_117, %c1_118, %c0_119, %c0_120] : memref<2x18x18x8xf32, #tpu.memory_space<vmem>>, vector<2x16x16x8xf32>
    %119 = vector.shape_cast %118 : vector<2x16x16x8xf32> to vector<512x8xf32>
    %120 = arith.truncf %119 : vector<512x8xf32> to vector<512x8xbf16>
    %c3_121 = arith.constant 3 : index
    %c0_122 = arith.constant 0 : index
    %c0_123 = arith.constant 0 : index
    %121 = vector.load %arg4[%c3_121, %c0_122, %c0_123] : memref<9x8x8xbf16, #tpu.memory_space<vmem>>, vector<1x8x8xbf16>
    %122 = vector.shape_cast %121 : vector<1x8x8xbf16> to vector<8x8xbf16>
    %cst_124 = arith.constant dense<0.000000e+00> : vector<512x8xf32>
    %123 = tpu.matmul %120, %122, %cst_124 {dimension_numbers = #tpu.dot_dimension_numbers<[1], [0], [0], [1], [0, 0, 1, 1], [], []>} : vector<512x8xbf16>, vector<8x8xbf16>, vector<512x8xf32> -> vector<512x8xf32>
    %124 = arith.addf %117, %123 : vector<512x8xf32>
    %c0_125 = arith.constant 0 : index
    %c1_126 = arith.constant 1 : index
    %c1_127 = arith.constant 1 : index
    %c0_128 = arith.constant 0 : index
    %125 = vector.load %arg10[%c0_125, %c1_126, %c1_127, %c0_128] : memref<2x18x18x8xf32, #tpu.memory_space<vmem>>, vector<2x16x16x8xf32>
    %126 = vector.shape_cast %125 : vector<2x16x16x8xf32> to vector<512x8xf32>
    %127 = arith.truncf %126 : vector<512x8xf32> to vector<512x8xbf16>
    %c4_129 = arith.constant 4 : index
    %c0_130 = arith.constant 0 : index
    %c0_131 = arith.constant 0 : index
    %128 = vector.load %arg4[%c4_129, %c0_130, %c0_131] : memref<9x8x8xbf16, #tpu.memory_space<vmem>>, vector<1x8x8xbf16>
    %129 = vector.shape_cast %128 : vector<1x8x8xbf16> to vector<8x8xbf16>
    %cst_132 = arith.constant dense<0.000000e+00> : vector<512x8xf32>
    %130 = tpu.matmul %127, %129, %cst_132 {dimension_numbers = #tpu.dot_dimension_numbers<[1], [0], [0], [1], [0, 0, 1, 1], [], []>} : vector<512x8xbf16>, vector<8x8xbf16>, vector<512x8xf32> -> vector<512x8xf32>
    %131 = arith.addf %124, %130 : vector<512x8xf32>
    %c0_133 = arith.constant 0 : index
    %c1_134 = arith.constant 1 : index
    %c2_135 = arith.constant 2 : index
    %c0_136 = arith.constant 0 : index
    %132 = vector.load %arg10[%c0_133, %c1_134, %c2_135, %c0_136] : memref<2x18x18x8xf32, #tpu.memory_space<vmem>>, vector<2x16x16x8xf32>
    %133 = vector.shape_cast %132 : vector<2x16x16x8xf32> to vector<512x8xf32>
    %134 = arith.truncf %133 : vector<512x8xf32> to vector<512x8xbf16>
    %c5_137 = arith.constant 5 : index
    %c0_138 = arith.constant 0 : index
    %c0_139 = arith.constant 0 : index
    %135 = vector.load %arg4[%c5_137, %c0_138, %c0_139] : memref<9x8x8xbf16, #tpu.memory_space<vmem>>, vector<1x8x8xbf16>
    %136 = vector.shape_cast %135 : vector<1x8x8xbf16> to vector<8x8xbf16>
    %cst_140 = arith.constant dense<0.000000e+00> : vector<512x8xf32>
    %137 = tpu.matmul %134, %136, %cst_140 {dimension_numbers = #tpu.dot_dimension_numbers<[1], [0], [0], [1], [0, 0, 1, 1], [], []>} : vector<512x8xbf16>, vector<8x8xbf16>, vector<512x8xf32> -> vector<512x8xf32>
    %138 = arith.addf %131, %137 : vector<512x8xf32>
    %c0_141 = arith.constant 0 : index
    %c2_142 = arith.constant 2 : index
    %c0_143 = arith.constant 0 : index
    %c0_144 = arith.constant 0 : index
    %139 = vector.load %arg10[%c0_141, %c2_142, %c0_143, %c0_144] : memref<2x18x18x8xf32, #tpu.memory_space<vmem>>, vector<2x16x16x8xf32>
    %140 = vector.shape_cast %139 : vector<2x16x16x8xf32> to vector<512x8xf32>
    %141 = arith.truncf %140 : vector<512x8xf32> to vector<512x8xbf16>
    %c6_145 = arith.constant 6 : index
    %c0_146 = arith.constant 0 : index
    %c0_147 = arith.constant 0 : index
    %142 = vector.load %arg4[%c6_145, %c0_146, %c0_147] : memref<9x8x8xbf16, #tpu.memory_space<vmem>>, vector<1x8x8xbf16>
    %143 = vector.shape_cast %142 : vector<1x8x8xbf16> to vector<8x8xbf16>
    %cst_148 = arith.constant dense<0.000000e+00> : vector<512x8xf32>
    %144 = tpu.matmul %141, %143, %cst_148 {dimension_numbers = #tpu.dot_dimension_numbers<[1], [0], [0], [1], [0, 0, 1, 1], [], []>} : vector<512x8xbf16>, vector<8x8xbf16>, vector<512x8xf32> -> vector<512x8xf32>
    %145 = arith.addf %138, %144 : vector<512x8xf32>
    %c0_149 = arith.constant 0 : index
    %c2_150 = arith.constant 2 : index
    %c1_151 = arith.constant 1 : index
    %c0_152 = arith.constant 0 : index
    %146 = vector.load %arg10[%c0_149, %c2_150, %c1_151, %c0_152] : memref<2x18x18x8xf32, #tpu.memory_space<vmem>>, vector<2x16x16x8xf32>
    %147 = vector.shape_cast %146 : vector<2x16x16x8xf32> to vector<512x8xf32>
    %148 = arith.truncf %147 : vector<512x8xf32> to vector<512x8xbf16>
    %c7_153 = arith.constant 7 : index
    %c0_154 = arith.constant 0 : index
    %c0_155 = arith.constant 0 : index
    %149 = vector.load %arg4[%c7_153, %c0_154, %c0_155] : memref<9x8x8xbf16, #tpu.memory_space<vmem>>, vector<1x8x8xbf16>
    %150 = vector.shape_cast %149 : vector<1x8x8xbf16> to vector<8x8xbf16>
    %cst_156 = arith.constant dense<0.000000e+00> : vector<512x8xf32>
    %151 = tpu.matmul %148, %150, %cst_156 {dimension_numbers = #tpu.dot_dimension_numbers<[1], [0], [0], [1], [0, 0, 1, 1], [], []>} : vector<512x8xbf16>, vector<8x8xbf16>, vector<512x8xf32> -> vector<512x8xf32>
    %152 = arith.addf %145, %151 : vector<512x8xf32>
    %c0_157 = arith.constant 0 : index
    %c2_158 = arith.constant 2 : index
    %c2_159 = arith.constant 2 : index
    %c0_160 = arith.constant 0 : index
    %153 = vector.load %arg10[%c0_157, %c2_158, %c2_159, %c0_160] : memref<2x18x18x8xf32, #tpu.memory_space<vmem>>, vector<2x16x16x8xf32>
    %154 = vector.shape_cast %153 : vector<2x16x16x8xf32> to vector<512x8xf32>
    %155 = arith.truncf %154 : vector<512x8xf32> to vector<512x8xbf16>
    %c8_161 = arith.constant 8 : index
    %c0_162 = arith.constant 0 : index
    %c0_163 = arith.constant 0 : index
    %156 = vector.load %arg4[%c8_161, %c0_162, %c0_163] : memref<9x8x8xbf16, #tpu.memory_space<vmem>>, vector<1x8x8xbf16>
    %157 = vector.shape_cast %156 : vector<1x8x8xbf16> to vector<8x8xbf16>
    %cst_164 = arith.constant dense<0.000000e+00> : vector<512x8xf32>
    %158 = tpu.matmul %155, %157, %cst_164 {dimension_numbers = #tpu.dot_dimension_numbers<[1], [0], [0], [1], [0, 0, 1, 1], [], []>} : vector<512x8xbf16>, vector<8x8xbf16>, vector<512x8xf32> -> vector<512x8xf32>
    %159 = arith.addf %152, %158 : vector<512x8xf32>
    %160 = tpu.transpose %159, [1, 0] : vector<512x8xf32> -> vector<8x512xf32>
    %c0_165 = arith.constant 0 : index
    %c0_166 = arith.constant 0 : index
    %161 = vector.load %arg5[%c0_165, %c0_166] : memref<8x1xf32, #tpu.memory_space<vmem>>, vector<8x1xf32>
    %c0_167 = arith.constant 0 : index
    %c0_168 = arith.constant 0 : index
    %162 = vector.load %arg6[%c0_167, %c0_168] : memref<8x1xf32, #tpu.memory_space<vmem>>, vector<8x1xf32>
    %cst_169 = arith.constant dense<0.000000e+00> : vector<8xf32>
    %163 = vector.multi_reduction <add>, %160, %cst_169 [1] : vector<8x512xf32> to vector<8xf32>
    %164 = vector.shape_cast %163 : vector<8xf32> to vector<8x1xf32>
    %cst_170 = arith.constant 0.001953125 : f32
    %165 = vector.broadcast %cst_170 : f32 to vector<8x1xf32>
    %166 = arith.mulf %164, %165 : vector<8x1xf32>
    %167 = vector.broadcast %166 : vector<8x1xf32> to vector<8x512xf32>
    %168 = arith.subf %160, %167 : vector<8x512xf32>
    %169 = arith.mulf %168, %168 : vector<8x512xf32>
    %cst_171 = arith.constant dense<0.000000e+00> : vector<8xf32>
    %170 = vector.multi_reduction <add>, %169, %cst_171 [1] : vector<8x512xf32> to vector<8xf32>
    %171 = vector.shape_cast %170 : vector<8xf32> to vector<8x1xf32>
    %cst_172 = arith.constant 0.001953125 : f32
    %172 = vector.broadcast %cst_172 : f32 to vector<8x1xf32>
    %173 = arith.mulf %171, %172 : vector<8x1xf32>
    %cst_173 = arith.constant 9.99999974E-6 : f32
    %174 = vector.broadcast %cst_173 : f32 to vector<8x1xf32>
    %175 = arith.addf %173, %174 : vector<8x1xf32>
    %176 = math.rsqrt %175 : vector<8x1xf32>
    %177 = arith.mulf %161, %176 : vector<8x1xf32>
    %178 = arith.mulf %166, %177 : vector<8x1xf32>
    %179 = arith.subf %162, %178 : vector<8x1xf32>
    %180 = vector.broadcast %177 : vector<8x1xf32> to vector<8x512xf32>
    %181 = arith.mulf %160, %180 : vector<8x512xf32>
    %182 = vector.broadcast %179 : vector<8x1xf32> to vector<8x512xf32>
    %183 = arith.addf %181, %182 : vector<8x512xf32>
    %c0_174 = arith.constant 0 : index
    %c1_175 = arith.constant 1 : index
    %c1_176 = arith.constant 1 : index
    %c0_177 = arith.constant 0 : index
    %184 = vector.load %arg0[%c0_174, %c1_175, %c1_176, %c0_177] : memref<2x18x18x4xf32, #tpu.memory_space<vmem>>, vector<2x16x16x4xf32>
    %185 = vector.shape_cast %184 : vector<2x16x16x4xf32> to vector<512x4xf32>
    %186 = tpu.transpose %185, [1, 0] : vector<512x4xf32> -> vector<4x512xf32>
    %c0_178 = arith.constant 0 : index
    %c0_179 = arith.constant 0 : index
    %187 = vector.load %arg7[%c0_178, %c0_179] : memref<8x4xf32, #tpu.memory_space<vmem>>, vector<8x4xf32>
    %188 = vector.extract_strided_slice %187 {offsets = [0, 0], sizes = [8, 1], strides = [1, 1]} : vector<8x4xf32> to vector<8x1xf32>
    %189 = vector.extract_strided_slice %186 {offsets = [0, 0], sizes = [1, 512], strides = [1, 1]} : vector<4x512xf32> to vector<1x512xf32>
    %190 = vector.broadcast %188 : vector<8x1xf32> to vector<8x512xf32>
    %191 = vector.broadcast %189 : vector<1x512xf32> to vector<8x512xf32>
    %192 = arith.mulf %190, %191 : vector<8x512xf32>
    %c0_180 = arith.constant 0 : index
    %c0_181 = arith.constant 0 : index
    %193 = vector.load %arg8[%c0_180, %c0_181] : memref<8x1xf32, #tpu.memory_space<vmem>>, vector<8x1xf32>
    %194 = vector.broadcast %193 : vector<8x1xf32> to vector<8x512xf32>
    %195 = arith.addf %192, %194 : vector<8x512xf32>
    %196 = vector.extract_strided_slice %187 {offsets = [0, 1], sizes = [8, 1], strides = [1, 1]} : vector<8x4xf32> to vector<8x1xf32>
    %197 = vector.extract_strided_slice %186 {offsets = [1, 0], sizes = [1, 512], strides = [1, 1]} : vector<4x512xf32> to vector<1x512xf32>
    %198 = vector.broadcast %196 : vector<8x1xf32> to vector<8x512xf32>
    %199 = vector.broadcast %197 : vector<1x512xf32> to vector<8x512xf32>
    %200 = arith.mulf %198, %199 : vector<8x512xf32>
    %201 = arith.addf %195, %200 : vector<8x512xf32>
    %202 = vector.extract_strided_slice %187 {offsets = [0, 2], sizes = [8, 1], strides = [1, 1]} : vector<8x4xf32> to vector<8x1xf32>
    %203 = vector.extract_strided_slice %186 {offsets = [2, 0], sizes = [1, 512], strides = [1, 1]} : vector<4x512xf32> to vector<1x512xf32>
    %204 = vector.broadcast %202 : vector<8x1xf32> to vector<8x512xf32>
    %205 = vector.broadcast %203 : vector<1x512xf32> to vector<8x512xf32>
    %206 = arith.mulf %204, %205 : vector<8x512xf32>
    %207 = arith.addf %201, %206 : vector<8x512xf32>
    %208 = vector.extract_strided_slice %187 {offsets = [0, 3], sizes = [8, 1], strides = [1, 1]} : vector<8x4xf32> to vector<8x1xf32>
    %209 = vector.extract_strided_slice %186 {offsets = [3, 0], sizes = [1, 512], strides = [1, 1]} : vector<4x512xf32> to vector<1x512xf32>
    %210 = vector.broadcast %208 : vector<8x1xf32> to vector<8x512xf32>
    %211 = vector.broadcast %209 : vector<1x512xf32> to vector<8x512xf32>
    %212 = arith.mulf %210, %211 : vector<8x512xf32>
    %213 = arith.addf %207, %212 : vector<8x512xf32>
    %214 = arith.addf %213, %183 : vector<8x512xf32>
    %cst_182 = arith.constant 0.000000e+00 : f32
    %215 = vector.broadcast %cst_182 : f32 to vector<8x512xf32>
    %216 = arith.maximumf %214, %215 : vector<8x512xf32>
    %c0_183 = arith.constant 0 : index
    %c0_184 = arith.constant 0 : index
    %217 = vector.load %arg9[%c0_183, %c0_184] : memref<8x512xf32, #tpu.memory_space<vmem>>, vector<8x512xf32>
    tpu.vector_store %arg9[%c0_183, %c0_184], %216 {strides = array<i32>} : memref<8x512xf32, #tpu.memory_space<vmem>>, vector<8x512xf32>,
    return
  }
}

</mosaic_0001>

<llo_original>
// kernel: tpu_custom_call.1
$region0: #{tpu_custom_call.1}
  #allocation0 [shape = 'u32[]', space=smem, size = 0x4, offset = 0x4, fixed_abs, tag = 'smem constant byte address 0x4 - core index']
  #allocation1 [shape = 'u32[144,128]{1,0:T(1,128)}', space=vmem, size = 0x12000, scoped, tag = 'internal scratch']
  #allocation2 [shape = 'f32[2,18,18,8]{3,2,1,0:T(8,128)}', space=vmem, size = 0x6c000, scoped, tag = 'scratch operand']
  %s0 = inlined_call_operand.vmem [shape: f32[2,18,18,4], index: 0, kind: input, shape index: {}]
  %s1 = inlined_call_operand.vmem [shape: bf16[9,4,8], index: 1, kind: input, shape index: {}]
  %s2 = inlined_call_operand.vmem [shape: f32[8,1], index: 2, kind: input, shape index: {}]
  %s3 = inlined_call_operand.vmem [shape: f32[8,1], index: 3, kind: input, shape index: {}]
  %s4 = inlined_call_operand.vmem [shape: bf16[9,8,8], index: 4, kind: input, shape index: {}]
  %s5 = inlined_call_operand.vmem [shape: f32[8,1], index: 5, kind: input, shape index: {}]
  %s6 = inlined_call_operand.vmem [shape: f32[8,1], index: 6, kind: input, shape index: {}]
  %s7 = inlined_call_operand.vmem [shape: f32[8,4], index: 7, kind: input, shape index: {}]
  %s8 = inlined_call_operand.vmem [shape: f32[8,1], index: 8, kind: input, shape index: {}]
  %s9 = inlined_call_operand.hbm [shape: f32[8,512], index: 9, kind: output, shape index: {}]
  %s10 = sld [smem:[#allocation0]]
  $region46: #{tpu_custom_call.1} parent=0
    _
  %s12 = ssub.s32 1, %s10
  %s13 = scalar_select 0, %s12, %s10
  $region1: #{tpu_custom_call.1} parent=0
    #allocation3 [shape = 'u8[16384]{0}', space=vmem, size = 0x4000, scoped, tag = 'output window, operand 0, single buffered']
    #allocation4 [shape = 's32[1]{0}', space=sflag, size = 0x4, scoped, tag = 'scoped memory for tpu_custom_call.1']
    %14 = vsyncpa [#allocation4], 0
    // Predicated region
    $region2: #{tpu_custom_call.1} parent=1 // pred_check
      _
    $region3: #{tpu_custom_call.1} parent=1 // pred_check_branch
      %16 = sbr.rel (0) target = $region5
    $region4: #{tpu_custom_call.1} parent=1 // pred_region
      _
    $region5: #{tpu_custom_call.1} parent=1 // pred_fallthru
      _
    // Predicated region
    $region6: #{tpu_custom_call.1} parent=1 // pred_check
      _
    $region7: #{tpu_custom_call.1} parent=1 // pred_check_branch
      %18 = sbr.rel (0) target = $region9
    $region8: #{tpu_custom_call.1} parent=1 // pred_region
      _
    $region9: #{tpu_custom_call.1} parent=1 // pred_fallthru
      _
    // Predicated region
    $region10: #{tpu_custom_call.1} parent=1 // pred_check
      _
    $region11: #{tpu_custom_call.1} parent=1 // pred_check_branch
      %20 = sbr.rel (0) target = $region13
    $region12: #{tpu_custom_call.1} parent=1 // pred_region
      _
    $region13: #{tpu_custom_call.1} parent=1 // pred_fallthru
      _
    // Predicated region
    $region14: #{tpu_custom_call.1} parent=1 // pred_check
      _
    $region15: #{tpu_custom_call.1} parent=1 // pred_check_branch
      %22 = sbr.rel (0) target = $region17
    $region16: #{tpu_custom_call.1} parent=1 // pred_region
      _
    $region17: #{tpu_custom_call.1} parent=1 // pred_fallthru
      _
    // Predicated region
    $region18: #{tpu_custom_call.1} parent=1 // pred_check
      _
    $region19: #{tpu_custom_call.1} parent=1 // pred_check_branch
      %24 = sbr.rel (0) target = $region21
    $region20: #{tpu_custom_call.1} parent=1 // pred_region
      _
    $region21: #{tpu_custom_call.1} parent=1 // pred_fallthru
      _
    // Predicated region
    $region22: #{tpu_custom_call.1} parent=1 // pred_check
      _
    $region23: #{tpu_custom_call.1} parent=1 // pred_check_branch
      %26 = sbr.rel (0) target = $region25
    $region24: #{tpu_custom_call.1} parent=1 // pred_region
      _
    $region25: #{tpu_custom_call.1} parent=1 // pred_fallthru
      _
    // Predicated region
    $region26: #{tpu_custom_call.1} parent=1 // pred_check
      _
    $region27: #{tpu_custom_call.1} parent=1 // pred_check_branch
      %28 = sbr.rel (0) target = $region29
    $region28: #{tpu_custom_call.1} parent=1 // pred_region
      _
    $region29: #{tpu_custom_call.1} parent=1 // pred_fallthru
      _
    // Predicated region
    $region30: #{tpu_custom_call.1} parent=1 // pred_check
      _
    $region31: #{tpu_custom_call.1} parent=1 // pred_check_branch
      %30 = sbr.rel (0) target = $region33
    $region32: #{tpu_custom_call.1} parent=1 // pred_region
      _
    $region33: #{tpu_custom_call.1} parent=1 // pred_fallthru
      _
    // Predicated region
    $region34: #{tpu_custom_call.1} parent=1 // pred_check
      _
    $region35: #{tpu_custom_call.1} parent=1 // pred_check_branch
      %32 = sbr.rel (0) target = $region37
    $region36: #{tpu_custom_call.1} parent=1 // pred_region
      _
    $region37: #{tpu_custom_call.1} parent=1 // pred_fallthru
      _
    %v34 = vld [vmem:[%s0] sm:$0xff]
    %v35 = vld [vmem:[%s0 + $0x8] sm:$0xff]
    %v36 = vld [vmem:[%s0 + $0x18] sm:$0xff]
    %v37 = vld [vmem:[%s0 + $0x20] sm:$0xff]
    %v38 = vld [vmem:[%s0 + $0x30] sm:$0xff]
    %v39 = vld [vmem:[%s0 + $0x38] sm:$0xff]
    %v40 = vld [vmem:[%s0 + $0x48] sm:$0xff]
    %v41 = vld [vmem:[%s0 + $0x50] sm:$0xff]
    %v42 = vld [vmem:[%s0 + $0x60] sm:$0xff]
    %v43 = vld [vmem:[%s0 + $0x68] sm:$0xff]
    %v44 = vld [vmem:[%s0 + $0x78] sm:$0xff]
    %v45 = vld [vmem:[%s0 + $0x80] sm:$0xff]
    %v46 = vld [vmem:[%s0 + $0x90] sm:$0xff]
    %v47 = vld [vmem:[%s0 + $0x98] sm:$0xff]
    %v48 = vld [vmem:[%s0 + $0xa8] sm:$0xff]
    %v49 = vld [vmem:[%s0 + $0xb0] sm:$0xff]
    %v50 = vld [vmem:[%s0 + $0xc0] sm:$0xff]
    %v51 = vld [vmem:[%s0 + $0xc8] sm:$0xff]
    %v52 = vld [vmem:[%s0 + $0xd8] sm:$0xff]
    %v53 = vld [vmem:[%s0 + $0xe0] sm:$0xff]
    %v54 = vld [vmem:[%s0 + $0xf0] sm:$0xff]
    %v55 = vld [vmem:[%s0 + $0xf8] sm:$0xff]
    %v56 = vld [vmem:[%s0 + $0x108] sm:$0xff]
    %v57 = vld [vmem:[%s0 + $0x110] sm:$0xff]
    %v58 = vld [vmem:[%s0 + $0x120] sm:$0xff]
    %v59 = vld [vmem:[%s0 + $0x128] sm:$0xff]
    %v60 = vld [vmem:[%s0 + $0x138] sm:$0xff]
    %v61 = vld [vmem:[%s0 + $0x140] sm:$0xff]
    %v62 = vld [vmem:[%s0 + $0x150] sm:$0xff]
    %v63 = vld [vmem:[%s0 + $0x158] sm:$0xff]
    %v64 = vld [vmem:[%s0 + $0x168] sm:$0xff]
    %v65 = vld [vmem:[%s0 + $0x170] sm:$0xff]
    %v66 = vld [vmem:[%s0 + $0x1b0] sm:$0xff]
    %v67 = vld [vmem:[%s0 + $0x1b8] sm:$0xff]
    %v68 = vld [vmem:[%s0 + $0x1c8] sm:$0xff]
    %v69 = vld [vmem:[%s0 + $0x1d0] sm:$0xff]
    %v70 = vld [vmem:[%s0 + $0x1e0] sm:$0xff]
    %v71 = vld [vmem:[%s0 + $0x1e8] sm:$0xff]
    %v72 = vld [vmem:[%s0 + $0x1f8] sm:$0xff]
    %v73 = vld [vmem:[%s0 + $0x200] sm:$0xff]
    %v74 = vld [vmem:[%s0 + $0x210] sm:$0xff]
    %v75 = vld [vmem:[%s0 + $0x218] sm:$0xff]
    %v76 = vld [vmem:[%s0 + $0x228] sm:$0xff]
    %v77 = vld [vmem:[%s0 + $0x230] sm:$0xff]
    %v78 = vld [vmem:[%s0 + $0x240] sm:$0xff]
    %v79 = vld [vmem:[%s0 + $0x248] sm:$0xff]
    %v80 = vld [vmem:[%s0 + $0x258] sm:$0xff]
    %v81 = vld [vmem:[%s0 + $0x260] sm:$0xff]
    %v82 = vld [vmem:[%s0 + $0x270] sm:$0xff]
    %v83 = vld [vmem:[%s0 + $0x278] sm:$0xff]
    %v84 = vld [vmem:[%s0 + $0x288] sm:$0xff]
    %v85 = vld [vmem:[%s0 + $0x290] sm:$0xff]
    %v86 = vld [vmem:[%s0 + $0x2a0] sm:$0xff]
    %v87 = vld [vmem:[%s0 + $0x2a8] sm:$0xff]
    %v88 = vld [vmem:[%s0 + $0x2b8] sm:$0xff]
    %v89 = vld [vmem:[%s0 + $0x2c0] sm:$0xff]
    %v90 = vld [vmem:[%s0 + $0x2d0] sm:$0xff]
    %v91 = vld [vmem:[%s0 + $0x2d8] sm:$0xff]
    %v92 = vld [vmem:[%s0 + $0x2e8] sm:$0xff]
    %v93 = vld [vmem:[%s0 + $0x2f0] sm:$0xff]
    %v94 = vld [vmem:[%s0 + $0x300] sm:$0xff]
    %v95 = vld [vmem:[%s0 + $0x308] sm:$0xff]
    %v96 = vld [vmem:[%s0 + $0x318] sm:$0xff]
    %v97 = vld [vmem:[%s0 + $0x320] sm:$0xff]
    %v98 = vpack.c.bf16 %v35, %v34
    %v99 = vpack.c.bf16 %v37, %v36
    %v100 = vpack.c.bf16 %v39, %v38
    %v101 = vpack.c.bf16 %v41, %v40
    %v102 = vpack.c.bf16 %v43, %v42
    %v103 = vpack.c.bf16 %v45, %v44
    %v104 = vpack.c.bf16 %v47, %v46
    %v105 = vpack.c.bf16 %v49, %v48
    %v106 = vpack.c.bf16 %v51, %v50
    %v107 = vpack.c.bf16 %v53, %v52
    %v108 = vpack.c.bf16 %v55, %v54
    %v109 = vpack.c.bf16 %v57, %v56
    %v110 = vpack.c.bf16 %v59, %v58
    %v111 = vpack.c.bf16 %v61, %v60
    %v112 = vpack.c.bf16 %v63, %v62
    %v113 = vpack.c.bf16 %v65, %v64
    %v114 = vpack.c.bf16 %v67, %v66
    %v115 = vpack.c.bf16 %v69, %v68
    %v116 = vpack.c.bf16 %v71, %v70
    %v117 = vpack.c.bf16 %v73, %v72
    %v118 = vpack.c.bf16 %v75, %v74
    %v119 = vpack.c.bf16 %v77, %v76
    %v120 = vpack.c.bf16 %v79, %v78
    %v121 = vpack.c.bf16 %v81, %v80
    %v122 = vpack.c.bf16 %v83, %v82
    %v123 = vpack.c.bf16 %v85, %v84
    %v124 = vpack.c.bf16 %v87, %v86
    %v125 = vpack.c.bf16 %v89, %v88
    %v126 = vpack.c.bf16 %v91, %v90
    %v127 = vpack.c.bf16 %v93, %v92
    %v128 = vpack.c.bf16 %v95, %v94
    %v129 = vpack.c.bf16 %v97, %v96
    %v130 = vld [vmem:[%s1] sm:$0x3]
    %v131 = vld [vmem:[%s0 + $0x1] sm:$0xff]
    %v132 = vld [vmem:[%s0 + $0x9] sm:$0xff]
    %v133 = vld [vmem:[%s0 + $0x19] sm:$0xff]
    %v134 = vld [vmem:[%s0 + $0x21] sm:$0xff]
    %v135 = vld [vmem:[%s0 + $0x31] sm:$0xff]
    %v136 = vld [vmem:[%s0 + $0x39] sm:$0xff]
    %v137 = vld [vmem:[%s0 + $0x49] sm:$0xff]
    %v138 = vld [vmem:[%s0 + $0x51] sm:$0xff]
    %v139 = vld [vmem:[%s0 + $0x61] sm:$0xff]
    %v140 = vld [vmem:[%s0 + $0x69] sm:$0xff]
    %v141 = vld [vmem:[%s0 + $0x79] sm:$0xff]
    %v142 = vld [vmem:[%s0 + $0x81] sm:$0xff]
    %v143 = vld [vmem:[%s0 + $0x91] sm:$0xff]
    %v144 = vld [vmem:[%s0 + $0x99] sm:$0xff]
    %v145 = vld [vmem:[%s0 + $0xa9] sm:$0xff]
    %v146 = vld [vmem:[%s0 + $0xb1] sm:$0xff]
    %v147 = vld [vmem:[%s0 + $0xc1] sm:$0xff]
    %v148 = vld [vmem:[%s0 + $0xc9] sm:$0xff]
    %v149 = vld [vmem:[%s0 + $0xd9] sm:$0xff]
    %v150 = vld [vmem:[%s0 + $0xe1] sm:$0xff]
    %v151 = vld [vmem:[%s0 + $0xf1] sm:$0xff]
    %v152 = vld [vmem:[%s0 + $0xf9] sm:$0xff]
    %v153 = vld [vmem:[%s0 + $0x109] sm:$0xff]
    %v154 = vld [vmem:[%s0 + $0x111] sm:$0xff]
    %v155 = vld [vmem:[%s0 + $0x121] sm:$0xff]
    %v156 = vld [vmem:[%s0 + $0x129] sm:$0xff]
    %v157 = vld [vmem:[%s0 + $0x139] sm:$0xff]
    %v158 = vld [vmem:[%s0 + $0x141] sm:$0xff]
    %v159 = vld [vmem:[%s0 + $0x151] sm:$0xff]
    %v160 = vld [vmem:[%s0 + $0x159] sm:$0xff]
    %v161 = vld [vmem:[%s0 + $0x169] sm:$0xff]
    %v162 = vld [vmem:[%s0 + $0x171] sm:$0xff]
    %v163 = vld [vmem:[%s0 + $0x1b1] sm:$0xff]
    %v164 = vld [vmem:[%s0 + $0x1b9] sm:$0xff]
    %v165 = vld [vmem:[%s0 + $0x1c9] sm:$0xff]
    %v166 = vld [vmem:[%s0 + $0x1d1] sm:$0xff]
    %v167 = vld [vmem:[%s0 + $0x1e1] sm:$0xff]
    %v168 = vld [vmem:[%s0 + $0x1e9] sm:$0xff]
    %v169 = vld [vmem:[%s0 + $0x1f9] sm:$0xff]
    %v170 = vld [vmem:[%s0 + $0x201] sm:$0xff]
    %v171 = vld [vmem:[%s0 + $0x211] sm:$0xff]
    %v172 = vld [vmem:[%s0 + $0x219] sm:$0xff]
    %v173 = vld [vmem:[%s0 + $0x229] sm:$0xff]
    %v174 = vld [vmem:[%s0 + $0x231] sm:$0xff]
    %v175 = vld [vmem:[%s0 + $0x241] sm:$0xff]
    %v176 = vld [vmem:[%s0 + $0x249] sm:$0xff]
    %v177 = vld [vmem:[%s0 + $0x259] sm:$0xff]
    %v178 = vld [vmem:[%s0 + $0x261] sm:$0xff]
    %v179 = vld [vmem:[%s0 + $0x271] sm:$0xff]
    %v180 = vld [vmem:[%s0 + $0x279] sm:$0xff]
    %v181 = vld [vmem:[%s0 + $0x289] sm:$0xff]
    %v182 = vld [vmem:[%s0 + $0x291] sm:$0xff]
    %v183 = vld [vmem:[%s0 + $0x2a1] sm:$0xff]
    %v184 = vld [vmem:[%s0 + $0x2a9] sm:$0xff]
    %v185 = vld [vmem:[%s0 + $0x2b9] sm:$0xff]
    %v186 = vld [vmem:[%s0 + $0x2c1] sm:$0xff]
    %v187 = vld [vmem:[%s0 + $0x2d1] sm:$0xff]
    %v188 = vld [vmem:[%s0 + $0x2d9] sm:$0xff]
    %v189 = vld [vmem:[%s0 + $0x2e9] sm:$0xff]
    %v190 = vld [vmem:[%s0 + $0x2f1] sm:$0xff]
    %v191 = vld [vmem:[%s0 + $0x301] sm:$0xff]
    %v192 = vld [vmem:[%s0 + $0x309] sm:$0xff]
    %v193 = vld [vmem:[%s0 + $0x319] sm:$0xff]
    %v194 = vld [vmem:[%s0 + $0x321] sm:$0xff]
    %v195 = vpack.c.bf16 %v132, %v131
    %v196 = vpack.c.bf16 %v134, %v133
    %v197 = vpack.c.bf16 %v136, %v135
    %v198 = vpack.c.bf16 %v138, %v137
    %v199 = vpack.c.bf16 %v140, %v139
    %v200 = vpack.c.bf16 %v142, %v141
    %v201 = vpack.c.bf16 %v144, %v143
    %v202 = vpack.c.bf16 %v146, %v145
    %v203 = vpack.c.bf16 %v148, %v147
    %v204 = vpack.c.bf16 %v150, %v149
    %v205 = vpack.c.bf16 %v152, %v151
    %v206 = vpack.c.bf16 %v154, %v153
    %v207 = vpack.c.bf16 %v156, %v155
    %v208 = vpack.c.bf16 %v158, %v157
    %v209 = vpack.c.bf16 %v160, %v159
    %v210 = vpack.c.bf16 %v162, %v161
    %v211 = vpack.c.bf16 %v164, %v163
    %v212 = vpack.c.bf16 %v166, %v165
    %v213 = vpack.c.bf16 %v168, %v167
    %v214 = vpack.c.bf16 %v170, %v169
    %v215 = vpack.c.bf16 %v172, %v171
    %v216 = vpack.c.bf16 %v174, %v173
    %v217 = vpack.c.bf16 %v176, %v175
    %v218 = vpack.c.bf16 %v178, %v177
    %v219 = vpack.c.bf16 %v180, %v179
    %v220 = vpack.c.bf16 %v182, %v181
    %v221 = vpack.c.bf16 %v184, %v183
    %v222 = vpack.c.bf16 %v186, %v185
    %v223 = vpack.c.bf16 %v188, %v187
    %v224 = vpack.c.bf16 %v190, %v189
    %v225 = vpack.c.bf16 %v192, %v191
    %v226 = vpack.c.bf16 %v194, %v193
    %s227 = scalar_lea.vmem %s1, 2
    %v228 = vld [vmem:[%s227] sm:$0x3]
    %vm229 = vcmask 31744
    %v231 = vsel %vm229, %v195, 0
    %v234 = vsel %vm229, %v196, 0
    %v237 = vsel %vm229, %v197, 0
    %v240 = vsel %vm229, %v198, 0
    %v243 = vsel %vm229, %v199, 0
    %v246 = vsel %vm229, %v200, 0
    %v249 = vsel %vm229, %v201, 0
    %v252 = vsel %vm229, %v202, 0
    %v255 = vsel %vm229, %v203, 0
    %v258 = vsel %vm229, %v204, 0
    %v261 = vsel %vm229, %v205, 0
    %v264 = vsel %vm229, %v206, 0
    %v267 = vsel %vm229, %v207, 0
    %v270 = vsel %vm229, %v208, 0
    %v273 = vsel %vm229, %v209, 0
    %v276 = vsel %vm229, %v210, 0
    %v279 = vsel %vm229, %v211, 0
    %v282 = vsel %vm229, %v212, 0
    %v285 = vsel %vm229, %v213, 0
    %v288 = vsel %vm229, %v214, 0
    %v291 = vsel %vm229, %v215, 0
    %v294 = vsel %vm229, %v216, 0
    %v297 = vsel %vm229, %v217, 0
    %v300 = vsel %vm229, %v218, 0
    %v303 = vsel %vm229, %v219, 0
    %v306 = vsel %vm229, %v220, 0
    %v309 = vsel %vm229, %v221, 0
    %v312 = vsel %vm229, %v222, 0
    %v315 = vsel %vm229, %v223, 0
    %v318 = vsel %vm229, %v224, 0
    %v321 = vsel %vm229, %v225, 0
    %v324 = vsel %vm229, %v226, 0
    %vm326 = vcmask 1041408
    %v328 = vsel %vm326, %v228, 0
    %330 = vmatprep.subr.bf16.mxu0 0
    %331 = vmatpush1.bf16.msra.mxu0 0
    %332 = vmatprep.subr.bf16.mxu0 0
    %333 = vmatpush1.bf16.msra.mxu0 0
    %334 = vmatprep.subr.bf16.mxu0 0
    %335 = vmatpush1.bf16.msra.mxu0 0
    %336 = vmatprep.subr.bf16.mxu0 0
    %337 = vmatpush1.bf16.msra.mxu0 0
    %338 = vmatprep.subr.bf16.mxu0 0
    %339 = vmatpush1.bf16.msra.mxu0 0
    %340 = vmatprep.subr.bf16.mxu0 0
    %341 = vmatpush1.bf16.msra.mxu0 0
    %342 = vmatprep.subr.bf16.mxu0 0
    %343 = vmatpush1.bf16.msra.mxu0 0
    %344 = vmatprep.subr.bf16.mxu0 0
    %345 = vmatpush1.bf16.msra.mxu0 %v328
    %346 = vmatprep.subr.bf16.mxu0 0
    %347 = vmatpush2.bf16.msra.mxu0 0
    %348 = vmatprep.subr.bf16.mxu0 0
    %349 = vmatpush2.bf16.msra.mxu0 0
    %350 = vmatprep.subr.bf16.mxu0 0
    %351 = vmatpush2.bf16.msra.mxu0 0
    %352 = vmatprep.subr.bf16.mxu0 0
    %353 = vmatpush2.bf16.msra.mxu0 0
    %354 = vmatprep.subr.bf16.mxu0 0
    %355 = vmatpush2.bf16.msra.mxu0 0
    %356 = vmatprep.subr.bf16.mxu0 0
    %357 = vmatpush2.bf16.msra.mxu0 0
    %358 = vmatprep.subr.bf16.mxu0 0
    %359 = vmatpush2.bf16.msra.mxu0 0
    %360 = vmatprep.subr.bf16.mxu0 0
    %361 = vmatpush2.bf16.msra.mxu0 0
    %362 = vmatprep.mubr.bf16.mxu0 0
    %363 = vmatmul.mubr.bf16.gmra.mxu0 %v231
    %v364 = vpop.f32.mrf.mxu0
    %v365 = vadd.f32 0.0, %v364
    %v366 = vpop.f32.mrf.mxu0
    %v367 = vpop.f32.mrf.mxu0
    %v368 = vadd.f32 0.0, %v367
    %v369 = vpop.f32.mrf.mxu0
    %370 = vmatprep.mubr.bf16.mxu0 0
    %371 = vmatmul.mubr.bf16.gmra.mxu0 %v234
    %v372 = vpop.f32.mrf.mxu0
    %v373 = vadd.f32 0.0, %v372
    %v374 = vpop.f32.mrf.mxu0
    %v375 = vpop.f32.mrf.mxu0
    %v376 = vadd.f32 0.0, %v375
    %v377 = vpop.f32.mrf.mxu0
    %378 = vmatprep.mubr.bf16.mxu0 0
    %379 = vmatmul.mubr.bf16.gmra.mxu0 %v237
    %v380 = vpop.f32.mrf.mxu0
    %v381 = vadd.f32 0.0, %v380
    %v382 = vpop.f32.mrf.mxu0
    %v383 = vpop.f32.mrf.mxu0
    %v384 = vadd.f32 0.0, %v383
    %v385 = vpop.f32.mrf.mxu0
    %386 = vmatprep.mubr.bf16.mxu0 0
    %387 = vmatmul.mubr.bf16.gmra.mxu0 %v240
    %v388 = vpop.f32.mrf.mxu0
    %v389 = vadd.f32 0.0, %v388
    %v390 = vpop.f32.mrf.mxu0
    %v391 = vpop.f32.mrf.mxu0
    %v392 = vadd.f32 0.0, %v391
    %v393 = vpop.f32.mrf.mxu0
    %394 = vmatprep.mubr.bf16.mxu0 0
    %395 = vmatmul.mubr.bf16.gmra.mxu0 %v243
    %v396 = vpop.f32.mrf.mxu0
    %v397 = vadd.f32 0.0, %v396
    %v398 = vpop.f32.mrf.mxu0
    %v399 = vpop.f32.mrf.mxu0
    %v400 = vadd.f32 0.0, %v399
    %v401 = vpop.f32.mrf.mxu0
    %402 = vmatprep.mubr.bf16.mxu0 0
    %403 = vmatmul.mubr.bf16.gmra.mxu0 %v246
    %v404 = vpop.f32.mrf.mxu0
    %v405 = vadd.f32 0.0, %v404
    %v406 = vpop.f32.mrf.mxu0
    %v407 = vpop.f32.mrf.mxu0
    %v408 = vadd.f32 0.0, %v407
    %v409 = vpop.f32.mrf.mxu0
    %410 = vmatprep.mubr.bf16.mxu0 0
    %411 = vmatmul.mubr.bf16.gmra.mxu0 %v249
    %v412 = vpop.f32.mrf.mxu0
    %v413 = vadd.f32 0.0, %v412
    %v414 = vpop.f32.mrf.mxu0
    %v415 = vpop.f32.mrf.mxu0
    %v416 = vadd.f32 0.0, %v415
    %v417 = vpop.f32.mrf.mxu0
    %418 = vmatprep.mubr.bf16.mxu0 0
    %419 = vmatmul.mubr.bf16.gmra.mxu0 %v252
    %v420 = vpop.f32.mrf.mxu0
    %v421 = vadd.f32 0.0, %v420
    %v422 = vpop.f32.mrf.mxu0
    %v423 = vpop.f32.mrf.mxu0
    %v424 = vadd.f32 0.0, %v423
    %v425 = vpop.f32.mrf.mxu0
    %426 = vmatprep.mubr.bf16.mxu0 0
    %427 = vmatmul.mubr.bf16.gmra.mxu0 %v255
    %v428 = vpop.f32.mrf.mxu0
    %v429 = vadd.f32 0.0, %v428
    %v430 = vpop.f32.mrf.mxu0
    %v431 = vpop.f32.mrf.mxu0
    %v432 = vadd.f32 0.0, %v431
    %v433 = vpop.f32.mrf.mxu0
    %434 = vmatprep.mubr.bf16.mxu0 0
    %435 = vmatmul.mubr.bf16.gmra.mxu0 %v258
    %v436 = vpop.f32.mrf.mxu0
    %v437 = vadd.f32 0.0, %v436
    %v438 = vpop.f32.mrf.mxu0
    %v439 = vpop.f32.mrf.mxu0
    %v440 = vadd.f32 0.0, %v439
    %v441 = vpop.f32.mrf.mxu0
    %442 = vmatprep.mubr.bf16.mxu0 0
    %443 = vmatmul.mubr.bf16.gmra.mxu0 %v261
    %v444 = vpop.f32.mrf.mxu0
    %v445 = vadd.f32 0.0, %v444
    %v446 = vpop.f32.mrf.mxu0
    %v447 = vpop.f32.mrf.mxu0
    %v448 = vadd.f32 0.0, %v447
    %v449 = vpop.f32.mrf.mxu0
    %450 = vmatprep.mubr.bf16.mxu0 0
    %451 = vmatmul.mubr.bf16.gmra.mxu0 %v264
    %v452 = vpop.f32.mrf.mxu0
    %v453 = vadd.f32 0.0, %v452
    %v454 = vpop.f32.mrf.mxu0
    %v455 = vpop.f32.mrf.mxu0
    %v456 = vadd.f32 0.0, %v455
    %v457 = vpop.f32.mrf.mxu0
    %458 = vmatprep.mubr.bf16.mxu0 0
    %459 = vmatmul.mubr.bf16.gmra.mxu0 %v267
    %v460 = vpop.f32.mrf.mxu0
    %v461 = vadd.f32 0.0, %v460
    %v462 = vpop.f32.mrf.mxu0
    %v463 = vpop.f32.mrf.mxu0
    %v464 = vadd.f32 0.0, %v463
    %v465 = vpop.f32.mrf.mxu0
    %466 = vmatprep.mubr.bf16.mxu0 0
    %467 = vmatmul.mubr.bf16.gmra.mxu0 %v270
    %v468 = vpop.f32.mrf.mxu0
    %v469 = vadd.f32 0.0, %v468
    %v470 = vpop.f32.mrf.mxu0
    %v471 = vpop.f32.mrf.mxu0
    %v472 = vadd.f32 0.0, %v471
    %v473 = vpop.f32.mrf.mxu0
    %474 = vmatprep.mubr.bf16.mxu0 0
    %475 = vmatmul.mubr.bf16.gmra.mxu0 %v273
    %v476 = vpop.f32.mrf.mxu0
    %v477 = vadd.f32 0.0, %v476
    %v478 = vpop.f32.mrf.mxu0
    %v479 = vpop.f32.mrf.mxu0
    %v480 = vadd.f32 0.0, %v479
    %v481 = vpop.f32.mrf.mxu0
    %482 = vmatprep.mubr.bf16.mxu0 0
    %483 = vmatmul.mubr.bf16.gmra.mxu0 %v276
    %v484 = vpop.f32.mrf.mxu0
    %v485 = vadd.f32 0.0, %v484
    %v486 = vpop.f32.mrf.mxu0
    %v487 = vpop.f32.mrf.mxu0
    %v488 = vadd.f32 0.0, %v487
    %v489 = vpop.f32.mrf.mxu0
    %490 = vmatprep.mubr.bf16.mxu0 0
    %491 = vmatmul.mubr.bf16.gmra.mxu0 %v279
    %v492 = vpop.f32.mrf.mxu0
    %v493 = vadd.f32 0.0, %v492
    %v494 = vpop.f32.mrf.mxu0
    %v495 = vpop.f32.mrf.mxu0
    %v496 = vadd.f32 0.0, %v495
    %v497 = vpop.f32.mrf.mxu0
    %498 = vmatprep.mubr.bf16.mxu0 0
    %499 = vmatmul.mubr.bf16.gmra.mxu0 %v282
    %v500 = vpop.f32.mrf.mxu0
    %v501 = vadd.f32 0.0, %v500
    %v502 = vpop.f32.mrf.mxu0
    %v503 = vpop.f32.mrf.mxu0
    %v504 = vadd.f32 0.0, %v503
    %v505 = vpop.f32.mrf.mxu0
    %506 = vmatprep.mubr.bf16.mxu0 0
    %507 = vmatmul.mubr.bf16.gmra.mxu0 %v285
    %v508 = vpop.f32.mrf.mxu0
    %v509 = vadd.f32 0.0, %v508
    %v510 = vpop.f32.mrf.mxu0
    %v511 = vpop.f32.mrf.mxu0
    %v512 = vadd.f32 0.0, %v511
    %v513 = vpop.f32.mrf.mxu0
    %514 = vmatprep.mubr.bf16.mxu0 0
    %515 = vmatmul.mubr.bf16.gmra.mxu0 %v288
    %v516 = vpop.f32.mrf.mxu0
    %v517 = vadd.f32 0.0, %v516
    %v518 = vpop.f32.mrf.mxu0
    %v519 = vpop.f32.mrf.mxu0
    %v520 = vadd.f32 0.0, %v519
    %v521 = vpop.f32.mrf.mxu0
    %522 = vmatprep.mubr.bf16.mxu0 0
    %523 = vmatmul.mubr.bf16.gmra.mxu0 %v291
    %v524 = vpop.f32.mrf.mxu0
    %v525 = vadd.f32 0.0, %v524
    %v526 = vpop.f32.mrf.mxu0
    %v527 = vpop.f32.mrf.mxu0
    %v528 = vadd.f32 0.0, %v527
    %v529 = vpop.f32.mrf.mxu0
    %530 = vmatprep.mubr.bf16.mxu0 0
    %531 = vmatmul.mubr.bf16.gmra.mxu0 %v294
    %v532 = vpop.f32.mrf.mxu0
    %v533 = vadd.f32 0.0, %v532
    %v534 = vpop.f32.mrf.mxu0
    %v535 = vpop.f32.mrf.mxu0
    %v536 = vadd.f32 0.0, %v535
    %v537 = vpop.f32.mrf.mxu0
    %538 = vmatprep.mubr.bf16.mxu0 0
    %539 = vmatmul.mubr.bf16.gmra.mxu0 %v297
    %v540 = vpop.f32.mrf.mxu0
    %v541 = vadd.f32 0.0, %v540
    %v542 = vpop.f32.mrf.mxu0
    %v543 = vpop.f32.mrf.mxu0
    %v544 = vadd.f32 0.0, %v543
    %v545 = vpop.f32.mrf.mxu0
    %546 = vmatprep.mubr.bf16.mxu0 0
    %547 = vmatmul.mubr.bf16.gmra.mxu0 %v300
    %v548 = vpop.f32.mrf.mxu0
    %v549 = vadd.f32 0.0, %v548
    %v550 = vpop.f32.mrf.mxu0
    %v551 = vpop.f32.mrf.mxu0
    %v552 = vadd.f32 0.0, %v551
    %v553 = vpop.f32.mrf.mxu0
    %554 = vmatprep.mubr.bf16.mxu0 0
    %555 = vmatmul.mubr.bf16.gmra.mxu0 %v303
    %v556 = vpop.f32.mrf.mxu0
    %v557 = vadd.f32 0.0, %v556
    %v558 = vpop.f32.mrf.mxu0
    %v559 = vpop.f32.mrf.mxu0
    %v560 = vadd.f32 0.0, %v559
    %v561 = vpop.f32.mrf.mxu0
    %562 = vmatprep.mubr.bf16.mxu0 0
    %563 = vmatmul.mubr.bf16.gmra.mxu0 %v306
    %v564 = vpop.f32.mrf.mxu0
    %v565 = vadd.f32 0.0, %v564
    %v566 = vpop.f32.mrf.mxu0
    %v567 = vpop.f32.mrf.mxu0
    %v568 = vadd.f32 0.0, %v567
    %v569 = vpop.f32.mrf.mxu0
    %570 = vmatprep.mubr.bf16.mxu0 0
    %571 = vmatmul.mubr.bf16.gmra.mxu0 %v309
    %v572 = vpop.f32.mrf.mxu0
    %v573 = vadd.f32 0.0, %v572
    %v574 = vpop.f32.mrf.mxu0
    %v575 = vpop.f32.mrf.mxu0
    %v576 = vadd.f32 0.0, %v575
    %v577 = vpop.f32.mrf.mxu0
    %578 = vmatprep.mubr.bf16.mxu0 0
    %579 = vmatmul.mubr.bf16.gmra.mxu0 %v312
    %v580 = vpop.f32.mrf.mxu0
    %v581 = vadd.f32 0.0, %v580
    %v582 = vpop.f32.mrf.mxu0
    %v583 = vpop.f32.mrf.mxu0
    %v584 = vadd.f32 0.0, %v583
    %v585 = vpop.f32.mrf.mxu0
    %586 = vmatprep.mubr.bf16.mxu0 0
    %587 = vmatmul.mubr.bf16.gmra.mxu0 %v315
    %v588 = vpop.f32.mrf.mxu0
    %v589 = vadd.f32 0.0, %v588
    %v590 = vpop.f32.mrf.mxu0
    %v591 = vpop.f32.mrf.mxu0
    %v592 = vadd.f32 0.0, %v591
    %v593 = vpop.f32.mrf.mxu0
    %594 = vmatprep.mubr.bf16.mxu0 0
    %595 = vmatmul.mubr.bf16.gmra.mxu0 %v318
    %v596 = vpop.f32.mrf.mxu0
    %v597 = vadd.f32 0.0, %v596
    %v598 = vpop.f32.mrf.mxu0
    %v599 = vpop.f32.mrf.mxu0
    %v600 = vadd.f32 0.0, %v599
    %v601 = vpop.f32.mrf.mxu0
    %602 = vmatprep.mubr.bf16.mxu0 0
    %603 = vmatmul.mubr.bf16.gmra.mxu0 %v321
    %v604 = vpop.f32.mrf.mxu0
    %v605 = vadd.f32 0.0, %v604
    %v606 = vpop.f32.mrf.mxu0
    %v607 = vpop.f32.mrf.mxu0
    %v608 = vadd.f32 0.0, %v607
    %v609 = vpop.f32.mrf.mxu0
    %610 = vmatprep.mubr.bf16.mxu0 0
    %611 = vmatmul.mubr.bf16.gmra.mxu0 %v324
    %v612 = vpop.f32.mrf.mxu0
    %v613 = vadd.f32 0.0, %v612
    %v614 = vpop.f32.mrf.mxu0
    %v615 = vpop.f32.mrf.mxu0
    %v616 = vadd.f32 0.0, %v615
    %v617 = vpop.f32.mrf.mxu0
    %618 = vdwg.mxu0
    %v620 = vsel %vm229, %v98, 0
    %v623 = vsel %vm229, %v99, 0
    %v626 = vsel %vm229, %v100, 0
    %v629 = vsel %vm229, %v101, 0
    %v632 = vsel %vm229, %v102, 0
    %v635 = vsel %vm229, %v103, 0
    %v638 = vsel %vm229, %v104, 0
    %v641 = vsel %vm229, %v105, 0
    %v644 = vsel %vm229, %v106, 0
    %v647 = vsel %vm229, %v107, 0
    %v650 = vsel %vm229, %v108, 0
    %v653 = vsel %vm229, %v109, 0
    %v656 = vsel %vm229, %v110, 0
    %v659 = vsel %vm229, %v111, 0
    %v662 = vsel %vm229, %v112, 0
    %v665 = vsel %vm229, %v113, 0
    %v668 = vsel %vm229, %v114, 0
    %v671 = vsel %vm229, %v115, 0
    %v674 = vsel %vm229, %v116, 0
    %v677 = vsel %vm229, %v117, 0
    %v680 = vsel %vm229, %v118, 0
    %v683 = vsel %vm229, %v119, 0
    %v686 = vsel %vm229, %v120, 0
    %v689 = vsel %vm229, %v121, 0
    %v692 = vsel %vm229, %v122, 0
    %v695 = vsel %vm229, %v123, 0
    %v698 = vsel %vm229, %v124, 0
    %v701 = vsel %vm229, %v125, 0
    %v704 = vsel %vm229, %v126, 0
    %v707 = vsel %vm229, %v127, 0
    %v710 = vsel %vm229, %v128, 0
    %v713 = vsel %vm229, %v129, 0
    %v716 = vsel %vm326, %v130, 0
    %718 = vmatprep.subr.bf16.mxu0 0
    %719 = vmatpush1.bf16.msra.mxu0 0
    %720 = vmatprep.subr.bf16.mxu0 0
    %721 = vmatpush1.bf16.msra.mxu0 0
    %722 = vmatprep.subr.bf16.mxu0 0
    %723 = vmatpush1.bf16.msra.mxu0 0
    %724 = vmatprep.subr.bf16.mxu0 0
    %725 = vmatpush1.bf16.msra.mxu0 0
    %726 = vmatprep.subr.bf16.mxu0 0
    %727 = vmatpush1.bf16.msra.mxu0 0
    %728 = vmatprep.subr.bf16.mxu0 0
    %729 = vmatpush1.bf16.msra.mxu0 0
    %730 = vmatprep.subr.bf16.mxu0 0
    %731 = vmatpush1.bf16.msra.mxu0 0
    %732 = vmatprep.subr.bf16.mxu0 0
    %733 = vmatpush1.bf16.msra.mxu0 %v716
    %734 = vmatprep.subr.bf16.mxu0 0
    %735 = vmatpush2.bf16.msra.mxu0 0
    %736 = vmatprep.subr.bf16.mxu0 0
    %737 = vmatpush2.bf16.msra.mxu0 0
    %738 = vmatprep.subr.bf16.mxu0 0
    %739 = vmatpush2.bf16.msra.mxu0 0
    %740 = vmatprep.subr.bf16.mxu0 0
    %741 = vmatpush2.bf16.msra.mxu0 0
    %742 = vmatprep.subr.bf16.mxu0 0
    %743 = vmatpush2.bf16.msra.mxu0 0
    %744 = vmatprep.subr.bf16.mxu0 0
    %745 = vmatpush2.bf16.msra.mxu0 0
    %746 = vmatprep.subr.bf16.mxu0 0
    %747 = vmatpush2.bf16.msra.mxu0 0
    %748 = vmatprep.subr.bf16.mxu0 0
    %749 = vmatpush2.bf16.msra.mxu0 0
    %750 = vmatprep.mubr.bf16.mxu0 0
    %751 = vmatmul.mubr.bf16.gmra.mxu0 %v620
    %v752 = vpop.f32.mrf.mxu0
    %v753 = vadd.f32 %v365, %v752
    %v754 = vpop.f32.mrf.mxu0
    %v755 = vpop.f32.mrf.mxu0
    %v756 = vadd.f32 %v368, %v755
    %v757 = vpop.f32.mrf.mxu0
    %758 = vmatprep.mubr.bf16.mxu0 0
    %759 = vmatmul.mubr.bf16.gmra.mxu0 %v623
    %v760 = vpop.f32.mrf.mxu0
    %v761 = vadd.f32 %v373, %v760
    %v762 = vpop.f32.mrf.mxu0
    %v763 = vpop.f32.mrf.mxu0
    %v764 = vadd.f32 %v376, %v763
    %v765 = vpop.f32.mrf.mxu0
    %766 = vmatprep.mubr.bf16.mxu0 0
    %767 = vmatmul.mubr.bf16.gmra.mxu0 %v626
    %v768 = vpop.f32.mrf.mxu0
    %v769 = vadd.f32 %v381, %v768
    %v770 = vpop.f32.mrf.mxu0
    %v771 = vpop.f32.mrf.mxu0
    %v772 = vadd.f32 %v384, %v771
    %v773 = vpop.f32.mrf.mxu0
    %774 = vmatprep.mubr.bf16.mxu0 0
    %775 = vmatmul.mubr.bf16.gmra.mxu0 %v629
    %v776 = vpop.f32.mrf.mxu0
    %v777 = vadd.f32 %v389, %v776
    %v778 = vpop.f32.mrf.mxu0
    %v779 = vpop.f32.mrf.mxu0
    %v780 = vadd.f32 %v392, %v779
    %v781 = vpop.f32.mrf.mxu0
    %782 = vmatprep.mubr.bf16.mxu0 0
    %783 = vmatmul.mubr.bf16.gmra.mxu0 %v632
    %v784 = vpop.f32.mrf.mxu0
    %v785 = vadd.f32 %v397, %v784
    %v786 = vpop.f32.mrf.mxu0
    %v787 = vpop.f32.mrf.mxu0
    %v788 = vadd.f32 %v400, %v787
    %v789 = vpop.f32.mrf.mxu0
    %790 = vmatprep.mubr.bf16.mxu0 0
    %791 = vmatmul.mubr.bf16.gmra.mxu0 %v635
    %v792 = vpop.f32.mrf.mxu0
    %v793 = vadd.f32 %v405, %v792
    %v794 = vpop.f32.mrf.mxu0
    %v795 = vpop.f32.mrf.mxu0
    %v796 = vadd.f32 %v408, %v795
    %v797 = vpop.f32.mrf.mxu0
    %798 = vmatprep.mubr.bf16.mxu0 0
    %799 = vmatmul.mubr.bf16.gmra.mxu0 %v638
    %v800 = vpop.f32.mrf.mxu0
    %v801 = vadd.f32 %v413, %v800
    %v802 = vpop.f32.mrf.mxu0
    %v803 = vpop.f32.mrf.mxu0
    %v804 = vadd.f32 %v416, %v803
    %v805 = vpop.f32.mrf.mxu0
    %806 = vmatprep.mubr.bf16.mxu0 0
    %807 = vmatmul.mubr.bf16.gmra.mxu0 %v641
    %v808 = vpop.f32.mrf.mxu0
    %v809 = vadd.f32 %v421, %v808
    %v810 = vpop.f32.mrf.mxu0
    %v811 = vpop.f32.mrf.mxu0
    %v812 = vadd.f32 %v424, %v811
    %v813 = vpop.f32.mrf.mxu0
    %814 = vmatprep.mubr.bf16.mxu0 0
    %815 = vmatmul.mubr.bf16.gmra.mxu0 %v644
    %v816 = vpop.f32.mrf.mxu0
    %v817 = vadd.f32 %v429, %v816
    %v818 = vpop.f32.mrf.mxu0
    %v819 = vpop.f32.mrf.mxu0
    %v820 = vadd.f32 %v432, %v819
    %v821 = vpop.f32.mrf.mxu0
    %822 = vmatprep.mubr.bf16.mxu0 0
    %823 = vmatmul.mubr.bf16.gmra.mxu0 %v647
    %v824 = vpop.f32.mrf.mxu0
    %v825 = vadd.f32 %v437, %v824
    %v826 = vpop.f32.mrf.mxu0
    %v827 = vpop.f32.mrf.mxu0
    %v828 = vadd.f32 %v440, %v827
    %v829 = vpop.f32.mrf.mxu0
    %830 = vmatprep.mubr.bf16.mxu0 0
    %831 = vmatmul.mubr.bf16.gmra.mxu0 %v650
    %v832 = vpop.f32.mrf.mxu0
    %v833 = vadd.f32 %v445, %v832
    %v834 = vpop.f32.mrf.mxu0
    %v835 = vpop.f32.mrf.mxu0
    %v836 = vadd.f32 %v448, %v835
    %v837 = vpop.f32.mrf.mxu0
    %838 = vmatprep.mubr.bf16.mxu0 0
    %839 = vmatmul.mubr.bf16.gmra.mxu0 %v653
    %v840 = vpop.f32.mrf.mxu0
    %v841 = vadd.f32 %v453, %v840
    %v842 = vpop.f32.mrf.mxu0
    %v843 = vpop.f32.mrf.mxu0
    %v844 = vadd.f32 %v456, %v843
    %v845 = vpop.f32.mrf.mxu0
    %846 = vmatprep.mubr.bf16.mxu0 0
    %847 = vmatmul.mubr.bf16.gmra.mxu0 %v656
    %v848 = vpop.f32.mrf.mxu0
    %v849 = vadd.f32 %v461, %v848
    %v850 = vpop.f32.mrf.mxu0
    %v851 = vpop.f32.mrf.mxu0
    %v852 = vadd.f32 %v464, %v851
    %v853 = vpop.f32.mrf.mxu0
    %854 = vmatprep.mubr.bf16.mxu0 0
    %855 = vmatmul.mubr.bf16.gmra.mxu0 %v659
    %v856 = vpop.f32.mrf.mxu0
    %v857 = vadd.f32 %v469, %v856
    %v858 = vpop.f32.mrf.mxu0
    %v859 = vpop.f32.mrf.mxu0
    %v860 = vadd.f32 %v472, %v859
    %v861 = vpop.f32.mrf.mxu0
    %862 = vmatprep.mubr.bf16.mxu0 0
    %863 = vmatmul.mubr.bf16.gmra.mxu0 %v662
    %v864 = vpop.f32.mrf.mxu0
    %v865 = vadd.f32 %v477, %v864
    %v866 = vpop.f32.mrf.mxu0
    %v867 = vpop.f32.mrf.mxu0
    %v868 = vadd.f32 %v480, %v867
    %v869 = vpop.f32.mrf.mxu0
    %870 = vmatprep.mubr.bf16.mxu0 0
    %871 = vmatmul.mubr.bf16.gmra.mxu0 %v665
    %v872 = vpop.f32.mrf.mxu0
    %v873 = vadd.f32 %v485, %v872
    %v874 = vpop.f32.mrf.mxu0
    %v875 = vpop.f32.mrf.mxu0
    %v876 = vadd.f32 %v488, %v875
    %v877 = vpop.f32.mrf.mxu0
    %878 = vmatprep.mubr.bf16.mxu0 0
    %879 = vmatmul.mubr.bf16.gmra.mxu0 %v668
    %v880 = vpop.f32.mrf.mxu0
    %v881 = vadd.f32 %v493, %v880
    %v882 = vpop.f32.mrf.mxu0
    %v883 = vpop.f32.mrf.mxu0
    %v884 = vadd.f32 %v496, %v883
    %v885 = vpop.f32.mrf.mxu0
    %886 = vmatprep.mubr.bf16.mxu0 0
    %887 = vmatmul.mubr.bf16.gmra.mxu0 %v671
    %v888 = vpop.f32.mrf.mxu0
    %v889 = vadd.f32 %v501, %v888
    %v890 = vpop.f32.mrf.mxu0
    %v891 = vpop.f32.mrf.mxu0
    %v892 = vadd.f32 %v504, %v891
    %v893 = vpop.f32.mrf.mxu0
    %894 = vmatprep.mubr.bf16.mxu0 0
    %895 = vmatmul.mubr.bf16.gmra.mxu0 %v674
    %v896 = vpop.f32.mrf.mxu0
    %v897 = vadd.f32 %v509, %v896
    %v898 = vpop.f32.mrf.mxu0
    %v899 = vpop.f32.mrf.mxu0
    %v900 = vadd.f32 %v512, %v899
    %v901 = vpop.f32.mrf.mxu0
    %902 = vmatprep.mubr.bf16.mxu0 0
    %903 = vmatmul.mubr.bf16.gmra.mxu0 %v677
    %v904 = vpop.f32.mrf.mxu0
    %v905 = vadd.f32 %v517, %v904
    %v906 = vpop.f32.mrf.mxu0
    %v907 = vpop.f32.mrf.mxu0
    %v908 = vadd.f32 %v520, %v907
    %v909 = vpop.f32.mrf.mxu0
    %910 = vmatprep.mubr.bf16.mxu0 0
    %911 = vmatmul.mubr.bf16.gmra.mxu0 %v680
    %v912 = vpop.f32.mrf.mxu0
    %v913 = vadd.f32 %v525, %v912
    %v914 = vpop.f32.mrf.mxu0
    %v915 = vpop.f32.mrf.mxu0
    %v916 = vadd.f32 %v528, %v915
    %v917 = vpop.f32.mrf.mxu0
    %918 = vmatprep.mubr.bf16.mxu0 0
    %919 = vmatmul.mubr.bf16.gmra.mxu0 %v683
    %v920 = vpop.f32.mrf.mxu0
    %v921 = vadd.f32 %v533, %v920
    %v922 = vpop.f32.mrf.mxu0
    %v923 = vpop.f32.mrf.mxu0
    %v924 = vadd.f32 %v536, %v923
    %v925 = vpop.f32.mrf.mxu0
    %926 = vmatprep.mubr.bf16.mxu0 0
    %927 = vmatmul.mubr.bf16.gmra.mxu0 %v686
    %v928 = vpop.f32.mrf.mxu0
    %v929 = vadd.f32 %v541, %v928
    %v930 = vpop.f32.mrf.mxu0
    %v931 = vpop.f32.mrf.mxu0
    %v932 = vadd.f32 %v544, %v931
    %v933 = vpop.f32.mrf.mxu0
    %934 = vmatprep.mubr.bf16.mxu0 0
    %935 = vmatmul.mubr.bf16.gmra.mxu0 %v689
    %v936 = vpop.f32.mrf.mxu0
    %v937 = vadd.f32 %v549, %v936
    %v938 = vpop.f32.mrf.mxu0
    %v939 = vpop.f32.mrf.mxu0
    %v940 = vadd.f32 %v552, %v939
    %v941 = vpop.f32.mrf.mxu0
    %942 = vmatprep.mubr.bf16.mxu0 0
    %943 = vmatmul.mubr.bf16.gmra.mxu0 %v692
    %v944 = vpop.f32.mrf.mxu0
    %v945 = vadd.f32 %v557, %v944
    %v946 = vpop.f32.mrf.mxu0
    %v947 = vpop.f32.mrf.mxu0
    %v948 = vadd.f32 %v560, %v947
    %v949 = vpop.f32.mrf.mxu0
    %950 = vmatprep.mubr.bf16.mxu0 0
    %951 = vmatmul.mubr.bf16.gmra.mxu0 %v695
    %v952 = vpop.f32.mrf.mxu0
    %v953 = vadd.f32 %v565, %v952
    %v954 = vpop.f32.mrf.mxu0
    %v955 = vpop.f32.mrf.mxu0
    %v956 = vadd.f32 %v568, %v955
    %v957 = vpop.f32.mrf.mxu0
    %958 = vmatprep.mubr.bf16.mxu0 0
    %959 = vmatmul.mubr.bf16.gmra.mxu0 %v698
    %v960 = vpop.f32.mrf.mxu0
    %v961 = vadd.f32 %v573, %v960
    %v962 = vpop.f32.mrf.mxu0
    %v963 = vpop.f32.mrf.mxu0
    %v964 = vadd.f32 %v576, %v963
    %v965 = vpop.f32.mrf.mxu0
    %966 = vmatprep.mubr.bf16.mxu0 0
    %967 = vmatmul.mubr.bf16.gmra.mxu0 %v701
    %v968 = vpop.f32.mrf.mxu0
    %v969 = vadd.f32 %v581, %v968
    %v970 = vpop.f32.mrf.mxu0
    %v971 = vpop.f32.mrf.mxu0
    %v972 = vadd.f32 %v584, %v971
    %v973 = vpop.f32.mrf.mxu0
    %974 = vmatprep.mubr.bf16.mxu0 0
    %975 = vmatmul.mubr.bf16.gmra.mxu0 %v704
    %v976 = vpop.f32.mrf.mxu0
    %v977 = vadd.f32 %v589, %v976
    %v978 = vpop.f32.mrf.mxu0
    %v979 = vpop.f32.mrf.mxu0
    %v980 = vadd.f32 %v592, %v979
    %v981 = vpop.f32.mrf.mxu0
    %982 = vmatprep.mubr.bf16.mxu0 0
    %983 = vmatmul.mubr.bf16.gmra.mxu0 %v707
    %v984 = vpop.f32.mrf.mxu0
    %v985 = vadd.f32 %v597, %v984
    %v986 = vpop.f32.mrf.mxu0
    %v987 = vpop.f32.mrf.mxu0
    %v988 = vadd.f32 %v600, %v987
    %v989 = vpop.f32.mrf.mxu0
    %990 = vmatprep.mubr.bf16.mxu0 0
    %991 = vmatmul.mubr.bf16.gmra.mxu0 %v710
    %v992 = vpop.f32.mrf.mxu0
    %v993 = vadd.f32 %v605, %v992
    %v994 = vpop.f32.mrf.mxu0
    %v995 = vpop.f32.mrf.mxu0
    %v996 = vadd.f32 %v608, %v995
    %v997 = vpop.f32.mrf.mxu0
    %998 = vmatprep.mubr.bf16.mxu0 0
    %999 = vmatmul.mubr.bf16.gmra.mxu0 %v713
    %v1000 = vpop.f32.mrf.mxu0
    %v1001 = vadd.f32 %v613, %v1000
    %v1002 = vpop.f32.mrf.mxu0
    %v1003 = vpop.f32.mrf.mxu0
    %v1004 = vadd.f32 %v616, %v1003
    %v1005 = vpop.f32.mrf.mxu0
    %1006 = vdwg.mxu0
    %v1007 = vld [vmem:[%s0 + $0x2] sm:$0xff]
    %v1008 = vld [vmem:[%s0 + $0xa] sm:$0xff]
    %v1009 = vld [vmem:[%s0 + $0x1a] sm:$0xff]
    %v1010 = vld [vmem:[%s0 + $0x22] sm:$0xff]
    %v1011 = vld [vmem:[%s0 + $0x32] sm:$0xff]
    %v1012 = vld [vmem:[%s0 + $0x3a] sm:$0xff]
    %v1013 = vld [vmem:[%s0 + $0x4a] sm:$0xff]
    %v1014 = vld [vmem:[%s0 + $0x52] sm:$0xff]
    %v1015 = vld [vmem:[%s0 + $0x62] sm:$0xff]
    %v1016 = vld [vmem:[%s0 + $0x6a] sm:$0xff]
    %v1017 = vld [vmem:[%s0 + $0x7a] sm:$0xff]
    %v1018 = vld [vmem:[%s0 + $0x82] sm:$0xff]
    %v1019 = vld [vmem:[%s0 + $0x92] sm:$0xff]
    %v1020 = vld [vmem:[%s0 + $0x9a] sm:$0xff]
    %v1021 = vld [vmem:[%s0 + $0xaa] sm:$0xff]
    %v1022 = vld [vmem:[%s0 + $0xb2] sm:$0xff]
    %v1023 = vld [vmem:[%s0 + $0xc2] sm:$0xff]
    %v1024 = vld [vmem:[%s0 + $0xca] sm:$0xff]
    %v1025 = vld [vmem:[%s0 + $0xda] sm:$0xff]
    %v1026 = vld [vmem:[%s0 + $0xe2] sm:$0xff]
    %v1027 = vld [vmem:[%s0 + $0xf2] sm:$0xff]
    %v1028 = vld [vmem:[%s0 + $0xfa] sm:$0xff]
    %v1029 = vld [vmem:[%s0 + $0x10a] sm:$0xff]
    %v1030 = vld [vmem:[%s0 + $0x112] sm:$0xff]
    %v1031 = vld [vmem:[%s0 + $0x122] sm:$0xff]
    %v1032 = vld [vmem:[%s0 + $0x12a] sm:$0xff]
    %v1033 = vld [vmem:[%s0 + $0x13a] sm:$0xff]
    %v1034 = vld [vmem:[%s0 + $0x142] sm:$0xff]
    %v1035 = vld [vmem:[%s0 + $0x152] sm:$0xff]
    %v1036 = vld [vmem:[%s0 + $0x15a] sm:$0xff]
    %v1037 = vld [vmem:[%s0 + $0x16a] sm:$0xff]
    %v1038 = vld [vmem:[%s0 + $0x172] sm:$0xff]
    %v1039 = vld [vmem:[%s0 + $0x1b2] sm:$0xff]
    %v1040 = vld [vmem:[%s0 + $0x1ba] sm:$0xff]
    %v1041 = vld [vmem:[%s0 + $0x1ca] sm:$0xff]
    %v1042 = vld [vmem:[%s0 + $0x1d2] sm:$0xff]
    %v1043 = vld [vmem:[%s0 + $0x1e2] sm:$0xff]
    %v1044 = vld [vmem:[%s0 + $0x1ea] sm:$0xff]
    %v1045 = vld [vmem:[%s0 + $0x1fa] sm:$0xff]
    %v1046 = vld [vmem:[%s0 + $0x202] sm:$0xff]
    %v1047 = vld [vmem:[%s0 + $0x212] sm:$0xff]
    %v1048 = vld [vmem:[%s0 + $0x21a] sm:$0xff]
    %v1049 = vld [vmem:[%s0 + $0x22a] sm:$0xff]
    %v1050 = vld [vmem:[%s0 + $0x232] sm:$0xff]
    %v1051 = vld [vmem:[%s0 + $0x242] sm:$0xff]
    %v1052 = vld [vmem:[%s0 + $0x24a] sm:$0xff]
    %v1053 = vld [vmem:[%s0 + $0x25a] sm:$0xff]
    %v1054 = vld [vmem:[%s0 + $0x262] sm:$0xff]
    %v1055 = vld [vmem:[%s0 + $0x272] sm:$0xff]
    %v1056 = vld [vmem:[%s0 + $0x27a] sm:$0xff]
    %v1057 = vld [vmem:[%s0 + $0x28a] sm:$0xff]
    %v1058 = vld [vmem:[%s0 + $0x292] sm:$0xff]
    %v1059 = vld [vmem:[%s0 + $0x2a2] sm:$0xff]
    %v1060 = vld [vmem:[%s0 + $0x2aa] sm:$0xff]
    %v1061 = vld [vmem:[%s0 + $0x2ba] sm:$0xff]
    %v1062 = vld [vmem:[%s0 + $0x2c2] sm:$0xff]
    %v1063 = vld [vmem:[%s0 + $0x2d2] sm:$0xff]
    %v1064 = vld [vmem:[%s0 + $0x2da] sm:$0xff]
    %v1065 = vld [vmem:[%s0 + $0x2ea] sm:$0xff]
    %v1066 = vld [vmem:[%s0 + $0x2f2] sm:$0xff]
    %v1067 = vld [vmem:[%s0 + $0x302] sm:$0xff]
    %v1068 = vld [vmem:[%s0 + $0x30a] sm:$0xff]
    %v1069 = vld [vmem:[%s0 + $0x31a] sm:$0xff]
    %v1070 = vld [vmem:[%s0 + $0x322] sm:$0xff]
    %v1071 = vpack.c.bf16 %v1008, %v1007
    %v1072 = vpack.c.bf16 %v1010, %v1009
    %v1073 = vpack.c.bf16 %v1012, %v1011
    %v1074 = vpack.c.bf16 %v1014, %v1013
    %v1075 = vpack.c.bf16 %v1016, %v1015
    %v1076 = vpack.c.bf16 %v1018, %v1017
    %v1077 = vpack.c.bf16 %v1020, %v1019
    %v1078 = vpack.c.bf16 %v1022, %v1021
    %v1079 = vpack.c.bf16 %v1024, %v1023
    %v1080 = vpack.c.bf16 %v1026, %v1025
    %v1081 = vpack.c.bf16 %v1028, %v1027
    %v1082 = vpack.c.bf16 %v1030, %v1029
    %v1083 = vpack.c.bf16 %v1032, %v1031
    %v1084 = vpack.c.bf16 %v1034, %v1033
    %v1085 = vpack.c.bf16 %v1036, %v1035
    %v1086 = vpack.c.bf16 %v1038, %v1037
    %v1087 = vpack.c.bf16 %v1040, %v1039
    %v1088 = vpack.c.bf16 %v1042, %v1041
    %v1089 = vpack.c.bf16 %v1044, %v1043
    %v1090 = vpack.c.bf16 %v1046, %v1045
    %v1091 = vpack.c.bf16 %v1048, %v1047
    %v1092 = vpack.c.bf16 %v1050, %v1049
    %v1093 = vpack.c.bf16 %v1052, %v1051
    %v1094 = vpack.c.bf16 %v1054, %v1053
    %v1095 = vpack.c.bf16 %v1056, %v1055
    %v1096 = vpack.c.bf16 %v1058, %v1057
    %v1097 = vpack.c.bf16 %v1060, %v1059
    %v1098 = vpack.c.bf16 %v1062, %v1061
    %v1099 = vpack.c.bf16 %v1064, %v1063
    %v1100 = vpack.c.bf16 %v1066, %v1065
    %v1101 = vpack.c.bf16 %v1068, %v1067
    %v1102 = vpack.c.bf16 %v1070, %v1069
    %s1103 = scalar_lea.vmem %s1, 4
    %v1104 = vld [vmem:[%s1103] sm:$0x3]
    %v1106 = vsel %vm229, %v1071, 0
    %v1109 = vsel %vm229, %v1072, 0
    %v1112 = vsel %vm229, %v1073, 0
    %v1115 = vsel %vm229, %v1074, 0
    %v1118 = vsel %vm229, %v1075, 0
    %v1121 = vsel %vm229, %v1076, 0
    %v1124 = vsel %vm229, %v1077, 0
    %v1127 = vsel %vm229, %v1078, 0
    %v1130 = vsel %vm229, %v1079, 0
    %v1133 = vsel %vm229, %v1080, 0
    %v1136 = vsel %vm229, %v1081, 0
    %v1139 = vsel %vm229, %v1082, 0
    %v1142 = vsel %vm229, %v1083, 0
    %v1145 = vsel %vm229, %v1084, 0
    %v1148 = vsel %vm229, %v1085, 0
    %v1151 = vsel %vm229, %v1086, 0
    %v1154 = vsel %vm229, %v1087, 0
    %v1157 = vsel %vm229, %v1088, 0
    %v1160 = vsel %vm229, %v1089, 0
    %v1163 = vsel %vm229, %v1090, 0
    %v1166 = vsel %vm229, %v1091, 0
    %v1169 = vsel %vm229, %v1092, 0
    %v1172 = vsel %vm229, %v1093, 0
    %v1175 = vsel %vm229, %v1094, 0
    %v1178 = vsel %vm229, %v1095, 0
    %v1181 = vsel %vm229, %v1096, 0
    %v1184 = vsel %vm229, %v1097, 0
    %v1187 = vsel %vm229, %v1098, 0
    %v1190 = vsel %vm229, %v1099, 0
    %v1193 = vsel %vm229, %v1100, 0
    %v1196 = vsel %vm229, %v1101, 0
    %v1199 = vsel %vm229, %v1102, 0
    %v1202 = vsel %vm326, %v1104, 0
    %1204 = vmatprep.subr.bf16.mxu0 0
    %1205 = vmatpush1.bf16.msra.mxu0 0
    %1206 = vmatprep.subr.bf16.mxu0 0
    %1207 = vmatpush1.bf16.msra.mxu0 0
    %1208 = vmatprep.subr.bf16.mxu0 0
    %1209 = vmatpush1.bf16.msra.mxu0 0
    %1210 = vmatprep.subr.bf16.mxu0 0
    %1211 = vmatpush1.bf16.msra.mxu0 0
    %1212 = vmatprep.subr.bf16.mxu0 0
    %1213 = vmatpush1.bf16.msra.mxu0 0
    %1214 = vmatprep.subr.bf16.mxu0 0
    %1215 = vmatpush1.bf16.msra.mxu0 0
    %1216 = vmatprep.subr.bf16.mxu0 0
    %1217 = vmatpush1.bf16.msra.mxu0 0
    %1218 = vmatprep.subr.bf16.mxu0 0
    %1219 = vmatpush1.bf16.msra.mxu0 %v1202
    %1220 = vmatprep.subr.bf16.mxu0 0
    %1221 = vmatpush2.bf16.msra.mxu0 0
    %1222 = vmatprep.subr.bf16.mxu0 0
    %1223 = vmatpush2.bf16.msra.mxu0 0
    %1224 = vmatprep.subr.bf16.mxu0 0
    %1225 = vmatpush2.bf16.msra.mxu0 0
    %1226 = vmatprep.subr.bf16.mxu0 0
    %1227 = vmatpush2.bf16.msra.mxu0 0
    %1228 = vmatprep.subr.bf16.mxu0 0
    %1229 = vmatpush2.bf16.msra.mxu0 0
    %1230 = vmatprep.subr.bf16.mxu0 0
    %1231 = vmatpush2.bf16.msra.mxu0 0
    %1232 = vmatprep.subr.bf16.mxu0 0
    %1233 = vmatpush2.bf16.msra.mxu0 0
    %1234 = vmatprep.subr.bf16.mxu0 0
    %1235 = vmatpush2.bf16.msra.mxu0 0
    %1236 = vmatprep.mubr.bf16.mxu0 0
    %1237 = vmatmul.mubr.bf16.gmra.mxu0 %v1106
    %v1238 = vpop.f32.mrf.mxu0
    %v1239 = vadd.f32 0.0, %v1238
    %v1240 = vpop.f32.mrf.mxu0
    %v1241 = vpop.f32.mrf.mxu0
    %v1242 = vadd.f32 0.0, %v1241
    %v1243 = vpop.f32.mrf.mxu0
    %1244 = vmatprep.mubr.bf16.mxu0 0
    %1245 = vmatmul.mubr.bf16.gmra.mxu0 %v1109
    %v1246 = vpop.f32.mrf.mxu0
    %v1247 = vadd.f32 0.0, %v1246
    %v1248 = vpop.f32.mrf.mxu0
    %v1249 = vpop.f32.mrf.mxu0
    %v1250 = vadd.f32 0.0, %v1249
    %v1251 = vpop.f32.mrf.mxu0
    %1252 = vmatprep.mubr.bf16.mxu0 0
    %1253 = vmatmul.mubr.bf16.gmra.mxu0 %v1112
    %v1254 = vpop.f32.mrf.mxu0
    %v1255 = vadd.f32 0.0, %v1254
    %v1256 = vpop.f32.mrf.mxu0
    %v1257 = vpop.f32.mrf.mxu0
    %v1258 = vadd.f32 0.0, %v1257
    %v1259 = vpop.f32.mrf.mxu0
    %1260 = vmatprep.mubr.bf16.mxu0 0
    %1261 = vmatmul.mubr.bf16.gmra.mxu0 %v1115
    %v1262 = vpop.f32.mrf.mxu0
    %v1263 = vadd.f32 0.0, %v1262
    %v1264 = vpop.f32.mrf.mxu0
    %v1265 = vpop.f32.mrf.mxu0
    %v1266 = vadd.f32 0.0, %v1265
    %v1267 = vpop.f32.mrf.mxu0
    %1268 = vmatprep.mubr.bf16.mxu0 0
    %1269 = vmatmul.mubr.bf16.gmra.mxu0 %v1118
    %v1270 = vpop.f32.mrf.mxu0
    %v1271 = vadd.f32 0.0, %v1270
    %v1272 = vpop.f32.mrf.mxu0
    %v1273 = vpop.f32.mrf.mxu0
    %v1274 = vadd.f32 0.0, %v1273
    %v1275 = vpop.f32.mrf.mxu0
    %1276 = vmatprep.mubr.bf16.mxu0 0
    %1277 = vmatmul.mubr.bf16.gmra.mxu0 %v1121
    %v1278 = vpop.f32.mrf.mxu0
    %v1279 = vadd.f32 0.0, %v1278
    %v1280 = vpop.f32.mrf.mxu0
    %v1281 = vpop.f32.mrf.mxu0
    %v1282 = vadd.f32 0.0, %v1281
    %v1283 = vpop.f32.mrf.mxu0
    %1284 = vmatprep.mubr.bf16.mxu0 0
    %1285 = vmatmul.mubr.bf16.gmra.mxu0 %v1124
    %v1286 = vpop.f32.mrf.mxu0
    %v1287 = vadd.f32 0.0, %v1286
    %v1288 = vpop.f32.mrf.mxu0
    %v1289 = vpop.f32.mrf.mxu0
    %v1290 = vadd.f32 0.0, %v1289
    %v1291 = vpop.f32.mrf.mxu0
    %1292 = vmatprep.mubr.bf16.mxu0 0
    %1293 = vmatmul.mubr.bf16.gmra.mxu0 %v1127
    %v1294 = vpop.f32.mrf.mxu0
    %v1295 = vadd.f32 0.0, %v1294
    %v1296 = vpop.f32.mrf.mxu0
    %v1297 = vpop.f32.mrf.mxu0
    %v1298 = vadd.f32 0.0, %v1297
    %v1299 = vpop.f32.mrf.mxu0
    %1300 = vmatprep.mubr.bf16.mxu0 0
    %1301 = vmatmul.mubr.bf16.gmra.mxu0 %v1130
    %v1302 = vpop.f32.mrf.mxu0
    %v1303 = vadd.f32 0.0, %v1302
    %v1304 = vpop.f32.mrf.mxu0
    %v1305 = vpop.f32.mrf.mxu0
    %v1306 = vadd.f32 0.0, %v1305
    %v1307 = vpop.f32.mrf.mxu0
    %1308 = vmatprep.mubr.bf16.mxu0 0
    %1309 = vmatmul.mubr.bf16.gmra.mxu0 %v1133
    %v1310 = vpop.f32.mrf.mxu0
    %v1311 = vadd.f32 0.0, %v1310
    %v1312 = vpop.f32.mrf.mxu0
    %v1313 = vpop.f32.mrf.mxu0
    %v1314 = vadd.f32 0.0, %v1313
    %v1315 = vpop.f32.mrf.mxu0
    %1316 = vmatprep.mubr.bf16.mxu0 0
    %1317 = vmatmul.mubr.bf16.gmra.mxu0 %v1136
    %v1318 = vpop.f32.mrf.mxu0
    %v1319 = vadd.f32 0.0, %v1318
    %v1320 = vpop.f32.mrf.mxu0
    %v1321 = vpop.f32.mrf.mxu0
    %v1322 = vadd.f32 0.0, %v1321
    %v1323 = vpop.f32.mrf.mxu0
    %1324 = vmatprep.mubr.bf16.mxu0 0
    %1325 = vmatmul.mubr.bf16.gmra.mxu0 %v1139
    %v1326 = vpop.f32.mrf.mxu0
    %v1327 = vadd.f32 0.0, %v1326
    %v1328 = vpop.f32.mrf.mxu0
    %v1329 = vpop.f32.mrf.mxu0
    %v1330 = vadd.f32 0.0, %v1329
    %v1331 = vpop.f32.mrf.mxu0
    %1332 = vmatprep.mubr.bf16.mxu0 0
    %1333 = vmatmul.mubr.bf16.gmra.mxu0 %v1142
    %v1334 = vpop.f32.mrf.mxu0
    %v1335 = vadd.f32 0.0, %v1334
    %v1336 = vpop.f32.mrf.mxu0
    %v1337 = vpop.f32.mrf.mxu0
    %v1338 = vadd.f32 0.0, %v1337
    %v1339 = vpop.f32.mrf.mxu0
    %1340 = vmatprep.mubr.bf16.mxu0 0
    %1341 = vmatmul.mubr.bf16.gmra.mxu0 %v1145
    %v1342 = vpop.f32.mrf.mxu0
    %v1343 = vadd.f32 0.0, %v1342
    %v1344 = vpop.f32.mrf.mxu0
    %v1345 = vpop.f32.mrf.mxu0
    %v1346 = vadd.f32 0.0, %v1345
    %v1347 = vpop.f32.mrf.mxu0
    %1348 = vmatprep.mubr.bf16.mxu0 0
    %1349 = vmatmul.mubr.bf16.gmra.mxu0 %v1148
    %v1350 = vpop.f32.mrf.mxu0
    %v1351 = vadd.f32 0.0, %v1350
    %v1352 = vpop.f32.mrf.mxu0
    %v1353 = vpop.f32.mrf.mxu0
    %v1354 = vadd.f32 0.0, %v1353
    %v1355 = vpop.f32.mrf.mxu0
    %1356 = vmatprep.mubr.bf16.mxu0 0
    %1357 = vmatmul.mubr.bf16.gmra.mxu0 %v1151
    %v1358 = vpop.f32.mrf.mxu0
    %v1359 = vadd.f32 0.0, %v1358
    %v1360 = vpop.f32.mrf.mxu0
    %v1361 = vpop.f32.mrf.mxu0
    %v1362 = vadd.f32 0.0, %v1361
    %v1363 = vpop.f32.mrf.mxu0
    %1364 = vmatprep.mubr.bf16.mxu0 0
    %1365 = vmatmul.mubr.bf16.gmra.mxu0 %v1154
    %v1366 = vpop.f32.mrf.mxu0
    %v1367 = vadd.f32 0.0, %v1366
    %v1368 = vpop.f32.mrf.mxu0
    %v1369 = vpop.f32.mrf.mxu0
    %v1370 = vadd.f32 0.0, %v1369
    %v1371 = vpop.f32.mrf.mxu0
    %1372 = vmatprep.mubr.bf16.mxu0 0
    %1373 = vmatmul.mubr.bf16.gmra.mxu0 %v1157
    %v1374 = vpop.f32.mrf.mxu0
    %v1375 = vadd.f32 0.0, %v1374
    %v1376 = vpop.f32.mrf.mxu0
    %v1377 = vpop.f32.mrf.mxu0
    %v1378 = vadd.f32 0.0, %v1377
    %v1379 = vpop.f32.mrf.mxu0
    %1380 = vmatprep.mubr.bf16.mxu0 0
    %1381 = vmatmul.mubr.bf16.gmra.mxu0 %v1160
    %v1382 = vpop.f32.mrf.mxu0
    %v1383 = vadd.f32 0.0, %v1382
    %v1384 = vpop.f32.mrf.mxu0
    %v1385 = vpop.f32.mrf.mxu0
    %v1386 = vadd.f32 0.0, %v1385
    %v1387 = vpop.f32.mrf.mxu0
    %1388 = vmatprep.mubr.bf16.mxu0 0
    %1389 = vmatmul.mubr.bf16.gmra.mxu0 %v1163
    %v1390 = vpop.f32.mrf.mxu0
    %v1391 = vadd.f32 0.0, %v1390
    %v1392 = vpop.f32.mrf.mxu0
    %v1393 = vpop.f32.mrf.mxu0
    %v1394 = vadd.f32 0.0, %v1393
    %v1395 = vpop.f32.mrf.mxu0
    %1396 = vmatprep.mubr.bf16.mxu0 0
    %1397 = vmatmul.mubr.bf16.gmra.mxu0 %v1166
    %v1398 = vpop.f32.mrf.mxu0
    %v1399 = vadd.f32 0.0, %v1398
    %v1400 = vpop.f32.mrf.mxu0
    %v1401 = vpop.f32.mrf.mxu0
    %v1402 = vadd.f32 0.0, %v1401
    %v1403 = vpop.f32.mrf.mxu0
    %1404 = vmatprep.mubr.bf16.mxu0 0
    %1405 = vmatmul.mubr.bf16.gmra.mxu0 %v1169
    %v1406 = vpop.f32.mrf.mxu0
    %v1407 = vadd.f32 0.0, %v1406
    %v1408 = vpop.f32.mrf.mxu0
    %v1409 = vpop.f32.mrf.mxu0
    %v1410 = vadd.f32 0.0, %v1409
    %v1411 = vpop.f32.mrf.mxu0
    %1412 = vmatprep.mubr.bf16.mxu0 0
    %1413 = vmatmul.mubr.bf16.gmra.mxu0 %v1172
    %v1414 = vpop.f32.mrf.mxu0
    %v1415 = vadd.f32 0.0, %v1414
    %v1416 = vpop.f32.mrf.mxu0
    %v1417 = vpop.f32.mrf.mxu0
    %v1418 = vadd.f32 0.0, %v1417
    %v1419 = vpop.f32.mrf.mxu0
    %1420 = vmatprep.mubr.bf16.mxu0 0
    %1421 = vmatmul.mubr.bf16.gmra.mxu0 %v1175
    %v1422 = vpop.f32.mrf.mxu0
    %v1423 = vadd.f32 0.0, %v1422
    %v1424 = vpop.f32.mrf.mxu0
    %v1425 = vpop.f32.mrf.mxu0
    %v1426 = vadd.f32 0.0, %v1425
    %v1427 = vpop.f32.mrf.mxu0
    %1428 = vmatprep.mubr.bf16.mxu0 0
    %1429 = vmatmul.mubr.bf16.gmra.mxu0 %v1178
    %v1430 = vpop.f32.mrf.mxu0
    %v1431 = vadd.f32 0.0, %v1430
    %v1432 = vpop.f32.mrf.mxu0
    %v1433 = vpop.f32.mrf.mxu0
    %v1434 = vadd.f32 0.0, %v1433
    %v1435 = vpop.f32.mrf.mxu0
    %1436 = vmatprep.mubr.bf16.mxu0 0
    %1437 = vmatmul.mubr.bf16.gmra.mxu0 %v1181
    %v1438 = vpop.f32.mrf.mxu0
    %v1439 = vadd.f32 0.0, %v1438
    %v1440 = vpop.f32.mrf.mxu0
    %v1441 = vpop.f32.mrf.mxu0
    %v1442 = vadd.f32 0.0, %v1441
    %v1443 = vpop.f32.mrf.mxu0
    %1444 = vmatprep.mubr.bf16.mxu0 0
    %1445 = vmatmul.mubr.bf16.gmra.mxu0 %v1184
    %v1446 = vpop.f32.mrf.mxu0
    %v1447 = vadd.f32 0.0, %v1446
    %v1448 = vpop.f32.mrf.mxu0
    %v1449 = vpop.f32.mrf.mxu0
    %v1450 = vadd.f32 0.0, %v1449
    %v1451 = vpop.f32.mrf.mxu0
    %1452 = vmatprep.mubr.bf16.mxu0 0
    %1453 = vmatmul.mubr.bf16.gmra.mxu0 %v1187
    %v1454 = vpop.f32.mrf.mxu0
    %v1455 = vadd.f32 0.0, %v1454
    %v1456 = vpop.f32.mrf.mxu0
    %v1457 = vpop.f32.mrf.mxu0
    %v1458 = vadd.f32 0.0, %v1457
    %v1459 = vpop.f32.mrf.mxu0
    %1460 = vmatprep.mubr.bf16.mxu0 0
    %1461 = vmatmul.mubr.bf16.gmra.mxu0 %v1190
    %v1462 = vpop.f32.mrf.mxu0
    %v1463 = vadd.f32 0.0, %v1462
    %v1464 = vpop.f32.mrf.mxu0
    %v1465 = vpop.f32.mrf.mxu0
    %v1466 = vadd.f32 0.0, %v1465
    %v1467 = vpop.f32.mrf.mxu0
    %1468 = vmatprep.mubr.bf16.mxu0 0
    %1469 = vmatmul.mubr.bf16.gmra.mxu0 %v1193
    %v1470 = vpop.f32.mrf.mxu0
    %v1471 = vadd.f32 0.0, %v1470
    %v1472 = vpop.f32.mrf.mxu0
    %v1473 = vpop.f32.mrf.mxu0
    %v1474 = vadd.f32 0.0, %v1473
    %v1475 = vpop.f32.mrf.mxu0
    %1476 = vmatprep.mubr.bf16.mxu0 0
    %1477 = vmatmul.mubr.bf16.gmra.mxu0 %v1196
    %v1478 = vpop.f32.mrf.mxu0
    %v1479 = vadd.f32 0.0, %v1478
    %v1480 = vpop.f32.mrf.mxu0
    %v1481 = vpop.f32.mrf.mxu0
    %v1482 = vadd.f32 0.0, %v1481
    %v1483 = vpop.f32.mrf.mxu0
    %1484 = vmatprep.mubr.bf16.mxu0 0
    %1485 = vmatmul.mubr.bf16.gmra.mxu0 %v1199
    %v1486 = vpop.f32.mrf.mxu0
    %v1487 = vadd.f32 0.0, %v1486
    %v1488 = vpop.f32.mrf.mxu0
    %v1489 = vpop.f32.mrf.mxu0
    %v1490 = vadd.f32 0.0, %v1489
    %v1491 = vpop.f32.mrf.mxu0
    %1492 = vdwg.mxu0
    %v1493 = vadd.f32 %v753, %v1239
    %v1494 = vadd.f32 %v756, %v1242
    %v1495 = vadd.f32 %v761, %v1247
    %v1496 = vadd.f32 %v764, %v1250
    %v1497 = vadd.f32 %v769, %v1255
    %v1498 = vadd.f32 %v772, %v1258
    %v1499 = vadd.f32 %v777, %v1263
    %v1500 = vadd.f32 %v780, %v1266
    %v1501 = vadd.f32 %v785, %v1271
    %v1502 = vadd.f32 %v788, %v1274
    %v1503 = vadd.f32 %v793, %v1279
    %v1504 = vadd.f32 %v796, %v1282
    %v1505 = vadd.f32 %v801, %v1287
    %v1506 = vadd.f32 %v804, %v1290
    %v1507 = vadd.f32 %v809, %v1295
    %v1508 = vadd.f32 %v812, %v1298
    %v1509 = vadd.f32 %v817, %v1303
    %v1510 = vadd.f32 %v820, %v1306
    %v1511 = vadd.f32 %v825, %v1311
    %v1512 = vadd.f32 %v828, %v1314
    %v1513 = vadd.f32 %v833, %v1319
    %v1514 = vadd.f32 %v836, %v1322
    %v1515 = vadd.f32 %v841, %v1327
    %v1516 = vadd.f32 %v844, %v1330
    %v1517 = vadd.f32 %v849, %v1335
    %v1518 = vadd.f32 %v852, %v1338
    %v1519 = vadd.f32 %v857, %v1343
    %v1520 = vadd.f32 %v860, %v1346
    %v1521 = vadd.f32 %v865, %v1351
    %v1522 = vadd.f32 %v868, %v1354
    %v1523 = vadd.f32 %v873, %v1359
    %v1524 = vadd.f32 %v876, %v1362
    %v1525 = vadd.f32 %v881, %v1367
    %v1526 = vadd.f32 %v884, %v1370
    %v1527 = vadd.f32 %v889, %v1375
    %v1528 = vadd.f32 %v892, %v1378
    %v1529 = vadd.f32 %v897, %v1383
    %v1530 = vadd.f32 %v900, %v1386
    %v1531 = vadd.f32 %v905, %v1391
    %v1532 = vadd.f32 %v908, %v1394
    %v1533 = vadd.f32 %v913, %v1399
    %v1534 = vadd.f32 %v916, %v1402
    %v1535 = vadd.f32 %v921, %v1407
    %v1536 = vadd.f32 %v924, %v1410
    %v1537 = vadd.f32 %v929, %v1415
    %v1538 = vadd.f32 %v932, %v1418
    %v1539 = vadd.f32 %v937, %v1423
    %v1540 = vadd.f32 %v940, %v1426
    %v1541 = vadd.f32 %v945, %v1431
    %v1542 = vadd.f32 %v948, %v1434
    %v1543 = vadd.f32 %v953, %v1439
    %v1544 = vadd.f32 %v956, %v1442
    %v1545 = vadd.f32 %v961, %v1447
    %v1546 = vadd.f32 %v964, %v1450
    %v1547 = vadd.f32 %v969, %v1455
    %v1548 = vadd.f32 %v972, %v1458
    %v1549 = vadd.f32 %v977, %v1463
    %v1550 = vadd.f32 %v980, %v1466
    %v1551 = vadd.f32 %v985, %v1471
    %v1552 = vadd.f32 %v988, %v1474
    %v1553 = vadd.f32 %v993, %v1479
    %v1554 = vadd.f32 %v996, %v1482
    %v1555 = vadd.f32 %v1001, %v1487
    %v1556 = vadd.f32 %v1004, %v1490
    %s1557 = scalar_lea.vmem %s0, 24
    %v1558 = vld [vmem:[%s1557] sm:$0xff]
    %v1559 = vld [vmem:[%s1557 + $0x8] sm:$0xff]
    %v1560 = vld [vmem:[%s1557 + $0x18] sm:$0xff]
    %v1561 = vld [vmem:[%s1557 + $0x20] sm:$0xff]
    %v1562 = vld [vmem:[%s1557 + $0x30] sm:$0xff]
    %v1563 = vld [vmem:[%s1557 + $0x38] sm:$0xff]
    %v1564 = vld [vmem:[%s1557 + $0x48] sm:$0xff]
    %v1565 = vld [vmem:[%s1557 + $0x50] sm:$0xff]
    %v1566 = vld [vmem:[%s1557 + $0x60] sm:$0xff]
    %v1567 = vld [vmem:[%s1557 + $0x68] sm:$0xff]
    %v1568 = vld [vmem:[%s1557 + $0x78] sm:$0xff]
    %v1569 = vld [vmem:[%s1557 + $0x80] sm:$0xff]
    %v1570 = vld [vmem:[%s1557 + $0x90] sm:$0xff]
    %v1571 = vld [vmem:[%s1557 + $0x98] sm:$0xff]
    %v1572 = vld [vmem:[%s1557 + $0xa8] sm:$0xff]
    %v1573 = vld [vmem:[%s1557 + $0xb0] sm:$0xff]
    %v1574 = vld [vmem:[%s1557 + $0xc0] sm:$0xff]
    %v1575 = vld [vmem:[%s1557 + $0xc8] sm:$0xff]
    %v1576 = vld [vmem:[%s1557 + $0xd8] sm:$0xff]
    %v1577 = vld [vmem:[%s1557 + $0xe0] sm:$0xff]
    %v1578 = vld [vmem:[%s1557 + $0xf0] sm:$0xff]
    %v1579 = vld [vmem:[%s1557 + $0xf8] sm:$0xff]
    %v1580 = vld [vmem:[%s1557 + $0x108] sm:$0xff]
    %v1581 = vld [vmem:[%s1557 + $0x110] sm:$0xff]
    %v1582 = vld [vmem:[%s1557 + $0x120] sm:$0xff]
    %v1583 = vld [vmem:[%s1557 + $0x128] sm:$0xff]
    %v1584 = vld [vmem:[%s1557 + $0x138] sm:$0xff]
    %v1585 = vld [vmem:[%s1557 + $0x140] sm:$0xff]
    %v1586 = vld [vmem:[%s1557 + $0x150] sm:$0xff]
    %v1587 = vld [vmem:[%s1557 + $0x158] sm:$0xff]
    %v1588 = vld [vmem:[%s1557 + $0x168] sm:$0xff]
    %v1589 = vld [vmem:[%s1557 + $0x170] sm:$0xff]
    %v1590 = vld [vmem:[%s1557 + $0x1b0] sm:$0xff]
    %v1591 = vld [vmem:[%s1557 + $0x1b8] sm:$0xff]
    %v1592 = vld [vmem:[%s1557 + $0x1c8] sm:$0xff]
    %v1593 = vld [vmem:[%s1557 + $0x1d0] sm:$0xff]
    %v1594 = vld [vmem:[%s1557 + $0x1e0] sm:$0xff]
    %v1595 = vld [vmem:[%s1557 + $0x1e8] sm:$0xff]
    %v1596 = vld [vmem:[%s1557 + $0x1f8] sm:$0xff]
    %v1597 = vld [vmem:[%s1557 + $0x200] sm:$0xff]
    %v1598 = vld [vmem:[%s1557 + $0x210] sm:$0xff]
    %v1599 = vld [vmem:[%s1557 + $0x218] sm:$0xff]
    %v1600 = vld [vmem:[%s1557 + $0x228] sm:$0xff]
    %v1601 = vld [vmem:[%s1557 + $0x230] sm:$0xff]
    %v1602 = vld [vmem:[%s1557 + $0x240] sm:$0xff]
    %v1603 = vld [vmem:[%s1557 + $0x248] sm:$0xff]
    %v1604 = vld [vmem:[%s1557 + $0x258] sm:$0xff]
    %v1605 = vld [vmem:[%s1557 + $0x260] sm:$0xff]
    %v1606 = vld [vmem:[%s1557 + $0x270] sm:$0xff]
    %v1607 = vld [vmem:[%s1557 + $0x278] sm:$0xff]
    %v1608 = vld [vmem:[%s1557 + $0x288] sm:$0xff]
    %v1609 = vld [vmem:[%s1557 + $0x290] sm:$0xff]
    %v1610 = vld [vmem:[%s1557 + $0x2a0] sm:$0xff]
    %v1611 = vld [vmem:[%s1557 + $0x2a8] sm:$0xff]
    %v1612 = vld [vmem:[%s1557 + $0x2b8] sm:$0xff]
    %v1613 = vld [vmem:[%s1557 + $0x2c0] sm:$0xff]
    %v1614 = vld [vmem:[%s1557 + $0x2d0] sm:$0xff]
    %v1615 = vld [vmem:[%s1557 + $0x2d8] sm:$0xff]
    %v1616 = vld [vmem:[%s1557 + $0x2e8] sm:$0xff]
    %v1617 = vld [vmem:[%s1557 + $0x2f0] sm:$0xff]
    %v1618 = vld [vmem:[%s1557 + $0x300] sm:$0xff]
    %v1619 = vld [vmem:[%s1557 + $0x308] sm:$0xff]
    %v1620 = vld [vmem:[%s1557 + $0x318] sm:$0xff]
    %v1621 = vld [vmem:[%s1557 + $0x320] sm:$0xff]
    %v1622 = vpack.c.bf16 %v1559, %v1558
    %v1623 = vpack.c.bf16 %v1561, %v1560
    %v1624 = vpack.c.bf16 %v1563, %v1562
    %v1625 = vpack.c.bf16 %v1565, %v1564
    %v1626 = vpack.c.bf16 %v1567, %v1566
    %v1627 = vpack.c.bf16 %v1569, %v1568
    %v1628 = vpack.c.bf16 %v1571, %v1570
    %v1629 = vpack.c.bf16 %v1573, %v1572
    %v1630 = vpack.c.bf16 %v1575, %v1574
    %v1631 = vpack.c.bf16 %v1577, %v1576
    %v1632 = vpack.c.bf16 %v1579, %v1578
    %v1633 = vpack.c.bf16 %v1581, %v1580
    %v1634 = vpack.c.bf16 %v1583, %v1582
    %v1635 = vpack.c.bf16 %v1585, %v1584
    %v1636 = vpack.c.bf16 %v1587, %v1586
    %v1637 = vpack.c.bf16 %v1589, %v1588
    %v1638 = vpack.c.bf16 %v1591, %v1590
    %v1639 = vpack.c.bf16 %v1593, %v1592
    %v1640 = vpack.c.bf16 %v1595, %v1594
    %v1641 = vpack.c.bf16 %v1597, %v1596
    %v1642 = vpack.c.bf16 %v1599, %v1598
    %v1643 = vpack.c.bf16 %v1601, %v1600
    %v1644 = vpack.c.bf16 %v1603, %v1602
    %v1645 = vpack.c.bf16 %v1605, %v1604
    %v1646 = vpack.c.bf16 %v1607, %v1606
    %v1647 = vpack.c.bf16 %v1609, %v1608
    %v1648 = vpack.c.bf16 %v1611, %v1610
    %v1649 = vpack.c.bf16 %v1613, %v1612
    %v1650 = vpack.c.bf16 %v1615, %v1614
    %v1651 = vpack.c.bf16 %v1617, %v1616
    %v1652 = vpack.c.bf16 %v1619, %v1618
    %v1653 = vpack.c.bf16 %v1621, %v1620
    %s1654 = scalar_lea.vmem %s1, 6
    %v1655 = vld [vmem:[%s1654] sm:$0x3]
    %v1657 = vsel %vm229, %v1622, 0
    %v1660 = vsel %vm229, %v1623, 0
    %v1663 = vsel %vm229, %v1624, 0
    %v1666 = vsel %vm229, %v1625, 0
    %v1669 = vsel %vm229, %v1626, 0
    %v1672 = vsel %vm229, %v1627, 0
    %v1675 = vsel %vm229, %v1628, 0
    %v1678 = vsel %vm229, %v1629, 0
    %v1681 = vsel %vm229, %v1630, 0
    %v1684 = vsel %vm229, %v1631, 0
    %v1687 = vsel %vm229, %v1632, 0
    %v1690 = vsel %vm229, %v1633, 0
    %v1693 = vsel %vm229, %v1634, 0
    %v1696 = vsel %vm229, %v1635, 0
    %v1699 = vsel %vm229, %v1636, 0
    %v1702 = vsel %vm229, %v1637, 0
    %v1705 = vsel %vm229, %v1638, 0
    %v1708 = vsel %vm229, %v1639, 0
    %v1711 = vsel %vm229, %v1640, 0
    %v1714 = vsel %vm229, %v1641, 0
    %v1717 = vsel %vm229, %v1642, 0
    %v1720 = vsel %vm229, %v1643, 0
    %v1723 = vsel %vm229, %v1644, 0
    %v1726 = vsel %vm229, %v1645, 0
    %v1729 = vsel %vm229, %v1646, 0
    %v1732 = vsel %vm229, %v1647, 0
    %v1735 = vsel %vm229, %v1648, 0
    %v1738 = vsel %vm229, %v1649, 0
    %v1741 = vsel %vm229, %v1650, 0
    %v1744 = vsel %vm229, %v1651, 0
    %v1747 = vsel %vm229, %v1652, 0
    %v1750 = vsel %vm229, %v1653, 0
    %v1753 = vsel %vm326, %v1655, 0
    %1755 = vmatprep.subr.bf16.mxu0 0
    %1756 = vmatpush1.bf16.msra.mxu0 0
    %1757 = vmatprep.subr.bf16.mxu0 0
    %1758 = vmatpush1.bf16.msra.mxu0 0
    %1759 = vmatprep.subr.bf16.mxu0 0
    %1760 = vmatpush1.bf16.msra.mxu0 0
    %1761 = vmatprep.subr.bf16.mxu0 0
    %1762 = vmatpush1.bf16.msra.mxu0 0
    %1763 = vmatprep.subr.bf16.mxu0 0
    %1764 = vmatpush1.bf16.msra.mxu0 0
    %1765 = vmatprep.subr.bf16.mxu0 0
    %1766 = vmatpush1.bf16.msra.mxu0 0
    %1767 = vmatprep.subr.bf16.mxu0 0
    %1768 = vmatpush1.bf16.msra.mxu0 0
    %1769 = vmatprep.subr.bf16.mxu0 0
    %1770 = vmatpush1.bf16.msra.mxu0 %v1753
    %1771 = vmatprep.subr.bf16.mxu0 0
    %1772 = vmatpush2.bf16.msra.mxu0 0
    %1773 = vmatprep.subr.bf16.mxu0 0
    %1774 = vmatpush2.bf16.msra.mxu0 0
    %1775 = vmatprep.subr.bf16.mxu0 0
    %1776 = vmatpush2.bf16.msra.mxu0 0
    %1777 = vmatprep.subr.bf16.mxu0 0
    %1778 = vmatpush2.bf16.msra.mxu0 0
    %1779 = vmatprep.subr.bf16.mxu0 0
    %1780 = vmatpush2.bf16.msra.mxu0 0
    %1781 = vmatprep.subr.bf16.mxu0 0
    %1782 = vmatpush2.bf16.msra.mxu0 0
    %1783 = vmatprep.subr.bf16.mxu0 0
    %1784 = vmatpush2.bf16.msra.mxu0 0
    %1785 = vmatprep.subr.bf16.mxu0 0
    %1786 = vmatpush2.bf16.msra.mxu0 0
    %1787 = vmatprep.mubr.bf16.mxu0 0
    %1788 = vmatmul.mubr.bf16.gmra.mxu0 %v1657
    %v1789 = vpop.f32.mrf.mxu0
    %v1790 = vadd.f32 0.0, %v1789
    %v1791 = vpop.f32.mrf.mxu0
    %v1792 = vpop.f32.mrf.mxu0
    %v1793 = vadd.f32 0.0, %v1792
    %v1794 = vpop.f32.mrf.mxu0
    %1795 = vmatprep.mubr.bf16.mxu0 0
    %1796 = vmatmul.mubr.bf16.gmra.mxu0 %v1660
    %v1797 = vpop.f32.mrf.mxu0
    %v1798 = vadd.f32 0.0, %v1797
    %v1799 = vpop.f32.mrf.mxu0
    %v1800 = vpop.f32.mrf.mxu0
    %v1801 = vadd.f32 0.0, %v1800
    %v1802 = vpop.f32.mrf.mxu0
    %1803 = vmatprep.mubr.bf16.mxu0 0
    %1804 = vmatmul.mubr.bf16.gmra.mxu0 %v1663
    %v1805 = vpop.f32.mrf.mxu0
    %v1806 = vadd.f32 0.0, %v1805
    %v1807 = vpop.f32.mrf.mxu0
    %v1808 = vpop.f32.mrf.mxu0
    %v1809 = vadd.f32 0.0, %v1808
    %v1810 = vpop.f32.mrf.mxu0
    %1811 = vmatprep.mubr.bf16.mxu0 0
    %1812 = vmatmul.mubr.bf16.gmra.mxu0 %v1666
    %v1813 = vpop.f32.mrf.mxu0
    %v1814 = vadd.f32 0.0, %v1813
    %v1815 = vpop.f32.mrf.mxu0
    %v1816 = vpop.f32.mrf.mxu0
    %v1817 = vadd.f32 0.0, %v1816
    %v1818 = vpop.f32.mrf.mxu0
    %1819 = vmatprep.mubr.bf16.mxu0 0
    %1820 = vmatmul.mubr.bf16.gmra.mxu0 %v1669
    %v1821 = vpop.f32.mrf.mxu0
    %v1822 = vadd.f32 0.0, %v1821
    %v1823 = vpop.f32.mrf.mxu0
    %v1824 = vpop.f32.mrf.mxu0
    %v1825 = vadd.f32 0.0, %v1824
    %v1826 = vpop.f32.mrf.mxu0
    %1827 = vmatprep.mubr.bf16.mxu0 0
    %1828 = vmatmul.mubr.bf16.gmra.mxu0 %v1672
    %v1829 = vpop.f32.mrf.mxu0
    %v1830 = vadd.f32 0.0, %v1829
    %v1831 = vpop.f32.mrf.mxu0
    %v1832 = vpop.f32.mrf.mxu0
    %v1833 = vadd.f32 0.0, %v1832
    %v1834 = vpop.f32.mrf.mxu0
    %1835 = vmatprep.mubr.bf16.mxu0 0
    %1836 = vmatmul.mubr.bf16.gmra.mxu0 %v1675
    %v1837 = vpop.f32.mrf.mxu0
    %v1838 = vadd.f32 0.0, %v1837
    %v1839 = vpop.f32.mrf.mxu0
    %v1840 = vpop.f32.mrf.mxu0
    %v1841 = vadd.f32 0.0, %v1840
    %v1842 = vpop.f32.mrf.mxu0
    %1843 = vmatprep.mubr.bf16.mxu0 0
    %1844 = vmatmul.mubr.bf16.gmra.mxu0 %v1678
    %v1845 = vpop.f32.mrf.mxu0
    %v1846 = vadd.f32 0.0, %v1845
    %v1847 = vpop.f32.mrf.mxu0
    %v1848 = vpop.f32.mrf.mxu0
    %v1849 = vadd.f32 0.0, %v1848
    %v1850 = vpop.f32.mrf.mxu0
    %1851 = vmatprep.mubr.bf16.mxu0 0
    %1852 = vmatmul.mubr.bf16.gmra.mxu0 %v1681
    %v1853 = vpop.f32.mrf.mxu0
    %v1854 = vadd.f32 0.0, %v1853
    %v1855 = vpop.f32.mrf.mxu0
    %v1856 = vpop.f32.mrf.mxu0
    %v1857 = vadd.f32 0.0, %v1856
    %v1858 = vpop.f32.mrf.mxu0
    %1859 = vmatprep.mubr.bf16.mxu0 0
    %1860 = vmatmul.mubr.bf16.gmra.mxu0 %v1684
    %v1861 = vpop.f32.mrf.mxu0
    %v1862 = vadd.f32 0.0, %v1861
    %v1863 = vpop.f32.mrf.mxu0
    %v1864 = vpop.f32.mrf.mxu0
    %v1865 = vadd.f32 0.0, %v1864
    %v1866 = vpop.f32.mrf.mxu0
    %1867 = vmatprep.mubr.bf16.mxu0 0
    %1868 = vmatmul.mubr.bf16.gmra.mxu0 %v1687
    %v1869 = vpop.f32.mrf.mxu0
    %v1870 = vadd.f32 0.0, %v1869
    %v1871 = vpop.f32.mrf.mxu0
    %v1872 = vpop.f32.mrf.mxu0
    %v1873 = vadd.f32 0.0, %v1872
    %v1874 = vpop.f32.mrf.mxu0
    %1875 = vmatprep.mubr.bf16.mxu0 0
    %1876 = vmatmul.mubr.bf16.gmra.mxu0 %v1690
    %v1877 = vpop.f32.mrf.mxu0
    %v1878 = vadd.f32 0.0, %v1877
    %v1879 = vpop.f32.mrf.mxu0
    %v1880 = vpop.f32.mrf.mxu0
    %v1881 = vadd.f32 0.0, %v1880
    %v1882 = vpop.f32.mrf.mxu0
    %1883 = vmatprep.mubr.bf16.mxu0 0
    %1884 = vmatmul.mubr.bf16.gmra.mxu0 %v1693
    %v1885 = vpop.f32.mrf.mxu0
    %v1886 = vadd.f32 0.0, %v1885
    %v1887 = vpop.f32.mrf.mxu0
    %v1888 = vpop.f32.mrf.mxu0
    %v1889 = vadd.f32 0.0, %v1888
    %v1890 = vpop.f32.mrf.mxu0
    %1891 = vmatprep.mubr.bf16.mxu0 0
    %1892 = vmatmul.mubr.bf16.gmra.mxu0 %v1696
    %v1893 = vpop.f32.mrf.mxu0
    %v1894 = vadd.f32 0.0, %v1893
    %v1895 = vpop.f32.mrf.mxu0
    %v1896 = vpop.f32.mrf.mxu0
    %v1897 = vadd.f32 0.0, %v1896
    %v1898 = vpop.f32.mrf.mxu0
    %1899 = vmatprep.mubr.bf16.mxu0 0
    %1900 = vmatmul.mubr.bf16.gmra.mxu0 %v1699
    %v1901 = vpop.f32.mrf.mxu0
    %v1902 = vadd.f32 0.0, %v1901
    %v1903 = vpop.f32.mrf.mxu0
    %v1904 = vpop.f32.mrf.mxu0
    %v1905 = vadd.f32 0.0, %v1904
    %v1906 = vpop.f32.mrf.mxu0
    %1907 = vmatprep.mubr.bf16.mxu0 0
    %1908 = vmatmul.mubr.bf16.gmra.mxu0 %v1702
    %v1909 = vpop.f32.mrf.mxu0
    %v1910 = vadd.f32 0.0, %v1909
    %v1911 = vpop.f32.mrf.mxu0
    %v1912 = vpop.f32.mrf.mxu0
    %v1913 = vadd.f32 0.0, %v1912
    %v1914 = vpop.f32.mrf.mxu0
    %1915 = vmatprep.mubr.bf16.mxu0 0
    %1916 = vmatmul.mubr.bf16.gmra.mxu0 %v1705
    %v1917 = vpop.f32.mrf.mxu0
    %v1918 = vadd.f32 0.0, %v1917
    %v1919 = vpop.f32.mrf.mxu0
    %v1920 = vpop.f32.mrf.mxu0
    %v1921 = vadd.f32 0.0, %v1920
    %v1922 = vpop.f32.mrf.mxu0
    %1923 = vmatprep.mubr.bf16.mxu0 0
    %1924 = vmatmul.mubr.bf16.gmra.mxu0 %v1708
    %v1925 = vpop.f32.mrf.mxu0
    %v1926 = vadd.f32 0.0, %v1925
    %v1927 = vpop.f32.mrf.mxu0
    %v1928 = vpop.f32.mrf.mxu0
    %v1929 = vadd.f32 0.0, %v1928
    %v1930 = vpop.f32.mrf.mxu0
    %1931 = vmatprep.mubr.bf16.mxu0 0
    %1932 = vmatmul.mubr.bf16.gmra.mxu0 %v1711
    %v1933 = vpop.f32.mrf.mxu0
    %v1934 = vadd.f32 0.0, %v1933
    %v1935 = vpop.f32.mrf.mxu0
    %v1936 = vpop.f32.mrf.mxu0
    %v1937 = vadd.f32 0.0, %v1936
    %v1938 = vpop.f32.mrf.mxu0
    %1939 = vmatprep.mubr.bf16.mxu0 0
    %1940 = vmatmul.mubr.bf16.gmra.mxu0 %v1714
    %v1941 = vpop.f32.mrf.mxu0
    %v1942 = vadd.f32 0.0, %v1941
    %v1943 = vpop.f32.mrf.mxu0
    %v1944 = vpop.f32.mrf.mxu0
    %v1945 = vadd.f32 0.0, %v1944
    %v1946 = vpop.f32.mrf.mxu0
    %1947 = vmatprep.mubr.bf16.mxu0 0
    %1948 = vmatmul.mubr.bf16.gmra.mxu0 %v1717
    %v1949 = vpop.f32.mrf.mxu0
    %v1950 = vadd.f32 0.0, %v1949
    %v1951 = vpop.f32.mrf.mxu0
    %v1952 = vpop.f32.mrf.mxu0
    %v1953 = vadd.f32 0.0, %v1952
    %v1954 = vpop.f32.mrf.mxu0
    %1955 = vmatprep.mubr.bf16.mxu0 0
    %1956 = vmatmul.mubr.bf16.gmra.mxu0 %v1720
    %v1957 = vpop.f32.mrf.mxu0
    %v1958 = vadd.f32 0.0, %v1957
    %v1959 = vpop.f32.mrf.mxu0
    %v1960 = vpop.f32.mrf.mxu0
    %v1961 = vadd.f32 0.0, %v1960
    %v1962 = vpop.f32.mrf.mxu0
    %1963 = vmatprep.mubr.bf16.mxu0 0
    %1964 = vmatmul.mubr.bf16.gmra.mxu0 %v1723
    %v1965 = vpop.f32.mrf.mxu0
    %v1966 = vadd.f32 0.0, %v1965
    %v1967 = vpop.f32.mrf.mxu0
    %v1968 = vpop.f32.mrf.mxu0
    %v1969 = vadd.f32 0.0, %v1968
    %v1970 = vpop.f32.mrf.mxu0
    %1971 = vmatprep.mubr.bf16.mxu0 0
    %1972 = vmatmul.mubr.bf16.gmra.mxu0 %v1726
    %v1973 = vpop.f32.mrf.mxu0
    %v1974 = vadd.f32 0.0, %v1973
    %v1975 = vpop.f32.mrf.mxu0
    %v1976 = vpop.f32.mrf.mxu0
    %v1977 = vadd.f32 0.0, %v1976
    %v1978 = vpop.f32.mrf.mxu0
    %1979 = vmatprep.mubr.bf16.mxu0 0
    %1980 = vmatmul.mubr.bf16.gmra.mxu0 %v1729
    %v1981 = vpop.f32.mrf.mxu0
    %v1982 = vadd.f32 0.0, %v1981
    %v1983 = vpop.f32.mrf.mxu0
    %v1984 = vpop.f32.mrf.mxu0
    %v1985 = vadd.f32 0.0, %v1984
    %v1986 = vpop.f32.mrf.mxu0
    %1987 = vmatprep.mubr.bf16.mxu0 0
    %1988 = vmatmul.mubr.bf16.gmra.mxu0 %v1732
    %v1989 = vpop.f32.mrf.mxu0
    %v1990 = vadd.f32 0.0, %v1989
    %v1991 = vpop.f32.mrf.mxu0
    %v1992 = vpop.f32.mrf.mxu0
    %v1993 = vadd.f32 0.0, %v1992
    %v1994 = vpop.f32.mrf.mxu0
    %1995 = vmatprep.mubr.bf16.mxu0 0
    %1996 = vmatmul.mubr.bf16.gmra.mxu0 %v1735
    %v1997 = vpop.f32.mrf.mxu0
    %v1998 = vadd.f32 0.0, %v1997
    %v1999 = vpop.f32.mrf.mxu0
    %v2000 = vpop.f32.mrf.mxu0
    %v2001 = vadd.f32 0.0, %v2000
    %v2002 = vpop.f32.mrf.mxu0
    %2003 = vmatprep.mubr.bf16.mxu0 0
    %2004 = vmatmul.mubr.bf16.gmra.mxu0 %v1738
    %v2005 = vpop.f32.mrf.mxu0
    %v2006 = vadd.f32 0.0, %v2005
    %v2007 = vpop.f32.mrf.mxu0
    %v2008 = vpop.f32.mrf.mxu0
    %v2009 = vadd.f32 0.0, %v2008
    %v2010 = vpop.f32.mrf.mxu0
    %2011 = vmatprep.mubr.bf16.mxu0 0
    %2012 = vmatmul.mubr.bf16.gmra.mxu0 %v1741
    %v2013 = vpop.f32.mrf.mxu0
    %v2014 = vadd.f32 0.0, %v2013
    %v2015 = vpop.f32.mrf.mxu0
    %v2016 = vpop.f32.mrf.mxu0
    %v2017 = vadd.f32 0.0, %v2016
    %v2018 = vpop.f32.mrf.mxu0
    %2019 = vmatprep.mubr.bf16.mxu0 0
    %2020 = vmatmul.mubr.bf16.gmra.mxu0 %v1744
    %v2021 = vpop.f32.mrf.mxu0
    %v2022 = vadd.f32 0.0, %v2021
    %v2023 = vpop.f32.mrf.mxu0
    %v2024 = vpop.f32.mrf.mxu0
    %v2025 = vadd.f32 0.0, %v2024
    %v2026 = vpop.f32.mrf.mxu0
    %2027 = vmatprep.mubr.bf16.mxu0 0
    %2028 = vmatmul.mubr.bf16.gmra.mxu0 %v1747
    %v2029 = vpop.f32.mrf.mxu0
    %v2030 = vadd.f32 0.0, %v2029
    %v2031 = vpop.f32.mrf.mxu0
    %v2032 = vpop.f32.mrf.mxu0
    %v2033 = vadd.f32 0.0, %v2032
    %v2034 = vpop.f32.mrf.mxu0
    %2035 = vmatprep.mubr.bf16.mxu0 0
    %2036 = vmatmul.mubr.bf16.gmra.mxu0 %v1750
    %v2037 = vpop.f32.mrf.mxu0
    %v2038 = vadd.f32 0.0, %v2037
    %v2039 = vpop.f32.mrf.mxu0
    %v2040 = vpop.f32.mrf.mxu0
    %v2041 = vadd.f32 0.0, %v2040
    %v2042 = vpop.f32.mrf.mxu0
    %2043 = vdwg.mxu0
    %v2044 = vadd.f32 %v1493, %v1790
    %v2045 = vadd.f32 %v1494, %v1793
    %v2046 = vadd.f32 %v1495, %v1798
    %v2047 = vadd.f32 %v1496, %v1801
    %v2048 = vadd.f32 %v1497, %v1806
    %v2049 = vadd.f32 %v1498, %v1809
    %v2050 = vadd.f32 %v1499, %v1814
    %v2051 = vadd.f32 %v1500, %v1817
    %v2052 = vadd.f32 %v1501, %v1822
    %v2053 = vadd.f32 %v1502, %v1825
    %v2054 = vadd.f32 %v1503, %v1830
    %v2055 = vadd.f32 %v1504, %v1833
    %v2056 = vadd.f32 %v1505, %v1838
    %v2057 = vadd.f32 %v1506, %v1841
    %v2058 = vadd.f32 %v1507, %v1846
    %v2059 = vadd.f32 %v1508, %v1849
    %v2060 = vadd.f32 %v1509, %v1854
    %v2061 = vadd.f32 %v1510, %v1857
    %v2062 = vadd.f32 %v1511, %v1862
    %v2063 = vadd.f32 %v1512, %v1865
    %v2064 = vadd.f32 %v1513, %v1870
    %v2065 = vadd.f32 %v1514, %v1873
    %v2066 = vadd.f32 %v1515, %v1878
    %v2067 = vadd.f32 %v1516, %v1881
    %v2068 = vadd.f32 %v1517, %v1886
    %v2069 = vadd.f32 %v1518, %v1889
    %v2070 = vadd.f32 %v1519, %v1894
    %v2071 = vadd.f32 %v1520, %v1897
    %v2072 = vadd.f32 %v1521, %v1902
    %v2073 = vadd.f32 %v1522, %v1905
    %v2074 = vadd.f32 %v1523, %v1910
    %v2075 = vadd.f32 %v1524, %v1913
    %v2076 = vadd.f32 %v1525, %v1918
    %v2077 = vadd.f32 %v1526, %v1921
    %v2078 = vadd.f32 %v1527, %v1926
    %v2079 = vadd.f32 %v1528, %v1929
    %v2080 = vadd.f32 %v1529, %v1934
    %v2081 = vadd.f32 %v1530, %v1937
    %v2082 = vadd.f32 %v1531, %v1942
    %v2083 = vadd.f32 %v1532, %v1945
    %v2084 = vadd.f32 %v1533, %v1950
    %v2085 = vadd.f32 %v1534, %v1953
    %v2086 = vadd.f32 %v1535, %v1958
    %v2087 = vadd.f32 %v1536, %v1961
    %v2088 = vadd.f32 %v1537, %v1966
    %v2089 = vadd.f32 %v1538, %v1969
    %v2090 = vadd.f32 %v1539, %v1974
    %v2091 = vadd.f32 %v1540, %v1977
    %v2092 = vadd.f32 %v1541, %v1982
    %v2093 = vadd.f32 %v1542, %v1985
    %v2094 = vadd.f32 %v1543, %v1990
    %v2095 = vadd.f32 %v1544, %v1993
    %v2096 = vadd.f32 %v1545, %v1998
    %v2097 = vadd.f32 %v1546, %v2001
    %v2098 = vadd.f32 %v1547, %v2006
    %v2099 = vadd.f32 %v1548, %v2009
    %v2100 = vadd.f32 %v1549, %v2014
    %v2101 = vadd.f32 %v1550, %v2017
    %v2102 = vadd.f32 %v1551, %v2022
    %v2103 = vadd.f32 %v1552, %v2025
    %v2104 = vadd.f32 %v1553, %v2030
    %v2105 = vadd.f32 %v1554, %v2033
    %v2106 = vadd.f32 %v1555, %v2038
    %v2107 = vadd.f32 %v1556, %v2041
    %v2108 = vld [vmem:[%s1557 + $0x1] sm:$0xff]
    %v2109 = vld [vmem:[%s1557 + $0x9] sm:$0xff]
    %v2110 = vld [vmem:[%s1557 + $0x19] sm:$0xff]
    %v2111 = vld [vmem:[%s1557 + $0x21] sm:$0xff]
    %v2112 = vld [vmem:[%s1557 + $0x31] sm:$0xff]
    %v2113 = vld [vmem:[%s1557 + $0x39] sm:$0xff]
    %v2114 = vld [vmem:[%s1557 + $0x49] sm:$0xff]
    %v2115 = vld [vmem:[%s1557 + $0x51] sm:$0xff]
    %v2116 = vld [vmem:[%s1557 + $0x61] sm:$0xff]
    %v2117 = vld [vmem:[%s1557 + $0x69] sm:$0xff]
    %v2118 = vld [vmem:[%s1557 + $0x79] sm:$0xff]
    %v2119 = vld [vmem:[%s1557 + $0x81] sm:$0xff]
    %v2120 = vld [vmem:[%s1557 + $0x91] sm:$0xff]
    %v2121 = vld [vmem:[%s1557 + $0x99] sm:$0xff]
    %v2122 = vld [vmem:[%s1557 + $0xa9] sm:$0xff]
    %v2123 = vld [vmem:[%s1557 + $0xb1] sm:$0xff]
    %v2124 = vld [vmem:[%s1557 + $0xc1] sm:$0xff]
    %v2125 = vld [vmem:[%s1557 + $0xc9] sm:$0xff]
    %v2126 = vld [vmem:[%s1557 + $0xd9] sm:$0xff]
    %v2127 = vld [vmem:[%s1557 + $0xe1] sm:$0xff]
    %v2128 = vld [vmem:[%s1557 + $0xf1] sm:$0xff]
    %v2129 = vld [vmem:[%s1557 + $0xf9] sm:$0xff]
    %v2130 = vld [vmem:[%s1557 + $0x109] sm:$0xff]
    %v2131 = vld [vmem:[%s1557 + $0x111] sm:$0xff]
    %v2132 = vld [vmem:[%s1557 + $0x121] sm:$0xff]
    %v2133 = vld [vmem:[%s1557 + $0x129] sm:$0xff]
    %v2134 = vld [vmem:[%s1557 + $0x139] sm:$0xff]
    %v2135 = vld [vmem:[%s1557 + $0x141] sm:$0xff]
    %v2136 = vld [vmem:[%s1557 + $0x151] sm:$0xff]
    %v2137 = vld [vmem:[%s1557 + $0x159] sm:$0xff]
    %v2138 = vld [vmem:[%s1557 + $0x169] sm:$0xff]
    %v2139 = vld [vmem:[%s1557 + $0x171] sm:$0xff]
    %v2140 = vld [vmem:[%s1557 + $0x1b1] sm:$0xff]
    %v2141 = vld [vmem:[%s1557 + $0x1b9] sm:$0xff]
    %v2142 = vld [vmem:[%s1557 + $0x1c9] sm:$0xff]
    %v2143 = vld [vmem:[%s1557 + $0x1d1] sm:$0xff]
    %v2144 = vld [vmem:[%s1557 + $0x1e1] sm:$0xff]
    %v2145 = vld [vmem:[%s1557 + $0x1e9] sm:$0xff]
    %v2146 = vld [vmem:[%s1557 + $0x1f9] sm:$0xff]
    %v2147 = vld [vmem:[%s1557 + $0x201] sm:$0xff]
    %v2148 = vld [vmem:[%s1557 + $0x211] sm:$0xff]
    %v2149 = vld [vmem:[%s1557 + $0x219] sm:$0xff]
    %v2150 = vld [vmem:[%s1557 + $0x229] sm:$0xff]
    %v2151 = vld [vmem:[%s1557 + $0x231] sm:$0xff]
    %v2152 = vld [vmem:[%s1557 + $0x241] sm:$0xff]
    %v2153 = vld [vmem:[%s1557 + $0x249] sm:$0xff]
    %v2154 = vld [vmem:[%s1557 + $0x259] sm:$0xff]
    %v2155 = vld [vmem:[%s1557 + $0x261] sm:$0xff]
    %v2156 = vld [vmem:[%s1557 + $0x271] sm:$0xff]
    %v2157 = vld [vmem:[%s1557 + $0x279] sm:$0xff]
    %v2158 = vld [vmem:[%s1557 + $0x289] sm:$0xff]
    %v2159 = vld [vmem:[%s1557 + $0x291] sm:$0xff]
    %v2160 = vld [vmem:[%s1557 + $0x2a1] sm:$0xff]
    %v2161 = vld [vmem:[%s1557 + $0x2a9] sm:$0xff]
    %v2162 = vld [vmem:[%s1557 + $0x2b9] sm:$0xff]
    %v2163 = vld [vmem:[%s1557 + $0x2c1] sm:$0xff]
    %v2164 = vld [vmem:[%s1557 + $0x2d1] sm:$0xff]
    %v2165 = vld [vmem:[%s1557 + $0x2d9] sm:$0xff]
    %v2166 = vld [vmem:[%s1557 + $0x2e9] sm:$0xff]
    %v2167 = vld [vmem:[%s1557 + $0x2f1] sm:$0xff]
    %v2168 = vld [vmem:[%s1557 + $0x301] sm:$0xff]
    %v2169 = vld [vmem:[%s1557 + $0x309] sm:$0xff]
    %v2170 = vld [vmem:[%s1557 + $0x319] sm:$0xff]
    %v2171 = vld [vmem:[%s1557 + $0x321] sm:$0xff]
    %v2172 = vpack.c.bf16 %v2109, %v2108
    %v2173 = vpack.c.bf16 %v2111, %v2110
    %v2174 = vpack.c.bf16 %v2113, %v2112
    %v2175 = vpack.c.bf16 %v2115, %v2114
    %v2176 = vpack.c.bf16 %v2117, %v2116
    %v2177 = vpack.c.bf16 %v2119, %v2118
    %v2178 = vpack.c.bf16 %v2121, %v2120
    %v2179 = vpack.c.bf16 %v2123, %v2122
    %v2180 = vpack.c.bf16 %v2125, %v2124
    %v2181 = vpack.c.bf16 %v2127, %v2126
    %v2182 = vpack.c.bf16 %v2129, %v2128
    %v2183 = vpack.c.bf16 %v2131, %v2130
    %v2184 = vpack.c.bf16 %v2133, %v2132
    %v2185 = vpack.c.bf16 %v2135, %v2134
    %v2186 = vpack.c.bf16 %v2137, %v2136
    %v2187 = vpack.c.bf16 %v2139, %v2138
    %v2188 = vpack.c.bf16 %v2141, %v2140
    %v2189 = vpack.c.bf16 %v2143, %v2142
    %v2190 = vpack.c.bf16 %v2145, %v2144
    %v2191 = vpack.c.bf16 %v2147, %v2146
    %v2192 = vpack.c.bf16 %v2149, %v2148
    %v2193 = vpack.c.bf16 %v2151, %v2150
    %v2194 = vpack.c.bf16 %v2153, %v2152
    %v2195 = vpack.c.bf16 %v2155, %v2154
    %v2196 = vpack.c.bf16 %v2157, %v2156
    %v2197 = vpack.c.bf16 %v2159, %v2158
    %v2198 = vpack.c.bf16 %v2161, %v2160
    %v2199 = vpack.c.bf16 %v2163, %v2162
    %v2200 = vpack.c.bf16 %v2165, %v2164
    %v2201 = vpack.c.bf16 %v2167, %v2166
    %v2202 = vpack.c.bf16 %v2169, %v2168
    %v2203 = vpack.c.bf16 %v2171, %v2170
    %s2204 = scalar_lea.vmem %s1, 8
    %v2205 = vld [vmem:[%s2204] sm:$0x3]
    %v2207 = vsel %vm229, %v2172, 0
    %v2210 = vsel %vm229, %v2173, 0
    %v2213 = vsel %vm229, %v2174, 0
    %v2216 = vsel %vm229, %v2175, 0
    %v2219 = vsel %vm229, %v2176, 0
    %v2222 = vsel %vm229, %v2177, 0
    %v2225 = vsel %vm229, %v2178, 0
    %v2228 = vsel %vm229, %v2179, 0
    %v2231 = vsel %vm229, %v2180, 0
    %v2234 = vsel %vm229, %v2181, 0
    %v2237 = vsel %vm229, %v2182, 0
    %v2240 = vsel %vm229, %v2183, 0
    %v2243 = vsel %vm229, %v2184, 0
    %v2246 = vsel %vm229, %v2185, 0
    %v2249 = vsel %vm229, %v2186, 0
    %v2252 = vsel %vm229, %v2187, 0
    %v2255 = vsel %vm229, %v2188, 0
    %v2258 = vsel %vm229, %v2189, 0
    %v2261 = vsel %vm229, %v2190, 0
    %v2264 = vsel %vm229, %v2191, 0
    %v2267 = vsel %vm229, %v2192, 0
    %v2270 = vsel %vm229, %v2193, 0
    %v2273 = vsel %vm229, %v2194, 0
    %v2276 = vsel %vm229, %v2195, 0
    %v2279 = vsel %vm229, %v2196, 0
    %v2282 = vsel %vm229, %v2197, 0
    %v2285 = vsel %vm229, %v2198, 0
    %v2288 = vsel %vm229, %v2199, 0
    %v2291 = vsel %vm229, %v2200, 0
    %v2294 = vsel %vm229, %v2201, 0
    %v2297 = vsel %vm229, %v2202, 0
    %v2300 = vsel %vm229, %v2203, 0
    %v2303 = vsel %vm326, %v2205, 0
    %2305 = vmatprep.subr.bf16.mxu0 0
    %2306 = vmatpush1.bf16.msra.mxu0 0
    %2307 = vmatprep.subr.bf16.mxu0 0
    %2308 = vmatpush1.bf16.msra.mxu0 0
    %2309 = vmatprep.subr.bf16.mxu0 0
    %2310 = vmatpush1.bf16.msra.mxu0 0
    %2311 = vmatprep.subr.bf16.mxu0 0
    %2312 = vmatpush1.bf16.msra.mxu0 0
    %2313 = vmatprep.subr.bf16.mxu0 0
    %2314 = vmatpush1.bf16.msra.mxu0 0
    %2315 = vmatprep.subr.bf16.mxu0 0
    %2316 = vmatpush1.bf16.msra.mxu0 0
    %2317 = vmatprep.subr.bf16.mxu0 0
    %2318 = vmatpush1.bf16.msra.mxu0 0
    %2319 = vmatprep.subr.bf16.mxu0 0
    %2320 = vmatpush1.bf16.msra.mxu0 %v2303
    %2321 = vmatprep.subr.bf16.mxu0 0
    %2322 = vmatpush2.bf16.msra.mxu0 0
    %2323 = vmatprep.subr.bf16.mxu0 0
    %2324 = vmatpush2.bf16.msra.mxu0 0
    %2325 = vmatprep.subr.bf16.mxu0 0
    %2326 = vmatpush2.bf16.msra.mxu0 0
    %2327 = vmatprep.subr.bf16.mxu0 0
    %2328 = vmatpush2.bf16.msra.mxu0 0
    %2329 = vmatprep.subr.bf16.mxu0 0
    %2330 = vmatpush2.bf16.msra.mxu0 0
    %2331 = vmatprep.subr.bf16.mxu0 0
    %2332 = vmatpush2.bf16.msra.mxu0 0
    %2333 = vmatprep.subr.bf16.mxu0 0
    %2334 = vmatpush2.bf16.msra.mxu0 0
    %2335 = vmatprep.subr.bf16.mxu0 0
    %2336 = vmatpush2.bf16.msra.mxu0 0
    %2337 = vmatprep.mubr.bf16.mxu0 0
    %2338 = vmatmul.mubr.bf16.gmra.mxu0 %v2207
    %v2339 = vpop.f32.mrf.mxu0
    %v2340 = vadd.f32 0.0, %v2339
    %v2341 = vpop.f32.mrf.mxu0
    %v2342 = vpop.f32.mrf.mxu0
    %v2343 = vadd.f32 0.0, %v2342
    %v2344 = vpop.f32.mrf.mxu0
    %2345 = vmatprep.mubr.bf16.mxu0 0
    %2346 = vmatmul.mubr.bf16.gmra.mxu0 %v2210
    %v2347 = vpop.f32.mrf.mxu0
    %v2348 = vadd.f32 0.0, %v2347
    %v2349 = vpop.f32.mrf.mxu0
    %v2350 = vpop.f32.mrf.mxu0
    %v2351 = vadd.f32 0.0, %v2350
    %v2352 = vpop.f32.mrf.mxu0
    %2353 = vmatprep.mubr.bf16.mxu0 0
    %2354 = vmatmul.mubr.bf16.gmra.mxu0 %v2213
    %v2355 = vpop.f32.mrf.mxu0
    %v2356 = vadd.f32 0.0, %v2355
    %v2357 = vpop.f32.mrf.mxu0
    %v2358 = vpop.f32.mrf.mxu0
    %v2359 = vadd.f32 0.0, %v2358
    %v2360 = vpop.f32.mrf.mxu0
    %2361 = vmatprep.mubr.bf16.mxu0 0
    %2362 = vmatmul.mubr.bf16.gmra.mxu0 %v2216
    %v2363 = vpop.f32.mrf.mxu0
    %v2364 = vadd.f32 0.0, %v2363
    %v2365 = vpop.f32.mrf.mxu0
    %v2366 = vpop.f32.mrf.mxu0
    %v2367 = vadd.f32 0.0, %v2366
    %v2368 = vpop.f32.mrf.mxu0
    %2369 = vmatprep.mubr.bf16.mxu0 0
    %2370 = vmatmul.mubr.bf16.gmra.mxu0 %v2219
    %v2371 = vpop.f32.mrf.mxu0
    %v2372 = vadd.f32 0.0, %v2371
    %v2373 = vpop.f32.mrf.mxu0
    %v2374 = vpop.f32.mrf.mxu0
    %v2375 = vadd.f32 0.0, %v2374
    %v2376 = vpop.f32.mrf.mxu0
    %2377 = vmatprep.mubr.bf16.mxu0 0
    %2378 = vmatmul.mubr.bf16.gmra.mxu0 %v2222
    %v2379 = vpop.f32.mrf.mxu0
    %v2380 = vadd.f32 0.0, %v2379
    %v2381 = vpop.f32.mrf.mxu0
    %v2382 = vpop.f32.mrf.mxu0
    %v2383 = vadd.f32 0.0, %v2382
    %v2384 = vpop.f32.mrf.mxu0
    %2385 = vmatprep.mubr.bf16.mxu0 0
    %2386 = vmatmul.mubr.bf16.gmra.mxu0 %v2225
    %v2387 = vpop.f32.mrf.mxu0
    %v2388 = vadd.f32 0.0, %v2387
    %v2389 = vpop.f32.mrf.mxu0
    %v2390 = vpop.f32.mrf.mxu0
    %v2391 = vadd.f32 0.0, %v2390
    %v2392 = vpop.f32.mrf.mxu0
    %2393 = vmatprep.mubr.bf16.mxu0 0
    %2394 = vmatmul.mubr.bf16.gmra.mxu0 %v2228
    %v2395 = vpop.f32.mrf.mxu0
    %v2396 = vadd.f32 0.0, %v2395
    %v2397 = vpop.f32.mrf.mxu0
    %v2398 = vpop.f32.mrf.mxu0
    %v2399 = vadd.f32 0.0, %v2398
    %v2400 = vpop.f32.mrf.mxu0
    %2401 = vmatprep.mubr.bf16.mxu0 0
    %2402 = vmatmul.mubr.bf16.gmra.mxu0 %v2231
    %v2403 = vpop.f32.mrf.mxu0
    %v2404 = vadd.f32 0.0, %v2403
    %v2405 = vpop.f32.mrf.mxu0
    %v2406 = vpop.f32.mrf.mxu0
    %v2407 = vadd.f32 0.0, %v2406
    %v2408 = vpop.f32.mrf.mxu0
    %2409 = vmatprep.mubr.bf16.mxu0 0
    %2410 = vmatmul.mubr.bf16.gmra.mxu0 %v2234
    %v2411 = vpop.f32.mrf.mxu0
    %v2412 = vadd.f32 0.0, %v2411
    %v2413 = vpop.f32.mrf.mxu0
    %v2414 = vpop.f32.mrf.mxu0
    %v2415 = vadd.f32 0.0, %v2414
    %v2416 = vpop.f32.mrf.mxu0
    %2417 = vmatprep.mubr.bf16.mxu0 0
    %2418 = vmatmul.mubr.bf16.gmra.mxu0 %v2237
    %v2419 = vpop.f32.mrf.mxu0
    %v2420 = vadd.f32 0.0, %v2419
    %v2421 = vpop.f32.mrf.mxu0
    %v2422 = vpop.f32.mrf.mxu0
    %v2423 = vadd.f32 0.0, %v2422
    %v2424 = vpop.f32.mrf.mxu0
    %2425 = vmatprep.mubr.bf16.mxu0 0
    %2426 = vmatmul.mubr.bf16.gmra.mxu0 %v2240
    %v2427 = vpop.f32.mrf.mxu0
    %v2428 = vadd.f32 0.0, %v2427
    %v2429 = vpop.f32.mrf.mxu0
    %v2430 = vpop.f32.mrf.mxu0
    %v2431 = vadd.f32 0.0, %v2430
    %v2432 = vpop.f32.mrf.mxu0
    %2433 = vmatprep.mubr.bf16.mxu0 0
    %2434 = vmatmul.mubr.bf16.gmra.mxu0 %v2243
    %v2435 = vpop.f32.mrf.mxu0
    %v2436 = vadd.f32 0.0, %v2435
    %v2437 = vpop.f32.mrf.mxu0
    %v2438 = vpop.f32.mrf.mxu0
    %v2439 = vadd.f32 0.0, %v2438
    %v2440 = vpop.f32.mrf.mxu0
    %2441 = vmatprep.mubr.bf16.mxu0 0
    %2442 = vmatmul.mubr.bf16.gmra.mxu0 %v2246
    %v2443 = vpop.f32.mrf.mxu0
    %v2444 = vadd.f32 0.0, %v2443
    %v2445 = vpop.f32.mrf.mxu0
    %v2446 = vpop.f32.mrf.mxu0
    %v2447 = vadd.f32 0.0, %v2446
    %v2448 = vpop.f32.mrf.mxu0
    %2449 = vmatprep.mubr.bf16.mxu0 0
    %2450 = vmatmul.mubr.bf16.gmra.mxu0 %v2249
    %v2451 = vpop.f32.mrf.mxu0
    %v2452 = vadd.f32 0.0, %v2451
    %v2453 = vpop.f32.mrf.mxu0
    %v2454 = vpop.f32.mrf.mxu0
    %v2455 = vadd.f32 0.0, %v2454
    %v2456 = vpop.f32.mrf.mxu0
    %2457 = vmatprep.mubr.bf16.mxu0 0
    %2458 = vmatmul.mubr.bf16.gmra.mxu0 %v2252
    %v2459 = vpop.f32.mrf.mxu0
    %v2460 = vadd.f32 0.0, %v2459
    %v2461 = vpop.f32.mrf.mxu0
    %v2462 = vpop.f32.mrf.mxu0
    %v2463 = vadd.f32 0.0, %v2462
    %v2464 = vpop.f32.mrf.mxu0
    %2465 = vmatprep.mubr.bf16.mxu0 0
    %2466 = vmatmul.mubr.bf16.gmra.mxu0 %v2255
    %v2467 = vpop.f32.mrf.mxu0
    %v2468 = vadd.f32 0.0, %v2467
    %v2469 = vpop.f32.mrf.mxu0
    %v2470 = vpop.f32.mrf.mxu0
    %v2471 = vadd.f32 0.0, %v2470
    %v2472 = vpop.f32.mrf.mxu0
    %2473 = vmatprep.mubr.bf16.mxu0 0
    %2474 = vmatmul.mubr.bf16.gmra.mxu0 %v2258
    %v2475 = vpop.f32.mrf.mxu0
    %v2476 = vadd.f32 0.0, %v2475
    %v2477 = vpop.f32.mrf.mxu0
    %v2478 = vpop.f32.mrf.mxu0
    %v2479 = vadd.f32 0.0, %v2478
    %v2480 = vpop.f32.mrf.mxu0
    %2481 = vmatprep.mubr.bf16.mxu0 0
    %2482 = vmatmul.mubr.bf16.gmra.mxu0 %v2261
    %v2483 = vpop.f32.mrf.mxu0
    %v2484 = vadd.f32 0.0, %v2483
    %v2485 = vpop.f32.mrf.mxu0
    %v2486 = vpop.f32.mrf.mxu0
    %v2487 = vadd.f32 0.0, %v2486
    %v2488 = vpop.f32.mrf.mxu0
    %2489 = vmatprep.mubr.bf16.mxu0 0
    %2490 = vmatmul.mubr.bf16.gmra.mxu0 %v2264
    %v2491 = vpop.f32.mrf.mxu0
    %v2492 = vadd.f32 0.0, %v2491
    %v2493 = vpop.f32.mrf.mxu0
    %v2494 = vpop.f32.mrf.mxu0
    %v2495 = vadd.f32 0.0, %v2494
    %v2496 = vpop.f32.mrf.mxu0
    %2497 = vmatprep.mubr.bf16.mxu0 0
    %2498 = vmatmul.mubr.bf16.gmra.mxu0 %v2267
    %v2499 = vpop.f32.mrf.mxu0
    %v2500 = vadd.f32 0.0, %v2499
    %v2501 = vpop.f32.mrf.mxu0
    %v2502 = vpop.f32.mrf.mxu0
    %v2503 = vadd.f32 0.0, %v2502
    %v2504 = vpop.f32.mrf.mxu0
    %2505 = vmatprep.mubr.bf16.mxu0 0
    %2506 = vmatmul.mubr.bf16.gmra.mxu0 %v2270
    %v2507 = vpop.f32.mrf.mxu0
    %v2508 = vadd.f32 0.0, %v2507
    %v2509 = vpop.f32.mrf.mxu0
    %v2510 = vpop.f32.mrf.mxu0
    %v2511 = vadd.f32 0.0, %v2510
    %v2512 = vpop.f32.mrf.mxu0
    %2513 = vmatprep.mubr.bf16.mxu0 0
    %2514 = vmatmul.mubr.bf16.gmra.mxu0 %v2273
    %v2515 = vpop.f32.mrf.mxu0
    %v2516 = vadd.f32 0.0, %v2515
    %v2517 = vpop.f32.mrf.mxu0
    %v2518 = vpop.f32.mrf.mxu0
    %v2519 = vadd.f32 0.0, %v2518
    %v2520 = vpop.f32.mrf.mxu0
    %2521 = vmatprep.mubr.bf16.mxu0 0
    %2522 = vmatmul.mubr.bf16.gmra.mxu0 %v2276
    %v2523 = vpop.f32.mrf.mxu0
    %v2524 = vadd.f32 0.0, %v2523
    %v2525 = vpop.f32.mrf.mxu0
    %v2526 = vpop.f32.mrf.mxu0
    %v2527 = vadd.f32 0.0, %v2526
    %v2528 = vpop.f32.mrf.mxu0
    %2529 = vmatprep.mubr.bf16.mxu0 0
    %2530 = vmatmul.mubr.bf16.gmra.mxu0 %v2279
    %v2531 = vpop.f32.mrf.mxu0
    %v2532 = vadd.f32 0.0, %v2531
    %v2533 = vpop.f32.mrf.mxu0
    %v2534 = vpop.f32.mrf.mxu0
    %v2535 = vadd.f32 0.0, %v2534
    %v2536 = vpop.f32.mrf.mxu0
    %2537 = vmatprep.mubr.bf16.mxu0 0
    %2538 = vmatmul.mubr.bf16.gmra.mxu0 %v2282
    %v2539 = vpop.f32.mrf.mxu0
    %v2540 = vadd.f32 0.0, %v2539
    %v2541 = vpop.f32.mrf.mxu0
    %v2542 = vpop.f32.mrf.mxu0
    %v2543 = vadd.f32 0.0, %v2542
    %v2544 = vpop.f32.mrf.mxu0
    %2545 = vmatprep.mubr.bf16.mxu0 0
    %2546 = vmatmul.mubr.bf16.gmra.mxu0 %v2285
    %v2547 = vpop.f32.mrf.mxu0
    %v2548 = vadd.f32 0.0, %v2547
    %v2549 = vpop.f32.mrf.mxu0
    %v2550 = vpop.f32.mrf.mxu0
    %v2551 = vadd.f32 0.0, %v2550
    %v2552 = vpop.f32.mrf.mxu0
    %2553 = vmatprep.mubr.bf16.mxu0 0
    %2554 = vmatmul.mubr.bf16.gmra.mxu0 %v2288
    %v2555 = vpop.f32.mrf.mxu0
    %v2556 = vadd.f32 0.0, %v2555
    %v2557 = vpop.f32.mrf.mxu0
    %v2558 = vpop.f32.mrf.mxu0
    %v2559 = vadd.f32 0.0, %v2558
    %v2560 = vpop.f32.mrf.mxu0
    %2561 = vmatprep.mubr.bf16.mxu0 0
    %2562 = vmatmul.mubr.bf16.gmra.mxu0 %v2291
    %v2563 = vpop.f32.mrf.mxu0
    %v2564 = vadd.f32 0.0, %v2563
    %v2565 = vpop.f32.mrf.mxu0
    %v2566 = vpop.f32.mrf.mxu0
    %v2567 = vadd.f32 0.0, %v2566
    %v2568 = vpop.f32.mrf.mxu0
    %2569 = vmatprep.mubr.bf16.mxu0 0
    %2570 = vmatmul.mubr.bf16.gmra.mxu0 %v2294
    %v2571 = vpop.f32.mrf.mxu0
    %v2572 = vadd.f32 0.0, %v2571
    %v2573 = vpop.f32.mrf.mxu0
    %v2574 = vpop.f32.mrf.mxu0
    %v2575 = vadd.f32 0.0, %v2574
    %v2576 = vpop.f32.mrf.mxu0
    %2577 = vmatprep.mubr.bf16.mxu0 0
    %2578 = vmatmul.mubr.bf16.gmra.mxu0 %v2297
    %v2579 = vpop.f32.mrf.mxu0
    %v2580 = vadd.f32 0.0, %v2579
    %v2581 = vpop.f32.mrf.mxu0
    %v2582 = vpop.f32.mrf.mxu0
    %v2583 = vadd.f32 0.0, %v2582
    %v2584 = vpop.f32.mrf.mxu0
    %2585 = vmatprep.mubr.bf16.mxu0 0
    %2586 = vmatmul.mubr.bf16.gmra.mxu0 %v2300
    %v2587 = vpop.f32.mrf.mxu0
    %v2588 = vadd.f32 0.0, %v2587
    %v2589 = vpop.f32.mrf.mxu0
    %v2590 = vpop.f32.mrf.mxu0
    %v2591 = vadd.f32 0.0, %v2590
    %v2592 = vpop.f32.mrf.mxu0
    %2593 = vdwg.mxu0
    %v2594 = vadd.f32 %v2044, %v2340
    %v2595 = vadd.f32 %v2045, %v2343
    %v2596 = vadd.f32 %v2046, %v2348
    %v2597 = vadd.f32 %v2047, %v2351
    %v2598 = vadd.f32 %v2048, %v2356
    %v2599 = vadd.f32 %v2049, %v2359
    %v2600 = vadd.f32 %v2050, %v2364
    %v2601 = vadd.f32 %v2051, %v2367
    %v2602 = vadd.f32 %v2052, %v2372
    %v2603 = vadd.f32 %v2053, %v2375
    %v2604 = vadd.f32 %v2054, %v2380
    %v2605 = vadd.f32 %v2055, %v2383
    %v2606 = vadd.f32 %v2056, %v2388
    %v2607 = vadd.f32 %v2057, %v2391
    %v2608 = vadd.f32 %v2058, %v2396
    %v2609 = vadd.f32 %v2059, %v2399
    %v2610 = vadd.f32 %v2060, %v2404
    %v2611 = vadd.f32 %v2061, %v2407
    %v2612 = vadd.f32 %v2062, %v2412
    %v2613 = vadd.f32 %v2063, %v2415
    %v2614 = vadd.f32 %v2064, %v2420
    %v2615 = vadd.f32 %v2065, %v2423
    %v2616 = vadd.f32 %v2066, %v2428
    %v2617 = vadd.f32 %v2067, %v2431
    %v2618 = vadd.f32 %v2068, %v2436
    %v2619 = vadd.f32 %v2069, %v2439
    %v2620 = vadd.f32 %v2070, %v2444
    %v2621 = vadd.f32 %v2071, %v2447
    %v2622 = vadd.f32 %v2072, %v2452
    %v2623 = vadd.f32 %v2073, %v2455
    %v2624 = vadd.f32 %v2074, %v2460
    %v2625 = vadd.f32 %v2075, %v2463
    %v2626 = vadd.f32 %v2076, %v2468
    %v2627 = vadd.f32 %v2077, %v2471
    %v2628 = vadd.f32 %v2078, %v2476
    %v2629 = vadd.f32 %v2079, %v2479
    %v2630 = vadd.f32 %v2080, %v2484
    %v2631 = vadd.f32 %v2081, %v2487
    %v2632 = vadd.f32 %v2082, %v2492
    %v2633 = vadd.f32 %v2083, %v2495
    %v2634 = vadd.f32 %v2084, %v2500
    %v2635 = vadd.f32 %v2085, %v2503
    %v2636 = vadd.f32 %v2086, %v2508
    %v2637 = vadd.f32 %v2087, %v2511
    %v2638 = vadd.f32 %v2088, %v2516
    %v2639 = vadd.f32 %v2089, %v2519
    %v2640 = vadd.f32 %v2090, %v2524
    %v2641 = vadd.f32 %v2091, %v2527
    %v2642 = vadd.f32 %v2092, %v2532
    %v2643 = vadd.f32 %v2093, %v2535
    %v2644 = vadd.f32 %v2094, %v2540
    %v2645 = vadd.f32 %v2095, %v2543
    %v2646 = vadd.f32 %v2096, %v2548
    %v2647 = vadd.f32 %v2097, %v2551
    %v2648 = vadd.f32 %v2098, %v2556
    %v2649 = vadd.f32 %v2099, %v2559
    %v2650 = vadd.f32 %v2100, %v2564
    %v2651 = vadd.f32 %v2101, %v2567
    %v2652 = vadd.f32 %v2102, %v2572
    %v2653 = vadd.f32 %v2103, %v2575
    %v2654 = vadd.f32 %v2104, %v2580
    %v2655 = vadd.f32 %v2105, %v2583
    %v2656 = vadd.f32 %v2106, %v2588
    %v2657 = vadd.f32 %v2107, %v2591
    %v2658 = vld [vmem:[%s1557 + $0x2] sm:$0xff]
    %v2659 = vld [vmem:[%s1557 + $0xa] sm:$0xff]
    %v2660 = vld [vmem:[%s1557 + $0x1a] sm:$0xff]
    %v2661 = vld [vmem:[%s1557 + $0x22] sm:$0xff]
    %v2662 = vld [vmem:[%s1557 + $0x32] sm:$0xff]
    %v2663 = vld [vmem:[%s1557 + $0x3a] sm:$0xff]
    %v2664 = vld [vmem:[%s1557 + $0x4a] sm:$0xff]
    %v2665 = vld [vmem:[%s1557 + $0x52] sm:$0xff]
    %v2666 = vld [vmem:[%s1557 + $0x62] sm:$0xff]
    %v2667 = vld [vmem:[%s1557 + $0x6a] sm:$0xff]
    %v2668 = vld [vmem:[%s1557 + $0x7a] sm:$0xff]
    %v2669 = vld [vmem:[%s1557 + $0x82] sm:$0xff]
    %v2670 = vld [vmem:[%s1557 + $0x92] sm:$0xff]
    %v2671 = vld [vmem:[%s1557 + $0x9a] sm:$0xff]
    %v2672 = vld [vmem:[%s1557 + $0xaa] sm:$0xff]
    %v2673 = vld [vmem:[%s1557 + $0xb2] sm:$0xff]
    %v2674 = vld [vmem:[%s1557 + $0xc2] sm:$0xff]
    %v2675 = vld [vmem:[%s1557 + $0xca] sm:$0xff]
    %v2676 = vld [vmem:[%s1557 + $0xda] sm:$0xff]
    %v2677 = vld [vmem:[%s1557 + $0xe2] sm:$0xff]
    %v2678 = vld [vmem:[%s1557 + $0xf2] sm:$0xff]
    %v2679 = vld [vmem:[%s1557 + $0xfa] sm:$0xff]
    %v2680 = vld [vmem:[%s1557 + $0x10a] sm:$0xff]
    %v2681 = vld [vmem:[%s1557 + $0x112] sm:$0xff]
    %v2682 = vld [vmem:[%s1557 + $0x122] sm:$0xff]
    %v2683 = vld [vmem:[%s1557 + $0x12a] sm:$0xff]
    %v2684 = vld [vmem:[%s1557 + $0x13a] sm:$0xff]
    %v2685 = vld [vmem:[%s1557 + $0x142] sm:$0xff]
    %v2686 = vld [vmem:[%s1557 + $0x152] sm:$0xff]
    %v2687 = vld [vmem:[%s1557 + $0x15a] sm:$0xff]
    %v2688 = vld [vmem:[%s1557 + $0x16a] sm:$0xff]
    %v2689 = vld [vmem:[%s1557 + $0x172] sm:$0xff]
    %v2690 = vld [vmem:[%s1557 + $0x1b2] sm:$0xff]
    %v2691 = vld [vmem:[%s1557 + $0x1ba] sm:$0xff]
    %v2692 = vld [vmem:[%s1557 + $0x1ca] sm:$0xff]
    %v2693 = vld [vmem:[%s1557 + $0x1d2] sm:$0xff]
    %v2694 = vld [vmem:[%s1557 + $0x1e2] sm:$0xff]
    %v2695 = vld [vmem:[%s1557 + $0x1ea] sm:$0xff]
    %v2696 = vld [vmem:[%s1557 + $0x1fa] sm:$0xff]
    %v2697 = vld [vmem:[%s1557 + $0x202] sm:$0xff]
    %v2698 = vld [vmem:[%s1557 + $0x212] sm:$0xff]
    %v2699 = vld [vmem:[%s1557 + $0x21a] sm:$0xff]
    %v2700 = vld [vmem:[%s1557 + $0x22a] sm:$0xff]
    %v2701 = vld [vmem:[%s1557 + $0x232] sm:$0xff]
    %v2702 = vld [vmem:[%s1557 + $0x242] sm:$0xff]
    %v2703 = vld [vmem:[%s1557 + $0x24a] sm:$0xff]
    %v2704 = vld [vmem:[%s1557 + $0x25a] sm:$0xff]
    %v2705 = vld [vmem:[%s1557 + $0x262] sm:$0xff]
    %v2706 = vld [vmem:[%s1557 + $0x272] sm:$0xff]
    %v2707 = vld [vmem:[%s1557 + $0x27a] sm:$0xff]
    %v2708 = vld [vmem:[%s1557 + $0x28a] sm:$0xff]
    %v2709 = vld [vmem:[%s1557 + $0x292] sm:$0xff]
    %v2710 = vld [vmem:[%s1557 + $0x2a2] sm:$0xff]
    %v2711 = vld [vmem:[%s1557 + $0x2aa] sm:$0xff]
    %v2712 = vld [vmem:[%s1557 + $0x2ba] sm:$0xff]
    %v2713 = vld [vmem:[%s1557 + $0x2c2] sm:$0xff]
    %v2714 = vld [vmem:[%s1557 + $0x2d2] sm:$0xff]
    %v2715 = vld [vmem:[%s1557 + $0x2da] sm:$0xff]
    %v2716 = vld [vmem:[%s1557 + $0x2ea] sm:$0xff]
    %v2717 = vld [vmem:[%s1557 + $0x2f2] sm:$0xff]
    %v2718 = vld [vmem:[%s1557 + $0x302] sm:$0xff]
    %v2719 = vld [vmem:[%s1557 + $0x30a] sm:$0xff]
    %v2720 = vld [vmem:[%s1557 + $0x31a] sm:$0xff]
    %v2721 = vld [vmem:[%s1557 + $0x322] sm:$0xff]
    %v2722 = vpack.c.bf16 %v2659, %v2658
    %v2723 = vpack.c.bf16 %v2661, %v2660
    %v2724 = vpack.c.bf16 %v2663, %v2662
    %v2725 = vpack.c.bf16 %v2665, %v2664
    %v2726 = vpack.c.bf16 %v2667, %v2666
    %v2727 = vpack.c.bf16 %v2669, %v2668
    %v2728 = vpack.c.bf16 %v2671, %v2670
    %v2729 = vpack.c.bf16 %v2673, %v2672
    %v2730 = vpack.c.bf16 %v2675, %v2674
    %v2731 = vpack.c.bf16 %v2677, %v2676
    %v2732 = vpack.c.bf16 %v2679, %v2678
    %v2733 = vpack.c.bf16 %v2681, %v2680
    %v2734 = vpack.c.bf16 %v2683, %v2682
    %v2735 = vpack.c.bf16 %v2685, %v2684
    %v2736 = vpack.c.bf16 %v2687, %v2686
    %v2737 = vpack.c.bf16 %v2689, %v2688
    %v2738 = vpack.c.bf16 %v2691, %v2690
    %v2739 = vpack.c.bf16 %v2693, %v2692
    %v2740 = vpack.c.bf16 %v2695, %v2694
    %v2741 = vpack.c.bf16 %v2697, %v2696
    %v2742 = vpack.c.bf16 %v2699, %v2698
    %v2743 = vpack.c.bf16 %v2701, %v2700
    %v2744 = vpack.c.bf16 %v2703, %v2702
    %v2745 = vpack.c.bf16 %v2705, %v2704
    %v2746 = vpack.c.bf16 %v2707, %v2706
    %v2747 = vpack.c.bf16 %v2709, %v2708
    %v2748 = vpack.c.bf16 %v2711, %v2710
    %v2749 = vpack.c.bf16 %v2713, %v2712
    %v2750 = vpack.c.bf16 %v2715, %v2714
    %v2751 = vpack.c.bf16 %v2717, %v2716
    %v2752 = vpack.c.bf16 %v2719, %v2718
    %v2753 = vpack.c.bf16 %v2721, %v2720
    %s2754 = scalar_lea.vmem %s1, 10
    %v2755 = vld [vmem:[%s2754] sm:$0x3]
    %v2757 = vsel %vm229, %v2722, 0
    %v2760 = vsel %vm229, %v2723, 0
    %v2763 = vsel %vm229, %v2724, 0
    %v2766 = vsel %vm229, %v2725, 0
    %v2769 = vsel %vm229, %v2726, 0
    %v2772 = vsel %vm229, %v2727, 0
    %v2775 = vsel %vm229, %v2728, 0
    %v2778 = vsel %vm229, %v2729, 0
    %v2781 = vsel %vm229, %v2730, 0
    %v2784 = vsel %vm229, %v2731, 0
    %v2787 = vsel %vm229, %v2732, 0
    %v2790 = vsel %vm229, %v2733, 0
    %v2793 = vsel %vm229, %v2734, 0
    %v2796 = vsel %vm229, %v2735, 0
    %v2799 = vsel %vm229, %v2736, 0
    %v2802 = vsel %vm229, %v2737, 0
    %v2805 = vsel %vm229, %v2738, 0
    %v2808 = vsel %vm229, %v2739, 0
    %v2811 = vsel %vm229, %v2740, 0
    %v2814 = vsel %vm229, %v2741, 0
    %v2817 = vsel %vm229, %v2742, 0
    %v2820 = vsel %vm229, %v2743, 0
    %v2823 = vsel %vm229, %v2744, 0
    %v2826 = vsel %vm229, %v2745, 0
    %v2829 = vsel %vm229, %v2746, 0
    %v2832 = vsel %vm229, %v2747, 0
    %v2835 = vsel %vm229, %v2748, 0
    %v2838 = vsel %vm229, %v2749, 0
    %v2841 = vsel %vm229, %v2750, 0
    %v2844 = vsel %vm229, %v2751, 0
    %v2847 = vsel %vm229, %v2752, 0
    %v2850 = vsel %vm229, %v2753, 0
    %v2853 = vsel %vm326, %v2755, 0
    %2855 = vmatprep.subr.bf16.mxu0 0
    %2856 = vmatpush1.bf16.msra.mxu0 0
    %2857 = vmatprep.subr.bf16.mxu0 0
    %2858 = vmatpush1.bf16.msra.mxu0 0
    %2859 = vmatprep.subr.bf16.mxu0 0
    %2860 = vmatpush1.bf16.msra.mxu0 0
    %2861 = vmatprep.subr.bf16.mxu0 0
    %2862 = vmatpush1.bf16.msra.mxu0 0
    %2863 = vmatprep.subr.bf16.mxu0 0
    %2864 = vmatpush1.bf16.msra.mxu0 0
    %2865 = vmatprep.subr.bf16.mxu0 0
    %2866 = vmatpush1.bf16.msra.mxu0 0
    %2867 = vmatprep.subr.bf16.mxu0 0
    %2868 = vmatpush1.bf16.msra.mxu0 0
    %2869 = vmatprep.subr.bf16.mxu0 0
    %2870 = vmatpush1.bf16.msra.mxu0 %v2853
    %2871 = vmatprep.subr.bf16.mxu0 0
    %2872 = vmatpush2.bf16.msra.mxu0 0
    %2873 = vmatprep.subr.bf16.mxu0 0
    %2874 = vmatpush2.bf16.msra.mxu0 0
    %2875 = vmatprep.subr.bf16.mxu0 0
    %2876 = vmatpush2.bf16.msra.mxu0 0
    %2877 = vmatprep.subr.bf16.mxu0 0
    %2878 = vmatpush2.bf16.msra.mxu0 0
    %2879 = vmatprep.subr.bf16.mxu0 0
    %2880 = vmatpush2.bf16.msra.mxu0 0
    %2881 = vmatprep.subr.bf16.mxu0 0
    %2882 = vmatpush2.bf16.msra.mxu0 0
    %2883 = vmatprep.subr.bf16.mxu0 0
    %2884 = vmatpush2.bf16.msra.mxu0 0
    %2885 = vmatprep.subr.bf16.mxu0 0
    %2886 = vmatpush2.bf16.msra.mxu0 0
    %2887 = vmatprep.mubr.bf16.mxu0 0
    %2888 = vmatmul.mubr.bf16.gmra.mxu0 %v2757
    %v2889 = vpop.f32.mrf.mxu0
    %v2890 = vadd.f32 0.0, %v2889
    %v2891 = vpop.f32.mrf.mxu0
    %v2892 = vpop.f32.mrf.mxu0
    %v2893 = vadd.f32 0.0, %v2892
    %v2894 = vpop.f32.mrf.mxu0
    %2895 = vmatprep.mubr.bf16.mxu0 0
    %2896 = vmatmul.mubr.bf16.gmra.mxu0 %v2760
    %v2897 = vpop.f32.mrf.mxu0
    %v2898 = vadd.f32 0.0, %v2897
    %v2899 = vpop.f32.mrf.mxu0
    %v2900 = vpop.f32.mrf.mxu0
    %v2901 = vadd.f32 0.0, %v2900
    %v2902 = vpop.f32.mrf.mxu0
    %2903 = vmatprep.mubr.bf16.mxu0 0
    %2904 = vmatmul.mubr.bf16.gmra.mxu0 %v2763
    %v2905 = vpop.f32.mrf.mxu0
    %v2906 = vadd.f32 0.0, %v2905
    %v2907 = vpop.f32.mrf.mxu0
    %v2908 = vpop.f32.mrf.mxu0
    %v2909 = vadd.f32 0.0, %v2908
    %v2910 = vpop.f32.mrf.mxu0
    %2911 = vmatprep.mubr.bf16.mxu0 0
    %2912 = vmatmul.mubr.bf16.gmra.mxu0 %v2766
    %v2913 = vpop.f32.mrf.mxu0
    %v2914 = vadd.f32 0.0, %v2913
    %v2915 = vpop.f32.mrf.mxu0
    %v2916 = vpop.f32.mrf.mxu0
    %v2917 = vadd.f32 0.0, %v2916
    %v2918 = vpop.f32.mrf.mxu0
    %2919 = vmatprep.mubr.bf16.mxu0 0
    %2920 = vmatmul.mubr.bf16.gmra.mxu0 %v2769
    %v2921 = vpop.f32.mrf.mxu0
    %v2922 = vadd.f32 0.0, %v2921
    %v2923 = vpop.f32.mrf.mxu0
    %v2924 = vpop.f32.mrf.mxu0
    %v2925 = vadd.f32 0.0, %v2924
    %v2926 = vpop.f32.mrf.mxu0
    %2927 = vmatprep.mubr.bf16.mxu0 0
    %2928 = vmatmul.mubr.bf16.gmra.mxu0 %v2772
    %v2929 = vpop.f32.mrf.mxu0
    %v2930 = vadd.f32 0.0, %v2929
    %v2931 = vpop.f32.mrf.mxu0
    %v2932 = vpop.f32.mrf.mxu0
    %v2933 = vadd.f32 0.0, %v2932
    %v2934 = vpop.f32.mrf.mxu0
    %2935 = vmatprep.mubr.bf16.mxu0 0
    %2936 = vmatmul.mubr.bf16.gmra.mxu0 %v2775
    %v2937 = vpop.f32.mrf.mxu0
    %v2938 = vadd.f32 0.0, %v2937
    %v2939 = vpop.f32.mrf.mxu0
    %v2940 = vpop.f32.mrf.mxu0
    %v2941 = vadd.f32 0.0, %v2940
    %v2942 = vpop.f32.mrf.mxu0
    %2943 = vmatprep.mubr.bf16.mxu0 0
    %2944 = vmatmul.mubr.bf16.gmra.mxu0 %v2778
    %v2945 = vpop.f32.mrf.mxu0
    %v2946 = vadd.f32 0.0, %v2945
    %v2947 = vpop.f32.mrf.mxu0
    %v2948 = vpop.f32.mrf.mxu0
    %v2949 = vadd.f32 0.0, %v2948
    %v2950 = vpop.f32.mrf.mxu0
    %2951 = vmatprep.mubr.bf16.mxu0 0
    %2952 = vmatmul.mubr.bf16.gmra.mxu0 %v2781
    %v2953 = vpop.f32.mrf.mxu0
    %v2954 = vadd.f32 0.0, %v2953
    %v2955 = vpop.f32.mrf.mxu0
    %v2956 = vpop.f32.mrf.mxu0
    %v2957 = vadd.f32 0.0, %v2956
    %v2958 = vpop.f32.mrf.mxu0
    %2959 = vmatprep.mubr.bf16.mxu0 0
    %2960 = vmatmul.mubr.bf16.gmra.mxu0 %v2784
    %v2961 = vpop.f32.mrf.mxu0
    %v2962 = vadd.f32 0.0, %v2961
    %v2963 = vpop.f32.mrf.mxu0
    %v2964 = vpop.f32.mrf.mxu0
    %v2965 = vadd.f32 0.0, %v2964
    %v2966 = vpop.f32.mrf.mxu0
    %2967 = vmatprep.mubr.bf16.mxu0 0
    %2968 = vmatmul.mubr.bf16.gmra.mxu0 %v2787
    %v2969 = vpop.f32.mrf.mxu0
    %v2970 = vadd.f32 0.0, %v2969
    %v2971 = vpop.f32.mrf.mxu0
    %v2972 = vpop.f32.mrf.mxu0
    %v2973 = vadd.f32 0.0, %v2972
    %v2974 = vpop.f32.mrf.mxu0
    %2975 = vmatprep.mubr.bf16.mxu0 0
    %2976 = vmatmul.mubr.bf16.gmra.mxu0 %v2790
    %v2977 = vpop.f32.mrf.mxu0
    %v2978 = vadd.f32 0.0, %v2977
    %v2979 = vpop.f32.mrf.mxu0
    %v2980 = vpop.f32.mrf.mxu0
    %v2981 = vadd.f32 0.0, %v2980
    %v2982 = vpop.f32.mrf.mxu0
    %2983 = vmatprep.mubr.bf16.mxu0 0
    %2984 = vmatmul.mubr.bf16.gmra.mxu0 %v2793
    %v2985 = vpop.f32.mrf.mxu0
    %v2986 = vadd.f32 0.0, %v2985
    %v2987 = vpop.f32.mrf.mxu0
    %v2988 = vpop.f32.mrf.mxu0
    %v2989 = vadd.f32 0.0, %v2988
    %v2990 = vpop.f32.mrf.mxu0
    %2991 = vmatprep.mubr.bf16.mxu0 0
    %2992 = vmatmul.mubr.bf16.gmra.mxu0 %v2796
    %v2993 = vpop.f32.mrf.mxu0
    %v2994 = vadd.f32 0.0, %v2993
    %v2995 = vpop.f32.mrf.mxu0
    %v2996 = vpop.f32.mrf.mxu0
    %v2997 = vadd.f32 0.0, %v2996
    %v2998 = vpop.f32.mrf.mxu0
    %2999 = vmatprep.mubr.bf16.mxu0 0
    %3000 = vmatmul.mubr.bf16.gmra.mxu0 %v2799
    %v3001 = vpop.f32.mrf.mxu0
    %v3002 = vadd.f32 0.0, %v3001
    %v3003 = vpop.f32.mrf.mxu0
    %v3004 = vpop.f32.mrf.mxu0
    %v3005 = vadd.f32 0.0, %v3004
    %v3006 = vpop.f32.mrf.mxu0
    %3007 = vmatprep.mubr.bf16.mxu0 0
    %3008 = vmatmul.mubr.bf16.gmra.mxu0 %v2802
    %v3009 = vpop.f32.mrf.mxu0
    %v3010 = vadd.f32 0.0, %v3009
    %v3011 = vpop.f32.mrf.mxu0
    %v3012 = vpop.f32.mrf.mxu0
    %v3013 = vadd.f32 0.0, %v3012
    %v3014 = vpop.f32.mrf.mxu0
    %3015 = vmatprep.mubr.bf16.mxu0 0
    %3016 = vmatmul.mubr.bf16.gmra.mxu0 %v2805
    %v3017 = vpop.f32.mrf.mxu0
    %v3018 = vadd.f32 0.0, %v3017
    %v3019 = vpop.f32.mrf.mxu0
    %v3020 = vpop.f32.mrf.mxu0
    %v3021 = vadd.f32 0.0, %v3020
    %v3022 = vpop.f32.mrf.mxu0
    %3023 = vmatprep.mubr.bf16.mxu0 0
    %3024 = vmatmul.mubr.bf16.gmra.mxu0 %v2808
    %v3025 = vpop.f32.mrf.mxu0
    %v3026 = vadd.f32 0.0, %v3025
    %v3027 = vpop.f32.mrf.mxu0
    %v3028 = vpop.f32.mrf.mxu0
    %v3029 = vadd.f32 0.0, %v3028
    %v3030 = vpop.f32.mrf.mxu0
    %3031 = vmatprep.mubr.bf16.mxu0 0
    %3032 = vmatmul.mubr.bf16.gmra.mxu0 %v2811
    %v3033 = vpop.f32.mrf.mxu0
    %v3034 = vadd.f32 0.0, %v3033
    %v3035 = vpop.f32.mrf.mxu0
    %v3036 = vpop.f32.mrf.mxu0
    %v3037 = vadd.f32 0.0, %v3036
    %v3038 = vpop.f32.mrf.mxu0
    %3039 = vmatprep.mubr.bf16.mxu0 0
    %3040 = vmatmul.mubr.bf16.gmra.mxu0 %v2814
    %v3041 = vpop.f32.mrf.mxu0
    %v3042 = vadd.f32 0.0, %v3041
    %v3043 = vpop.f32.mrf.mxu0
    %v3044 = vpop.f32.mrf.mxu0
    %v3045 = vadd.f32 0.0, %v3044
    %v3046 = vpop.f32.mrf.mxu0
    %3047 = vmatprep.mubr.bf16.mxu0 0
    %3048 = vmatmul.mubr.bf16.gmra.mxu0 %v2817
    %v3049 = vpop.f32.mrf.mxu0
    %v3050 = vadd.f32 0.0, %v3049
    %v3051 = vpop.f32.mrf.mxu0
    %v3052 = vpop.f32.mrf.mxu0
    %v3053 = vadd.f32 0.0, %v3052
    %v3054 = vpop.f32.mrf.mxu0
    %3055 = vmatprep.mubr.bf16.mxu0 0
    %3056 = vmatmul.mubr.bf16.gmra.mxu0 %v2820
    %v3057 = vpop.f32.mrf.mxu0
    %v3058 = vadd.f32 0.0, %v3057
    %v3059 = vpop.f32.mrf.mxu0
    %v3060 = vpop.f32.mrf.mxu0
    %v3061 = vadd.f32 0.0, %v3060
    %v3062 = vpop.f32.mrf.mxu0
    %3063 = vmatprep.mubr.bf16.mxu0 0
    %3064 = vmatmul.mubr.bf16.gmra.mxu0 %v2823
    %v3065 = vpop.f32.mrf.mxu0
    %v3066 = vadd.f32 0.0, %v3065
    %v3067 = vpop.f32.mrf.mxu0
    %v3068 = vpop.f32.mrf.mxu0
    %v3069 = vadd.f32 0.0, %v3068
    %v3070 = vpop.f32.mrf.mxu0
    %3071 = vmatprep.mubr.bf16.mxu0 0
    %3072 = vmatmul.mubr.bf16.gmra.mxu0 %v2826
    %v3073 = vpop.f32.mrf.mxu0
    %v3074 = vadd.f32 0.0, %v3073
    %v3075 = vpop.f32.mrf.mxu0
    %v3076 = vpop.f32.mrf.mxu0
    %v3077 = vadd.f32 0.0, %v3076
    %v3078 = vpop.f32.mrf.mxu0
    %3079 = vmatprep.mubr.bf16.mxu0 0
    %3080 = vmatmul.mubr.bf16.gmra.mxu0 %v2829
    %v3081 = vpop.f32.mrf.mxu0
    %v3082 = vadd.f32 0.0, %v3081
    %v3083 = vpop.f32.mrf.mxu0
    %v3084 = vpop.f32.mrf.mxu0
    %v3085 = vadd.f32 0.0, %v3084
    %v3086 = vpop.f32.mrf.mxu0
    %3087 = vmatprep.mubr.bf16.mxu0 0
    %3088 = vmatmul.mubr.bf16.gmra.mxu0 %v2832
    %v3089 = vpop.f32.mrf.mxu0
    %v3090 = vadd.f32 0.0, %v3089
    %v3091 = vpop.f32.mrf.mxu0
    %v3092 = vpop.f32.mrf.mxu0
    %v3093 = vadd.f32 0.0, %v3092
    %v3094 = vpop.f32.mrf.mxu0
    %3095 = vmatprep.mubr.bf16.mxu0 0
    %3096 = vmatmul.mubr.bf16.gmra.mxu0 %v2835
    %v3097 = vpop.f32.mrf.mxu0
    %v3098 = vadd.f32 0.0, %v3097
    %v3099 = vpop.f32.mrf.mxu0
    %v3100 = vpop.f32.mrf.mxu0
    %v3101 = vadd.f32 0.0, %v3100
    %v3102 = vpop.f32.mrf.mxu0
    %3103 = vmatprep.mubr.bf16.mxu0 0
    %3104 = vmatmul.mubr.bf16.gmra.mxu0 %v2838
    %v3105 = vpop.f32.mrf.mxu0
    %v3106 = vadd.f32 0.0, %v3105
    %v3107 = vpop.f32.mrf.mxu0
    %v3108 = vpop.f32.mrf.mxu0
    %v3109 = vadd.f32 0.0, %v3108
    %v3110 = vpop.f32.mrf.mxu0
    %3111 = vmatprep.mubr.bf16.mxu0 0
    %3112 = vmatmul.mubr.bf16.gmra.mxu0 %v2841
    %v3113 = vpop.f32.mrf.mxu0
    %v3114 = vadd.f32 0.0, %v3113
    %v3115 = vpop.f32.mrf.mxu0
    %v3116 = vpop.f32.mrf.mxu0
    %v3117 = vadd.f32 0.0, %v3116
    %v3118 = vpop.f32.mrf.mxu0
    %3119 = vmatprep.mubr.bf16.mxu0 0
    %3120 = vmatmul.mubr.bf16.gmra.mxu0 %v2844
    %v3121 = vpop.f32.mrf.mxu0
    %v3122 = vadd.f32 0.0, %v3121
    %v3123 = vpop.f32.mrf.mxu0
    %v3124 = vpop.f32.mrf.mxu0
    %v3125 = vadd.f32 0.0, %v3124
    %v3126 = vpop.f32.mrf.mxu0
    %3127 = vmatprep.mubr.bf16.mxu0 0
    %3128 = vmatmul.mubr.bf16.gmra.mxu0 %v2847
    %v3129 = vpop.f32.mrf.mxu0
    %v3130 = vadd.f32 0.0, %v3129
    %v3131 = vpop.f32.mrf.mxu0
    %v3132 = vpop.f32.mrf.mxu0
    %v3133 = vadd.f32 0.0, %v3132
    %v3134 = vpop.f32.mrf.mxu0
    %3135 = vmatprep.mubr.bf16.mxu0 0
    %3136 = vmatmul.mubr.bf16.gmra.mxu0 %v2850
    %v3137 = vpop.f32.mrf.mxu0
    %v3138 = vadd.f32 0.0, %v3137
    %v3139 = vpop.f32.mrf.mxu0
    %v3140 = vpop.f32.mrf.mxu0
    %v3141 = vadd.f32 0.0, %v3140
    %v3142 = vpop.f32.mrf.mxu0
    %3143 = vdwg.mxu0
    %v3144 = vadd.f32 %v2594, %v2890
    %v3145 = vadd.f32 %v2595, %v2893
    %v3146 = vadd.f32 %v2596, %v2898
    %v3147 = vadd.f32 %v2597, %v2901
    %v3148 = vadd.f32 %v2598, %v2906
    %v3149 = vadd.f32 %v2599, %v2909
    %v3150 = vadd.f32 %v2600, %v2914
    %v3151 = vadd.f32 %v2601, %v2917
    %v3152 = vadd.f32 %v2602, %v2922
    %v3153 = vadd.f32 %v2603, %v2925
    %v3154 = vadd.f32 %v2604, %v2930
    %v3155 = vadd.f32 %v2605, %v2933
    %v3156 = vadd.f32 %v2606, %v2938
    %v3157 = vadd.f32 %v2607, %v2941
    %v3158 = vadd.f32 %v2608, %v2946
    %v3159 = vadd.f32 %v2609, %v2949
    %v3160 = vadd.f32 %v2610, %v2954
    %v3161 = vadd.f32 %v2611, %v2957
    %v3162 = vadd.f32 %v2612, %v2962
    %v3163 = vadd.f32 %v2613, %v2965
    %v3164 = vadd.f32 %v2614, %v2970
    %v3165 = vadd.f32 %v2615, %v2973
    %v3166 = vadd.f32 %v2616, %v2978
    %v3167 = vadd.f32 %v2617, %v2981
    %v3168 = vadd.f32 %v2618, %v2986
    %v3169 = vadd.f32 %v2619, %v2989
    %v3170 = vadd.f32 %v2620, %v2994
    %v3171 = vadd.f32 %v2621, %v2997
    %v3172 = vadd.f32 %v2622, %v3002
    %v3173 = vadd.f32 %v2623, %v3005
    %v3174 = vadd.f32 %v2624, %v3010
    %v3175 = vadd.f32 %v2625, %v3013
    %v3176 = vadd.f32 %v2626, %v3018
    %v3177 = vadd.f32 %v2627, %v3021
    %v3178 = vadd.f32 %v2628, %v3026
    %v3179 = vadd.f32 %v2629, %v3029
    %v3180 = vadd.f32 %v2630, %v3034
    %v3181 = vadd.f32 %v2631, %v3037
    %v3182 = vadd.f32 %v2632, %v3042
    %v3183 = vadd.f32 %v2633, %v3045
    %v3184 = vadd.f32 %v2634, %v3050
    %v3185 = vadd.f32 %v2635, %v3053
    %v3186 = vadd.f32 %v2636, %v3058
    %v3187 = vadd.f32 %v2637, %v3061
    %v3188 = vadd.f32 %v2638, %v3066
    %v3189 = vadd.f32 %v2639, %v3069
    %v3190 = vadd.f32 %v2640, %v3074
    %v3191 = vadd.f32 %v2641, %v3077
    %v3192 = vadd.f32 %v2642, %v3082
    %v3193 = vadd.f32 %v2643, %v3085
    %v3194 = vadd.f32 %v2644, %v3090
    %v3195 = vadd.f32 %v2645, %v3093
    %v3196 = vadd.f32 %v2646, %v3098
    %v3197 = vadd.f32 %v2647, %v3101
    %v3198 = vadd.f32 %v2648, %v3106
    %v3199 = vadd.f32 %v2649, %v3109
    %v3200 = vadd.f32 %v2650, %v3114
    %v3201 = vadd.f32 %v2651, %v3117
    %v3202 = vadd.f32 %v2652, %v3122
    %v3203 = vadd.f32 %v2653, %v3125
    %v3204 = vadd.f32 %v2654, %v3130
    %v3205 = vadd.f32 %v2655, %v3133
    %v3206 = vadd.f32 %v2656, %v3138
    %v3207 = vadd.f32 %v2657, %v3141
    %s3208 = scalar_lea.vmem %s0, 48
    %v3209 = vld [vmem:[%s3208] sm:$0xff]
    %v3210 = vld [vmem:[%s3208 + $0x8] sm:$0xff]
    %v3211 = vld [vmem:[%s3208 + $0x18] sm:$0xff]
    %v3212 = vld [vmem:[%s3208 + $0x20] sm:$0xff]
    %v3213 = vld [vmem:[%s3208 + $0x30] sm:$0xff]
    %v3214 = vld [vmem:[%s3208 + $0x38] sm:$0xff]
    %v3215 = vld [vmem:[%s3208 + $0x48] sm:$0xff]
    %v3216 = vld [vmem:[%s3208 + $0x50] sm:$0xff]
    %v3217 = vld [vmem:[%s3208 + $0x60] sm:$0xff]
    %v3218 = vld [vmem:[%s3208 + $0x68] sm:$0xff]
    %v3219 = vld [vmem:[%s3208 + $0x78] sm:$0xff]
    %v3220 = vld [vmem:[%s3208 + $0x80] sm:$0xff]
    %v3221 = vld [vmem:[%s3208 + $0x90] sm:$0xff]
    %v3222 = vld [vmem:[%s3208 + $0x98] sm:$0xff]
    %v3223 = vld [vmem:[%s3208 + $0xa8] sm:$0xff]
    %v3224 = vld [vmem:[%s3208 + $0xb0] sm:$0xff]
    %v3225 = vld [vmem:[%s3208 + $0xc0] sm:$0xff]
    %v3226 = vld [vmem:[%s3208 + $0xc8] sm:$0xff]
    %v3227 = vld [vmem:[%s3208 + $0xd8] sm:$0xff]
    %v3228 = vld [vmem:[%s3208 + $0xe0] sm:$0xff]
    %v3229 = vld [vmem:[%s3208 + $0xf0] sm:$0xff]
    %v3230 = vld [vmem:[%s3208 + $0xf8] sm:$0xff]
    %v3231 = vld [vmem:[%s3208 + $0x108] sm:$0xff]
    %v3232 = vld [vmem:[%s3208 + $0x110] sm:$0xff]
    %v3233 = vld [vmem:[%s3208 + $0x120] sm:$0xff]
    %v3234 = vld [vmem:[%s3208 + $0x128] sm:$0xff]
    %v3235 = vld [vmem:[%s3208 + $0x138] sm:$0xff]
    %v3236 = vld [vmem:[%s3208 + $0x140] sm:$0xff]
    %v3237 = vld [vmem:[%s3208 + $0x150] sm:$0xff]
    %v3238 = vld [vmem:[%s3208 + $0x158] sm:$0xff]
    %v3239 = vld [vmem:[%s3208 + $0x168] sm:$0xff]
    %v3240 = vld [vmem:[%s3208 + $0x170] sm:$0xff]
    %v3241 = vld [vmem:[%s3208 + $0x1b0] sm:$0xff]
    %v3242 = vld [vmem:[%s3208 + $0x1b8] sm:$0xff]
    %v3243 = vld [vmem:[%s3208 + $0x1c8] sm:$0xff]
    %v3244 = vld [vmem:[%s3208 + $0x1d0] sm:$0xff]
    %v3245 = vld [vmem:[%s3208 + $0x1e0] sm:$0xff]
    %v3246 = vld [vmem:[%s3208 + $0x1e8] sm:$0xff]
    %v3247 = vld [vmem:[%s3208 + $0x1f8] sm:$0xff]
    %v3248 = vld [vmem:[%s3208 + $0x200] sm:$0xff]
    %v3249 = vld [vmem:[%s3208 + $0x210] sm:$0xff]
    %v3250 = vld [vmem:[%s3208 + $0x218] sm:$0xff]
    %v3251 = vld [vmem:[%s3208 + $0x228] sm:$0xff]
    %v3252 = vld [vmem:[%s3208 + $0x230] sm:$0xff]
    %v3253 = vld [vmem:[%s3208 + $0x240] sm:$0xff]
    %v3254 = vld [vmem:[%s3208 + $0x248] sm:$0xff]
    %v3255 = vld [vmem:[%s3208 + $0x258] sm:$0xff]
    %v3256 = vld [vmem:[%s3208 + $0x260] sm:$0xff]
    %v3257 = vld [vmem:[%s3208 + $0x270] sm:$0xff]
    %v3258 = vld [vmem:[%s3208 + $0x278] sm:$0xff]
    %v3259 = vld [vmem:[%s3208 + $0x288] sm:$0xff]
    %v3260 = vld [vmem:[%s3208 + $0x290] sm:$0xff]
    %v3261 = vld [vmem:[%s3208 + $0x2a0] sm:$0xff]
    %v3262 = vld [vmem:[%s3208 + $0x2a8] sm:$0xff]
    %v3263 = vld [vmem:[%s3208 + $0x2b8] sm:$0xff]
    %v3264 = vld [vmem:[%s3208 + $0x2c0] sm:$0xff]
    %v3265 = vld [vmem:[%s3208 + $0x2d0] sm:$0xff]
    %v3266 = vld [vmem:[%s3208 + $0x2d8] sm:$0xff]
    %v3267 = vld [vmem:[%s3208 + $0x2e8] sm:$0xff]
    %v3268 = vld [vmem:[%s3208 + $0x2f0] sm:$0xff]
    %v3269 = vld [vmem:[%s3208 + $0x300] sm:$0xff]
    %v3270 = vld [vmem:[%s3208 + $0x308] sm:$0xff]
    %v3271 = vld [vmem:[%s3208 + $0x318] sm:$0xff]
    %v3272 = vld [vmem:[%s3208 + $0x320] sm:$0xff]
    %v3273 = vpack.c.bf16 %v3210, %v3209
    %v3274 = vpack.c.bf16 %v3212, %v3211
    %v3275 = vpack.c.bf16 %v3214, %v3213
    %v3276 = vpack.c.bf16 %v3216, %v3215
    %v3277 = vpack.c.bf16 %v3218, %v3217
    %v3278 = vpack.c.bf16 %v3220, %v3219
    %v3279 = vpack.c.bf16 %v3222, %v3221
    %v3280 = vpack.c.bf16 %v3224, %v3223
    %v3281 = vpack.c.bf16 %v3226, %v3225
    %v3282 = vpack.c.bf16 %v3228, %v3227
    %v3283 = vpack.c.bf16 %v3230, %v3229
    %v3284 = vpack.c.bf16 %v3232, %v3231
    %v3285 = vpack.c.bf16 %v3234, %v3233
    %v3286 = vpack.c.bf16 %v3236, %v3235
    %v3287 = vpack.c.bf16 %v3238, %v3237
    %v3288 = vpack.c.bf16 %v3240, %v3239
    %v3289 = vpack.c.bf16 %v3242, %v3241
    %v3290 = vpack.c.bf16 %v3244, %v3243
    %v3291 = vpack.c.bf16 %v3246, %v3245
    %v3292 = vpack.c.bf16 %v3248, %v3247
    %v3293 = vpack.c.bf16 %v3250, %v3249
    %v3294 = vpack.c.bf16 %v3252, %v3251
    %v3295 = vpack.c.bf16 %v3254, %v3253
    %v3296 = vpack.c.bf16 %v3256, %v3255
    %v3297 = vpack.c.bf16 %v3258, %v3257
    %v3298 = vpack.c.bf16 %v3260, %v3259
    %v3299 = vpack.c.bf16 %v3262, %v3261
    %v3300 = vpack.c.bf16 %v3264, %v3263
    %v3301 = vpack.c.bf16 %v3266, %v3265
    %v3302 = vpack.c.bf16 %v3268, %v3267
    %v3303 = vpack.c.bf16 %v3270, %v3269
    %v3304 = vpack.c.bf16 %v3272, %v3271
    %s3305 = scalar_lea.vmem %s1, 12
    %v3306 = vld [vmem:[%s3305] sm:$0x3]
    %v3308 = vsel %vm229, %v3273, 0
    %v3311 = vsel %vm229, %v3274, 0
    %v3314 = vsel %vm229, %v3275, 0
    %v3317 = vsel %vm229, %v3276, 0
    %v3320 = vsel %vm229, %v3277, 0
    %v3323 = vsel %vm229, %v3278, 0
    %v3326 = vsel %vm229, %v3279, 0
    %v3329 = vsel %vm229, %v3280, 0
    %v3332 = vsel %vm229, %v3281, 0
    %v3335 = vsel %vm229, %v3282, 0
    %v3338 = vsel %vm229, %v3283, 0
    %v3341 = vsel %vm229, %v3284, 0
    %v3344 = vsel %vm229, %v3285, 0
    %v3347 = vsel %vm229, %v3286, 0
    %v3350 = vsel %vm229, %v3287, 0
    %v3353 = vsel %vm229, %v3288, 0
    %v3356 = vsel %vm229, %v3289, 0
    %v3359 = vsel %vm229, %v3290, 0
    %v3362 = vsel %vm229, %v3291, 0
    %v3365 = vsel %vm229, %v3292, 0
    %v3368 = vsel %vm229, %v3293, 0
    %v3371 = vsel %vm229, %v3294, 0
    %v3374 = vsel %vm229, %v3295, 0
    %v3377 = vsel %vm229, %v3296, 0
    %v3380 = vsel %vm229, %v3297, 0
    %v3383 = vsel %vm229, %v3298, 0
    %v3386 = vsel %vm229, %v3299, 0
    %v3389 = vsel %vm229, %v3300, 0
    %v3392 = vsel %vm229, %v3301, 0
    %v3395 = vsel %vm229, %v3302, 0
    %v3398 = vsel %vm229, %v3303, 0
    %v3401 = vsel %vm229, %v3304, 0
    %v3404 = vsel %vm326, %v3306, 0
    %3406 = vmatprep.subr.bf16.mxu0 0
    %3407 = vmatpush1.bf16.msra.mxu0 0
    %3408 = vmatprep.subr.bf16.mxu0 0
    %3409 = vmatpush1.bf16.msra.mxu0 0
    %3410 = vmatprep.subr.bf16.mxu0 0
    %3411 = vmatpush1.bf16.msra.mxu0 0
    %3412 = vmatprep.subr.bf16.mxu0 0
    %3413 = vmatpush1.bf16.msra.mxu0 0
    %3414 = vmatprep.subr.bf16.mxu0 0
    %3415 = vmatpush1.bf16.msra.mxu0 0
    %3416 = vmatprep.subr.bf16.mxu0 0
    %3417 = vmatpush1.bf16.msra.mxu0 0
    %3418 = vmatprep.subr.bf16.mxu0 0
    %3419 = vmatpush1.bf16.msra.mxu0 0
    %3420 = vmatprep.subr.bf16.mxu0 0
    %3421 = vmatpush1.bf16.msra.mxu0 %v3404
    %3422 = vmatprep.subr.bf16.mxu0 0
    %3423 = vmatpush2.bf16.msra.mxu0 0
    %3424 = vmatprep.subr.bf16.mxu0 0
    %3425 = vmatpush2.bf16.msra.mxu0 0
    %3426 = vmatprep.subr.bf16.mxu0 0
    %3427 = vmatpush2.bf16.msra.mxu0 0
    %3428 = vmatprep.subr.bf16.mxu0 0
    %3429 = vmatpush2.bf16.msra.mxu0 0
    %3430 = vmatprep.subr.bf16.mxu0 0
    %3431 = vmatpush2.bf16.msra.mxu0 0
    %3432 = vmatprep.subr.bf16.mxu0 0
    %3433 = vmatpush2.bf16.msra.mxu0 0
    %3434 = vmatprep.subr.bf16.mxu0 0
    %3435 = vmatpush2.bf16.msra.mxu0 0
    %3436 = vmatprep.subr.bf16.mxu0 0
    %3437 = vmatpush2.bf16.msra.mxu0 0
    %3438 = vmatprep.mubr.bf16.mxu0 0
    %3439 = vmatmul.mubr.bf16.gmra.mxu0 %v3308
    %v3440 = vpop.f32.mrf.mxu0
    %v3441 = vadd.f32 0.0, %v3440
    %v3442 = vpop.f32.mrf.mxu0
    %v3443 = vpop.f32.mrf.mxu0
    %v3444 = vadd.f32 0.0, %v3443
    %v3445 = vpop.f32.mrf.mxu0
    %3446 = vmatprep.mubr.bf16.mxu0 0
    %3447 = vmatmul.mubr.bf16.gmra.mxu0 %v3311
    %v3448 = vpop.f32.mrf.mxu0
    %v3449 = vadd.f32 0.0, %v3448
    %v3450 = vpop.f32.mrf.mxu0
    %v3451 = vpop.f32.mrf.mxu0
    %v3452 = vadd.f32 0.0, %v3451
    %v3453 = vpop.f32.mrf.mxu0
    %3454 = vmatprep.mubr.bf16.mxu0 0
    %3455 = vmatmul.mubr.bf16.gmra.mxu0 %v3314
    %v3456 = vpop.f32.mrf.mxu0
    %v3457 = vadd.f32 0.0, %v3456
    %v3458 = vpop.f32.mrf.mxu0
    %v3459 = vpop.f32.mrf.mxu0
    %v3460 = vadd.f32 0.0, %v3459
    %v3461 = vpop.f32.mrf.mxu0
    %3462 = vmatprep.mubr.bf16.mxu0 0
    %3463 = vmatmul.mubr.bf16.gmra.mxu0 %v3317
    %v3464 = vpop.f32.mrf.mxu0
    %v3465 = vadd.f32 0.0, %v3464
    %v3466 = vpop.f32.mrf.mxu0
    %v3467 = vpop.f32.mrf.mxu0
    %v3468 = vadd.f32 0.0, %v3467
    %v3469 = vpop.f32.mrf.mxu0
    %3470 = vmatprep.mubr.bf16.mxu0 0
    %3471 = vmatmul.mubr.bf16.gmra.mxu0 %v3320
    %v3472 = vpop.f32.mrf.mxu0
    %v3473 = vadd.f32 0.0, %v3472
    %v3474 = vpop.f32.mrf.mxu0
    %v3475 = vpop.f32.mrf.mxu0
    %v3476 = vadd.f32 0.0, %v3475
    %v3477 = vpop.f32.mrf.mxu0
    %3478 = vmatprep.mubr.bf16.mxu0 0
    %3479 = vmatmul.mubr.bf16.gmra.mxu0 %v3323
    %v3480 = vpop.f32.mrf.mxu0
    %v3481 = vadd.f32 0.0, %v3480
    %v3482 = vpop.f32.mrf.mxu0
    %v3483 = vpop.f32.mrf.mxu0
    %v3484 = vadd.f32 0.0, %v3483
    %v3485 = vpop.f32.mrf.mxu0
    %3486 = vmatprep.mubr.bf16.mxu0 0
    %3487 = vmatmul.mubr.bf16.gmra.mxu0 %v3326
    %v3488 = vpop.f32.mrf.mxu0
    %v3489 = vadd.f32 0.0, %v3488
    %v3490 = vpop.f32.mrf.mxu0
    %v3491 = vpop.f32.mrf.mxu0
    %v3492 = vadd.f32 0.0, %v3491
    %v3493 = vpop.f32.mrf.mxu0
    %3494 = vmatprep.mubr.bf16.mxu0 0
    %3495 = vmatmul.mubr.bf16.gmra.mxu0 %v3329
    %v3496 = vpop.f32.mrf.mxu0
    %v3497 = vadd.f32 0.0, %v3496
    %v3498 = vpop.f32.mrf.mxu0
    %v3499 = vpop.f32.mrf.mxu0
    %v3500 = vadd.f32 0.0, %v3499
    %v3501 = vpop.f32.mrf.mxu0
    %3502 = vmatprep.mubr.bf16.mxu0 0
    %3503 = vmatmul.mubr.bf16.gmra.mxu0 %v3332
    %v3504 = vpop.f32.mrf.mxu0
    %v3505 = vadd.f32 0.0, %v3504
    %v3506 = vpop.f32.mrf.mxu0
    %v3507 = vpop.f32.mrf.mxu0
    %v3508 = vadd.f32 0.0, %v3507
    %v3509 = vpop.f32.mrf.mxu0
    %3510 = vmatprep.mubr.bf16.mxu0 0
    %3511 = vmatmul.mubr.bf16.gmra.mxu0 %v3335
    %v3512 = vpop.f32.mrf.mxu0
    %v3513 = vadd.f32 0.0, %v3512
    %v3514 = vpop.f32.mrf.mxu0
    %v3515 = vpop.f32.mrf.mxu0
    %v3516 = vadd.f32 0.0, %v3515
    %v3517 = vpop.f32.mrf.mxu0
    %3518 = vmatprep.mubr.bf16.mxu0 0
    %3519 = vmatmul.mubr.bf16.gmra.mxu0 %v3338
    %v3520 = vpop.f32.mrf.mxu0
    %v3521 = vadd.f32 0.0, %v3520
    %v3522 = vpop.f32.mrf.mxu0
    %v3523 = vpop.f32.mrf.mxu0
    %v3524 = vadd.f32 0.0, %v3523
    %v3525 = vpop.f32.mrf.mxu0
    %3526 = vmatprep.mubr.bf16.mxu0 0
    %3527 = vmatmul.mubr.bf16.gmra.mxu0 %v3341
    %v3528 = vpop.f32.mrf.mxu0
    %v3529 = vadd.f32 0.0, %v3528
    %v3530 = vpop.f32.mrf.mxu0
    %v3531 = vpop.f32.mrf.mxu0
    %v3532 = vadd.f32 0.0, %v3531
    %v3533 = vpop.f32.mrf.mxu0
    %3534 = vmatprep.mubr.bf16.mxu0 0
    %3535 = vmatmul.mubr.bf16.gmra.mxu0 %v3344
    %v3536 = vpop.f32.mrf.mxu0
    %v3537 = vadd.f32 0.0, %v3536
    %v3538 = vpop.f32.mrf.mxu0
    %v3539 = vpop.f32.mrf.mxu0
    %v3540 = vadd.f32 0.0, %v3539
    %v3541 = vpop.f32.mrf.mxu0
    %3542 = vmatprep.mubr.bf16.mxu0 0
    %3543 = vmatmul.mubr.bf16.gmra.mxu0 %v3347
    %v3544 = vpop.f32.mrf.mxu0
    %v3545 = vadd.f32 0.0, %v3544
    %v3546 = vpop.f32.mrf.mxu0
    %v3547 = vpop.f32.mrf.mxu0
    %v3548 = vadd.f32 0.0, %v3547
    %v3549 = vpop.f32.mrf.mxu0
    %3550 = vmatprep.mubr.bf16.mxu0 0
    %3551 = vmatmul.mubr.bf16.gmra.mxu0 %v3350
    %v3552 = vpop.f32.mrf.mxu0
    %v3553 = vadd.f32 0.0, %v3552
    %v3554 = vpop.f32.mrf.mxu0
    %v3555 = vpop.f32.mrf.mxu0
    %v3556 = vadd.f32 0.0, %v3555
    %v3557 = vpop.f32.mrf.mxu0
    %3558 = vmatprep.mubr.bf16.mxu0 0
    %3559 = vmatmul.mubr.bf16.gmra.mxu0 %v3353
    %v3560 = vpop.f32.mrf.mxu0
    %v3561 = vadd.f32 0.0, %v3560
    %v3562 = vpop.f32.mrf.mxu0
    %v3563 = vpop.f32.mrf.mxu0
    %v3564 = vadd.f32 0.0, %v3563
    %v3565 = vpop.f32.mrf.mxu0
    %3566 = vmatprep.mubr.bf16.mxu0 0
    %3567 = vmatmul.mubr.bf16.gmra.mxu0 %v3356
    %v3568 = vpop.f32.mrf.mxu0
    %v3569 = vadd.f32 0.0, %v3568
    %v3570 = vpop.f32.mrf.mxu0
    %v3571 = vpop.f32.mrf.mxu0
    %v3572 = vadd.f32 0.0, %v3571
    %v3573 = vpop.f32.mrf.mxu0
    %3574 = vmatprep.mubr.bf16.mxu0 0
    %3575 = vmatmul.mubr.bf16.gmra.mxu0 %v3359
    %v3576 = vpop.f32.mrf.mxu0
    %v3577 = vadd.f32 0.0, %v3576
    %v3578 = vpop.f32.mrf.mxu0
    %v3579 = vpop.f32.mrf.mxu0
    %v3580 = vadd.f32 0.0, %v3579
    %v3581 = vpop.f32.mrf.mxu0
    %3582 = vmatprep.mubr.bf16.mxu0 0
    %3583 = vmatmul.mubr.bf16.gmra.mxu0 %v3362
    %v3584 = vpop.f32.mrf.mxu0
    %v3585 = vadd.f32 0.0, %v3584
    %v3586 = vpop.f32.mrf.mxu0
    %v3587 = vpop.f32.mrf.mxu0
    %v3588 = vadd.f32 0.0, %v3587
    %v3589 = vpop.f32.mrf.mxu0
    %3590 = vmatprep.mubr.bf16.mxu0 0
    %3591 = vmatmul.mubr.bf16.gmra.mxu0 %v3365
    %v3592 = vpop.f32.mrf.mxu0
    %v3593 = vadd.f32 0.0, %v3592
    %v3594 = vpop.f32.mrf.mxu0
    %v3595 = vpop.f32.mrf.mxu0
    %v3596 = vadd.f32 0.0, %v3595
    %v3597 = vpop.f32.mrf.mxu0
    %3598 = vmatprep.mubr.bf16.mxu0 0
    %3599 = vmatmul.mubr.bf16.gmra.mxu0 %v3368
    %v3600 = vpop.f32.mrf.mxu0
    %v3601 = vadd.f32 0.0, %v3600
    %v3602 = vpop.f32.mrf.mxu0
    %v3603 = vpop.f32.mrf.mxu0
    %v3604 = vadd.f32 0.0, %v3603
    %v3605 = vpop.f32.mrf.mxu0
    %3606 = vmatprep.mubr.bf16.mxu0 0
    %3607 = vmatmul.mubr.bf16.gmra.mxu0 %v3371
    %v3608 = vpop.f32.mrf.mxu0
    %v3609 = vadd.f32 0.0, %v3608
    %v3610 = vpop.f32.mrf.mxu0
    %v3611 = vpop.f32.mrf.mxu0
    %v3612 = vadd.f32 0.0, %v3611
    %v3613 = vpop.f32.mrf.mxu0
    %3614 = vmatprep.mubr.bf16.mxu0 0
    %3615 = vmatmul.mubr.bf16.gmra.mxu0 %v3374
    %v3616 = vpop.f32.mrf.mxu0
    %v3617 = vadd.f32 0.0, %v3616
    %v3618 = vpop.f32.mrf.mxu0
    %v3619 = vpop.f32.mrf.mxu0
    %v3620 = vadd.f32 0.0, %v3619
    %v3621 = vpop.f32.mrf.mxu0
    %3622 = vmatprep.mubr.bf16.mxu0 0
    %3623 = vmatmul.mubr.bf16.gmra.mxu0 %v3377
    %v3624 = vpop.f32.mrf.mxu0
    %v3625 = vadd.f32 0.0, %v3624
    %v3626 = vpop.f32.mrf.mxu0
    %v3627 = vpop.f32.mrf.mxu0
    %v3628 = vadd.f32 0.0, %v3627
    %v3629 = vpop.f32.mrf.mxu0
    %3630 = vmatprep.mubr.bf16.mxu0 0
    %3631 = vmatmul.mubr.bf16.gmra.mxu0 %v3380
    %v3632 = vpop.f32.mrf.mxu0
    %v3633 = vadd.f32 0.0, %v3632
    %v3634 = vpop.f32.mrf.mxu0
    %v3635 = vpop.f32.mrf.mxu0
    %v3636 = vadd.f32 0.0, %v3635
    %v3637 = vpop.f32.mrf.mxu0
    %3638 = vmatprep.mubr.bf16.mxu0 0
    %3639 = vmatmul.mubr.bf16.gmra.mxu0 %v3383
    %v3640 = vpop.f32.mrf.mxu0
    %v3641 = vadd.f32 0.0, %v3640
    %v3642 = vpop.f32.mrf.mxu0
    %v3643 = vpop.f32.mrf.mxu0
    %v3644 = vadd.f32 0.0, %v3643
    %v3645 = vpop.f32.mrf.mxu0
    %3646 = vmatprep.mubr.bf16.mxu0 0
    %3647 = vmatmul.mubr.bf16.gmra.mxu0 %v3386
    %v3648 = vpop.f32.mrf.mxu0
    %v3649 = vadd.f32 0.0, %v3648
    %v3650 = vpop.f32.mrf.mxu0
    %v3651 = vpop.f32.mrf.mxu0
    %v3652 = vadd.f32 0.0, %v3651
    %v3653 = vpop.f32.mrf.mxu0
    %3654 = vmatprep.mubr.bf16.mxu0 0
    %3655 = vmatmul.mubr.bf16.gmra.mxu0 %v3389
    %v3656 = vpop.f32.mrf.mxu0
    %v3657 = vadd.f32 0.0, %v3656
    %v3658 = vpop.f32.mrf.mxu0
    %v3659 = vpop.f32.mrf.mxu0
    %v3660 = vadd.f32 0.0, %v3659
    %v3661 = vpop.f32.mrf.mxu0
    %3662 = vmatprep.mubr.bf16.mxu0 0
    %3663 = vmatmul.mubr.bf16.gmra.mxu0 %v3392
    %v3664 = vpop.f32.mrf.mxu0
    %v3665 = vadd.f32 0.0, %v3664
    %v3666 = vpop.f32.mrf.mxu0
    %v3667 = vpop.f32.mrf.mxu0
    %v3668 = vadd.f32 0.0, %v3667
    %v3669 = vpop.f32.mrf.mxu0
    %3670 = vmatprep.mubr.bf16.mxu0 0
    %3671 = vmatmul.mubr.bf16.gmra.mxu0 %v3395
    %v3672 = vpop.f32.mrf.mxu0
    %v3673 = vadd.f32 0.0, %v3672
    %v3674 = vpop.f32.mrf.mxu0
    %v3675 = vpop.f32.mrf.mxu0
    %v3676 = vadd.f32 0.0, %v3675
    %v3677 = vpop.f32.mrf.mxu0
    %3678 = vmatprep.mubr.bf16.mxu0 0
    %3679 = vmatmul.mubr.bf16.gmra.mxu0 %v3398
    %v3680 = vpop.f32.mrf.mxu0
    %v3681 = vadd.f32 0.0, %v3680
    %v3682 = vpop.f32.mrf.mxu0
    %v3683 = vpop.f32.mrf.mxu0
    %v3684 = vadd.f32 0.0, %v3683
    %v3685 = vpop.f32.mrf.mxu0
    %3686 = vmatprep.mubr.bf16.mxu0 0
    %3687 = vmatmul.mubr.bf16.gmra.mxu0 %v3401
    %v3688 = vpop.f32.mrf.mxu0
    %v3689 = vadd.f32 0.0, %v3688
    %v3690 = vpop.f32.mrf.mxu0
    %v3691 = vpop.f32.mrf.mxu0
    %v3692 = vadd.f32 0.0, %v3691
    %v3693 = vpop.f32.mrf.mxu0
    %3694 = vdwg.mxu0
    %v3695 = vadd.f32 %v3144, %v3441
    %v3696 = vadd.f32 %v3145, %v3444
    %v3697 = vadd.f32 %v3146, %v3449
    %v3698 = vadd.f32 %v3147, %v3452
    %v3699 = vadd.f32 %v3148, %v3457
    %v3700 = vadd.f32 %v3149, %v3460
    %v3701 = vadd.f32 %v3150, %v3465
    %v3702 = vadd.f32 %v3151, %v3468
    %v3703 = vadd.f32 %v3152, %v3473
    %v3704 = vadd.f32 %v3153, %v3476
    %v3705 = vadd.f32 %v3154, %v3481
    %v3706 = vadd.f32 %v3155, %v3484
    %v3707 = vadd.f32 %v3156, %v3489
    %v3708 = vadd.f32 %v3157, %v3492
    %v3709 = vadd.f32 %v3158, %v3497
    %v3710 = vadd.f32 %v3159, %v3500
    %v3711 = vadd.f32 %v3160, %v3505
    %v3712 = vadd.f32 %v3161, %v3508
    %v3713 = vadd.f32 %v3162, %v3513
    %v3714 = vadd.f32 %v3163, %v3516
    %v3715 = vadd.f32 %v3164, %v3521
    %v3716 = vadd.f32 %v3165, %v3524
    %v3717 = vadd.f32 %v3166, %v3529
    %v3718 = vadd.f32 %v3167, %v3532
    %v3719 = vadd.f32 %v3168, %v3537
    %v3720 = vadd.f32 %v3169, %v3540
    %v3721 = vadd.f32 %v3170, %v3545
    %v3722 = vadd.f32 %v3171, %v3548
    %v3723 = vadd.f32 %v3172, %v3553
    %v3724 = vadd.f32 %v3173, %v3556
    %v3725 = vadd.f32 %v3174, %v3561
    %v3726 = vadd.f32 %v3175, %v3564
    %v3727 = vadd.f32 %v3176, %v3569
    %v3728 = vadd.f32 %v3177, %v3572
    %v3729 = vadd.f32 %v3178, %v3577
    %v3730 = vadd.f32 %v3179, %v3580
    %v3731 = vadd.f32 %v3180, %v3585
    %v3732 = vadd.f32 %v3181, %v3588
    %v3733 = vadd.f32 %v3182, %v3593
    %v3734 = vadd.f32 %v3183, %v3596
    %v3735 = vadd.f32 %v3184, %v3601
    %v3736 = vadd.f32 %v3185, %v3604
    %v3737 = vadd.f32 %v3186, %v3609
    %v3738 = vadd.f32 %v3187, %v3612
    %v3739 = vadd.f32 %v3188, %v3617
    %v3740 = vadd.f32 %v3189, %v3620
    %v3741 = vadd.f32 %v3190, %v3625
    %v3742 = vadd.f32 %v3191, %v3628
    %v3743 = vadd.f32 %v3192, %v3633
    %v3744 = vadd.f32 %v3193, %v3636
    %v3745 = vadd.f32 %v3194, %v3641
    %v3746 = vadd.f32 %v3195, %v3644
    %v3747 = vadd.f32 %v3196, %v3649
    %v3748 = vadd.f32 %v3197, %v3652
    %v3749 = vadd.f32 %v3198, %v3657
    %v3750 = vadd.f32 %v3199, %v3660
    %v3751 = vadd.f32 %v3200, %v3665
    %v3752 = vadd.f32 %v3201, %v3668
    %v3753 = vadd.f32 %v3202, %v3673
    %v3754 = vadd.f32 %v3203, %v3676
    %v3755 = vadd.f32 %v3204, %v3681
    %v3756 = vadd.f32 %v3205, %v3684
    %v3757 = vadd.f32 %v3206, %v3689
    %v3758 = vadd.f32 %v3207, %v3692
    %v3759 = vld [vmem:[%s3208 + $0x1] sm:$0xff]
    %v3760 = vld [vmem:[%s3208 + $0x9] sm:$0xff]
    %v3761 = vld [vmem:[%s3208 + $0x19] sm:$0xff]
    %v3762 = vld [vmem:[%s3208 + $0x21] sm:$0xff]
    %v3763 = vld [vmem:[%s3208 + $0x31] sm:$0xff]
    %v3764 = vld [vmem:[%s3208 + $0x39] sm:$0xff]
    %v3765 = vld [vmem:[%s3208 + $0x49] sm:$0xff]
    %v3766 = vld [vmem:[%s3208 + $0x51] sm:$0xff]
    %v3767 = vld [vmem:[%s3208 + $0x61] sm:$0xff]
    %v3768 = vld [vmem:[%s3208 + $0x69] sm:$0xff]
    %v3769 = vld [vmem:[%s3208 + $0x79] sm:$0xff]
    %v3770 = vld [vmem:[%s3208 + $0x81] sm:$0xff]
    %v3771 = vld [vmem:[%s3208 + $0x91] sm:$0xff]
    %v3772 = vld [vmem:[%s3208 + $0x99] sm:$0xff]
    %v3773 = vld [vmem:[%s3208 + $0xa9] sm:$0xff]
    %v3774 = vld [vmem:[%s3208 + $0xb1] sm:$0xff]
    %v3775 = vld [vmem:[%s3208 + $0xc1] sm:$0xff]
    %v3776 = vld [vmem:[%s3208 + $0xc9] sm:$0xff]
    %v3777 = vld [vmem:[%s3208 + $0xd9] sm:$0xff]
    %v3778 = vld [vmem:[%s3208 + $0xe1] sm:$0xff]
    %v3779 = vld [vmem:[%s3208 + $0xf1] sm:$0xff]
    %v3780 = vld [vmem:[%s3208 + $0xf9] sm:$0xff]
    %v3781 = vld [vmem:[%s3208 + $0x109] sm:$0xff]
    %v3782 = vld [vmem:[%s3208 + $0x111] sm:$0xff]
    %v3783 = vld [vmem:[%s3208 + $0x121] sm:$0xff]
    %v3784 = vld [vmem:[%s3208 + $0x129] sm:$0xff]
    %v3785 = vld [vmem:[%s3208 + $0x139] sm:$0xff]
    %v3786 = vld [vmem:[%s3208 + $0x141] sm:$0xff]
    %v3787 = vld [vmem:[%s3208 + $0x151] sm:$0xff]
    %v3788 = vld [vmem:[%s3208 + $0x159] sm:$0xff]
    %v3789 = vld [vmem:[%s3208 + $0x169] sm:$0xff]
    %v3790 = vld [vmem:[%s3208 + $0x171] sm:$0xff]
    %v3791 = vld [vmem:[%s3208 + $0x1b1] sm:$0xff]
    %v3792 = vld [vmem:[%s3208 + $0x1b9] sm:$0xff]
    %v3793 = vld [vmem:[%s3208 + $0x1c9] sm:$0xff]
    %v3794 = vld [vmem:[%s3208 + $0x1d1] sm:$0xff]
    %v3795 = vld [vmem:[%s3208 + $0x1e1] sm:$0xff]
    %v3796 = vld [vmem:[%s3208 + $0x1e9] sm:$0xff]
    %v3797 = vld [vmem:[%s3208 + $0x1f9] sm:$0xff]
    %v3798 = vld [vmem:[%s3208 + $0x201] sm:$0xff]
    %v3799 = vld [vmem:[%s3208 + $0x211] sm:$0xff]
    %v3800 = vld [vmem:[%s3208 + $0x219] sm:$0xff]
    %v3801 = vld [vmem:[%s3208 + $0x229] sm:$0xff]
    %v3802 = vld [vmem:[%s3208 + $0x231] sm:$0xff]
    %v3803 = vld [vmem:[%s3208 + $0x241] sm:$0xff]
    %v3804 = vld [vmem:[%s3208 + $0x249] sm:$0xff]
    %v3805 = vld [vmem:[%s3208 + $0x259] sm:$0xff]
    %v3806 = vld [vmem:[%s3208 + $0x261] sm:$0xff]
    %v3807 = vld [vmem:[%s3208 + $0x271] sm:$0xff]
    %v3808 = vld [vmem:[%s3208 + $0x279] sm:$0xff]
    %v3809 = vld [vmem:[%s3208 + $0x289] sm:$0xff]
    %v3810 = vld [vmem:[%s3208 + $0x291] sm:$0xff]
    %v3811 = vld [vmem:[%s3208 + $0x2a1] sm:$0xff]
    %v3812 = vld [vmem:[%s3208 + $0x2a9] sm:$0xff]
    %v3813 = vld [vmem:[%s3208 + $0x2b9] sm:$0xff]
    %v3814 = vld [vmem:[%s3208 + $0x2c1] sm:$0xff]
    %v3815 = vld [vmem:[%s3208 + $0x2d1] sm:$0xff]
    %v3816 = vld [vmem:[%s3208 + $0x2d9] sm:$0xff]
    %v3817 = vld [vmem:[%s3208 + $0x2e9] sm:$0xff]
    %v3818 = vld [vmem:[%s3208 + $0x2f1] sm:$0xff]
    %v3819 = vld [vmem:[%s3208 + $0x301] sm:$0xff]
    %v3820 = vld [vmem:[%s3208 + $0x309] sm:$0xff]
    %v3821 = vld [vmem:[%s3208 + $0x319] sm:$0xff]
    %v3822 = vld [vmem:[%s3208 + $0x321] sm:$0xff]
    %v3823 = vpack.c.bf16 %v3760, %v3759
    %v3824 = vpack.c.bf16 %v3762, %v3761
    %v3825 = vpack.c.bf16 %v3764, %v3763
    %v3826 = vpack.c.bf16 %v3766, %v3765
    %v3827 = vpack.c.bf16 %v3768, %v3767
    %v3828 = vpack.c.bf16 %v3770, %v3769
    %v3829 = vpack.c.bf16 %v3772, %v3771
    %v3830 = vpack.c.bf16 %v3774, %v3773
    %v3831 = vpack.c.bf16 %v3776, %v3775
    %v3832 = vpack.c.bf16 %v3778, %v3777
    %v3833 = vpack.c.bf16 %v3780, %v3779
    %v3834 = vpack.c.bf16 %v3782, %v3781
    %v3835 = vpack.c.bf16 %v3784, %v3783
    %v3836 = vpack.c.bf16 %v3786, %v3785
    %v3837 = vpack.c.bf16 %v3788, %v3787
    %v3838 = vpack.c.bf16 %v3790, %v3789
    %v3839 = vpack.c.bf16 %v3792, %v3791
    %v3840 = vpack.c.bf16 %v3794, %v3793
    %v3841 = vpack.c.bf16 %v3796, %v3795
    %v3842 = vpack.c.bf16 %v3798, %v3797
    %v3843 = vpack.c.bf16 %v3800, %v3799
    %v3844 = vpack.c.bf16 %v3802, %v3801
    %v3845 = vpack.c.bf16 %v3804, %v3803
    %v3846 = vpack.c.bf16 %v3806, %v3805
    %v3847 = vpack.c.bf16 %v3808, %v3807
    %v3848 = vpack.c.bf16 %v3810, %v3809
    %v3849 = vpack.c.bf16 %v3812, %v3811
    %v3850 = vpack.c.bf16 %v3814, %v3813
    %v3851 = vpack.c.bf16 %v3816, %v3815
    %v3852 = vpack.c.bf16 %v3818, %v3817
    %v3853 = vpack.c.bf16 %v3820, %v3819
    %v3854 = vpack.c.bf16 %v3822, %v3821
    %s3855 = scalar_lea.vmem %s1, 14
    %v3856 = vld [vmem:[%s3855] sm:$0x3]
    %v3858 = vsel %vm229, %v3823, 0
    %v3861 = vsel %vm229, %v3824, 0
    %v3864 = vsel %vm229, %v3825, 0
    %v3867 = vsel %vm229, %v3826, 0
    %v3870 = vsel %vm229, %v3827, 0
    %v3873 = vsel %vm229, %v3828, 0
    %v3876 = vsel %vm229, %v3829, 0
    %v3879 = vsel %vm229, %v3830, 0
    %v3882 = vsel %vm229, %v3831, 0
    %v3885 = vsel %vm229, %v3832, 0
    %v3888 = vsel %vm229, %v3833, 0
    %v3891 = vsel %vm229, %v3834, 0
    %v3894 = vsel %vm229, %v3835, 0
    %v3897 = vsel %vm229, %v3836, 0
    %v3900 = vsel %vm229, %v3837, 0
    %v3903 = vsel %vm229, %v3838, 0
    %v3906 = vsel %vm229, %v3839, 0
    %v3909 = vsel %vm229, %v3840, 0
    %v3912 = vsel %vm229, %v3841, 0
    %v3915 = vsel %vm229, %v3842, 0
    %v3918 = vsel %vm229, %v3843, 0
    %v3921 = vsel %vm229, %v3844, 0
    %v3924 = vsel %vm229, %v3845, 0
    %v3927 = vsel %vm229, %v3846, 0
    %v3930 = vsel %vm229, %v3847, 0
    %v3933 = vsel %vm229, %v3848, 0
    %v3936 = vsel %vm229, %v3849, 0
    %v3939 = vsel %vm229, %v3850, 0
    %v3942 = vsel %vm229, %v3851, 0
    %v3945 = vsel %vm229, %v3852, 0
    %v3948 = vsel %vm229, %v3853, 0
    %v3951 = vsel %vm229, %v3854, 0
    %v3954 = vsel %vm326, %v3856, 0
    %3956 = vmatprep.subr.bf16.mxu0 0
    %3957 = vmatpush1.bf16.msra.mxu0 0
    %3958 = vmatprep.subr.bf16.mxu0 0
    %3959 = vmatpush1.bf16.msra.mxu0 0
    %3960 = vmatprep.subr.bf16.mxu0 0
    %3961 = vmatpush1.bf16.msra.mxu0 0
    %3962 = vmatprep.subr.bf16.mxu0 0
    %3963 = vmatpush1.bf16.msra.mxu0 0
    %3964 = vmatprep.subr.bf16.mxu0 0
    %3965 = vmatpush1.bf16.msra.mxu0 0
    %3966 = vmatprep.subr.bf16.mxu0 0
    %3967 = vmatpush1.bf16.msra.mxu0 0
    %3968 = vmatprep.subr.bf16.mxu0 0
    %3969 = vmatpush1.bf16.msra.mxu0 0
    %3970 = vmatprep.subr.bf16.mxu0 0
    %3971 = vmatpush1.bf16.msra.mxu0 %v3954
    %3972 = vmatprep.subr.bf16.mxu0 0
    %3973 = vmatpush2.bf16.msra.mxu0 0
    %3974 = vmatprep.subr.bf16.mxu0 0
    %3975 = vmatpush2.bf16.msra.mxu0 0
    %3976 = vmatprep.subr.bf16.mxu0 0
    %3977 = vmatpush2.bf16.msra.mxu0 0
    %3978 = vmatprep.subr.bf16.mxu0 0
    %3979 = vmatpush2.bf16.msra.mxu0 0
    %3980 = vmatprep.subr.bf16.mxu0 0
    %3981 = vmatpush2.bf16.msra.mxu0 0
    %3982 = vmatprep.subr.bf16.mxu0 0
    %3983 = vmatpush2.bf16.msra.mxu0 0
    %3984 = vmatprep.subr.bf16.mxu0 0
    %3985 = vmatpush2.bf16.msra.mxu0 0
    %3986 = vmatprep.subr.bf16.mxu0 0
    %3987 = vmatpush2.bf16.msra.mxu0 0
    %3988 = vmatprep.mubr.bf16.mxu0 0
    %3989 = vmatmul.mubr.bf16.gmra.mxu0 %v3858
    %v3990 = vpop.f32.mrf.mxu0
    %v3991 = vadd.f32 0.0, %v3990
    %v3992 = vpop.f32.mrf.mxu0
    %v3993 = vpop.f32.mrf.mxu0
    %v3994 = vadd.f32 0.0, %v3993
    %v3995 = vpop.f32.mrf.mxu0
    %3996 = vmatprep.mubr.bf16.mxu0 0
    %3997 = vmatmul.mubr.bf16.gmra.mxu0 %v3861
    %v3998 = vpop.f32.mrf.mxu0
    %v3999 = vadd.f32 0.0, %v3998
    %v4000 = vpop.f32.mrf.mxu0
    %v4001 = vpop.f32.mrf.mxu0
    %v4002 = vadd.f32 0.0, %v4001
    %v4003 = vpop.f32.mrf.mxu0
    %4004 = vmatprep.mubr.bf16.mxu0 0
    %4005 = vmatmul.mubr.bf16.gmra.mxu0 %v3864
    %v4006 = vpop.f32.mrf.mxu0
    %v4007 = vadd.f32 0.0, %v4006
    %v4008 = vpop.f32.mrf.mxu0
    %v4009 = vpop.f32.mrf.mxu0
    %v4010 = vadd.f32 0.0, %v4009
    %v4011 = vpop.f32.mrf.mxu0
    %4012 = vmatprep.mubr.bf16.mxu0 0
    %4013 = vmatmul.mubr.bf16.gmra.mxu0 %v3867
    %v4014 = vpop.f32.mrf.mxu0
    %v4015 = vadd.f32 0.0, %v4014
    %v4016 = vpop.f32.mrf.mxu0
    %v4017 = vpop.f32.mrf.mxu0
    %v4018 = vadd.f32 0.0, %v4017
    %v4019 = vpop.f32.mrf.mxu0
    %4020 = vmatprep.mubr.bf16.mxu0 0
    %4021 = vmatmul.mubr.bf16.gmra.mxu0 %v3870
    %v4022 = vpop.f32.mrf.mxu0
    %v4023 = vadd.f32 0.0, %v4022
    %v4024 = vpop.f32.mrf.mxu0
    %v4025 = vpop.f32.mrf.mxu0
    %v4026 = vadd.f32 0.0, %v4025
    %v4027 = vpop.f32.mrf.mxu0
    %4028 = vmatprep.mubr.bf16.mxu0 0
    %4029 = vmatmul.mubr.bf16.gmra.mxu0 %v3873
    %v4030 = vpop.f32.mrf.mxu0
    %v4031 = vadd.f32 0.0, %v4030
    %v4032 = vpop.f32.mrf.mxu0
    %v4033 = vpop.f32.mrf.mxu0
    %v4034 = vadd.f32 0.0, %v4033
    %v4035 = vpop.f32.mrf.mxu0
    %4036 = vmatprep.mubr.bf16.mxu0 0
    %4037 = vmatmul.mubr.bf16.gmra.mxu0 %v3876
    %v4038 = vpop.f32.mrf.mxu0
    %v4039 = vadd.f32 0.0, %v4038
    %v4040 = vpop.f32.mrf.mxu0
    %v4041 = vpop.f32.mrf.mxu0
    %v4042 = vadd.f32 0.0, %v4041
    %v4043 = vpop.f32.mrf.mxu0
    %4044 = vmatprep.mubr.bf16.mxu0 0
    %4045 = vmatmul.mubr.bf16.gmra.mxu0 %v3879
    %v4046 = vpop.f32.mrf.mxu0
    %v4047 = vadd.f32 0.0, %v4046
    %v4048 = vpop.f32.mrf.mxu0
    %v4049 = vpop.f32.mrf.mxu0
    %v4050 = vadd.f32 0.0, %v4049
    %v4051 = vpop.f32.mrf.mxu0
    %4052 = vmatprep.mubr.bf16.mxu0 0
    %4053 = vmatmul.mubr.bf16.gmra.mxu0 %v3882
    %v4054 = vpop.f32.mrf.mxu0
    %v4055 = vadd.f32 0.0, %v4054
    %v4056 = vpop.f32.mrf.mxu0
    %v4057 = vpop.f32.mrf.mxu0
    %v4058 = vadd.f32 0.0, %v4057
    %v4059 = vpop.f32.mrf.mxu0
    %4060 = vmatprep.mubr.bf16.mxu0 0
    %4061 = vmatmul.mubr.bf16.gmra.mxu0 %v3885
    %v4062 = vpop.f32.mrf.mxu0
    %v4063 = vadd.f32 0.0, %v4062
    %v4064 = vpop.f32.mrf.mxu0
    %v4065 = vpop.f32.mrf.mxu0
    %v4066 = vadd.f32 0.0, %v4065
    %v4067 = vpop.f32.mrf.mxu0
    %4068 = vmatprep.mubr.bf16.mxu0 0
    %4069 = vmatmul.mubr.bf16.gmra.mxu0 %v3888
    %v4070 = vpop.f32.mrf.mxu0
    %v4071 = vadd.f32 0.0, %v4070
    %v4072 = vpop.f32.mrf.mxu0
    %v4073 = vpop.f32.mrf.mxu0
    %v4074 = vadd.f32 0.0, %v4073
    %v4075 = vpop.f32.mrf.mxu0
    %4076 = vmatprep.mubr.bf16.mxu0 0
    %4077 = vmatmul.mubr.bf16.gmra.mxu0 %v3891
    %v4078 = vpop.f32.mrf.mxu0
    %v4079 = vadd.f32 0.0, %v4078
    %v4080 = vpop.f32.mrf.mxu0
    %v4081 = vpop.f32.mrf.mxu0
    %v4082 = vadd.f32 0.0, %v4081
    %v4083 = vpop.f32.mrf.mxu0
    %4084 = vmatprep.mubr.bf16.mxu0 0
    %4085 = vmatmul.mubr.bf16.gmra.mxu0 %v3894
    %v4086 = vpop.f32.mrf.mxu0
    %v4087 = vadd.f32 0.0, %v4086
    %v4088 = vpop.f32.mrf.mxu0
    %v4089 = vpop.f32.mrf.mxu0
    %v4090 = vadd.f32 0.0, %v4089
    %v4091 = vpop.f32.mrf.mxu0
    %4092 = vmatprep.mubr.bf16.mxu0 0
    %4093 = vmatmul.mubr.bf16.gmra.mxu0 %v3897
    %v4094 = vpop.f32.mrf.mxu0
    %v4095 = vadd.f32 0.0, %v4094
    %v4096 = vpop.f32.mrf.mxu0
    %v4097 = vpop.f32.mrf.mxu0
    %v4098 = vadd.f32 0.0, %v4097
    %v4099 = vpop.f32.mrf.mxu0
    %4100 = vmatprep.mubr.bf16.mxu0 0
    %4101 = vmatmul.mubr.bf16.gmra.mxu0 %v3900
    %v4102 = vpop.f32.mrf.mxu0
    %v4103 = vadd.f32 0.0, %v4102
    %v4104 = vpop.f32.mrf.mxu0
    %v4105 = vpop.f32.mrf.mxu0
    %v4106 = vadd.f32 0.0, %v4105
    %v4107 = vpop.f32.mrf.mxu0
    %4108 = vmatprep.mubr.bf16.mxu0 0
    %4109 = vmatmul.mubr.bf16.gmra.mxu0 %v3903
    %v4110 = vpop.f32.mrf.mxu0
    %v4111 = vadd.f32 0.0, %v4110
    %v4112 = vpop.f32.mrf.mxu0
    %v4113 = vpop.f32.mrf.mxu0
    %v4114 = vadd.f32 0.0, %v4113
    %v4115 = vpop.f32.mrf.mxu0
    %4116 = vmatprep.mubr.bf16.mxu0 0
    %4117 = vmatmul.mubr.bf16.gmra.mxu0 %v3906
    %v4118 = vpop.f32.mrf.mxu0
    %v4119 = vadd.f32 0.0, %v4118
    %v4120 = vpop.f32.mrf.mxu0
    %v4121 = vpop.f32.mrf.mxu0
    %v4122 = vadd.f32 0.0, %v4121
    %v4123 = vpop.f32.mrf.mxu0
    %4124 = vmatprep.mubr.bf16.mxu0 0
    %4125 = vmatmul.mubr.bf16.gmra.mxu0 %v3909
    %v4126 = vpop.f32.mrf.mxu0
    %v4127 = vadd.f32 0.0, %v4126
    %v4128 = vpop.f32.mrf.mxu0
    %v4129 = vpop.f32.mrf.mxu0
    %v4130 = vadd.f32 0.0, %v4129
    %v4131 = vpop.f32.mrf.mxu0
    %4132 = vmatprep.mubr.bf16.mxu0 0
    %4133 = vmatmul.mubr.bf16.gmra.mxu0 %v3912
    %v4134 = vpop.f32.mrf.mxu0
    %v4135 = vadd.f32 0.0, %v4134
    %v4136 = vpop.f32.mrf.mxu0
    %v4137 = vpop.f32.mrf.mxu0
    %v4138 = vadd.f32 0.0, %v4137
    %v4139 = vpop.f32.mrf.mxu0
    %4140 = vmatprep.mubr.bf16.mxu0 0
    %4141 = vmatmul.mubr.bf16.gmra.mxu0 %v3915
    %v4142 = vpop.f32.mrf.mxu0
    %v4143 = vadd.f32 0.0, %v4142
    %v4144 = vpop.f32.mrf.mxu0
    %v4145 = vpop.f32.mrf.mxu0
    %v4146 = vadd.f32 0.0, %v4145
    %v4147 = vpop.f32.mrf.mxu0
    %4148 = vmatprep.mubr.bf16.mxu0 0
    %4149 = vmatmul.mubr.bf16.gmra.mxu0 %v3918
    %v4150 = vpop.f32.mrf.mxu0
    %v4151 = vadd.f32 0.0, %v4150
    %v4152 = vpop.f32.mrf.mxu0
    %v4153 = vpop.f32.mrf.mxu0
    %v4154 = vadd.f32 0.0, %v4153
    %v4155 = vpop.f32.mrf.mxu0
    %4156 = vmatprep.mubr.bf16.mxu0 0
    %4157 = vmatmul.mubr.bf16.gmra.mxu0 %v3921
    %v4158 = vpop.f32.mrf.mxu0
    %v4159 = vadd.f32 0.0, %v4158
    %v4160 = vpop.f32.mrf.mxu0
    %v4161 = vpop.f32.mrf.mxu0
    %v4162 = vadd.f32 0.0, %v4161
    %v4163 = vpop.f32.mrf.mxu0
    %4164 = vmatprep.mubr.bf16.mxu0 0
    %4165 = vmatmul.mubr.bf16.gmra.mxu0 %v3924
    %v4166 = vpop.f32.mrf.mxu0
    %v4167 = vadd.f32 0.0, %v4166
    %v4168 = vpop.f32.mrf.mxu0
    %v4169 = vpop.f32.mrf.mxu0
    %v4170 = vadd.f32 0.0, %v4169
    %v4171 = vpop.f32.mrf.mxu0
    %4172 = vmatprep.mubr.bf16.mxu0 0
    %4173 = vmatmul.mubr.bf16.gmra.mxu0 %v3927
    %v4174 = vpop.f32.mrf.mxu0
    %v4175 = vadd.f32 0.0, %v4174
    %v4176 = vpop.f32.mrf.mxu0
    %v4177 = vpop.f32.mrf.mxu0
    %v4178 = vadd.f32 0.0, %v4177
    %v4179 = vpop.f32.mrf.mxu0
    %4180 = vmatprep.mubr.bf16.mxu0 0
    %4181 = vmatmul.mubr.bf16.gmra.mxu0 %v3930
    %v4182 = vpop.f32.mrf.mxu0
    %v4183 = vadd.f32 0.0, %v4182
    %v4184 = vpop.f32.mrf.mxu0
    %v4185 = vpop.f32.mrf.mxu0
    %v4186 = vadd.f32 0.0, %v4185
    %v4187 = vpop.f32.mrf.mxu0
    %4188 = vmatprep.mubr.bf16.mxu0 0
    %4189 = vmatmul.mubr.bf16.gmra.mxu0 %v3933
    %v4190 = vpop.f32.mrf.mxu0
    %v4191 = vadd.f32 0.0, %v4190
    %v4192 = vpop.f32.mrf.mxu0
    %v4193 = vpop.f32.mrf.mxu0
    %v4194 = vadd.f32 0.0, %v4193
    %v4195 = vpop.f32.mrf.mxu0
    %4196 = vmatprep.mubr.bf16.mxu0 0
    %4197 = vmatmul.mubr.bf16.gmra.mxu0 %v3936
    %v4198 = vpop.f32.mrf.mxu0
    %v4199 = vadd.f32 0.0, %v4198
    %v4200 = vpop.f32.mrf.mxu0
    %v4201 = vpop.f32.mrf.mxu0
    %v4202 = vadd.f32 0.0, %v4201
    %v4203 = vpop.f32.mrf.mxu0
    %4204 = vmatprep.mubr.bf16.mxu0 0
    %4205 = vmatmul.mubr.bf16.gmra.mxu0 %v3939
    %v4206 = vpop.f32.mrf.mxu0
    %v4207 = vadd.f32 0.0, %v4206
    %v4208 = vpop.f32.mrf.mxu0
    %v4209 = vpop.f32.mrf.mxu0
    %v4210 = vadd.f32 0.0, %v4209
    %v4211 = vpop.f32.mrf.mxu0
    %4212 = vmatprep.mubr.bf16.mxu0 0
    %4213 = vmatmul.mubr.bf16.gmra.mxu0 %v3942
    %v4214 = vpop.f32.mrf.mxu0
    %v4215 = vadd.f32 0.0, %v4214
    %v4216 = vpop.f32.mrf.mxu0
    %v4217 = vpop.f32.mrf.mxu0
    %v4218 = vadd.f32 0.0, %v4217
    %v4219 = vpop.f32.mrf.mxu0
    %4220 = vmatprep.mubr.bf16.mxu0 0
    %4221 = vmatmul.mubr.bf16.gmra.mxu0 %v3945
    %v4222 = vpop.f32.mrf.mxu0
    %v4223 = vadd.f32 0.0, %v4222
    %v4224 = vpop.f32.mrf.mxu0
    %v4225 = vpop.f32.mrf.mxu0
    %v4226 = vadd.f32 0.0, %v4225
    %v4227 = vpop.f32.mrf.mxu0
    %4228 = vmatprep.mubr.bf16.mxu0 0
    %4229 = vmatmul.mubr.bf16.gmra.mxu0 %v3948
    %v4230 = vpop.f32.mrf.mxu0
    %v4231 = vadd.f32 0.0, %v4230
    %v4232 = vpop.f32.mrf.mxu0
    %v4233 = vpop.f32.mrf.mxu0
    %v4234 = vadd.f32 0.0, %v4233
    %v4235 = vpop.f32.mrf.mxu0
    %4236 = vmatprep.mubr.bf16.mxu0 0
    %4237 = vmatmul.mubr.bf16.gmra.mxu0 %v3951
    %v4238 = vpop.f32.mrf.mxu0
    %v4239 = vadd.f32 0.0, %v4238
    %v4240 = vpop.f32.mrf.mxu0
    %v4241 = vpop.f32.mrf.mxu0
    %v4242 = vadd.f32 0.0, %v4241
    %v4243 = vpop.f32.mrf.mxu0
    %4244 = vdwg.mxu0
    %v4245 = vadd.f32 %v3695, %v3991
    %v4246 = vadd.f32 %v3696, %v3994
    %v4247 = vadd.f32 %v3697, %v3999
    %v4248 = vadd.f32 %v3698, %v4002
    %v4249 = vadd.f32 %v3699, %v4007
    %v4250 = vadd.f32 %v3700, %v4010
    %v4251 = vadd.f32 %v3701, %v4015
    %v4252 = vadd.f32 %v3702, %v4018
    %v4253 = vadd.f32 %v3703, %v4023
    %v4254 = vadd.f32 %v3704, %v4026
    %v4255 = vadd.f32 %v3705, %v4031
    %v4256 = vadd.f32 %v3706, %v4034
    %v4257 = vadd.f32 %v3707, %v4039
    %v4258 = vadd.f32 %v3708, %v4042
    %v4259 = vadd.f32 %v3709, %v4047
    %v4260 = vadd.f32 %v3710, %v4050
    %v4261 = vadd.f32 %v3711, %v4055
    %v4262 = vadd.f32 %v3712, %v4058
    %v4263 = vadd.f32 %v3713, %v4063
    %v4264 = vadd.f32 %v3714, %v4066
    %v4265 = vadd.f32 %v3715, %v4071
    %v4266 = vadd.f32 %v3716, %v4074
    %v4267 = vadd.f32 %v3717, %v4079
    %v4268 = vadd.f32 %v3718, %v4082
    %v4269 = vadd.f32 %v3719, %v4087
    %v4270 = vadd.f32 %v3720, %v4090
    %v4271 = vadd.f32 %v3721, %v4095
    %v4272 = vadd.f32 %v3722, %v4098
    %v4273 = vadd.f32 %v3723, %v4103
    %v4274 = vadd.f32 %v3724, %v4106
    %v4275 = vadd.f32 %v3725, %v4111
    %v4276 = vadd.f32 %v3726, %v4114
    %v4277 = vadd.f32 %v3727, %v4119
    %v4278 = vadd.f32 %v3728, %v4122
    %v4279 = vadd.f32 %v3729, %v4127
    %v4280 = vadd.f32 %v3730, %v4130
    %v4281 = vadd.f32 %v3731, %v4135
    %v4282 = vadd.f32 %v3732, %v4138
    %v4283 = vadd.f32 %v3733, %v4143
    %v4284 = vadd.f32 %v3734, %v4146
    %v4285 = vadd.f32 %v3735, %v4151
    %v4286 = vadd.f32 %v3736, %v4154
    %v4287 = vadd.f32 %v3737, %v4159
    %v4288 = vadd.f32 %v3738, %v4162
    %v4289 = vadd.f32 %v3739, %v4167
    %v4290 = vadd.f32 %v3740, %v4170
    %v4291 = vadd.f32 %v3741, %v4175
    %v4292 = vadd.f32 %v3742, %v4178
    %v4293 = vadd.f32 %v3743, %v4183
    %v4294 = vadd.f32 %v3744, %v4186
    %v4295 = vadd.f32 %v3745, %v4191
    %v4296 = vadd.f32 %v3746, %v4194
    %v4297 = vadd.f32 %v3747, %v4199
    %v4298 = vadd.f32 %v3748, %v4202
    %v4299 = vadd.f32 %v3749, %v4207
    %v4300 = vadd.f32 %v3750, %v4210
    %v4301 = vadd.f32 %v3751, %v4215
    %v4302 = vadd.f32 %v3752, %v4218
    %v4303 = vadd.f32 %v3753, %v4223
    %v4304 = vadd.f32 %v3754, %v4226
    %v4305 = vadd.f32 %v3755, %v4231
    %v4306 = vadd.f32 %v3756, %v4234
    %v4307 = vadd.f32 %v3757, %v4239
    %v4308 = vadd.f32 %v3758, %v4242
    %v4309 = vld [vmem:[%s3208 + $0x2] sm:$0xff]
    %v4310 = vld [vmem:[%s3208 + $0xa] sm:$0xff]
    %v4311 = vld [vmem:[%s3208 + $0x1a] sm:$0xff]
    %v4312 = vld [vmem:[%s3208 + $0x22] sm:$0xff]
    %v4313 = vld [vmem:[%s3208 + $0x32] sm:$0xff]
    %v4314 = vld [vmem:[%s3208 + $0x3a] sm:$0xff]
    %v4315 = vld [vmem:[%s3208 + $0x4a] sm:$0xff]
    %v4316 = vld [vmem:[%s3208 + $0x52] sm:$0xff]
    %v4317 = vld [vmem:[%s3208 + $0x62] sm:$0xff]
    %v4318 = vld [vmem:[%s3208 + $0x6a] sm:$0xff]
    %v4319 = vld [vmem:[%s3208 + $0x7a] sm:$0xff]
    %v4320 = vld [vmem:[%s3208 + $0x82] sm:$0xff]
    %v4321 = vld [vmem:[%s3208 + $0x92] sm:$0xff]
    %v4322 = vld [vmem:[%s3208 + $0x9a] sm:$0xff]
    %v4323 = vld [vmem:[%s3208 + $0xaa] sm:$0xff]
    %v4324 = vld [vmem:[%s3208 + $0xb2] sm:$0xff]
    %v4325 = vld [vmem:[%s3208 + $0xc2] sm:$0xff]
    %v4326 = vld [vmem:[%s3208 + $0xca] sm:$0xff]
    %v4327 = vld [vmem:[%s3208 + $0xda] sm:$0xff]
    %v4328 = vld [vmem:[%s3208 + $0xe2] sm:$0xff]
    %v4329 = vld [vmem:[%s3208 + $0xf2] sm:$0xff]
    %v4330 = vld [vmem:[%s3208 + $0xfa] sm:$0xff]
    %v4331 = vld [vmem:[%s3208 + $0x10a] sm:$0xff]
    %v4332 = vld [vmem:[%s3208 + $0x112] sm:$0xff]
    %v4333 = vld [vmem:[%s3208 + $0x122] sm:$0xff]
    %v4334 = vld [vmem:[%s3208 + $0x12a] sm:$0xff]
    %v4335 = vld [vmem:[%s3208 + $0x13a] sm:$0xff]
    %v4336 = vld [vmem:[%s3208 + $0x142] sm:$0xff]
    %v4337 = vld [vmem:[%s3208 + $0x152] sm:$0xff]
    %v4338 = vld [vmem:[%s3208 + $0x15a] sm:$0xff]
    %v4339 = vld [vmem:[%s3208 + $0x16a] sm:$0xff]
    %v4340 = vld [vmem:[%s3208 + $0x172] sm:$0xff]
    %v4341 = vld [vmem:[%s3208 + $0x1b2] sm:$0xff]
    %v4342 = vld [vmem:[%s3208 + $0x1ba] sm:$0xff]
    %v4343 = vld [vmem:[%s3208 + $0x1ca] sm:$0xff]
    %v4344 = vld [vmem:[%s3208 + $0x1d2] sm:$0xff]
    %v4345 = vld [vmem:[%s3208 + $0x1e2] sm:$0xff]
    %v4346 = vld [vmem:[%s3208 + $0x1ea] sm:$0xff]
    %v4347 = vld [vmem:[%s3208 + $0x1fa] sm:$0xff]
    %v4348 = vld [vmem:[%s3208 + $0x202] sm:$0xff]
    %v4349 = vld [vmem:[%s3208 + $0x212] sm:$0xff]
    %v4350 = vld [vmem:[%s3208 + $0x21a] sm:$0xff]
    %v4351 = vld [vmem:[%s3208 + $0x22a] sm:$0xff]
    %v4352 = vld [vmem:[%s3208 + $0x232] sm:$0xff]
    %v4353 = vld [vmem:[%s3208 + $0x242] sm:$0xff]
    %v4354 = vld [vmem:[%s3208 + $0x24a] sm:$0xff]
    %v4355 = vld [vmem:[%s3208 + $0x25a] sm:$0xff]
    %v4356 = vld [vmem:[%s3208 + $0x262] sm:$0xff]
    %v4357 = vld [vmem:[%s3208 + $0x272] sm:$0xff]
    %v4358 = vld [vmem:[%s3208 + $0x27a] sm:$0xff]
    %v4359 = vld [vmem:[%s3208 + $0x28a] sm:$0xff]
    %v4360 = vld [vmem:[%s3208 + $0x292] sm:$0xff]
    %v4361 = vld [vmem:[%s3208 + $0x2a2] sm:$0xff]
    %v4362 = vld [vmem:[%s3208 + $0x2aa] sm:$0xff]
    %v4363 = vld [vmem:[%s3208 + $0x2ba] sm:$0xff]
    %v4364 = vld [vmem:[%s3208 + $0x2c2] sm:$0xff]
    %v4365 = vld [vmem:[%s3208 + $0x2d2] sm:$0xff]
    %v4366 = vld [vmem:[%s3208 + $0x2da] sm:$0xff]
    %v4367 = vld [vmem:[%s3208 + $0x2ea] sm:$0xff]
    %v4368 = vld [vmem:[%s3208 + $0x2f2] sm:$0xff]
    %v4369 = vld [vmem:[%s3208 + $0x302] sm:$0xff]
    %v4370 = vld [vmem:[%s3208 + $0x30a] sm:$0xff]
    %v4371 = vld [vmem:[%s3208 + $0x31a] sm:$0xff]
    %v4372 = vld [vmem:[%s3208 + $0x322] sm:$0xff]
    %v4373 = vpack.c.bf16 %v4310, %v4309
    %v4374 = vpack.c.bf16 %v4312, %v4311
    %v4375 = vpack.c.bf16 %v4314, %v4313
    %v4376 = vpack.c.bf16 %v4316, %v4315
    %v4377 = vpack.c.bf16 %v4318, %v4317
    %v4378 = vpack.c.bf16 %v4320, %v4319
    %v4379 = vpack.c.bf16 %v4322, %v4321
    %v4380 = vpack.c.bf16 %v4324, %v4323
    %v4381 = vpack.c.bf16 %v4326, %v4325
    %v4382 = vpack.c.bf16 %v4328, %v4327
    %v4383 = vpack.c.bf16 %v4330, %v4329
    %v4384 = vpack.c.bf16 %v4332, %v4331
    %v4385 = vpack.c.bf16 %v4334, %v4333
    %v4386 = vpack.c.bf16 %v4336, %v4335
    %v4387 = vpack.c.bf16 %v4338, %v4337
    %v4388 = vpack.c.bf16 %v4340, %v4339
    %v4389 = vpack.c.bf16 %v4342, %v4341
    %v4390 = vpack.c.bf16 %v4344, %v4343
    %v4391 = vpack.c.bf16 %v4346, %v4345
    %v4392 = vpack.c.bf16 %v4348, %v4347
    %v4393 = vpack.c.bf16 %v4350, %v4349
    %v4394 = vpack.c.bf16 %v4352, %v4351
    %v4395 = vpack.c.bf16 %v4354, %v4353
    %v4396 = vpack.c.bf16 %v4356, %v4355
    %v4397 = vpack.c.bf16 %v4358, %v4357
    %v4398 = vpack.c.bf16 %v4360, %v4359
    %v4399 = vpack.c.bf16 %v4362, %v4361
    %v4400 = vpack.c.bf16 %v4364, %v4363
    %v4401 = vpack.c.bf16 %v4366, %v4365
    %v4402 = vpack.c.bf16 %v4368, %v4367
    %v4403 = vpack.c.bf16 %v4370, %v4369
    %v4404 = vpack.c.bf16 %v4372, %v4371
    %s4405 = scalar_lea.vmem %s1, 16
    %v4406 = vld [vmem:[%s4405] sm:$0x3]
    %v4408 = vsel %vm229, %v4373, 0
    %v4411 = vsel %vm229, %v4374, 0
    %v4414 = vsel %vm229, %v4375, 0
    %v4417 = vsel %vm229, %v4376, 0
    %v4420 = vsel %vm229, %v4377, 0
    %v4423 = vsel %vm229, %v4378, 0
    %v4426 = vsel %vm229, %v4379, 0
    %v4429 = vsel %vm229, %v4380, 0
    %v4432 = vsel %vm229, %v4381, 0
    %v4435 = vsel %vm229, %v4382, 0
    %v4438 = vsel %vm229, %v4383, 0
    %v4441 = vsel %vm229, %v4384, 0
    %v4444 = vsel %vm229, %v4385, 0
    %v4447 = vsel %vm229, %v4386, 0
    %v4450 = vsel %vm229, %v4387, 0
    %v4453 = vsel %vm229, %v4388, 0
    %v4456 = vsel %vm229, %v4389, 0
    %v4459 = vsel %vm229, %v4390, 0
    %v4462 = vsel %vm229, %v4391, 0
    %v4465 = vsel %vm229, %v4392, 0
    %v4468 = vsel %vm229, %v4393, 0
    %v4471 = vsel %vm229, %v4394, 0
    %v4474 = vsel %vm229, %v4395, 0
    %v4477 = vsel %vm229, %v4396, 0
    %v4480 = vsel %vm229, %v4397, 0
    %v4483 = vsel %vm229, %v4398, 0
    %v4486 = vsel %vm229, %v4399, 0
    %v4489 = vsel %vm229, %v4400, 0
    %v4492 = vsel %vm229, %v4401, 0
    %v4495 = vsel %vm229, %v4402, 0
    %v4498 = vsel %vm229, %v4403, 0
    %v4501 = vsel %vm229, %v4404, 0
    %v4504 = vsel %vm326, %v4406, 0
    %4506 = vmatprep.subr.bf16.mxu0 0
    %4507 = vmatpush1.bf16.msra.mxu0 0
    %4508 = vmatprep.subr.bf16.mxu0 0
    %4509 = vmatpush1.bf16.msra.mxu0 0
    %4510 = vmatprep.subr.bf16.mxu0 0
    %4511 = vmatpush1.bf16.msra.mxu0 0
    %4512 = vmatprep.subr.bf16.mxu0 0
    %4513 = vmatpush1.bf16.msra.mxu0 0
    %4514 = vmatprep.subr.bf16.mxu0 0
    %4515 = vmatpush1.bf16.msra.mxu0 0
    %4516 = vmatprep.subr.bf16.mxu0 0
    %4517 = vmatpush1.bf16.msra.mxu0 0
    %4518 = vmatprep.subr.bf16.mxu0 0
    %4519 = vmatpush1.bf16.msra.mxu0 0
    %4520 = vmatprep.subr.bf16.mxu0 0
    %4521 = vmatpush1.bf16.msra.mxu0 %v4504
    %4522 = vmatprep.subr.bf16.mxu0 0
    %4523 = vmatpush2.bf16.msra.mxu0 0
    %4524 = vmatprep.subr.bf16.mxu0 0
    %4525 = vmatpush2.bf16.msra.mxu0 0
    %4526 = vmatprep.subr.bf16.mxu0 0
    %4527 = vmatpush2.bf16.msra.mxu0 0
    %4528 = vmatprep.subr.bf16.mxu0 0
    %4529 = vmatpush2.bf16.msra.mxu0 0
    %4530 = vmatprep.subr.bf16.mxu0 0
    %4531 = vmatpush2.bf16.msra.mxu0 0
    %4532 = vmatprep.subr.bf16.mxu0 0
    %4533 = vmatpush2.bf16.msra.mxu0 0
    %4534 = vmatprep.subr.bf16.mxu0 0
    %4535 = vmatpush2.bf16.msra.mxu0 0
    %4536 = vmatprep.subr.bf16.mxu0 0
    %4537 = vmatpush2.bf16.msra.mxu0 0
    %4538 = vmatprep.mubr.bf16.mxu0 0
    %4539 = vmatmul.mubr.bf16.gmra.mxu0 %v4408
    %v4540 = vpop.f32.mrf.mxu0
    %v4541 = vadd.f32 0.0, %v4540
    %v4542 = vpop.f32.mrf.mxu0
    %v4543 = vpop.f32.mrf.mxu0
    %v4544 = vadd.f32 0.0, %v4543
    %v4545 = vpop.f32.mrf.mxu0
    %4546 = vmatprep.mubr.bf16.mxu0 0
    %4547 = vmatmul.mubr.bf16.gmra.mxu0 %v4411
    %v4548 = vpop.f32.mrf.mxu0
    %v4549 = vadd.f32 0.0, %v4548
    %v4550 = vpop.f32.mrf.mxu0
    %v4551 = vpop.f32.mrf.mxu0
    %v4552 = vadd.f32 0.0, %v4551
    %v4553 = vpop.f32.mrf.mxu0
    %4554 = vmatprep.mubr.bf16.mxu0 0
    %4555 = vmatmul.mubr.bf16.gmra.mxu0 %v4414
    %v4556 = vpop.f32.mrf.mxu0
    %v4557 = vadd.f32 0.0, %v4556
    %v4558 = vpop.f32.mrf.mxu0
    %v4559 = vpop.f32.mrf.mxu0
    %v4560 = vadd.f32 0.0, %v4559
    %v4561 = vpop.f32.mrf.mxu0
    %4562 = vmatprep.mubr.bf16.mxu0 0
    %4563 = vmatmul.mubr.bf16.gmra.mxu0 %v4417
    %v4564 = vpop.f32.mrf.mxu0
    %v4565 = vadd.f32 0.0, %v4564
    %v4566 = vpop.f32.mrf.mxu0
    %v4567 = vpop.f32.mrf.mxu0
    %v4568 = vadd.f32 0.0, %v4567
    %v4569 = vpop.f32.mrf.mxu0
    %4570 = vmatprep.mubr.bf16.mxu0 0
    %4571 = vmatmul.mubr.bf16.gmra.mxu0 %v4420
    %v4572 = vpop.f32.mrf.mxu0
    %v4573 = vadd.f32 0.0, %v4572
    %v4574 = vpop.f32.mrf.mxu0
    %v4575 = vpop.f32.mrf.mxu0
    %v4576 = vadd.f32 0.0, %v4575
    %v4577 = vpop.f32.mrf.mxu0
    %4578 = vmatprep.mubr.bf16.mxu0 0
    %4579 = vmatmul.mubr.bf16.gmra.mxu0 %v4423
    %v4580 = vpop.f32.mrf.mxu0
    %v4581 = vadd.f32 0.0, %v4580
    %v4582 = vpop.f32.mrf.mxu0
    %v4583 = vpop.f32.mrf.mxu0
    %v4584 = vadd.f32 0.0, %v4583
    %v4585 = vpop.f32.mrf.mxu0
    %4586 = vmatprep.mubr.bf16.mxu0 0
    %4587 = vmatmul.mubr.bf16.gmra.mxu0 %v4426
    %v4588 = vpop.f32.mrf.mxu0
    %v4589 = vadd.f32 0.0, %v4588
    %v4590 = vpop.f32.mrf.mxu0
    %v4591 = vpop.f32.mrf.mxu0
    %v4592 = vadd.f32 0.0, %v4591
    %v4593 = vpop.f32.mrf.mxu0
    %4594 = vmatprep.mubr.bf16.mxu0 0
    %4595 = vmatmul.mubr.bf16.gmra.mxu0 %v4429
    %v4596 = vpop.f32.mrf.mxu0
    %v4597 = vadd.f32 0.0, %v4596
    %v4598 = vpop.f32.mrf.mxu0
    %v4599 = vpop.f32.mrf.mxu0
    %v4600 = vadd.f32 0.0, %v4599
    %v4601 = vpop.f32.mrf.mxu0
    %4602 = vmatprep.mubr.bf16.mxu0 0
    %4603 = vmatmul.mubr.bf16.gmra.mxu0 %v4432
    %v4604 = vpop.f32.mrf.mxu0
    %v4605 = vadd.f32 0.0, %v4604
    %v4606 = vpop.f32.mrf.mxu0
    %v4607 = vpop.f32.mrf.mxu0
    %v4608 = vadd.f32 0.0, %v4607
    %v4609 = vpop.f32.mrf.mxu0
    %4610 = vmatprep.mubr.bf16.mxu0 0
    %4611 = vmatmul.mubr.bf16.gmra.mxu0 %v4435
    %v4612 = vpop.f32.mrf.mxu0
    %v4613 = vadd.f32 0.0, %v4612
    %v4614 = vpop.f32.mrf.mxu0
    %v4615 = vpop.f32.mrf.mxu0
    %v4616 = vadd.f32 0.0, %v4615
    %v4617 = vpop.f32.mrf.mxu0
    %4618 = vmatprep.mubr.bf16.mxu0 0
    %4619 = vmatmul.mubr.bf16.gmra.mxu0 %v4438
    %v4620 = vpop.f32.mrf.mxu0
    %v4621 = vadd.f32 0.0, %v4620
    %v4622 = vpop.f32.mrf.mxu0
    %v4623 = vpop.f32.mrf.mxu0
    %v4624 = vadd.f32 0.0, %v4623
    %v4625 = vpop.f32.mrf.mxu0
    %4626 = vmatprep.mubr.bf16.mxu0 0
    %4627 = vmatmul.mubr.bf16.gmra.mxu0 %v4441
    %v4628 = vpop.f32.mrf.mxu0
    %v4629 = vadd.f32 0.0, %v4628
    %v4630 = vpop.f32.mrf.mxu0
    %v4631 = vpop.f32.mrf.mxu0
    %v4632 = vadd.f32 0.0, %v4631
    %v4633 = vpop.f32.mrf.mxu0
    %4634 = vmatprep.mubr.bf16.mxu0 0
    %4635 = vmatmul.mubr.bf16.gmra.mxu0 %v4444
    %v4636 = vpop.f32.mrf.mxu0
    %v4637 = vadd.f32 0.0, %v4636
    %v4638 = vpop.f32.mrf.mxu0
    %v4639 = vpop.f32.mrf.mxu0
    %v4640 = vadd.f32 0.0, %v4639
    %v4641 = vpop.f32.mrf.mxu0
    %4642 = vmatprep.mubr.bf16.mxu0 0
    %4643 = vmatmul.mubr.bf16.gmra.mxu0 %v4447
    %v4644 = vpop.f32.mrf.mxu0
    %v4645 = vadd.f32 0.0, %v4644
    %v4646 = vpop.f32.mrf.mxu0
    %v4647 = vpop.f32.mrf.mxu0
    %v4648 = vadd.f32 0.0, %v4647
    %v4649 = vpop.f32.mrf.mxu0
    %4650 = vmatprep.mubr.bf16.mxu0 0
    %4651 = vmatmul.mubr.bf16.gmra.mxu0 %v4450
    %v4652 = vpop.f32.mrf.mxu0
    %v4653 = vadd.f32 0.0, %v4652
    %v4654 = vpop.f32.mrf.mxu0
    %v4655 = vpop.f32.mrf.mxu0
    %v4656 = vadd.f32 0.0, %v4655
    %v4657 = vpop.f32.mrf.mxu0
    %4658 = vmatprep.mubr.bf16.mxu0 0
    %4659 = vmatmul.mubr.bf16.gmra.mxu0 %v4453
    %v4660 = vpop.f32.mrf.mxu0
    %v4661 = vadd.f32 0.0, %v4660
    %v4662 = vpop.f32.mrf.mxu0
    %v4663 = vpop.f32.mrf.mxu0
    %v4664 = vadd.f32 0.0, %v4663
    %v4665 = vpop.f32.mrf.mxu0
    %4666 = vmatprep.mubr.bf16.mxu0 0
    %4667 = vmatmul.mubr.bf16.gmra.mxu0 %v4456
    %v4668 = vpop.f32.mrf.mxu0
    %v4669 = vadd.f32 0.0, %v4668
    %v4670 = vpop.f32.mrf.mxu0
    %v4671 = vpop.f32.mrf.mxu0
    %v4672 = vadd.f32 0.0, %v4671
    %v4673 = vpop.f32.mrf.mxu0
    %4674 = vmatprep.mubr.bf16.mxu0 0
    %4675 = vmatmul.mubr.bf16.gmra.mxu0 %v4459
    %v4676 = vpop.f32.mrf.mxu0
    %v4677 = vadd.f32 0.0, %v4676
    %v4678 = vpop.f32.mrf.mxu0
    %v4679 = vpop.f32.mrf.mxu0
    %v4680 = vadd.f32 0.0, %v4679
    %v4681 = vpop.f32.mrf.mxu0
    %4682 = vmatprep.mubr.bf16.mxu0 0
    %4683 = vmatmul.mubr.bf16.gmra.mxu0 %v4462
    %v4684 = vpop.f32.mrf.mxu0
    %v4685 = vadd.f32 0.0, %v4684
    %v4686 = vpop.f32.mrf.mxu0
    %v4687 = vpop.f32.mrf.mxu0
    %v4688 = vadd.f32 0.0, %v4687
    %v4689 = vpop.f32.mrf.mxu0
    %4690 = vmatprep.mubr.bf16.mxu0 0
    %4691 = vmatmul.mubr.bf16.gmra.mxu0 %v4465
    %v4692 = vpop.f32.mrf.mxu0
    %v4693 = vadd.f32 0.0, %v4692
    %v4694 = vpop.f32.mrf.mxu0
    %v4695 = vpop.f32.mrf.mxu0
    %v4696 = vadd.f32 0.0, %v4695
    %v4697 = vpop.f32.mrf.mxu0
    %4698 = vmatprep.mubr.bf16.mxu0 0
    %4699 = vmatmul.mubr.bf16.gmra.mxu0 %v4468
    %v4700 = vpop.f32.mrf.mxu0
    %v4701 = vadd.f32 0.0, %v4700
    %v4702 = vpop.f32.mrf.mxu0
    %v4703 = vpop.f32.mrf.mxu0
    %v4704 = vadd.f32 0.0, %v4703
    %v4705 = vpop.f32.mrf.mxu0
    %4706 = vmatprep.mubr.bf16.mxu0 0
    %4707 = vmatmul.mubr.bf16.gmra.mxu0 %v4471
    %v4708 = vpop.f32.mrf.mxu0
    %v4709 = vadd.f32 0.0, %v4708
    %v4710 = vpop.f32.mrf.mxu0
    %v4711 = vpop.f32.mrf.mxu0
    %v4712 = vadd.f32 0.0, %v4711
    %v4713 = vpop.f32.mrf.mxu0
    %4714 = vmatprep.mubr.bf16.mxu0 0
    %4715 = vmatmul.mubr.bf16.gmra.mxu0 %v4474
    %v4716 = vpop.f32.mrf.mxu0
    %v4717 = vadd.f32 0.0, %v4716
    %v4718 = vpop.f32.mrf.mxu0
    %v4719 = vpop.f32.mrf.mxu0
    %v4720 = vadd.f32 0.0, %v4719
    %v4721 = vpop.f32.mrf.mxu0
    %4722 = vmatprep.mubr.bf16.mxu0 0
    %4723 = vmatmul.mubr.bf16.gmra.mxu0 %v4477
    %v4724 = vpop.f32.mrf.mxu0
    %v4725 = vadd.f32 0.0, %v4724
    %v4726 = vpop.f32.mrf.mxu0
    %v4727 = vpop.f32.mrf.mxu0
    %v4728 = vadd.f32 0.0, %v4727
    %v4729 = vpop.f32.mrf.mxu0
    %4730 = vmatprep.mubr.bf16.mxu0 0
    %4731 = vmatmul.mubr.bf16.gmra.mxu0 %v4480
    %v4732 = vpop.f32.mrf.mxu0
    %v4733 = vadd.f32 0.0, %v4732
    %v4734 = vpop.f32.mrf.mxu0
    %v4735 = vpop.f32.mrf.mxu0
    %v4736 = vadd.f32 0.0, %v4735
    %v4737 = vpop.f32.mrf.mxu0
    %4738 = vmatprep.mubr.bf16.mxu0 0
    %4739 = vmatmul.mubr.bf16.gmra.mxu0 %v4483
    %v4740 = vpop.f32.mrf.mxu0
    %v4741 = vadd.f32 0.0, %v4740
    %v4742 = vpop.f32.mrf.mxu0
    %v4743 = vpop.f32.mrf.mxu0
    %v4744 = vadd.f32 0.0, %v4743
    %v4745 = vpop.f32.mrf.mxu0
    %4746 = vmatprep.mubr.bf16.mxu0 0
    %4747 = vmatmul.mubr.bf16.gmra.mxu0 %v4486
    %v4748 = vpop.f32.mrf.mxu0
    %v4749 = vadd.f32 0.0, %v4748
    %v4750 = vpop.f32.mrf.mxu0
    %v4751 = vpop.f32.mrf.mxu0
    %v4752 = vadd.f32 0.0, %v4751
    %v4753 = vpop.f32.mrf.mxu0
    %4754 = vmatprep.mubr.bf16.mxu0 0
    %4755 = vmatmul.mubr.bf16.gmra.mxu0 %v4489
    %v4756 = vpop.f32.mrf.mxu0
    %v4757 = vadd.f32 0.0, %v4756
    %v4758 = vpop.f32.mrf.mxu0
    %v4759 = vpop.f32.mrf.mxu0
    %v4760 = vadd.f32 0.0, %v4759
    %v4761 = vpop.f32.mrf.mxu0
    %4762 = vmatprep.mubr.bf16.mxu0 0
    %4763 = vmatmul.mubr.bf16.gmra.mxu0 %v4492
    %v4764 = vpop.f32.mrf.mxu0
    %v4765 = vadd.f32 0.0, %v4764
    %v4766 = vpop.f32.mrf.mxu0
    %v4767 = vpop.f32.mrf.mxu0
    %v4768 = vadd.f32 0.0, %v4767
    %v4769 = vpop.f32.mrf.mxu0
    %4770 = vmatprep.mubr.bf16.mxu0 0
    %4771 = vmatmul.mubr.bf16.gmra.mxu0 %v4495
    %v4772 = vpop.f32.mrf.mxu0
    %v4773 = vadd.f32 0.0, %v4772
    %v4774 = vpop.f32.mrf.mxu0
    %v4775 = vpop.f32.mrf.mxu0
    %v4776 = vadd.f32 0.0, %v4775
    %v4777 = vpop.f32.mrf.mxu0
    %4778 = vmatprep.mubr.bf16.mxu0 0
    %4779 = vmatmul.mubr.bf16.gmra.mxu0 %v4498
    %v4780 = vpop.f32.mrf.mxu0
    %v4781 = vadd.f32 0.0, %v4780
    %v4782 = vpop.f32.mrf.mxu0
    %v4783 = vpop.f32.mrf.mxu0
    %v4784 = vadd.f32 0.0, %v4783
    %v4785 = vpop.f32.mrf.mxu0
    %4786 = vmatprep.mubr.bf16.mxu0 0
    %4787 = vmatmul.mubr.bf16.gmra.mxu0 %v4501
    %v4788 = vpop.f32.mrf.mxu0
    %v4789 = vadd.f32 0.0, %v4788
    %v4790 = vpop.f32.mrf.mxu0
    %v4791 = vpop.f32.mrf.mxu0
    %v4792 = vadd.f32 0.0, %v4791
    %v4793 = vpop.f32.mrf.mxu0
    %4794 = vdwg.mxu0
    %v4795 = vadd.f32 %v4245, %v4541
    %v4796 = vadd.f32 %v4246, %v4544
    %v4797 = vadd.f32 %v4247, %v4549
    %v4798 = vadd.f32 %v4248, %v4552
    %v4799 = vadd.f32 %v4249, %v4557
    %v4800 = vadd.f32 %v4250, %v4560
    %v4801 = vadd.f32 %v4251, %v4565
    %v4802 = vadd.f32 %v4252, %v4568
    %v4803 = vadd.f32 %v4253, %v4573
    %v4804 = vadd.f32 %v4254, %v4576
    %v4805 = vadd.f32 %v4255, %v4581
    %v4806 = vadd.f32 %v4256, %v4584
    %v4807 = vadd.f32 %v4257, %v4589
    %v4808 = vadd.f32 %v4258, %v4592
    %v4809 = vadd.f32 %v4259, %v4597
    %v4810 = vadd.f32 %v4260, %v4600
    %v4811 = vadd.f32 %v4261, %v4605
    %v4812 = vadd.f32 %v4262, %v4608
    %v4813 = vadd.f32 %v4263, %v4613
    %v4814 = vadd.f32 %v4264, %v4616
    %v4815 = vadd.f32 %v4265, %v4621
    %v4816 = vadd.f32 %v4266, %v4624
    %v4817 = vadd.f32 %v4267, %v4629
    %v4818 = vadd.f32 %v4268, %v4632
    %v4819 = vadd.f32 %v4269, %v4637
    %v4820 = vadd.f32 %v4270, %v4640
    %v4821 = vadd.f32 %v4271, %v4645
    %v4822 = vadd.f32 %v4272, %v4648
    %v4823 = vadd.f32 %v4273, %v4653
    %v4824 = vadd.f32 %v4274, %v4656
    %v4825 = vadd.f32 %v4275, %v4661
    %v4826 = vadd.f32 %v4276, %v4664
    %v4827 = vadd.f32 %v4277, %v4669
    %v4828 = vadd.f32 %v4278, %v4672
    %v4829 = vadd.f32 %v4279, %v4677
    %v4830 = vadd.f32 %v4280, %v4680
    %v4831 = vadd.f32 %v4281, %v4685
    %v4832 = vadd.f32 %v4282, %v4688
    %v4833 = vadd.f32 %v4283, %v4693
    %v4834 = vadd.f32 %v4284, %v4696
    %v4835 = vadd.f32 %v4285, %v4701
    %v4836 = vadd.f32 %v4286, %v4704
    %v4837 = vadd.f32 %v4287, %v4709
    %v4838 = vadd.f32 %v4288, %v4712
    %v4839 = vadd.f32 %v4289, %v4717
    %v4840 = vadd.f32 %v4290, %v4720
    %v4841 = vadd.f32 %v4291, %v4725
    %v4842 = vadd.f32 %v4292, %v4728
    %v4843 = vadd.f32 %v4293, %v4733
    %v4844 = vadd.f32 %v4294, %v4736
    %v4845 = vadd.f32 %v4295, %v4741
    %v4846 = vadd.f32 %v4296, %v4744
    %v4847 = vadd.f32 %v4297, %v4749
    %v4848 = vadd.f32 %v4298, %v4752
    %v4849 = vadd.f32 %v4299, %v4757
    %v4850 = vadd.f32 %v4300, %v4760
    %v4851 = vadd.f32 %v4301, %v4765
    %v4852 = vadd.f32 %v4302, %v4768
    %v4853 = vadd.f32 %v4303, %v4773
    %v4854 = vadd.f32 %v4304, %v4776
    %v4855 = vadd.f32 %v4305, %v4781
    %v4856 = vadd.f32 %v4306, %v4784
    %v4857 = vadd.f32 %v4307, %v4789
    %v4858 = vadd.f32 %v4308, %v4792
    %4859 = vxpose.xlu0.b32.start [1/16] %v4795, 128
    %4860 = vxpose.xlu0.b32.cont [2/16] %v4796, 128
    %4861 = vxpose.xlu0.b32.cont [3/16] %v4797, 128
    %4862 = vxpose.xlu0.b32.cont [4/16] %v4798, 128
    %4863 = vxpose.xlu0.b32.cont [5/16] %v4799, 128
    %4864 = vxpose.xlu0.b32.cont [6/16] %v4800, 128
    %4865 = vxpose.xlu0.b32.cont [7/16] %v4801, 128
    %4866 = vxpose.xlu0.b32.cont [8/16] %v4802, 128
    %4867 = vxpose.xlu0.b32.cont [9/16] %v4803, 128
    %4868 = vxpose.xlu0.b32.cont [10/16] %v4804, 128
    %4869 = vxpose.xlu0.b32.cont [11/16] %v4805, 128
    %4870 = vxpose.xlu0.b32.cont [12/16] %v4806, 128
    %4871 = vxpose.xlu0.b32.cont [13/16] %v4807, 128
    %4872 = vxpose.xlu0.b32.cont [14/16] %v4808, 128
    %4873 = vxpose.xlu0.b32.cont [15/16] %v4809, 128
    %4874 = vxpose.xlu0.b32.end [16/16] %v4810, 128
    %v4875 = vpop.trf.xlu0
    %v4876 = vpop.trf.xlu0
    %v4877 = vpop.trf.xlu0
    %v4878 = vpop.trf.xlu0
    %v4879 = vpop.trf.xlu0
    %v4880 = vpop.trf.xlu0
    %v4881 = vpop.trf.xlu0
    %v4882 = vpop.trf.xlu0
    %v4883 = vpop.trf.xlu0
    %v4884 = vpop.trf.xlu0
    %v4885 = vpop.trf.xlu0
    %v4886 = vpop.trf.xlu0
    %v4887 = vpop.trf.xlu0
    %v4888 = vpop.trf.xlu0
    %v4889 = vpop.trf.xlu0
    %v4890 = vpop.trf.xlu0
    %4891 = vxpose.xlu0.b32.start [1/16] %v4811, 128
    %4892 = vxpose.xlu0.b32.cont [2/16] %v4812, 128
    %4893 = vxpose.xlu0.b32.cont [3/16] %v4813, 128
    %4894 = vxpose.xlu0.b32.cont [4/16] %v4814, 128
    %4895 = vxpose.xlu0.b32.cont [5/16] %v4815, 128
    %4896 = vxpose.xlu0.b32.cont [6/16] %v4816, 128
    %4897 = vxpose.xlu0.b32.cont [7/16] %v4817, 128
    %4898 = vxpose.xlu0.b32.cont [8/16] %v4818, 128
    %4899 = vxpose.xlu0.b32.cont [9/16] %v4819, 128
    %4900 = vxpose.xlu0.b32.cont [10/16] %v4820, 128
    %4901 = vxpose.xlu0.b32.cont [11/16] %v4821, 128
    %4902 = vxpose.xlu0.b32.cont [12/16] %v4822, 128
    %4903 = vxpose.xlu0.b32.cont [13/16] %v4823, 128
    %4904 = vxpose.xlu0.b32.cont [14/16] %v4824, 128
    %4905 = vxpose.xlu0.b32.cont [15/16] %v4825, 128
    %4906 = vxpose.xlu0.b32.end [16/16] %v4826, 128
    %v4907 = vpop.trf.xlu0
    %v4908 = vpop.trf.xlu0
    %v4909 = vpop.trf.xlu0
    %v4910 = vpop.trf.xlu0
    %v4911 = vpop.trf.xlu0
    %v4912 = vpop.trf.xlu0
    %v4913 = vpop.trf.xlu0
    %v4914 = vpop.trf.xlu0
    %v4915 = vpop.trf.xlu0
    %v4916 = vpop.trf.xlu0
    %v4917 = vpop.trf.xlu0
    %v4918 = vpop.trf.xlu0
    %v4919 = vpop.trf.xlu0
    %v4920 = vpop.trf.xlu0
    %v4921 = vpop.trf.xlu0
    %v4922 = vpop.trf.xlu0
    %4923 = vxpose.xlu0.b32.start [1/16] %v4827, 128
    %4924 = vxpose.xlu0.b32.cont [2/16] %v4828, 128
    %4925 = vxpose.xlu0.b32.cont [3/16] %v4829, 128
    %4926 = vxpose.xlu0.b32.cont [4/16] %v4830, 128
    %4927 = vxpose.xlu0.b32.cont [5/16] %v4831, 128
    %4928 = vxpose.xlu0.b32.cont [6/16] %v4832, 128
    %4929 = vxpose.xlu0.b32.cont [7/16] %v4833, 128
    %4930 = vxpose.xlu0.b32.cont [8/16] %v4834, 128
    %4931 = vxpose.xlu0.b32.cont [9/16] %v4835, 128
    %4932 = vxpose.xlu0.b32.cont [10/16] %v4836, 128
    %4933 = vxpose.xlu0.b32.cont [11/16] %v4837, 128
    %4934 = vxpose.xlu0.b32.cont [12/16] %v4838, 128
    %4935 = vxpose.xlu0.b32.cont [13/16] %v4839, 128
    %4936 = vxpose.xlu0.b32.cont [14/16] %v4840, 128
    %4937 = vxpose.xlu0.b32.cont [15/16] %v4841, 128
    %4938 = vxpose.xlu0.b32.end [16/16] %v4842, 128
    %v4939 = vpop.trf.xlu0
    %v4940 = vpop.trf.xlu0
    %v4941 = vpop.trf.xlu0
    %v4942 = vpop.trf.xlu0
    %v4943 = vpop.trf.xlu0
    %v4944 = vpop.trf.xlu0
    %v4945 = vpop.trf.xlu0
    %v4946 = vpop.trf.xlu0
    %v4947 = vpop.trf.xlu0
    %v4948 = vpop.trf.xlu0
    %v4949 = vpop.trf.xlu0
    %v4950 = vpop.trf.xlu0
    %v4951 = vpop.trf.xlu0
    %v4952 = vpop.trf.xlu0
    %v4953 = vpop.trf.xlu0
    %v4954 = vpop.trf.xlu0
    %4955 = vxpose.xlu0.b32.start [1/16] %v4843, 128
    %4956 = vxpose.xlu0.b32.cont [2/16] %v4844, 128
    %4957 = vxpose.xlu0.b32.cont [3/16] %v4845, 128
    %4958 = vxpose.xlu0.b32.cont [4/16] %v4846, 128
    %4959 = vxpose.xlu0.b32.cont [5/16] %v4847, 128
    %4960 = vxpose.xlu0.b32.cont [6/16] %v4848, 128
    %4961 = vxpose.xlu0.b32.cont [7/16] %v4849, 128
    %4962 = vxpose.xlu0.b32.cont [8/16] %v4850, 128
    %4963 = vxpose.xlu0.b32.cont [9/16] %v4851, 128
    %4964 = vxpose.xlu0.b32.cont [10/16] %v4852, 128
    %4965 = vxpose.xlu0.b32.cont [11/16] %v4853, 128
    %4966 = vxpose.xlu0.b32.cont [12/16] %v4854, 128
    %4967 = vxpose.xlu0.b32.cont [13/16] %v4855, 128
    %4968 = vxpose.xlu0.b32.cont [14/16] %v4856, 128
    %4969 = vxpose.xlu0.b32.cont [15/16] %v4857, 128
    %4970 = vxpose.xlu0.b32.end [16/16] %v4858, 128
    %v4971 = vpop.trf.xlu0
    %v4972 = vpop.trf.xlu0
    %v4973 = vpop.trf.xlu0
    %v4974 = vpop.trf.xlu0
    %v4975 = vpop.trf.xlu0
    %v4976 = vpop.trf.xlu0
    %v4977 = vpop.trf.xlu0
    %v4978 = vpop.trf.xlu0
    %v4979 = vpop.trf.xlu0
    %v4980 = vpop.trf.xlu0
    %v4981 = vpop.trf.xlu0
    %v4982 = vpop.trf.xlu0
    %v4983 = vpop.trf.xlu0
    %v4984 = vpop.trf.xlu0
    %v4985 = vpop.trf.xlu0
    %v4986 = vpop.trf.xlu0
    %v4987 = vld [vmem:[%s2] sm:$0xff]
    %v4988 = vld [vmem:[%s3] sm:$0xff]
    %v4989 = vadd.f32 %v4875, %v4907
    %v4990 = vadd.f32 %v4989, %v4939
    %v4991 = vadd.f32 %v4990, %v4971
    %4992 = vadd.xlane.f32.xlu0 %v4991
    %v4993 = vpop.xlane.xlu0 %4992
    %v4994 = vmul.f32 %v4993, 0.001953125
    %v4995 = vsub.f32 %v4875, %v4994
    %v4996 = vsub.f32 %v4907, %v4994
    %v4997 = vsub.f32 %v4939, %v4994
    %v4998 = vsub.f32 %v4971, %v4994
    %v4999 = vmul.f32 %v4995, %v4995
    %v5000 = vmul.f32 %v4996, %v4996
    %v5001 = vmul.f32 %v4997, %v4997
    %v5002 = vmul.f32 %v4998, %v4998
    %v5003 = vadd.f32 %v4999, %v5000
    %v5004 = vadd.f32 %v5003, %v5001
    %v5005 = vadd.f32 %v5004, %v5002
    %5006 = vadd.xlane.f32.xlu0 %v5005
    %v5007 = vpop.xlane.xlu0 %5006
    %v5008 = vmul.f32 %v5007, 0.001953125
    %v5009 = vadd.f32 %v5008, 1e-05
    %v5010 = vrsqrt.pop %v5009
    %v5011 = vmul.f32 %v4987, %v5010
    %v5012 = vmul.f32 %v4994, %v5011
    %v5013 = vsub.f32 %v4988, %v5012
    %5014 = vxpose.xlu0.b32.start [1/16] %v5011, 128
    %5015 = vxpose.xlu0.b32.cont [2/16] 0.0, 128
    %5016 = vxpose.xlu0.b32.cont [3/16] 0.0, 128
    %5017 = vxpose.xlu0.b32.cont [4/16] 0.0, 128
    %5018 = vxpose.xlu0.b32.cont [5/16] 0.0, 128
    %5019 = vxpose.xlu0.b32.cont [6/16] 0.0, 128
    %5020 = vxpose.xlu0.b32.cont [7/16] 0.0, 128
    %5021 = vxpose.xlu0.b32.cont [8/16] 0.0, 128
    %5022 = vxpose.xlu0.b32.cont [9/16] 0.0, 128
    %5023 = vxpose.xlu0.b32.cont [10/16] 0.0, 128
    %5024 = vxpose.xlu0.b32.cont [11/16] 0.0, 128
    %5025 = vxpose.xlu0.b32.cont [12/16] 0.0, 128
    %5026 = vxpose.xlu0.b32.cont [13/16] 0.0, 128
    %5027 = vxpose.xlu0.b32.cont [14/16] 0.0, 128
    %5028 = vxpose.xlu0.b32.cont [15/16] 0.0, 128
    %5029 = vxpose.xlu0.b32.end [16/16] 0.0, 128
    %v5030 = vpop.trf.xlu0
    %v5031 = vpop.trf.xlu0
    %v5032 = vpop.trf.xlu0
    %v5033 = vpop.trf.xlu0
    %v5034 = vpop.trf.xlu0
    %v5035 = vpop.trf.xlu0
    %v5036 = vpop.trf.xlu0
    %v5037 = vpop.trf.xlu0
    %v5038 = vpop.trf.xlu0
    %v5039 = vpop.trf.xlu0
    %v5040 = vpop.trf.xlu0
    %v5041 = vpop.trf.xlu0
    %v5042 = vpop.trf.xlu0
    %v5043 = vpop.trf.xlu0
    %v5044 = vpop.trf.xlu0
    %v5045 = vpop.trf.xlu0
    %5046 = vxpose.xlu0.b32.start [1/16] %v5013, 128
    %5047 = vxpose.xlu0.b32.cont [2/16] 0.0, 128
    %5048 = vxpose.xlu0.b32.cont [3/16] 0.0, 128
    %5049 = vxpose.xlu0.b32.cont [4/16] 0.0, 128
    %5050 = vxpose.xlu0.b32.cont [5/16] 0.0, 128
    %5051 = vxpose.xlu0.b32.cont [6/16] 0.0, 128
    %5052 = vxpose.xlu0.b32.cont [7/16] 0.0, 128
    %5053 = vxpose.xlu0.b32.cont [8/16] 0.0, 128
    %5054 = vxpose.xlu0.b32.cont [9/16] 0.0, 128
    %5055 = vxpose.xlu0.b32.cont [10/16] 0.0, 128
    %5056 = vxpose.xlu0.b32.cont [11/16] 0.0, 128
    %5057 = vxpose.xlu0.b32.cont [12/16] 0.0, 128
    %5058 = vxpose.xlu0.b32.cont [13/16] 0.0, 128
    %5059 = vxpose.xlu0.b32.cont [14/16] 0.0, 128
    %5060 = vxpose.xlu0.b32.cont [15/16] 0.0, 128
    %5061 = vxpose.xlu0.b32.end [16/16] 0.0, 128
    %v5062 = vpop.trf.xlu0
    %v5063 = vpop.trf.xlu0
    %v5064 = vpop.trf.xlu0
    %v5065 = vpop.trf.xlu0
    %v5066 = vpop.trf.xlu0
    %v5067 = vpop.trf.xlu0
    %v5068 = vpop.trf.xlu0
    %v5069 = vpop.trf.xlu0
    %v5070 = vpop.trf.xlu0
    %v5071 = vpop.trf.xlu0
    %v5072 = vpop.trf.xlu0
    %v5073 = vpop.trf.xlu0
    %v5074 = vpop.trf.xlu0
    %v5075 = vpop.trf.xlu0
    %v5076 = vpop.trf.xlu0
    %v5077 = vpop.trf.xlu0
    %v5078 = vlaneseq
    %v5079 = vshrl.u32 %v5078, 7
    %v5080 = vsub.s32 0, %v5079
    %v5081 = vrot.slane %v5030, %v5080
    %v5082 = vmul.f32 %v4795, %v5081
    %v5083 = vmul.f32 %v4796, %v5081
    %v5084 = vmul.f32 %v4797, %v5081
    %v5085 = vmul.f32 %v4798, %v5081
    %v5086 = vmul.f32 %v4799, %v5081
    %v5087 = vmul.f32 %v4800, %v5081
    %v5088 = vmul.f32 %v4801, %v5081
    %v5089 = vmul.f32 %v4802, %v5081
    %v5090 = vmul.f32 %v4803, %v5081
    %v5091 = vmul.f32 %v4804, %v5081
    %v5092 = vmul.f32 %v4805, %v5081
    %v5093 = vmul.f32 %v4806, %v5081
    %v5094 = vmul.f32 %v4807, %v5081
    %v5095 = vmul.f32 %v4808, %v5081
    %v5096 = vmul.f32 %v4809, %v5081
    %v5097 = vmul.f32 %v4810, %v5081
    %v5098 = vmul.f32 %v4811, %v5081
    %v5099 = vmul.f32 %v4812, %v5081
    %v5100 = vmul.f32 %v4813, %v5081
    %v5101 = vmul.f32 %v4814, %v5081
    %v5102 = vmul.f32 %v4815, %v5081
    %v5103 = vmul.f32 %v4816, %v5081
    %v5104 = vmul.f32 %v4817, %v5081
    %v5105 = vmul.f32 %v4818, %v5081
    %v5106 = vmul.f32 %v4819, %v5081
    %v5107 = vmul.f32 %v4820, %v5081
    %v5108 = vmul.f32 %v4821, %v5081
    %v5109 = vmul.f32 %v4822, %v5081
    %v5110 = vmul.f32 %v4823, %v5081
    %v5111 = vmul.f32 %v4824, %v5081
    %v5112 = vmul.f32 %v4825, %v5081
    %v5113 = vmul.f32 %v4826, %v5081
    %v5114 = vmul.f32 %v4827, %v5081
    %v5115 = vmul.f32 %v4828, %v5081
    %v5116 = vmul.f32 %v4829, %v5081
    %v5117 = vmul.f32 %v4830, %v5081
    %v5118 = vmul.f32 %v4831, %v5081
    %v5119 = vmul.f32 %v4832, %v5081
    %v5120 = vmul.f32 %v4833, %v5081
    %v5121 = vmul.f32 %v4834, %v5081
    %v5122 = vmul.f32 %v4835, %v5081
    %v5123 = vmul.f32 %v4836, %v5081
    %v5124 = vmul.f32 %v4837, %v5081
    %v5125 = vmul.f32 %v4838, %v5081
    %v5126 = vmul.f32 %v4839, %v5081
    %v5127 = vmul.f32 %v4840, %v5081
    %v5128 = vmul.f32 %v4841, %v5081
    %v5129 = vmul.f32 %v4842, %v5081
    %v5130 = vmul.f32 %v4843, %v5081
    %v5131 = vmul.f32 %v4844, %v5081
    %v5132 = vmul.f32 %v4845, %v5081
    %v5133 = vmul.f32 %v4846, %v5081
    %v5134 = vmul.f32 %v4847, %v5081
    %v5135 = vmul.f32 %v4848, %v5081
    %v5136 = vmul.f32 %v4849, %v5081
    %v5137 = vmul.f32 %v4850, %v5081
    %v5138 = vmul.f32 %v4851, %v5081
    %v5139 = vmul.f32 %v4852, %v5081
    %v5140 = vmul.f32 %v4853, %v5081
    %v5141 = vmul.f32 %v4854, %v5081
    %v5142 = vmul.f32 %v4855, %v5081
    %v5143 = vmul.f32 %v4856, %v5081
    %v5144 = vmul.f32 %v4857, %v5081
    %v5145 = vmul.f32 %v4858, %v5081
    %v5146 = vlaneseq
    %v5147 = vshrl.u32 %v5146, 7
    %v5148 = vsub.s32 0, %v5147
    %v5149 = vrot.slane %v5062, %v5148
    %v5150 = vadd.f32 %v5082, %v5149
    %v5151 = vadd.f32 %v5083, %v5149
    %v5152 = vadd.f32 %v5084, %v5149
    %v5153 = vadd.f32 %v5085, %v5149
    %v5154 = vadd.f32 %v5086, %v5149
    %v5155 = vadd.f32 %v5087, %v5149
    %v5156 = vadd.f32 %v5088, %v5149
    %v5157 = vadd.f32 %v5089, %v5149
    %v5158 = vadd.f32 %v5090, %v5149
    %v5159 = vadd.f32 %v5091, %v5149
    %v5160 = vadd.f32 %v5092, %v5149
    %v5161 = vadd.f32 %v5093, %v5149
    %v5162 = vadd.f32 %v5094, %v5149
    %v5163 = vadd.f32 %v5095, %v5149
    %v5164 = vadd.f32 %v5096, %v5149
    %v5165 = vadd.f32 %v5097, %v5149
    %v5166 = vadd.f32 %v5098, %v5149
    %v5167 = vadd.f32 %v5099, %v5149
    %v5168 = vadd.f32 %v5100, %v5149
    %v5169 = vadd.f32 %v5101, %v5149
    %v5170 = vadd.f32 %v5102, %v5149
    %v5171 = vadd.f32 %v5103, %v5149
    %v5172 = vadd.f32 %v5104, %v5149
    %v5173 = vadd.f32 %v5105, %v5149
    %v5174 = vadd.f32 %v5106, %v5149
    %v5175 = vadd.f32 %v5107, %v5149
    %v5176 = vadd.f32 %v5108, %v5149
    %v5177 = vadd.f32 %v5109, %v5149
    %v5178 = vadd.f32 %v5110, %v5149
    %v5179 = vadd.f32 %v5111, %v5149
    %v5180 = vadd.f32 %v5112, %v5149
    %v5181 = vadd.f32 %v5113, %v5149
    %v5182 = vadd.f32 %v5114, %v5149
    %v5183 = vadd.f32 %v5115, %v5149
    %v5184 = vadd.f32 %v5116, %v5149
    %v5185 = vadd.f32 %v5117, %v5149
    %v5186 = vadd.f32 %v5118, %v5149
    %v5187 = vadd.f32 %v5119, %v5149
    %v5188 = vadd.f32 %v5120, %v5149
    %v5189 = vadd.f32 %v5121, %v5149
    %v5190 = vadd.f32 %v5122, %v5149
    %v5191 = vadd.f32 %v5123, %v5149
    %v5192 = vadd.f32 %v5124, %v5149
    %v5193 = vadd.f32 %v5125, %v5149
    %v5194 = vadd.f32 %v5126, %v5149
    %v5195 = vadd.f32 %v5127, %v5149
    %v5196 = vadd.f32 %v5128, %v5149
    %v5197 = vadd.f32 %v5129, %v5149
    %v5198 = vadd.f32 %v5130, %v5149
    %v5199 = vadd.f32 %v5131, %v5149
    %v5200 = vadd.f32 %v5132, %v5149
    %v5201 = vadd.f32 %v5133, %v5149
    %v5202 = vadd.f32 %v5134, %v5149
    %v5203 = vadd.f32 %v5135, %v5149
    %v5204 = vadd.f32 %v5136, %v5149
    %v5205 = vadd.f32 %v5137, %v5149
    %v5206 = vadd.f32 %v5138, %v5149
    %v5207 = vadd.f32 %v5139, %v5149
    %v5208 = vadd.f32 %v5140, %v5149
    %v5209 = vadd.f32 %v5141, %v5149
    %v5210 = vadd.f32 %v5142, %v5149
    %v5211 = vadd.f32 %v5143, %v5149
    %v5212 = vadd.f32 %v5144, %v5149
    %v5213 = vadd.f32 %v5145, %v5149
    %v5214 = vmax.f32 %v5150, 0.0
    %v5215 = vmax.f32 %v5151, 0.0
    %v5216 = vmax.f32 %v5152, 0.0
    %v5217 = vmax.f32 %v5153, 0.0
    %v5218 = vmax.f32 %v5154, 0.0
    %v5219 = vmax.f32 %v5155, 0.0
    %v5220 = vmax.f32 %v5156, 0.0
    %v5221 = vmax.f32 %v5157, 0.0
    %v5222 = vmax.f32 %v5158, 0.0
    %v5223 = vmax.f32 %v5159, 0.0
    %v5224 = vmax.f32 %v5160, 0.0
    %v5225 = vmax.f32 %v5161, 0.0
    %v5226 = vmax.f32 %v5162, 0.0
    %v5227 = vmax.f32 %v5163, 0.0
    %v5228 = vmax.f32 %v5164, 0.0
    %v5229 = vmax.f32 %v5165, 0.0
    %v5230 = vmax.f32 %v5166, 0.0
    %v5231 = vmax.f32 %v5167, 0.0
    %v5232 = vmax.f32 %v5168, 0.0
    %v5233 = vmax.f32 %v5169, 0.0
    %v5234 = vmax.f32 %v5170, 0.0
    %v5235 = vmax.f32 %v5171, 0.0
    %v5236 = vmax.f32 %v5172, 0.0
    %v5237 = vmax.f32 %v5173, 0.0
    %v5238 = vmax.f32 %v5174, 0.0
    %v5239 = vmax.f32 %v5175, 0.0
    %v5240 = vmax.f32 %v5176, 0.0
    %v5241 = vmax.f32 %v5177, 0.0
    %v5242 = vmax.f32 %v5178, 0.0
    %v5243 = vmax.f32 %v5179, 0.0
    %v5244 = vmax.f32 %v5180, 0.0
    %v5245 = vmax.f32 %v5181, 0.0
    %v5246 = vmax.f32 %v5182, 0.0
    %v5247 = vmax.f32 %v5183, 0.0
    %v5248 = vmax.f32 %v5184, 0.0
    %v5249 = vmax.f32 %v5185, 0.0
    %v5250 = vmax.f32 %v5186, 0.0
    %v5251 = vmax.f32 %v5187, 0.0
    %v5252 = vmax.f32 %v5188, 0.0
    %v5253 = vmax.f32 %v5189, 0.0
    %v5254 = vmax.f32 %v5190, 0.0
    %v5255 = vmax.f32 %v5191, 0.0
    %v5256 = vmax.f32 %v5192, 0.0
    %v5257 = vmax.f32 %v5193, 0.0
    %v5258 = vmax.f32 %v5194, 0.0
    %v5259 = vmax.f32 %v5195, 0.0
    %v5260 = vmax.f32 %v5196, 0.0
    %v5261 = vmax.f32 %v5197, 0.0
    %v5262 = vmax.f32 %v5198, 0.0
    %v5263 = vmax.f32 %v5199, 0.0
    %v5264 = vmax.f32 %v5200, 0.0
    %v5265 = vmax.f32 %v5201, 0.0
    %v5266 = vmax.f32 %v5202, 0.0
    %v5267 = vmax.f32 %v5203, 0.0
    %v5268 = vmax.f32 %v5204, 0.0
    %v5269 = vmax.f32 %v5205, 0.0
    %v5270 = vmax.f32 %v5206, 0.0
    %v5271 = vmax.f32 %v5207, 0.0
    %v5272 = vmax.f32 %v5208, 0.0
    %v5273 = vmax.f32 %v5209, 0.0
    %v5274 = vmax.f32 %v5210, 0.0
    %v5275 = vmax.f32 %v5211, 0.0
    %v5276 = vmax.f32 %v5212, 0.0
    %v5277 = vmax.f32 %v5213, 0.0
    %vm5278 = vcmask 64512
    %5279 = vst.msk [vmem:[#allocation2] sm:$0xff] %vm5278, 0.0
    %5280 = vst.msk [vmem:[#allocation2 + $0x8] sm:$0xff] %vm5278, 0.0
    %vm5281 = vcmask 58368
    %5282 = vst.msk [vmem:[#allocation2 + $0x10] sm:$0x3] %vm5281, 0.0
    %5283 = vst.msk [vmem:[#allocation2 + $0x1b0] sm:$0xff] %vm5278, 0.0
    %5284 = vst.msk [vmem:[#allocation2 + $0x1b8] sm:$0xff] %vm5278, 0.0
    %5285 = vst.msk [vmem:[#allocation2 + $0x1c0] sm:$0x3] %vm5281, 0.0
    %s5286 = scalar_lea.vmem [#allocation2], 408
    %5287 = vst.msk [vmem:[%s5286] sm:$0xff] %vm5278, 0.0
    %5288 = vst.msk [vmem:[%s5286 + $0x8] sm:$0xff] %vm5278, 0.0
    %5289 = vst.msk [vmem:[%s5286 + $0x10] sm:$0x3] %vm5281, 0.0
    %5290 = vst.msk [vmem:[%s5286 + $0x1b0] sm:$0xff] %vm5278, 0.0
    %5291 = vst.msk [vmem:[%s5286 + $0x1b8] sm:$0xff] %vm5278, 0.0
    %5292 = vst.msk [vmem:[%s5286 + $0x1c0] sm:$0x3] %vm5281, 0.0
    %vm5293 = vcmask 57344
    %5294 = vst.msk [vmem:[#allocation2] sm:$0x1] %vm5293, 0.0
    %5295 = vst.msk [vmem:[#allocation2 + $0x18] sm:$0x1] %vm5293, 0.0
    %5296 = vst.msk [vmem:[#allocation2 + $0x30] sm:$0x1] %vm5293, 0.0
    %5297 = vst.msk [vmem:[#allocation2 + $0x48] sm:$0x1] %vm5293, 0.0
    %5298 = vst.msk [vmem:[#allocation2 + $0x60] sm:$0x1] %vm5293, 0.0
    %5299 = vst.msk [vmem:[#allocation2 + $0x78] sm:$0x1] %vm5293, 0.0
    %5300 = vst.msk [vmem:[#allocation2 + $0x90] sm:$0x1] %vm5293, 0.0
    %5301 = vst.msk [vmem:[#allocation2 + $0xa8] sm:$0x1] %vm5293, 0.0
    %5302 = vst.msk [vmem:[#allocation2 + $0xc0] sm:$0x1] %vm5293, 0.0
    %5303 = vst.msk [vmem:[#allocation2 + $0xd8] sm:$0x1] %vm5293, 0.0
    %5304 = vst.msk [vmem:[#allocation2 + $0xf0] sm:$0x1] %vm5293, 0.0
    %5305 = vst.msk [vmem:[#allocation2 + $0x108] sm:$0x1] %vm5293, 0.0
    %5306 = vst.msk [vmem:[#allocation2 + $0x120] sm:$0x1] %vm5293, 0.0
    %5307 = vst.msk [vmem:[#allocation2 + $0x138] sm:$0x1] %vm5293, 0.0
    %5308 = vst.msk [vmem:[#allocation2 + $0x150] sm:$0x1] %vm5293, 0.0
    %5309 = vst.msk [vmem:[#allocation2 + $0x168] sm:$0x1] %vm5293, 0.0
    %5310 = vst.msk [vmem:[#allocation2 + $0x180] sm:$0x1] %vm5293, 0.0
    %5311 = vst.msk [vmem:[#allocation2 + $0x198] sm:$0x1] %vm5293, 0.0
    %5312 = vst.msk [vmem:[#allocation2 + $0x1b0] sm:$0x1] %vm5293, 0.0
    %5313 = vst.msk [vmem:[#allocation2 + $0x1c8] sm:$0x1] %vm5293, 0.0
    %5314 = vst.msk [vmem:[#allocation2 + $0x1e0] sm:$0x1] %vm5293, 0.0
    %5315 = vst.msk [vmem:[#allocation2 + $0x1f8] sm:$0x1] %vm5293, 0.0
    %5316 = vst.msk [vmem:[#allocation2 + $0x210] sm:$0x1] %vm5293, 0.0
    %5317 = vst.msk [vmem:[#allocation2 + $0x228] sm:$0x1] %vm5293, 0.0
    %5318 = vst.msk [vmem:[#allocation2 + $0x240] sm:$0x1] %vm5293, 0.0
    %5319 = vst.msk [vmem:[#allocation2 + $0x258] sm:$0x1] %vm5293, 0.0
    %5320 = vst.msk [vmem:[#allocation2 + $0x270] sm:$0x1] %vm5293, 0.0
    %5321 = vst.msk [vmem:[#allocation2 + $0x288] sm:$0x1] %vm5293, 0.0
    %5322 = vst.msk [vmem:[#allocation2 + $0x2a0] sm:$0x1] %vm5293, 0.0
    %5323 = vst.msk [vmem:[#allocation2 + $0x2b8] sm:$0x1] %vm5293, 0.0
    %5324 = vst.msk [vmem:[#allocation2 + $0x2d0] sm:$0x1] %vm5293, 0.0
    %5325 = vst.msk [vmem:[#allocation2 + $0x2e8] sm:$0x1] %vm5293, 0.0
    %5326 = vst.msk [vmem:[#allocation2 + $0x300] sm:$0x1] %vm5293, 0.0
    %5327 = vst.msk [vmem:[#allocation2 + $0x318] sm:$0x1] %vm5293, 0.0
    %5328 = vst.msk [vmem:[#allocation2 + $0x330] sm:$0x1] %vm5293, 0.0
    %5329 = vst.msk [vmem:[#allocation2 + $0x348] sm:$0x1] %vm5293, 0.0
    %5330 = vst.msk [vmem:[#allocation2 + $0x11] sm:$0x1] %vm5293, 0.0
    %5331 = vst.msk [vmem:[#allocation2 + $0x29] sm:$0x1] %vm5293, 0.0
    %5332 = vst.msk [vmem:[#allocation2 + $0x41] sm:$0x1] %vm5293, 0.0
    %5333 = vst.msk [vmem:[#allocation2 + $0x59] sm:$0x1] %vm5293, 0.0
    %5334 = vst.msk [vmem:[#allocation2 + $0x71] sm:$0x1] %vm5293, 0.0
    %5335 = vst.msk [vmem:[#allocation2 + $0x89] sm:$0x1] %vm5293, 0.0
    %5336 = vst.msk [vmem:[#allocation2 + $0xa1] sm:$0x1] %vm5293, 0.0
    %5337 = vst.msk [vmem:[#allocation2 + $0xb9] sm:$0x1] %vm5293, 0.0
    %5338 = vst.msk [vmem:[#allocation2 + $0xd1] sm:$0x1] %vm5293, 0.0
    %5339 = vst.msk [vmem:[#allocation2 + $0xe9] sm:$0x1] %vm5293, 0.0
    %5340 = vst.msk [vmem:[#allocation2 + $0x101] sm:$0x1] %vm5293, 0.0
    %5341 = vst.msk [vmem:[#allocation2 + $0x119] sm:$0x1] %vm5293, 0.0
    %5342 = vst.msk [vmem:[#allocation2 + $0x131] sm:$0x1] %vm5293, 0.0
    %5343 = vst.msk [vmem:[#allocation2 + $0x149] sm:$0x1] %vm5293, 0.0
    %5344 = vst.msk [vmem:[#allocation2 + $0x161] sm:$0x1] %vm5293, 0.0
    %5345 = vst.msk [vmem:[#allocation2 + $0x179] sm:$0x1] %vm5293, 0.0
    %5346 = vst.msk [vmem:[#allocation2 + $0x191] sm:$0x1] %vm5293, 0.0
    %5347 = vst.msk [vmem:[#allocation2 + $0x1a9] sm:$0x1] %vm5293, 0.0
    %5348 = vst.msk [vmem:[#allocation2 + $0x1c1] sm:$0x1] %vm5293, 0.0
    %5349 = vst.msk [vmem:[#allocation2 + $0x1d9] sm:$0x1] %vm5293, 0.0
    %5350 = vst.msk [vmem:[#allocation2 + $0x1f1] sm:$0x1] %vm5293, 0.0
    %5351 = vst.msk [vmem:[#allocation2 + $0x209] sm:$0x1] %vm5293, 0.0
    %5352 = vst.msk [vmem:[#allocation2 + $0x221] sm:$0x1] %vm5293, 0.0
    %5353 = vst.msk [vmem:[#allocation2 + $0x239] sm:$0x1] %vm5293, 0.0
    %5354 = vst.msk [vmem:[#allocation2 + $0x251] sm:$0x1] %vm5293, 0.0
    %5355 = vst.msk [vmem:[#allocation2 + $0x269] sm:$0x1] %vm5293, 0.0
    %5356 = vst.msk [vmem:[#allocation2 + $0x281] sm:$0x1] %vm5293, 0.0
    %5357 = vst.msk [vmem:[#allocation2 + $0x299] sm:$0x1] %vm5293, 0.0
    %5358 = vst.msk [vmem:[#allocation2 + $0x2b1] sm:$0x1] %vm5293, 0.0
    %5359 = vst.msk [vmem:[#allocation2 + $0x2c9] sm:$0x1] %vm5293, 0.0
    %5360 = vst.msk [vmem:[#allocation2 + $0x2e1] sm:$0x1] %vm5293, 0.0
    %5361 = vst.msk [vmem:[#allocation2 + $0x2f9] sm:$0x1] %vm5293, 0.0
    %5362 = vst.msk [vmem:[#allocation2 + $0x311] sm:$0x1] %vm5293, 0.0
    %5363 = vst.msk [vmem:[#allocation2 + $0x329] sm:$0x1] %vm5293, 0.0
    %5364 = vst.msk [vmem:[#allocation2 + $0x341] sm:$0x1] %vm5293, 0.0
    %5365 = vst.msk [vmem:[#allocation2 + $0x359] sm:$0x1] %vm5293, 0.0
    %s5366 = scalar_lea.vmem [#allocation2], 24
    %5367 = vst.msk [vmem:[%s5366 + $0x1] sm:$0xff] %vm5278, %v5214
    %5368 = vst.msk [vmem:[%s5366 + $0x9] sm:$0xff] %vm5278, %v5215
    %5369 = vst.msk [vmem:[%s5366 + $0x19] sm:$0xff] %vm5278, %v5216
    %5370 = vst.msk [vmem:[%s5366 + $0x21] sm:$0xff] %vm5278, %v5217
    %5371 = vst.msk [vmem:[%s5366 + $0x31] sm:$0xff] %vm5278, %v5218
    %5372 = vst.msk [vmem:[%s5366 + $0x39] sm:$0xff] %vm5278, %v5219
    %5373 = vst.msk [vmem:[%s5366 + $0x49] sm:$0xff] %vm5278, %v5220
    %5374 = vst.msk [vmem:[%s5366 + $0x51] sm:$0xff] %vm5278, %v5221
    %5375 = vst.msk [vmem:[%s5366 + $0x61] sm:$0xff] %vm5278, %v5222
    %5376 = vst.msk [vmem:[%s5366 + $0x69] sm:$0xff] %vm5278, %v5223
    %5377 = vst.msk [vmem:[%s5366 + $0x79] sm:$0xff] %vm5278, %v5224
    %5378 = vst.msk [vmem:[%s5366 + $0x81] sm:$0xff] %vm5278, %v5225
    %5379 = vst.msk [vmem:[%s5366 + $0x91] sm:$0xff] %vm5278, %v5226
    %5380 = vst.msk [vmem:[%s5366 + $0x99] sm:$0xff] %vm5278, %v5227
    %5381 = vst.msk [vmem:[%s5366 + $0xa9] sm:$0xff] %vm5278, %v5228
    %5382 = vst.msk [vmem:[%s5366 + $0xb1] sm:$0xff] %vm5278, %v5229
    %5383 = vst.msk [vmem:[%s5366 + $0xc1] sm:$0xff] %vm5278, %v5230
    %5384 = vst.msk [vmem:[%s5366 + $0xc9] sm:$0xff] %vm5278, %v5231
    %5385 = vst.msk [vmem:[%s5366 + $0xd9] sm:$0xff] %vm5278, %v5232
    %5386 = vst.msk [vmem:[%s5366 + $0xe1] sm:$0xff] %vm5278, %v5233
    %5387 = vst.msk [vmem:[%s5366 + $0xf1] sm:$0xff] %vm5278, %v5234
    %5388 = vst.msk [vmem:[%s5366 + $0xf9] sm:$0xff] %vm5278, %v5235
    %5389 = vst.msk [vmem:[%s5366 + $0x109] sm:$0xff] %vm5278, %v5236
    %5390 = vst.msk [vmem:[%s5366 + $0x111] sm:$0xff] %vm5278, %v5237
    %5391 = vst.msk [vmem:[%s5366 + $0x121] sm:$0xff] %vm5278, %v5238
    %5392 = vst.msk [vmem:[%s5366 + $0x129] sm:$0xff] %vm5278, %v5239
    %5393 = vst.msk [vmem:[%s5366 + $0x139] sm:$0xff] %vm5278, %v5240
    %5394 = vst.msk [vmem:[%s5366 + $0x141] sm:$0xff] %vm5278, %v5241
    %5395 = vst.msk [vmem:[%s5366 + $0x151] sm:$0xff] %vm5278, %v5242
    %5396 = vst.msk [vmem:[%s5366 + $0x159] sm:$0xff] %vm5278, %v5243
    %5397 = vst.msk [vmem:[%s5366 + $0x169] sm:$0xff] %vm5278, %v5244
    %5398 = vst.msk [vmem:[%s5366 + $0x171] sm:$0xff] %vm5278, %v5245
    %5399 = vst.msk [vmem:[%s5366 + $0x1b1] sm:$0xff] %vm5278, %v5246
    %5400 = vst.msk [vmem:[%s5366 + $0x1b9] sm:$0xff] %vm5278, %v5247
    %5401 = vst.msk [vmem:[%s5366 + $0x1c9] sm:$0xff] %vm5278, %v5248
    %5402 = vst.msk [vmem:[%s5366 + $0x1d1] sm:$0xff] %vm5278, %v5249
    %5403 = vst.msk [vmem:[%s5366 + $0x1e1] sm:$0xff] %vm5278, %v5250
    %5404 = vst.msk [vmem:[%s5366 + $0x1e9] sm:$0xff] %vm5278, %v5251
    %5405 = vst.msk [vmem:[%s5366 + $0x1f9] sm:$0xff] %vm5278, %v5252
    %5406 = vst.msk [vmem:[%s5366 + $0x201] sm:$0xff] %vm5278, %v5253
    %5407 = vst.msk [vmem:[%s5366 + $0x211] sm:$0xff] %vm5278, %v5254
    %5408 = vst.msk [vmem:[%s5366 + $0x219] sm:$0xff] %vm5278, %v5255
    %5409 = vst.msk [vmem:[%s5366 + $0x229] sm:$0xff] %vm5278, %v5256
    %5410 = vst.msk [vmem:[%s5366 + $0x231] sm:$0xff] %vm5278, %v5257
    %5411 = vst.msk [vmem:[%s5366 + $0x241] sm:$0xff] %vm5278, %v5258
    %5412 = vst.msk [vmem:[%s5366 + $0x249] sm:$0xff] %vm5278, %v5259
    %5413 = vst.msk [vmem:[%s5366 + $0x259] sm:$0xff] %vm5278, %v5260
    %5414 = vst.msk [vmem:[%s5366 + $0x261] sm:$0xff] %vm5278, %v5261
    %5415 = vst.msk [vmem:[%s5366 + $0x271] sm:$0xff] %vm5278, %v5262
    %5416 = vst.msk [vmem:[%s5366 + $0x279] sm:$0xff] %vm5278, %v5263
    %5417 = vst.msk [vmem:[%s5366 + $0x289] sm:$0xff] %vm5278, %v5264
    %5418 = vst.msk [vmem:[%s5366 + $0x291] sm:$0xff] %vm5278, %v5265
    %5419 = vst.msk [vmem:[%s5366 + $0x2a1] sm:$0xff] %vm5278, %v5266
    %5420 = vst.msk [vmem:[%s5366 + $0x2a9] sm:$0xff] %vm5278, %v5267
    %5421 = vst.msk [vmem:[%s5366 + $0x2b9] sm:$0xff] %vm5278, %v5268
    %5422 = vst.msk [vmem:[%s5366 + $0x2c1] sm:$0xff] %vm5278, %v5269
    %5423 = vst.msk [vmem:[%s5366 + $0x2d1] sm:$0xff] %vm5278, %v5270
    %5424 = vst.msk [vmem:[%s5366 + $0x2d9] sm:$0xff] %vm5278, %v5271
    %5425 = vst.msk [vmem:[%s5366 + $0x2e9] sm:$0xff] %vm5278, %v5272
    %5426 = vst.msk [vmem:[%s5366 + $0x2f1] sm:$0xff] %vm5278, %v5273
    %5427 = vst.msk [vmem:[%s5366 + $0x301] sm:$0xff] %vm5278, %v5274
    %5428 = vst.msk [vmem:[%s5366 + $0x309] sm:$0xff] %vm5278, %v5275
    %5429 = vst.msk [vmem:[%s5366 + $0x319] sm:$0xff] %vm5278, %v5276
    %5430 = vst.msk [vmem:[%s5366 + $0x321] sm:$0xff] %vm5278, %v5277
    %v5431 = vld [vmem:[#allocation2] sm:$0xff]
    %v5432 = vld [vmem:[#allocation2 + $0x8] sm:$0xff]
    %v5433 = vld [vmem:[#allocation2 + $0x18] sm:$0xff]
    %v5434 = vld [vmem:[#allocation2 + $0x20] sm:$0xff]
    %v5435 = vld [vmem:[#allocation2 + $0x30] sm:$0xff]
    %v5436 = vld [vmem:[#allocation2 + $0x38] sm:$0xff]
    %v5437 = vld [vmem:[#allocation2 + $0x48] sm:$0xff]
    %v5438 = vld [vmem:[#allocation2 + $0x50] sm:$0xff]
    %v5439 = vld [vmem:[#allocation2 + $0x60] sm:$0xff]
    %v5440 = vld [vmem:[#allocation2 + $0x68] sm:$0xff]
    %v5441 = vld [vmem:[#allocation2 + $0x78] sm:$0xff]
    %v5442 = vld [vmem:[#allocation2 + $0x80] sm:$0xff]
    %v5443 = vld [vmem:[#allocation2 + $0x90] sm:$0xff]
    %v5444 = vld [vmem:[#allocation2 + $0x98] sm:$0xff]
    %v5445 = vld [vmem:[#allocation2 + $0xa8] sm:$0xff]
    %v5446 = vld [vmem:[#allocation2 + $0xb0] sm:$0xff]
    %v5447 = vld [vmem:[#allocation2 + $0xc0] sm:$0xff]
    %v5448 = vld [vmem:[#allocation2 + $0xc8] sm:$0xff]
    %v5449 = vld [vmem:[#allocation2 + $0xd8] sm:$0xff]
    %v5450 = vld [vmem:[#allocation2 + $0xe0] sm:$0xff]
    %v5451 = vld [vmem:[#allocation2 + $0xf0] sm:$0xff]
    %v5452 = vld [vmem:[#allocation2 + $0xf8] sm:$0xff]
    %v5453 = vld [vmem:[#allocation2 + $0x108] sm:$0xff]
    %v5454 = vld [vmem:[#allocation2 + $0x110] sm:$0xff]
    %v5455 = vld [vmem:[#allocation2 + $0x120] sm:$0xff]
    %v5456 = vld [vmem:[#allocation2 + $0x128] sm:$0xff]
    %v5457 = vld [vmem:[#allocation2 + $0x138] sm:$0xff]
    %v5458 = vld [vmem:[#allocation2 + $0x140] sm:$0xff]
    %v5459 = vld [vmem:[#allocation2 + $0x150] sm:$0xff]
    %v5460 = vld [vmem:[#allocation2 + $0x158] sm:$0xff]
    %v5461 = vld [vmem:[#allocation2 + $0x168] sm:$0xff]
    %v5462 = vld [vmem:[#allocation2 + $0x170] sm:$0xff]
    %v5463 = vld [vmem:[#allocation2 + $0x1b0] sm:$0xff]
    %v5464 = vld [vmem:[#allocation2 + $0x1b8] sm:$0xff]
    %v5465 = vld [vmem:[#allocation2 + $0x1c8] sm:$0xff]
    %v5466 = vld [vmem:[#allocation2 + $0x1d0] sm:$0xff]
    %v5467 = vld [vmem:[#allocation2 + $0x1e0] sm:$0xff]
    %v5468 = vld [vmem:[#allocation2 + $0x1e8] sm:$0xff]
    %v5469 = vld [vmem:[#allocation2 + $0x1f8] sm:$0xff]
    %v5470 = vld [vmem:[#allocation2 + $0x200] sm:$0xff]
    %v5471 = vld [vmem:[#allocation2 + $0x210] sm:$0xff]
    %v5472 = vld [vmem:[#allocation2 + $0x218] sm:$0xff]
    %v5473 = vld [vmem:[#allocation2 + $0x228] sm:$0xff]
    %v5474 = vld [vmem:[#allocation2 + $0x230] sm:$0xff]
    %v5475 = vld [vmem:[#allocation2 + $0x240] sm:$0xff]
    %v5476 = vld [vmem:[#allocation2 + $0x248] sm:$0xff]
    %v5477 = vld [vmem:[#allocation2 + $0x258] sm:$0xff]
    %v5478 = vld [vmem:[#allocation2 + $0x260] sm:$0xff]
    %v5479 = vld [vmem:[#allocation2 + $0x270] sm:$0xff]
    %v5480 = vld [vmem:[#allocation2 + $0x278] sm:$0xff]
    %v5481 = vld [vmem:[#allocation2 + $0x288] sm:$0xff]
    %v5482 = vld [vmem:[#allocation2 + $0x290] sm:$0xff]
    %v5483 = vld [vmem:[#allocation2 + $0x2a0] sm:$0xff]
    %v5484 = vld [vmem:[#allocation2 + $0x2a8] sm:$0xff]
    %v5485 = vld [vmem:[#allocation2 + $0x2b8] sm:$0xff]
    %v5486 = vld [vmem:[#allocation2 + $0x2c0] sm:$0xff]
    %v5487 = vld [vmem:[#allocation2 + $0x2d0] sm:$0xff]
    %v5488 = vld [vmem:[#allocation2 + $0x2d8] sm:$0xff]
    %v5489 = vld [vmem:[#allocation2 + $0x2e8] sm:$0xff]
    %v5490 = vld [vmem:[#allocation2 + $0x2f0] sm:$0xff]
    %v5491 = vld [vmem:[#allocation2 + $0x300] sm:$0xff]
    %v5492 = vld [vmem:[#allocation2 + $0x308] sm:$0xff]
    %v5493 = vld [vmem:[#allocation2 + $0x318] sm:$0xff]
    %v5494 = vld [vmem:[#allocation2 + $0x320] sm:$0xff]
    %v5495 = vpack.c.bf16 %v5432, %v5431
    %v5496 = vpack.c.bf16 %v5434, %v5433
    %v5497 = vpack.c.bf16 %v5436, %v5435
    %v5498 = vpack.c.bf16 %v5438, %v5437
    %v5499 = vpack.c.bf16 %v5440, %v5439
    %v5500 = vpack.c.bf16 %v5442, %v5441
    %v5501 = vpack.c.bf16 %v5444, %v5443
    %v5502 = vpack.c.bf16 %v5446, %v5445
    %v5503 = vpack.c.bf16 %v5448, %v5447
    %v5504 = vpack.c.bf16 %v5450, %v5449
    %v5505 = vpack.c.bf16 %v5452, %v5451
    %v5506 = vpack.c.bf16 %v5454, %v5453
    %v5507 = vpack.c.bf16 %v5456, %v5455
    %v5508 = vpack.c.bf16 %v5458, %v5457
    %v5509 = vpack.c.bf16 %v5460, %v5459
    %v5510 = vpack.c.bf16 %v5462, %v5461
    %v5511 = vpack.c.bf16 %v5464, %v5463
    %v5512 = vpack.c.bf16 %v5466, %v5465
    %v5513 = vpack.c.bf16 %v5468, %v5467
    %v5514 = vpack.c.bf16 %v5470, %v5469
    %v5515 = vpack.c.bf16 %v5472, %v5471
    %v5516 = vpack.c.bf16 %v5474, %v5473
    %v5517 = vpack.c.bf16 %v5476, %v5475
    %v5518 = vpack.c.bf16 %v5478, %v5477
    %v5519 = vpack.c.bf16 %v5480, %v5479
    %v5520 = vpack.c.bf16 %v5482, %v5481
    %v5521 = vpack.c.bf16 %v5484, %v5483
    %v5522 = vpack.c.bf16 %v5486, %v5485
    %v5523 = vpack.c.bf16 %v5488, %v5487
    %v5524 = vpack.c.bf16 %v5490, %v5489
    %v5525 = vpack.c.bf16 %v5492, %v5491
    %v5526 = vpack.c.bf16 %v5494, %v5493
    %v5527 = vld [vmem:[%s4] sm:$0xf]
    %v5528 = vld [vmem:[#allocation2 + $0x1] sm:$0xff]
    %v5529 = vld [vmem:[#allocation2 + $0x9] sm:$0xff]
    %v5530 = vld [vmem:[#allocation2 + $0x19] sm:$0xff]
    %v5531 = vld [vmem:[#allocation2 + $0x21] sm:$0xff]
    %v5532 = vld [vmem:[#allocation2 + $0x31] sm:$0xff]
    %v5533 = vld [vmem:[#allocation2 + $0x39] sm:$0xff]
    %v5534 = vld [vmem:[#allocation2 + $0x49] sm:$0xff]
    %v5535 = vld [vmem:[#allocation2 + $0x51] sm:$0xff]
    %v5536 = vld [vmem:[#allocation2 + $0x61] sm:$0xff]
    %v5537 = vld [vmem:[#allocation2 + $0x69] sm:$0xff]
    %v5538 = vld [vmem:[#allocation2 + $0x79] sm:$0xff]
    %v5539 = vld [vmem:[#allocation2 + $0x81] sm:$0xff]
    %v5540 = vld [vmem:[#allocation2 + $0x91] sm:$0xff]
    %v5541 = vld [vmem:[#allocation2 + $0x99] sm:$0xff]
    %v5542 = vld [vmem:[#allocation2 + $0xa9] sm:$0xff]
    %v5543 = vld [vmem:[#allocation2 + $0xb1] sm:$0xff]
    %v5544 = vld [vmem:[#allocation2 + $0xc1] sm:$0xff]
    %v5545 = vld [vmem:[#allocation2 + $0xc9] sm:$0xff]
    %v5546 = vld [vmem:[#allocation2 + $0xd9] sm:$0xff]
    %v5547 = vld [vmem:[#allocation2 + $0xe1] sm:$0xff]
    %v5548 = vld [vmem:[#allocation2 + $0xf1] sm:$0xff]
    %v5549 = vld [vmem:[#allocation2 + $0xf9] sm:$0xff]
    %v5550 = vld [vmem:[#allocation2 + $0x109] sm:$0xff]
    %v5551 = vld [vmem:[#allocation2 + $0x111] sm:$0xff]
    %v5552 = vld [vmem:[#allocation2 + $0x121] sm:$0xff]
    %v5553 = vld [vmem:[#allocation2 + $0x129] sm:$0xff]
    %v5554 = vld [vmem:[#allocation2 + $0x139] sm:$0xff]
    %v5555 = vld [vmem:[#allocation2 + $0x141] sm:$0xff]
    %v5556 = vld [vmem:[#allocation2 + $0x151] sm:$0xff]
    %v5557 = vld [vmem:[#allocation2 + $0x159] sm:$0xff]
    %v5558 = vld [vmem:[#allocation2 + $0x169] sm:$0xff]
    %v5559 = vld [vmem:[#allocation2 + $0x171] sm:$0xff]
    %v5560 = vld [vmem:[#allocation2 + $0x1b1] sm:$0xff]
    %v5561 = vld [vmem:[#allocation2 + $0x1b9] sm:$0xff]
    %v5562 = vld [vmem:[#allocation2 + $0x1c9] sm:$0xff]
    %v5563 = vld [vmem:[#allocation2 + $0x1d1] sm:$0xff]
    %v5564 = vld [vmem:[#allocation2 + $0x1e1] sm:$0xff]
    %v5565 = vld [vmem:[#allocation2 + $0x1e9] sm:$0xff]
    %v5566 = vld [vmem:[#allocation2 + $0x1f9] sm:$0xff]
    %v5567 = vld [vmem:[#allocation2 + $0x201] sm:$0xff]
    %v5568 = vld [vmem:[#allocation2 + $0x211] sm:$0xff]
    %v5569 = vld [vmem:[#allocation2 + $0x219] sm:$0xff]
    %v5570 = vld [vmem:[#allocation2 + $0x229] sm:$0xff]
    %v5571 = vld [vmem:[#allocation2 + $0x231] sm:$0xff]
    %v5572 = vld [vmem:[#allocation2 + $0x241] sm:$0xff]
    %v5573 = vld [vmem:[#allocation2 + $0x249] sm:$0xff]
    %v5574 = vld [vmem:[#allocation2 + $0x259] sm:$0xff]
    %v5575 = vld [vmem:[#allocation2 + $0x261] sm:$0xff]
    %v5576 = vld [vmem:[#allocation2 + $0x271] sm:$0xff]
    %v5577 = vld [vmem:[#allocation2 + $0x279] sm:$0xff]
    %v5578 = vld [vmem:[#allocation2 + $0x289] sm:$0xff]
    %v5579 = vld [vmem:[#allocation2 + $0x291] sm:$0xff]
    %v5580 = vld [vmem:[#allocation2 + $0x2a1] sm:$0xff]
    %v5581 = vld [vmem:[#allocation2 + $0x2a9] sm:$0xff]
    %v5582 = vld [vmem:[#allocation2 + $0x2b9] sm:$0xff]
    %v5583 = vld [vmem:[#allocation2 + $0x2c1] sm:$0xff]
    %v5584 = vld [vmem:[#allocation2 + $0x2d1] sm:$0xff]
    %v5585 = vld [vmem:[#allocation2 + $0x2d9] sm:$0xff]
    %v5586 = vld [vmem:[#allocation2 + $0x2e9] sm:$0xff]
    %v5587 = vld [vmem:[#allocation2 + $0x2f1] sm:$0xff]
    %v5588 = vld [vmem:[#allocation2 + $0x301] sm:$0xff]
    %v5589 = vld [vmem:[#allocation2 + $0x309] sm:$0xff]
    %v5590 = vld [vmem:[#allocation2 + $0x319] sm:$0xff]
    %v5591 = vld [vmem:[#allocation2 + $0x321] sm:$0xff]
    %v5592 = vpack.c.bf16 %v5529, %v5528
    %v5593 = vpack.c.bf16 %v5531, %v5530
    %v5594 = vpack.c.bf16 %v5533, %v5532
    %v5595 = vpack.c.bf16 %v5535, %v5534
    %v5596 = vpack.c.bf16 %v5537, %v5536
    %v5597 = vpack.c.bf16 %v5539, %v5538
    %v5598 = vpack.c.bf16 %v5541, %v5540
    %v5599 = vpack.c.bf16 %v5543, %v5542
    %v5600 = vpack.c.bf16 %v5545, %v5544
    %v5601 = vpack.c.bf16 %v5547, %v5546
    %v5602 = vpack.c.bf16 %v5549, %v5548
    %v5603 = vpack.c.bf16 %v5551, %v5550
    %v5604 = vpack.c.bf16 %v5553, %v5552
    %v5605 = vpack.c.bf16 %v5555, %v5554
    %v5606 = vpack.c.bf16 %v5557, %v5556
    %v5607 = vpack.c.bf16 %v5559, %v5558
    %v5608 = vpack.c.bf16 %v5561, %v5560
    %v5609 = vpack.c.bf16 %v5563, %v5562
    %v5610 = vpack.c.bf16 %v5565, %v5564
    %v5611 = vpack.c.bf16 %v5567, %v5566
    %v5612 = vpack.c.bf16 %v5569, %v5568
    %v5613 = vpack.c.bf16 %v5571, %v5570
    %v5614 = vpack.c.bf16 %v5573, %v5572
    %v5615 = vpack.c.bf16 %v5575, %v5574
    %v5616 = vpack.c.bf16 %v5577, %v5576
    %v5617 = vpack.c.bf16 %v5579, %v5578
    %v5618 = vpack.c.bf16 %v5581, %v5580
    %v5619 = vpack.c.bf16 %v5583, %v5582
    %v5620 = vpack.c.bf16 %v5585, %v5584
    %v5621 = vpack.c.bf16 %v5587, %v5586
    %v5622 = vpack.c.bf16 %v5589, %v5588
    %v5623 = vpack.c.bf16 %v5591, %v5590
    %s5624 = scalar_lea.vmem %s4, 4
    %v5625 = vld [vmem:[%s5624] sm:$0xf]
    %v5627 = vsel %vm5278, %v5592, 0
    %v5630 = vsel %vm5278, %v5593, 0
    %v5633 = vsel %vm5278, %v5594, 0
    %v5636 = vsel %vm5278, %v5595, 0
    %v5639 = vsel %vm5278, %v5596, 0
    %v5642 = vsel %vm5278, %v5597, 0
    %v5645 = vsel %vm5278, %v5598, 0
    %v5648 = vsel %vm5278, %v5599, 0
    %v5651 = vsel %vm5278, %v5600, 0
    %v5654 = vsel %vm5278, %v5601, 0
    %v5657 = vsel %vm5278, %v5602, 0
    %v5660 = vsel %vm5278, %v5603, 0
    %v5663 = vsel %vm5278, %v5604, 0
    %v5666 = vsel %vm5278, %v5605, 0
    %v5669 = vsel %vm5278, %v5606, 0
    %v5672 = vsel %vm5278, %v5607, 0
    %v5675 = vsel %vm5278, %v5608, 0
    %v5678 = vsel %vm5278, %v5609, 0
    %v5681 = vsel %vm5278, %v5610, 0
    %v5684 = vsel %vm5278, %v5611, 0
    %v5687 = vsel %vm5278, %v5612, 0
    %v5690 = vsel %vm5278, %v5613, 0
    %v5693 = vsel %vm5278, %v5614, 0
    %v5696 = vsel %vm5278, %v5615, 0
    %v5699 = vsel %vm5278, %v5616, 0
    %v5702 = vsel %vm5278, %v5617, 0
    %v5705 = vsel %vm5278, %v5618, 0
    %v5708 = vsel %vm5278, %v5619, 0
    %v5711 = vsel %vm5278, %v5620, 0
    %v5714 = vsel %vm5278, %v5621, 0
    %v5717 = vsel %vm5278, %v5622, 0
    %v5720 = vsel %vm5278, %v5623, 0
    %vm5722 = vcmask 1043456
    %v5724 = vsel %vm5722, %v5625, 0
    %5726 = vmatprep.subr.bf16.mxu0 0
    %5727 = vmatpush1.bf16.msra.mxu0 0
    %5728 = vmatprep.subr.bf16.mxu0 0
    %5729 = vmatpush1.bf16.msra.mxu0 0
    %5730 = vmatprep.subr.bf16.mxu0 0
    %5731 = vmatpush1.bf16.msra.mxu0 0
    %5732 = vmatprep.subr.bf16.mxu0 0
    %5733 = vmatpush1.bf16.msra.mxu0 0
    %5734 = vmatprep.subr.bf16.mxu0 0
    %5735 = vmatpush1.bf16.msra.mxu0 0
    %5736 = vmatprep.subr.bf16.mxu0 0
    %5737 = vmatpush1.bf16.msra.mxu0 0
    %5738 = vmatprep.subr.bf16.mxu0 0
    %5739 = vmatpush1.bf16.msra.mxu0 0
    %5740 = vmatprep.subr.bf16.mxu0 0
    %5741 = vmatpush1.bf16.msra.mxu0 %v5724
    %5742 = vmatprep.subr.bf16.mxu0 0
    %5743 = vmatpush2.bf16.msra.mxu0 0
    %5744 = vmatprep.subr.bf16.mxu0 0
    %5745 = vmatpush2.bf16.msra.mxu0 0
    %5746 = vmatprep.subr.bf16.mxu0 0
    %5747 = vmatpush2.bf16.msra.mxu0 0
    %5748 = vmatprep.subr.bf16.mxu0 0
    %5749 = vmatpush2.bf16.msra.mxu0 0
    %5750 = vmatprep.subr.bf16.mxu0 0
    %5751 = vmatpush2.bf16.msra.mxu0 0
    %5752 = vmatprep.subr.bf16.mxu0 0
    %5753 = vmatpush2.bf16.msra.mxu0 0
    %5754 = vmatprep.subr.bf16.mxu0 0
    %5755 = vmatpush2.bf16.msra.mxu0 0
    %5756 = vmatprep.subr.bf16.mxu0 0
    %5757 = vmatpush2.bf16.msra.mxu0 0
    %5758 = vmatprep.mubr.bf16.mxu0 0
    %5759 = vmatmul.mubr.bf16.gmra.mxu0 %v5627
    %v5760 = vpop.f32.mrf.mxu0
    %v5761 = vadd.f32 0.0, %v5760
    %v5762 = vpop.f32.mrf.mxu0
    %v5763 = vpop.f32.mrf.mxu0
    %v5764 = vadd.f32 0.0, %v5763
    %v5765 = vpop.f32.mrf.mxu0
    %5766 = vmatprep.mubr.bf16.mxu0 0
    %5767 = vmatmul.mubr.bf16.gmra.mxu0 %v5630
    %v5768 = vpop.f32.mrf.mxu0
    %v5769 = vadd.f32 0.0, %v5768
    %v5770 = vpop.f32.mrf.mxu0
    %v5771 = vpop.f32.mrf.mxu0
    %v5772 = vadd.f32 0.0, %v5771
    %v5773 = vpop.f32.mrf.mxu0
    %5774 = vmatprep.mubr.bf16.mxu0 0
    %5775 = vmatmul.mubr.bf16.gmra.mxu0 %v5633
    %v5776 = vpop.f32.mrf.mxu0
    %v5777 = vadd.f32 0.0, %v5776
    %v5778 = vpop.f32.mrf.mxu0
    %v5779 = vpop.f32.mrf.mxu0
    %v5780 = vadd.f32 0.0, %v5779
    %v5781 = vpop.f32.mrf.mxu0
    %5782 = vmatprep.mubr.bf16.mxu0 0
    %5783 = vmatmul.mubr.bf16.gmra.mxu0 %v5636
    %v5784 = vpop.f32.mrf.mxu0
    %v5785 = vadd.f32 0.0, %v5784
    %v5786 = vpop.f32.mrf.mxu0
    %v5787 = vpop.f32.mrf.mxu0
    %v5788 = vadd.f32 0.0, %v5787
    %v5789 = vpop.f32.mrf.mxu0
    %5790 = vmatprep.mubr.bf16.mxu0 0
    %5791 = vmatmul.mubr.bf16.gmra.mxu0 %v5639
    %v5792 = vpop.f32.mrf.mxu0
    %v5793 = vadd.f32 0.0, %v5792
    %v5794 = vpop.f32.mrf.mxu0
    %v5795 = vpop.f32.mrf.mxu0
    %v5796 = vadd.f32 0.0, %v5795
    %v5797 = vpop.f32.mrf.mxu0
    %5798 = vmatprep.mubr.bf16.mxu0 0
    %5799 = vmatmul.mubr.bf16.gmra.mxu0 %v5642
    %v5800 = vpop.f32.mrf.mxu0
    %v5801 = vadd.f32 0.0, %v5800
    %v5802 = vpop.f32.mrf.mxu0
    %v5803 = vpop.f32.mrf.mxu0
    %v5804 = vadd.f32 0.0, %v5803
    %v5805 = vpop.f32.mrf.mxu0
    %5806 = vmatprep.mubr.bf16.mxu0 0
    %5807 = vmatmul.mubr.bf16.gmra.mxu0 %v5645
    %v5808 = vpop.f32.mrf.mxu0
    %v5809 = vadd.f32 0.0, %v5808
    %v5810 = vpop.f32.mrf.mxu0
    %v5811 = vpop.f32.mrf.mxu0
    %v5812 = vadd.f32 0.0, %v5811
    %v5813 = vpop.f32.mrf.mxu0
    %5814 = vmatprep.mubr.bf16.mxu0 0
    %5815 = vmatmul.mubr.bf16.gmra.mxu0 %v5648
    %v5816 = vpop.f32.mrf.mxu0
    %v5817 = vadd.f32 0.0, %v5816
    %v5818 = vpop.f32.mrf.mxu0
    %v5819 = vpop.f32.mrf.mxu0
    %v5820 = vadd.f32 0.0, %v5819
    %v5821 = vpop.f32.mrf.mxu0
    %5822 = vmatprep.mubr.bf16.mxu0 0
    %5823 = vmatmul.mubr.bf16.gmra.mxu0 %v5651
    %v5824 = vpop.f32.mrf.mxu0
    %v5825 = vadd.f32 0.0, %v5824
    %v5826 = vpop.f32.mrf.mxu0
    %v5827 = vpop.f32.mrf.mxu0
    %v5828 = vadd.f32 0.0, %v5827
    %v5829 = vpop.f32.mrf.mxu0
    %5830 = vmatprep.mubr.bf16.mxu0 0
    %5831 = vmatmul.mubr.bf16.gmra.mxu0 %v5654
    %v5832 = vpop.f32.mrf.mxu0
    %v5833 = vadd.f32 0.0, %v5832
    %v5834 = vpop.f32.mrf.mxu0
    %v5835 = vpop.f32.mrf.mxu0
    %v5836 = vadd.f32 0.0, %v5835
    %v5837 = vpop.f32.mrf.mxu0
    %5838 = vmatprep.mubr.bf16.mxu0 0
    %5839 = vmatmul.mubr.bf16.gmra.mxu0 %v5657
    %v5840 = vpop.f32.mrf.mxu0
    %v5841 = vadd.f32 0.0, %v5840
    %v5842 = vpop.f32.mrf.mxu0
    %v5843 = vpop.f32.mrf.mxu0
    %v5844 = vadd.f32 0.0, %v5843
    %v5845 = vpop.f32.mrf.mxu0
    %5846 = vmatprep.mubr.bf16.mxu0 0
    %5847 = vmatmul.mubr.bf16.gmra.mxu0 %v5660
    %v5848 = vpop.f32.mrf.mxu0
    %v5849 = vadd.f32 0.0, %v5848
    %v5850 = vpop.f32.mrf.mxu0
    %v5851 = vpop.f32.mrf.mxu0
    %v5852 = vadd.f32 0.0, %v5851
    %v5853 = vpop.f32.mrf.mxu0
    %5854 = vmatprep.mubr.bf16.mxu0 0
    %5855 = vmatmul.mubr.bf16.gmra.mxu0 %v5663
    %v5856 = vpop.f32.mrf.mxu0
    %v5857 = vadd.f32 0.0, %v5856
    %v5858 = vpop.f32.mrf.mxu0
    %v5859 = vpop.f32.mrf.mxu0
    %v5860 = vadd.f32 0.0, %v5859
    %v5861 = vpop.f32.mrf.mxu0
    %5862 = vmatprep.mubr.bf16.mxu0 0
    %5863 = vmatmul.mubr.bf16.gmra.mxu0 %v5666
    %v5864 = vpop.f32.mrf.mxu0
    %v5865 = vadd.f32 0.0, %v5864
    %v5866 = vpop.f32.mrf.mxu0
    %v5867 = vpop.f32.mrf.mxu0
    %v5868 = vadd.f32 0.0, %v5867
    %v5869 = vpop.f32.mrf.mxu0
    %5870 = vmatprep.mubr.bf16.mxu0 0
    %5871 = vmatmul.mubr.bf16.gmra.mxu0 %v5669
    %v5872 = vpop.f32.mrf.mxu0
    %v5873 = vadd.f32 0.0, %v5872
    %v5874 = vpop.f32.mrf.mxu0
    %v5875 = vpop.f32.mrf.mxu0
    %v5876 = vadd.f32 0.0, %v5875
    %v5877 = vpop.f32.mrf.mxu0
    %5878 = vmatprep.mubr.bf16.mxu0 0
    %5879 = vmatmul.mubr.bf16.gmra.mxu0 %v5672
    %v5880 = vpop.f32.mrf.mxu0
    %v5881 = vadd.f32 0.0, %v5880
    %v5882 = vpop.f32.mrf.mxu0
    %v5883 = vpop.f32.mrf.mxu0
    %v5884 = vadd.f32 0.0, %v5883
    %v5885 = vpop.f32.mrf.mxu0
    %5886 = vmatprep.mubr.bf16.mxu0 0
    %5887 = vmatmul.mubr.bf16.gmra.mxu0 %v5675
    %v5888 = vpop.f32.mrf.mxu0
    %v5889 = vadd.f32 0.0, %v5888
    %v5890 = vpop.f32.mrf.mxu0
    %v5891 = vpop.f32.mrf.mxu0
    %v5892 = vadd.f32 0.0, %v5891
    %v5893 = vpop.f32.mrf.mxu0
    %5894 = vmatprep.mubr.bf16.mxu0 0
    %5895 = vmatmul.mubr.bf16.gmra.mxu0 %v5678
    %v5896 = vpop.f32.mrf.mxu0
    %v5897 = vadd.f32 0.0, %v5896
    %v5898 = vpop.f32.mrf.mxu0
    %v5899 = vpop.f32.mrf.mxu0
    %v5900 = vadd.f32 0.0, %v5899
    %v5901 = vpop.f32.mrf.mxu0
    %5902 = vmatprep.mubr.bf16.mxu0 0
    %5903 = vmatmul.mubr.bf16.gmra.mxu0 %v5681
    %v5904 = vpop.f32.mrf.mxu0
    %v5905 = vadd.f32 0.0, %v5904
    %v5906 = vpop.f32.mrf.mxu0
    %v5907 = vpop.f32.mrf.mxu0
    %v5908 = vadd.f32 0.0, %v5907
    %v5909 = vpop.f32.mrf.mxu0
    %5910 = vmatprep.mubr.bf16.mxu0 0
    %5911 = vmatmul.mubr.bf16.gmra.mxu0 %v5684
    %v5912 = vpop.f32.mrf.mxu0
    %v5913 = vadd.f32 0.0, %v5912
    %v5914 = vpop.f32.mrf.mxu0
    %v5915 = vpop.f32.mrf.mxu0
    %v5916 = vadd.f32 0.0, %v5915
    %v5917 = vpop.f32.mrf.mxu0
    %5918 = vmatprep.mubr.bf16.mxu0 0
    %5919 = vmatmul.mubr.bf16.gmra.mxu0 %v5687
    %v5920 = vpop.f32.mrf.mxu0
    %v5921 = vadd.f32 0.0, %v5920
    %v5922 = vpop.f32.mrf.mxu0
    %v5923 = vpop.f32.mrf.mxu0
    %v5924 = vadd.f32 0.0, %v5923
    %v5925 = vpop.f32.mrf.mxu0
    %5926 = vmatprep.mubr.bf16.mxu0 0
    %5927 = vmatmul.mubr.bf16.gmra.mxu0 %v5690
    %v5928 = vpop.f32.mrf.mxu0
    %v5929 = vadd.f32 0.0, %v5928
    %v5930 = vpop.f32.mrf.mxu0
    %v5931 = vpop.f32.mrf.mxu0
    %v5932 = vadd.f32 0.0, %v5931
    %v5933 = vpop.f32.mrf.mxu0
    %5934 = vmatprep.mubr.bf16.mxu0 0
    %5935 = vmatmul.mubr.bf16.gmra.mxu0 %v5693
    %v5936 = vpop.f32.mrf.mxu0
    %v5937 = vadd.f32 0.0, %v5936
    %v5938 = vpop.f32.mrf.mxu0
    %v5939 = vpop.f32.mrf.mxu0
    %v5940 = vadd.f32 0.0, %v5939
    %v5941 = vpop.f32.mrf.mxu0
    %5942 = vmatprep.mubr.bf16.mxu0 0
    %5943 = vmatmul.mubr.bf16.gmra.mxu0 %v5696
    %v5944 = vpop.f32.mrf.mxu0
    %v5945 = vadd.f32 0.0, %v5944
    %v5946 = vpop.f32.mrf.mxu0
    %v5947 = vpop.f32.mrf.mxu0
    %v5948 = vadd.f32 0.0, %v5947
    %v5949 = vpop.f32.mrf.mxu0
    %5950 = vmatprep.mubr.bf16.mxu0 0
    %5951 = vmatmul.mubr.bf16.gmra.mxu0 %v5699
    %v5952 = vpop.f32.mrf.mxu0
    %v5953 = vadd.f32 0.0, %v5952
    %v5954 = vpop.f32.mrf.mxu0
    %v5955 = vpop.f32.mrf.mxu0
    %v5956 = vadd.f32 0.0, %v5955
    %v5957 = vpop.f32.mrf.mxu0
    %5958 = vmatprep.mubr.bf16.mxu0 0
    %5959 = vmatmul.mubr.bf16.gmra.mxu0 %v5702
    %v5960 = vpop.f32.mrf.mxu0
    %v5961 = vadd.f32 0.0, %v5960
    %v5962 = vpop.f32.mrf.mxu0
    %v5963 = vpop.f32.mrf.mxu0
    %v5964 = vadd.f32 0.0, %v5963
    %v5965 = vpop.f32.mrf.mxu0
    %5966 = vmatprep.mubr.bf16.mxu0 0
    %5967 = vmatmul.mubr.bf16.gmra.mxu0 %v5705
    %v5968 = vpop.f32.mrf.mxu0
    %v5969 = vadd.f32 0.0, %v5968
    %v5970 = vpop.f32.mrf.mxu0
    %v5971 = vpop.f32.mrf.mxu0
    %v5972 = vadd.f32 0.0, %v5971
    %v5973 = vpop.f32.mrf.mxu0
    %5974 = vmatprep.mubr.bf16.mxu0 0
    %5975 = vmatmul.mubr.bf16.gmra.mxu0 %v5708
    %v5976 = vpop.f32.mrf.mxu0
    %v5977 = vadd.f32 0.0, %v5976
    %v5978 = vpop.f32.mrf.mxu0
    %v5979 = vpop.f32.mrf.mxu0
    %v5980 = vadd.f32 0.0, %v5979
    %v5981 = vpop.f32.mrf.mxu0
    %5982 = vmatprep.mubr.bf16.mxu0 0
    %5983 = vmatmul.mubr.bf16.gmra.mxu0 %v5711
    %v5984 = vpop.f32.mrf.mxu0
    %v5985 = vadd.f32 0.0, %v5984
    %v5986 = vpop.f32.mrf.mxu0
    %v5987 = vpop.f32.mrf.mxu0
    %v5988 = vadd.f32 0.0, %v5987
    %v5989 = vpop.f32.mrf.mxu0
    %5990 = vmatprep.mubr.bf16.mxu0 0
    %5991 = vmatmul.mubr.bf16.gmra.mxu0 %v5714
    %v5992 = vpop.f32.mrf.mxu0
    %v5993 = vadd.f32 0.0, %v5992
    %v5994 = vpop.f32.mrf.mxu0
    %v5995 = vpop.f32.mrf.mxu0
    %v5996 = vadd.f32 0.0, %v5995
    %v5997 = vpop.f32.mrf.mxu0
    %5998 = vmatprep.mubr.bf16.mxu0 0
    %5999 = vmatmul.mubr.bf16.gmra.mxu0 %v5717
    %v6000 = vpop.f32.mrf.mxu0
    %v6001 = vadd.f32 0.0, %v6000
    %v6002 = vpop.f32.mrf.mxu0
    %v6003 = vpop.f32.mrf.mxu0
    %v6004 = vadd.f32 0.0, %v6003
    %v6005 = vpop.f32.mrf.mxu0
    %6006 = vmatprep.mubr.bf16.mxu0 0
    %6007 = vmatmul.mubr.bf16.gmra.mxu0 %v5720
    %v6008 = vpop.f32.mrf.mxu0
    %v6009 = vadd.f32 0.0, %v6008
    %v6010 = vpop.f32.mrf.mxu0
    %v6011 = vpop.f32.mrf.mxu0
    %v6012 = vadd.f32 0.0, %v6011
    %v6013 = vpop.f32.mrf.mxu0
    %6014 = vdwg.mxu0
    %v6016 = vsel %vm5278, %v5495, 0
    %v6019 = vsel %vm5278, %v5496, 0
    %v6022 = vsel %vm5278, %v5497, 0
    %v6025 = vsel %vm5278, %v5498, 0
    %v6028 = vsel %vm5278, %v5499, 0
    %v6031 = vsel %vm5278, %v5500, 0
    %v6034 = vsel %vm5278, %v5501, 0
    %v6037 = vsel %vm5278, %v5502, 0
    %v6040 = vsel %vm5278, %v5503, 0
    %v6043 = vsel %vm5278, %v5504, 0
    %v6046 = vsel %vm5278, %v5505, 0
    %v6049 = vsel %vm5278, %v5506, 0
    %v6052 = vsel %vm5278, %v5507, 0
    %v6055 = vsel %vm5278, %v5508, 0
    %v6058 = vsel %vm5278, %v5509, 0
    %v6061 = vsel %vm5278, %v5510, 0
    %v6064 = vsel %vm5278, %v5511, 0
    %v6067 = vsel %vm5278, %v5512, 0
    %v6070 = vsel %vm5278, %v5513, 0
    %v6073 = vsel %vm5278, %v5514, 0
    %v6076 = vsel %vm5278, %v5515, 0
    %v6079 = vsel %vm5278, %v5516, 0
    %v6082 = vsel %vm5278, %v5517, 0
    %v6085 = vsel %vm5278, %v5518, 0
    %v6088 = vsel %vm5278, %v5519, 0
    %v6091 = vsel %vm5278, %v5520, 0
    %v6094 = vsel %vm5278, %v5521, 0
    %v6097 = vsel %vm5278, %v5522, 0
    %v6100 = vsel %vm5278, %v5523, 0
    %v6103 = vsel %vm5278, %v5524, 0
    %v6106 = vsel %vm5278, %v5525, 0
    %v6109 = vsel %vm5278, %v5526, 0
    %v6112 = vsel %vm5722, %v5527, 0
    %6114 = vmatprep.subr.bf16.mxu0 0
    %6115 = vmatpush1.bf16.msra.mxu0 0
    %6116 = vmatprep.subr.bf16.mxu0 0
    %6117 = vmatpush1.bf16.msra.mxu0 0
    %6118 = vmatprep.subr.bf16.mxu0 0
    %6119 = vmatpush1.bf16.msra.mxu0 0
    %6120 = vmatprep.subr.bf16.mxu0 0
    %6121 = vmatpush1.bf16.msra.mxu0 0
    %6122 = vmatprep.subr.bf16.mxu0 0
    %6123 = vmatpush1.bf16.msra.mxu0 0
    %6124 = vmatprep.subr.bf16.mxu0 0
    %6125 = vmatpush1.bf16.msra.mxu0 0
    %6126 = vmatprep.subr.bf16.mxu0 0
    %6127 = vmatpush1.bf16.msra.mxu0 0
    %6128 = vmatprep.subr.bf16.mxu0 0
    %6129 = vmatpush1.bf16.msra.mxu0 %v6112
    %6130 = vmatprep.subr.bf16.mxu0 0
    %6131 = vmatpush2.bf16.msra.mxu0 0
    %6132 = vmatprep.subr.bf16.mxu0 0
    %6133 = vmatpush2.bf16.msra.mxu0 0
    %6134 = vmatprep.subr.bf16.mxu0 0
    %6135 = vmatpush2.bf16.msra.mxu0 0
    %6136 = vmatprep.subr.bf16.mxu0 0
    %6137 = vmatpush2.bf16.msra.mxu0 0
    %6138 = vmatprep.subr.bf16.mxu0 0
    %6139 = vmatpush2.bf16.msra.mxu0 0
    %6140 = vmatprep.subr.bf16.mxu0 0
    %6141 = vmatpush2.bf16.msra.mxu0 0
    %6142 = vmatprep.subr.bf16.mxu0 0
    %6143 = vmatpush2.bf16.msra.mxu0 0
    %6144 = vmatprep.subr.bf16.mxu0 0
    %6145 = vmatpush2.bf16.msra.mxu0 0
    %6146 = vmatprep.mubr.bf16.mxu0 0
    %6147 = vmatmul.mubr.bf16.gmra.mxu0 %v6016
    %v6148 = vpop.f32.mrf.mxu0
    %v6149 = vadd.f32 %v5761, %v6148
    %v6150 = vpop.f32.mrf.mxu0
    %v6151 = vpop.f32.mrf.mxu0
    %v6152 = vadd.f32 %v5764, %v6151
    %v6153 = vpop.f32.mrf.mxu0
    %6154 = vmatprep.mubr.bf16.mxu0 0
    %6155 = vmatmul.mubr.bf16.gmra.mxu0 %v6019
    %v6156 = vpop.f32.mrf.mxu0
    %v6157 = vadd.f32 %v5769, %v6156
    %v6158 = vpop.f32.mrf.mxu0
    %v6159 = vpop.f32.mrf.mxu0
    %v6160 = vadd.f32 %v5772, %v6159
    %v6161 = vpop.f32.mrf.mxu0
    %6162 = vmatprep.mubr.bf16.mxu0 0
    %6163 = vmatmul.mubr.bf16.gmra.mxu0 %v6022
    %v6164 = vpop.f32.mrf.mxu0
    %v6165 = vadd.f32 %v5777, %v6164
    %v6166 = vpop.f32.mrf.mxu0
    %v6167 = vpop.f32.mrf.mxu0
    %v6168 = vadd.f32 %v5780, %v6167
    %v6169 = vpop.f32.mrf.mxu0
    %6170 = vmatprep.mubr.bf16.mxu0 0
    %6171 = vmatmul.mubr.bf16.gmra.mxu0 %v6025
    %v6172 = vpop.f32.mrf.mxu0
    %v6173 = vadd.f32 %v5785, %v6172
    %v6174 = vpop.f32.mrf.mxu0
    %v6175 = vpop.f32.mrf.mxu0
    %v6176 = vadd.f32 %v5788, %v6175
    %v6177 = vpop.f32.mrf.mxu0
    %6178 = vmatprep.mubr.bf16.mxu0 0
    %6179 = vmatmul.mubr.bf16.gmra.mxu0 %v6028
    %v6180 = vpop.f32.mrf.mxu0
    %v6181 = vadd.f32 %v5793, %v6180
    %v6182 = vpop.f32.mrf.mxu0
    %v6183 = vpop.f32.mrf.mxu0
    %v6184 = vadd.f32 %v5796, %v6183
    %v6185 = vpop.f32.mrf.mxu0
    %6186 = vmatprep.mubr.bf16.mxu0 0
    %6187 = vmatmul.mubr.bf16.gmra.mxu0 %v6031
    %v6188 = vpop.f32.mrf.mxu0
    %v6189 = vadd.f32 %v5801, %v6188
    %v6190 = vpop.f32.mrf.mxu0
    %v6191 = vpop.f32.mrf.mxu0
    %v6192 = vadd.f32 %v5804, %v6191
    %v6193 = vpop.f32.mrf.mxu0
    %6194 = vmatprep.mubr.bf16.mxu0 0
    %6195 = vmatmul.mubr.bf16.gmra.mxu0 %v6034
    %v6196 = vpop.f32.mrf.mxu0
    %v6197 = vadd.f32 %v5809, %v6196
    %v6198 = vpop.f32.mrf.mxu0
    %v6199 = vpop.f32.mrf.mxu0
    %v6200 = vadd.f32 %v5812, %v6199
    %v6201 = vpop.f32.mrf.mxu0
    %6202 = vmatprep.mubr.bf16.mxu0 0
    %6203 = vmatmul.mubr.bf16.gmra.mxu0 %v6037
    %v6204 = vpop.f32.mrf.mxu0
    %v6205 = vadd.f32 %v5817, %v6204
    %v6206 = vpop.f32.mrf.mxu0
    %v6207 = vpop.f32.mrf.mxu0
    %v6208 = vadd.f32 %v5820, %v6207
    %v6209 = vpop.f32.mrf.mxu0
    %6210 = vmatprep.mubr.bf16.mxu0 0
    %6211 = vmatmul.mubr.bf16.gmra.mxu0 %v6040
    %v6212 = vpop.f32.mrf.mxu0
    %v6213 = vadd.f32 %v5825, %v6212
    %v6214 = vpop.f32.mrf.mxu0
    %v6215 = vpop.f32.mrf.mxu0
    %v6216 = vadd.f32 %v5828, %v6215
    %v6217 = vpop.f32.mrf.mxu0
    %6218 = vmatprep.mubr.bf16.mxu0 0
    %6219 = vmatmul.mubr.bf16.gmra.mxu0 %v6043
    %v6220 = vpop.f32.mrf.mxu0
    %v6221 = vadd.f32 %v5833, %v6220
    %v6222 = vpop.f32.mrf.mxu0
    %v6223 = vpop.f32.mrf.mxu0
    %v6224 = vadd.f32 %v5836, %v6223
    %v6225 = vpop.f32.mrf.mxu0
    %6226 = vmatprep.mubr.bf16.mxu0 0
    %6227 = vmatmul.mubr.bf16.gmra.mxu0 %v6046
    %v6228 = vpop.f32.mrf.mxu0
    %v6229 = vadd.f32 %v5841, %v6228
    %v6230 = vpop.f32.mrf.mxu0
    %v6231 = vpop.f32.mrf.mxu0
    %v6232 = vadd.f32 %v5844, %v6231
    %v6233 = vpop.f32.mrf.mxu0
    %6234 = vmatprep.mubr.bf16.mxu0 0
    %6235 = vmatmul.mubr.bf16.gmra.mxu0 %v6049
    %v6236 = vpop.f32.mrf.mxu0
    %v6237 = vadd.f32 %v5849, %v6236
    %v6238 = vpop.f32.mrf.mxu0
    %v6239 = vpop.f32.mrf.mxu0
    %v6240 = vadd.f32 %v5852, %v6239
    %v6241 = vpop.f32.mrf.mxu0
    %6242 = vmatprep.mubr.bf16.mxu0 0
    %6243 = vmatmul.mubr.bf16.gmra.mxu0 %v6052
    %v6244 = vpop.f32.mrf.mxu0
    %v6245 = vadd.f32 %v5857, %v6244
    %v6246 = vpop.f32.mrf.mxu0
    %v6247 = vpop.f32.mrf.mxu0
    %v6248 = vadd.f32 %v5860, %v6247
    %v6249 = vpop.f32.mrf.mxu0
    %6250 = vmatprep.mubr.bf16.mxu0 0
    %6251 = vmatmul.mubr.bf16.gmra.mxu0 %v6055
    %v6252 = vpop.f32.mrf.mxu0
    %v6253 = vadd.f32 %v5865, %v6252
    %v6254 = vpop.f32.mrf.mxu0
    %v6255 = vpop.f32.mrf.mxu0
    %v6256 = vadd.f32 %v5868, %v6255
    %v6257 = vpop.f32.mrf.mxu0
    %6258 = vmatprep.mubr.bf16.mxu0 0
    %6259 = vmatmul.mubr.bf16.gmra.mxu0 %v6058
    %v6260 = vpop.f32.mrf.mxu0
    %v6261 = vadd.f32 %v5873, %v6260
    %v6262 = vpop.f32.mrf.mxu0
    %v6263 = vpop.f32.mrf.mxu0
    %v6264 = vadd.f32 %v5876, %v6263
    %v6265 = vpop.f32.mrf.mxu0
    %6266 = vmatprep.mubr.bf16.mxu0 0
    %6267 = vmatmul.mubr.bf16.gmra.mxu0 %v6061
    %v6268 = vpop.f32.mrf.mxu0
    %v6269 = vadd.f32 %v5881, %v6268
    %v6270 = vpop.f32.mrf.mxu0
    %v6271 = vpop.f32.mrf.mxu0
    %v6272 = vadd.f32 %v5884, %v6271
    %v6273 = vpop.f32.mrf.mxu0
    %6274 = vmatprep.mubr.bf16.mxu0 0
    %6275 = vmatmul.mubr.bf16.gmra.mxu0 %v6064
    %v6276 = vpop.f32.mrf.mxu0
    %v6277 = vadd.f32 %v5889, %v6276
    %v6278 = vpop.f32.mrf.mxu0
    %v6279 = vpop.f32.mrf.mxu0
    %v6280 = vadd.f32 %v5892, %v6279
    %v6281 = vpop.f32.mrf.mxu0
    %6282 = vmatprep.mubr.bf16.mxu0 0
    %6283 = vmatmul.mubr.bf16.gmra.mxu0 %v6067
    %v6284 = vpop.f32.mrf.mxu0
    %v6285 = vadd.f32 %v5897, %v6284
    %v6286 = vpop.f32.mrf.mxu0
    %v6287 = vpop.f32.mrf.mxu0
    %v6288 = vadd.f32 %v5900, %v6287
    %v6289 = vpop.f32.mrf.mxu0
    %6290 = vmatprep.mubr.bf16.mxu0 0
    %6291 = vmatmul.mubr.bf16.gmra.mxu0 %v6070
    %v6292 = vpop.f32.mrf.mxu0
    %v6293 = vadd.f32 %v5905, %v6292
    %v6294 = vpop.f32.mrf.mxu0
    %v6295 = vpop.f32.mrf.mxu0
    %v6296 = vadd.f32 %v5908, %v6295
    %v6297 = vpop.f32.mrf.mxu0
    %6298 = vmatprep.mubr.bf16.mxu0 0
    %6299 = vmatmul.mubr.bf16.gmra.mxu0 %v6073
    %v6300 = vpop.f32.mrf.mxu0
    %v6301 = vadd.f32 %v5913, %v6300
    %v6302 = vpop.f32.mrf.mxu0
    %v6303 = vpop.f32.mrf.mxu0
    %v6304 = vadd.f32 %v5916, %v6303
    %v6305 = vpop.f32.mrf.mxu0
    %6306 = vmatprep.mubr.bf16.mxu0 0
    %6307 = vmatmul.mubr.bf16.gmra.mxu0 %v6076
    %v6308 = vpop.f32.mrf.mxu0
    %v6309 = vadd.f32 %v5921, %v6308
    %v6310 = vpop.f32.mrf.mxu0
    %v6311 = vpop.f32.mrf.mxu0
    %v6312 = vadd.f32 %v5924, %v6311
    %v6313 = vpop.f32.mrf.mxu0
    %6314 = vmatprep.mubr.bf16.mxu0 0
    %6315 = vmatmul.mubr.bf16.gmra.mxu0 %v6079
    %v6316 = vpop.f32.mrf.mxu0
    %v6317 = vadd.f32 %v5929, %v6316
    %v6318 = vpop.f32.mrf.mxu0
    %v6319 = vpop.f32.mrf.mxu0
    %v6320 = vadd.f32 %v5932, %v6319
    %v6321 = vpop.f32.mrf.mxu0
    %6322 = vmatprep.mubr.bf16.mxu0 0
    %6323 = vmatmul.mubr.bf16.gmra.mxu0 %v6082
    %v6324 = vpop.f32.mrf.mxu0
    %v6325 = vadd.f32 %v5937, %v6324
    %v6326 = vpop.f32.mrf.mxu0
    %v6327 = vpop.f32.mrf.mxu0
    %v6328 = vadd.f32 %v5940, %v6327
    %v6329 = vpop.f32.mrf.mxu0
    %6330 = vmatprep.mubr.bf16.mxu0 0
    %6331 = vmatmul.mubr.bf16.gmra.mxu0 %v6085
    %v6332 = vpop.f32.mrf.mxu0
    %v6333 = vadd.f32 %v5945, %v6332
    %v6334 = vpop.f32.mrf.mxu0
    %v6335 = vpop.f32.mrf.mxu0
    %v6336 = vadd.f32 %v5948, %v6335
    %v6337 = vpop.f32.mrf.mxu0
    %6338 = vmatprep.mubr.bf16.mxu0 0
    %6339 = vmatmul.mubr.bf16.gmra.mxu0 %v6088
    %v6340 = vpop.f32.mrf.mxu0
    %v6341 = vadd.f32 %v5953, %v6340
    %v6342 = vpop.f32.mrf.mxu0
    %v6343 = vpop.f32.mrf.mxu0
    %v6344 = vadd.f32 %v5956, %v6343
    %v6345 = vpop.f32.mrf.mxu0
    %6346 = vmatprep.mubr.bf16.mxu0 0
    %6347 = vmatmul.mubr.bf16.gmra.mxu0 %v6091
    %v6348 = vpop.f32.mrf.mxu0
    %v6349 = vadd.f32 %v5961, %v6348
    %v6350 = vpop.f32.mrf.mxu0
    %v6351 = vpop.f32.mrf.mxu0
    %v6352 = vadd.f32 %v5964, %v6351
    %v6353 = vpop.f32.mrf.mxu0
    %6354 = vmatprep.mubr.bf16.mxu0 0
    %6355 = vmatmul.mubr.bf16.gmra.mxu0 %v6094
    %v6356 = vpop.f32.mrf.mxu0
    %v6357 = vadd.f32 %v5969, %v6356
    %v6358 = vpop.f32.mrf.mxu0
    %v6359 = vpop.f32.mrf.mxu0
    %v6360 = vadd.f32 %v5972, %v6359
    %v6361 = vpop.f32.mrf.mxu0
    %6362 = vmatprep.mubr.bf16.mxu0 0
    %6363 = vmatmul.mubr.bf16.gmra.mxu0 %v6097
    %v6364 = vpop.f32.mrf.mxu0
    %v6365 = vadd.f32 %v5977, %v6364
    %v6366 = vpop.f32.mrf.mxu0
    %v6367 = vpop.f32.mrf.mxu0
    %v6368 = vadd.f32 %v5980, %v6367
    %v6369 = vpop.f32.mrf.mxu0
    %6370 = vmatprep.mubr.bf16.mxu0 0
    %6371 = vmatmul.mubr.bf16.gmra.mxu0 %v6100
    %v6372 = vpop.f32.mrf.mxu0
    %v6373 = vadd.f32 %v5985, %v6372
    %v6374 = vpop.f32.mrf.mxu0
    %v6375 = vpop.f32.mrf.mxu0
    %v6376 = vadd.f32 %v5988, %v6375
    %v6377 = vpop.f32.mrf.mxu0
    %6378 = vmatprep.mubr.bf16.mxu0 0
    %6379 = vmatmul.mubr.bf16.gmra.mxu0 %v6103
    %v6380 = vpop.f32.mrf.mxu0
    %v6381 = vadd.f32 %v5993, %v6380
    %v6382 = vpop.f32.mrf.mxu0
    %v6383 = vpop.f32.mrf.mxu0
    %v6384 = vadd.f32 %v5996, %v6383
    %v6385 = vpop.f32.mrf.mxu0
    %6386 = vmatprep.mubr.bf16.mxu0 0
    %6387 = vmatmul.mubr.bf16.gmra.mxu0 %v6106
    %v6388 = vpop.f32.mrf.mxu0
    %v6389 = vadd.f32 %v6001, %v6388
    %v6390 = vpop.f32.mrf.mxu0
    %v6391 = vpop.f32.mrf.mxu0
    %v6392 = vadd.f32 %v6004, %v6391
    %v6393 = vpop.f32.mrf.mxu0
    %6394 = vmatprep.mubr.bf16.mxu0 0
    %6395 = vmatmul.mubr.bf16.gmra.mxu0 %v6109
    %v6396 = vpop.f32.mrf.mxu0
    %v6397 = vadd.f32 %v6009, %v6396
    %v6398 = vpop.f32.mrf.mxu0
    %v6399 = vpop.f32.mrf.mxu0
    %v6400 = vadd.f32 %v6012, %v6399
    %v6401 = vpop.f32.mrf.mxu0
    %6402 = vdwg.mxu0
    %v6403 = vld [vmem:[#allocation2 + $0x2] sm:$0xff]
    %v6404 = vld [vmem:[#allocation2 + $0xa] sm:$0xff]
    %v6405 = vld [vmem:[#allocation2 + $0x1a] sm:$0xff]
    %v6406 = vld [vmem:[#allocation2 + $0x22] sm:$0xff]
    %v6407 = vld [vmem:[#allocation2 + $0x32] sm:$0xff]
    %v6408 = vld [vmem:[#allocation2 + $0x3a] sm:$0xff]
    %v6409 = vld [vmem:[#allocation2 + $0x4a] sm:$0xff]
    %v6410 = vld [vmem:[#allocation2 + $0x52] sm:$0xff]
    %v6411 = vld [vmem:[#allocation2 + $0x62] sm:$0xff]
    %v6412 = vld [vmem:[#allocation2 + $0x6a] sm:$0xff]
    %v6413 = vld [vmem:[#allocation2 + $0x7a] sm:$0xff]
    %v6414 = vld [vmem:[#allocation2 + $0x82] sm:$0xff]
    %v6415 = vld [vmem:[#allocation2 + $0x92] sm:$0xff]
    %v6416 = vld [vmem:[#allocation2 + $0x9a] sm:$0xff]
    %v6417 = vld [vmem:[#allocation2 + $0xaa] sm:$0xff]
    %v6418 = vld [vmem:[#allocation2 + $0xb2] sm:$0xff]
    %v6419 = vld [vmem:[#allocation2 + $0xc2] sm:$0xff]
    %v6420 = vld [vmem:[#allocation2 + $0xca] sm:$0xff]
    %v6421 = vld [vmem:[#allocation2 + $0xda] sm:$0xff]
    %v6422 = vld [vmem:[#allocation2 + $0xe2] sm:$0xff]
    %v6423 = vld [vmem:[#allocation2 + $0xf2] sm:$0xff]
    %v6424 = vld [vmem:[#allocation2 + $0xfa] sm:$0xff]
    %v6425 = vld [vmem:[#allocation2 + $0x10a] sm:$0xff]
    %v6426 = vld [vmem:[#allocation2 + $0x112] sm:$0xff]
    %v6427 = vld [vmem:[#allocation2 + $0x122] sm:$0xff]
    %v6428 = vld [vmem:[#allocation2 + $0x12a] sm:$0xff]
    %v6429 = vld [vmem:[#allocation2 + $0x13a] sm:$0xff]
    %v6430 = vld [vmem:[#allocation2 + $0x142] sm:$0xff]
    %v6431 = vld [vmem:[#allocation2 + $0x152] sm:$0xff]
    %v6432 = vld [vmem:[#allocation2 + $0x15a] sm:$0xff]
    %v6433 = vld [vmem:[#allocation2 + $0x16a] sm:$0xff]
    %v6434 = vld [vmem:[#allocation2 + $0x172] sm:$0xff]
    %v6435 = vld [vmem:[#allocation2 + $0x1b2] sm:$0xff]
    %v6436 = vld [vmem:[#allocation2 + $0x1ba] sm:$0xff]
    %v6437 = vld [vmem:[#allocation2 + $0x1ca] sm:$0xff]
    %v6438 = vld [vmem:[#allocation2 + $0x1d2] sm:$0xff]
    %v6439 = vld [vmem:[#allocation2 + $0x1e2] sm:$0xff]
    %v6440 = vld [vmem:[#allocation2 + $0x1ea] sm:$0xff]
    %v6441 = vld [vmem:[#allocation2 + $0x1fa] sm:$0xff]
    %v6442 = vld [vmem:[#allocation2 + $0x202] sm:$0xff]
    %v6443 = vld [vmem:[#allocation2 + $0x212] sm:$0xff]
    %v6444 = vld [vmem:[#allocation2 + $0x21a] sm:$0xff]
    %v6445 = vld [vmem:[#allocation2 + $0x22a] sm:$0xff]
    %v6446 = vld [vmem:[#allocation2 + $0x232] sm:$0xff]
    %v6447 = vld [vmem:[#allocation2 + $0x242] sm:$0xff]
    %v6448 = vld [vmem:[#allocation2 + $0x24a] sm:$0xff]
    %v6449 = vld [vmem:[#allocation2 + $0x25a] sm:$0xff]
    %v6450 = vld [vmem:[#allocation2 + $0x262] sm:$0xff]
    %v6451 = vld [vmem:[#allocation2 + $0x272] sm:$0xff]
    %v6452 = vld [vmem:[#allocation2 + $0x27a] sm:$0xff]
    %v6453 = vld [vmem:[#allocation2 + $0x28a] sm:$0xff]
    %v6454 = vld [vmem:[#allocation2 + $0x292] sm:$0xff]
    %v6455 = vld [vmem:[#allocation2 + $0x2a2] sm:$0xff]
    %v6456 = vld [vmem:[#allocation2 + $0x2aa] sm:$0xff]
    %v6457 = vld [vmem:[#allocation2 + $0x2ba] sm:$0xff]
    %v6458 = vld [vmem:[#allocation2 + $0x2c2] sm:$0xff]
    %v6459 = vld [vmem:[#allocation2 + $0x2d2] sm:$0xff]
    %v6460 = vld [vmem:[#allocation2 + $0x2da] sm:$0xff]
    %v6461 = vld [vmem:[#allocation2 + $0x2ea] sm:$0xff]
    %v6462 = vld [vmem:[#allocation2 + $0x2f2] sm:$0xff]
    %v6463 = vld [vmem:[#allocation2 + $0x302] sm:$0xff]
    %v6464 = vld [vmem:[#allocation2 + $0x30a] sm:$0xff]
    %v6465 = vld [vmem:[#allocation2 + $0x31a] sm:$0xff]
    %v6466 = vld [vmem:[#allocation2 + $0x322] sm:$0xff]
    %v6467 = vpack.c.bf16 %v6404, %v6403
    %v6468 = vpack.c.bf16 %v6406, %v6405
    %v6469 = vpack.c.bf16 %v6408, %v6407
    %v6470 = vpack.c.bf16 %v6410, %v6409
    %v6471 = vpack.c.bf16 %v6412, %v6411
    %v6472 = vpack.c.bf16 %v6414, %v6413
    %v6473 = vpack.c.bf16 %v6416, %v6415
    %v6474 = vpack.c.bf16 %v6418, %v6417
    %v6475 = vpack.c.bf16 %v6420, %v6419
    %v6476 = vpack.c.bf16 %v6422, %v6421
    %v6477 = vpack.c.bf16 %v6424, %v6423
    %v6478 = vpack.c.bf16 %v6426, %v6425
    %v6479 = vpack.c.bf16 %v6428, %v6427
    %v6480 = vpack.c.bf16 %v6430, %v6429
    %v6481 = vpack.c.bf16 %v6432, %v6431
    %v6482 = vpack.c.bf16 %v6434, %v6433
    %v6483 = vpack.c.bf16 %v6436, %v6435
    %v6484 = vpack.c.bf16 %v6438, %v6437
    %v6485 = vpack.c.bf16 %v6440, %v6439
    %v6486 = vpack.c.bf16 %v6442, %v6441
    %v6487 = vpack.c.bf16 %v6444, %v6443
    %v6488 = vpack.c.bf16 %v6446, %v6445
    %v6489 = vpack.c.bf16 %v6448, %v6447
    %v6490 = vpack.c.bf16 %v6450, %v6449
    %v6491 = vpack.c.bf16 %v6452, %v6451
    %v6492 = vpack.c.bf16 %v6454, %v6453
    %v6493 = vpack.c.bf16 %v6456, %v6455
    %v6494 = vpack.c.bf16 %v6458, %v6457
    %v6495 = vpack.c.bf16 %v6460, %v6459
    %v6496 = vpack.c.bf16 %v6462, %v6461
    %v6497 = vpack.c.bf16 %v6464, %v6463
    %v6498 = vpack.c.bf16 %v6466, %v6465
    %s6499 = scalar_lea.vmem %s4, 8
    %v6500 = vld [vmem:[%s6499] sm:$0xf]
    %v6502 = vsel %vm5278, %v6467, 0
    %v6505 = vsel %vm5278, %v6468, 0
    %v6508 = vsel %vm5278, %v6469, 0
    %v6511 = vsel %vm5278, %v6470, 0
    %v6514 = vsel %vm5278, %v6471, 0
    %v6517 = vsel %vm5278, %v6472, 0
    %v6520 = vsel %vm5278, %v6473, 0
    %v6523 = vsel %vm5278, %v6474, 0
    %v6526 = vsel %vm5278, %v6475, 0
    %v6529 = vsel %vm5278, %v6476, 0
    %v6532 = vsel %vm5278, %v6477, 0
    %v6535 = vsel %vm5278, %v6478, 0
    %v6538 = vsel %vm5278, %v6479, 0
    %v6541 = vsel %vm5278, %v6480, 0
    %v6544 = vsel %vm5278, %v6481, 0
    %v6547 = vsel %vm5278, %v6482, 0
    %v6550 = vsel %vm5278, %v6483, 0
    %v6553 = vsel %vm5278, %v6484, 0
    %v6556 = vsel %vm5278, %v6485, 0
    %v6559 = vsel %vm5278, %v6486, 0
    %v6562 = vsel %vm5278, %v6487, 0
    %v6565 = vsel %vm5278, %v6488, 0
    %v6568 = vsel %vm5278, %v6489, 0
    %v6571 = vsel %vm5278, %v6490, 0
    %v6574 = vsel %vm5278, %v6491, 0
    %v6577 = vsel %vm5278, %v6492, 0
    %v6580 = vsel %vm5278, %v6493, 0
    %v6583 = vsel %vm5278, %v6494, 0
    %v6586 = vsel %vm5278, %v6495, 0
    %v6589 = vsel %vm5278, %v6496, 0
    %v6592 = vsel %vm5278, %v6497, 0
    %v6595 = vsel %vm5278, %v6498, 0
    %v6598 = vsel %vm5722, %v6500, 0
    %6600 = vmatprep.subr.bf16.mxu0 0
    %6601 = vmatpush1.bf16.msra.mxu0 0
    %6602 = vmatprep.subr.bf16.mxu0 0
    %6603 = vmatpush1.bf16.msra.mxu0 0
    %6604 = vmatprep.subr.bf16.mxu0 0
    %6605 = vmatpush1.bf16.msra.mxu0 0
    %6606 = vmatprep.subr.bf16.mxu0 0
    %6607 = vmatpush1.bf16.msra.mxu0 0
    %6608 = vmatprep.subr.bf16.mxu0 0
    %6609 = vmatpush1.bf16.msra.mxu0 0
    %6610 = vmatprep.subr.bf16.mxu0 0
    %6611 = vmatpush1.bf16.msra.mxu0 0
    %6612 = vmatprep.subr.bf16.mxu0 0
    %6613 = vmatpush1.bf16.msra.mxu0 0
    %6614 = vmatprep.subr.bf16.mxu0 0
    %6615 = vmatpush1.bf16.msra.mxu0 %v6598
    %6616 = vmatprep.subr.bf16.mxu0 0
    %6617 = vmatpush2.bf16.msra.mxu0 0
    %6618 = vmatprep.subr.bf16.mxu0 0
    %6619 = vmatpush2.bf16.msra.mxu0 0
    %6620 = vmatprep.subr.bf16.mxu0 0
    %6621 = vmatpush2.bf16.msra.mxu0 0
    %6622 = vmatprep.subr.bf16.mxu0 0
    %6623 = vmatpush2.bf16.msra.mxu0 0
    %6624 = vmatprep.subr.bf16.mxu0 0
    %6625 = vmatpush2.bf16.msra.mxu0 0
    %6626 = vmatprep.subr.bf16.mxu0 0
    %6627 = vmatpush2.bf16.msra.mxu0 0
    %6628 = vmatprep.subr.bf16.mxu0 0
    %6629 = vmatpush2.bf16.msra.mxu0 0
    %6630 = vmatprep.subr.bf16.mxu0 0
    %6631 = vmatpush2.bf16.msra.mxu0 0
    %6632 = vmatprep.mubr.bf16.mxu0 0
    %6633 = vmatmul.mubr.bf16.gmra.mxu0 %v6502
    %v6634 = vpop.f32.mrf.mxu0
    %v6635 = vadd.f32 0.0, %v6634
    %v6636 = vpop.f32.mrf.mxu0
    %v6637 = vpop.f32.mrf.mxu0
    %v6638 = vadd.f32 0.0, %v6637
    %v6639 = vpop.f32.mrf.mxu0
    %6640 = vmatprep.mubr.bf16.mxu0 0
    %6641 = vmatmul.mubr.bf16.gmra.mxu0 %v6505
    %v6642 = vpop.f32.mrf.mxu0
    %v6643 = vadd.f32 0.0, %v6642
    %v6644 = vpop.f32.mrf.mxu0
    %v6645 = vpop.f32.mrf.mxu0
    %v6646 = vadd.f32 0.0, %v6645
    %v6647 = vpop.f32.mrf.mxu0
    %6648 = vmatprep.mubr.bf16.mxu0 0
    %6649 = vmatmul.mubr.bf16.gmra.mxu0 %v6508
    %v6650 = vpop.f32.mrf.mxu0
    %v6651 = vadd.f32 0.0, %v6650
    %v6652 = vpop.f32.mrf.mxu0
    %v6653 = vpop.f32.mrf.mxu0
    %v6654 = vadd.f32 0.0, %v6653
    %v6655 = vpop.f32.mrf.mxu0
    %6656 = vmatprep.mubr.bf16.mxu0 0
    %6657 = vmatmul.mubr.bf16.gmra.mxu0 %v6511
    %v6658 = vpop.f32.mrf.mxu0
    %v6659 = vadd.f32 0.0, %v6658
    %v6660 = vpop.f32.mrf.mxu0
    %v6661 = vpop.f32.mrf.mxu0
    %v6662 = vadd.f32 0.0, %v6661
    %v6663 = vpop.f32.mrf.mxu0
    %6664 = vmatprep.mubr.bf16.mxu0 0
    %6665 = vmatmul.mubr.bf16.gmra.mxu0 %v6514
    %v6666 = vpop.f32.mrf.mxu0
    %v6667 = vadd.f32 0.0, %v6666
    %v6668 = vpop.f32.mrf.mxu0
    %v6669 = vpop.f32.mrf.mxu0
    %v6670 = vadd.f32 0.0, %v6669
    %v6671 = vpop.f32.mrf.mxu0
    %6672 = vmatprep.mubr.bf16.mxu0 0
    %6673 = vmatmul.mubr.bf16.gmra.mxu0 %v6517
    %v6674 = vpop.f32.mrf.mxu0
    %v6675 = vadd.f32 0.0, %v6674
    %v6676 = vpop.f32.mrf.mxu0
    %v6677 = vpop.f32.mrf.mxu0
    %v6678 = vadd.f32 0.0, %v6677
    %v6679 = vpop.f32.mrf.mxu0
    %6680 = vmatprep.mubr.bf16.mxu0 0
    %6681 = vmatmul.mubr.bf16.gmra.mxu0 %v6520
    %v6682 = vpop.f32.mrf.mxu0
    %v6683 = vadd.f32 0.0, %v6682
    %v6684 = vpop.f32.mrf.mxu0
    %v6685 = vpop.f32.mrf.mxu0
    %v6686 = vadd.f32 0.0, %v6685
    %v6687 = vpop.f32.mrf.mxu0
    %6688 = vmatprep.mubr.bf16.mxu0 0
    %6689 = vmatmul.mubr.bf16.gmra.mxu0 %v6523
    %v6690 = vpop.f32.mrf.mxu0
    %v6691 = vadd.f32 0.0, %v6690
    %v6692 = vpop.f32.mrf.mxu0
    %v6693 = vpop.f32.mrf.mxu0
    %v6694 = vadd.f32 0.0, %v6693
    %v6695 = vpop.f32.mrf.mxu0
    %6696 = vmatprep.mubr.bf16.mxu0 0
    %6697 = vmatmul.mubr.bf16.gmra.mxu0 %v6526
    %v6698 = vpop.f32.mrf.mxu0
    %v6699 = vadd.f32 0.0, %v6698
    %v6700 = vpop.f32.mrf.mxu0
    %v6701 = vpop.f32.mrf.mxu0
    %v6702 = vadd.f32 0.0, %v6701
    %v6703 = vpop.f32.mrf.mxu0
    %6704 = vmatprep.mubr.bf16.mxu0 0
    %6705 = vmatmul.mubr.bf16.gmra.mxu0 %v6529
    %v6706 = vpop.f32.mrf.mxu0
    %v6707 = vadd.f32 0.0, %v6706
    %v6708 = vpop.f32.mrf.mxu0
    %v6709 = vpop.f32.mrf.mxu0
    %v6710 = vadd.f32 0.0, %v6709
    %v6711 = vpop.f32.mrf.mxu0
    %6712 = vmatprep.mubr.bf16.mxu0 0
    %6713 = vmatmul.mubr.bf16.gmra.mxu0 %v6532
    %v6714 = vpop.f32.mrf.mxu0
    %v6715 = vadd.f32 0.0, %v6714
    %v6716 = vpop.f32.mrf.mxu0
    %v6717 = vpop.f32.mrf.mxu0
    %v6718 = vadd.f32 0.0, %v6717
    %v6719 = vpop.f32.mrf.mxu0
    %6720 = vmatprep.mubr.bf16.mxu0 0
    %6721 = vmatmul.mubr.bf16.gmra.mxu0 %v6535
    %v6722 = vpop.f32.mrf.mxu0
    %v6723 = vadd.f32 0.0, %v6722
    %v6724 = vpop.f32.mrf.mxu0
    %v6725 = vpop.f32.mrf.mxu0
    %v6726 = vadd.f32 0.0, %v6725
    %v6727 = vpop.f32.mrf.mxu0
    %6728 = vmatprep.mubr.bf16.mxu0 0
    %6729 = vmatmul.mubr.bf16.gmra.mxu0 %v6538
    %v6730 = vpop.f32.mrf.mxu0
    %v6731 = vadd.f32 0.0, %v6730
    %v6732 = vpop.f32.mrf.mxu0
    %v6733 = vpop.f32.mrf.mxu0
    %v6734 = vadd.f32 0.0, %v6733
    %v6735 = vpop.f32.mrf.mxu0
    %6736 = vmatprep.mubr.bf16.mxu0 0
    %6737 = vmatmul.mubr.bf16.gmra.mxu0 %v6541
    %v6738 = vpop.f32.mrf.mxu0
    %v6739 = vadd.f32 0.0, %v6738
    %v6740 = vpop.f32.mrf.mxu0
    %v6741 = vpop.f32.mrf.mxu0
    %v6742 = vadd.f32 0.0, %v6741
    %v6743 = vpop.f32.mrf.mxu0
    %6744 = vmatprep.mubr.bf16.mxu0 0
    %6745 = vmatmul.mubr.bf16.gmra.mxu0 %v6544
    %v6746 = vpop.f32.mrf.mxu0
    %v6747 = vadd.f32 0.0, %v6746
    %v6748 = vpop.f32.mrf.mxu0
    %v6749 = vpop.f32.mrf.mxu0
    %v6750 = vadd.f32 0.0, %v6749
    %v6751 = vpop.f32.mrf.mxu0
    %6752 = vmatprep.mubr.bf16.mxu0 0
    %6753 = vmatmul.mubr.bf16.gmra.mxu0 %v6547
    %v6754 = vpop.f32.mrf.mxu0
    %v6755 = vadd.f32 0.0, %v6754
    %v6756 = vpop.f32.mrf.mxu0
    %v6757 = vpop.f32.mrf.mxu0
    %v6758 = vadd.f32 0.0, %v6757
    %v6759 = vpop.f32.mrf.mxu0
    %6760 = vmatprep.mubr.bf16.mxu0 0
    %6761 = vmatmul.mubr.bf16.gmra.mxu0 %v6550
    %v6762 = vpop.f32.mrf.mxu0
    %v6763 = vadd.f32 0.0, %v6762
    %v6764 = vpop.f32.mrf.mxu0
    %v6765 = vpop.f32.mrf.mxu0
    %v6766 = vadd.f32 0.0, %v6765
    %v6767 = vpop.f32.mrf.mxu0
    %6768 = vmatprep.mubr.bf16.mxu0 0
    %6769 = vmatmul.mubr.bf16.gmra.mxu0 %v6553
    %v6770 = vpop.f32.mrf.mxu0
    %v6771 = vadd.f32 0.0, %v6770
    %v6772 = vpop.f32.mrf.mxu0
    %v6773 = vpop.f32.mrf.mxu0
    %v6774 = vadd.f32 0.0, %v6773
    %v6775 = vpop.f32.mrf.mxu0
    %6776 = vmatprep.mubr.bf16.mxu0 0
    %6777 = vmatmul.mubr.bf16.gmra.mxu0 %v6556
    %v6778 = vpop.f32.mrf.mxu0
    %v6779 = vadd.f32 0.0, %v6778
    %v6780 = vpop.f32.mrf.mxu0
    %v6781 = vpop.f32.mrf.mxu0
    %v6782 = vadd.f32 0.0, %v6781
    %v6783 = vpop.f32.mrf.mxu0
    %6784 = vmatprep.mubr.bf16.mxu0 0
    %6785 = vmatmul.mubr.bf16.gmra.mxu0 %v6559
    %v6786 = vpop.f32.mrf.mxu0
    %v6787 = vadd.f32 0.0, %v6786
    %v6788 = vpop.f32.mrf.mxu0
    %v6789 = vpop.f32.mrf.mxu0
    %v6790 = vadd.f32 0.0, %v6789
    %v6791 = vpop.f32.mrf.mxu0
    %6792 = vmatprep.mubr.bf16.mxu0 0
    %6793 = vmatmul.mubr.bf16.gmra.mxu0 %v6562
    %v6794 = vpop.f32.mrf.mxu0
    %v6795 = vadd.f32 0.0, %v6794
    %v6796 = vpop.f32.mrf.mxu0
    %v6797 = vpop.f32.mrf.mxu0
    %v6798 = vadd.f32 0.0, %v6797
    %v6799 = vpop.f32.mrf.mxu0
    %6800 = vmatprep.mubr.bf16.mxu0 0
    %6801 = vmatmul.mubr.bf16.gmra.mxu0 %v6565
    %v6802 = vpop.f32.mrf.mxu0
    %v6803 = vadd.f32 0.0, %v6802
    %v6804 = vpop.f32.mrf.mxu0
    %v6805 = vpop.f32.mrf.mxu0
    %v6806 = vadd.f32 0.0, %v6805
    %v6807 = vpop.f32.mrf.mxu0
    %6808 = vmatprep.mubr.bf16.mxu0 0
    %6809 = vmatmul.mubr.bf16.gmra.mxu0 %v6568
    %v6810 = vpop.f32.mrf.mxu0
    %v6811 = vadd.f32 0.0, %v6810
    %v6812 = vpop.f32.mrf.mxu0
    %v6813 = vpop.f32.mrf.mxu0
    %v6814 = vadd.f32 0.0, %v6813
    %v6815 = vpop.f32.mrf.mxu0
    %6816 = vmatprep.mubr.bf16.mxu0 0
    %6817 = vmatmul.mubr.bf16.gmra.mxu0 %v6571
    %v6818 = vpop.f32.mrf.mxu0
    %v6819 = vadd.f32 0.0, %v6818
    %v6820 = vpop.f32.mrf.mxu0
    %v6821 = vpop.f32.mrf.mxu0
    %v6822 = vadd.f32 0.0, %v6821
    %v6823 = vpop.f32.mrf.mxu0
    %6824 = vmatprep.mubr.bf16.mxu0 0
    %6825 = vmatmul.mubr.bf16.gmra.mxu0 %v6574
    %v6826 = vpop.f32.mrf.mxu0
    %v6827 = vadd.f32 0.0, %v6826
    %v6828 = vpop.f32.mrf.mxu0
    %v6829 = vpop.f32.mrf.mxu0
    %v6830 = vadd.f32 0.0, %v6829
    %v6831 = vpop.f32.mrf.mxu0
    %6832 = vmatprep.mubr.bf16.mxu0 0
    %6833 = vmatmul.mubr.bf16.gmra.mxu0 %v6577
    %v6834 = vpop.f32.mrf.mxu0
    %v6835 = vadd.f32 0.0, %v6834
    %v6836 = vpop.f32.mrf.mxu0
    %v6837 = vpop.f32.mrf.mxu0
    %v6838 = vadd.f32 0.0, %v6837
    %v6839 = vpop.f32.mrf.mxu0
    %6840 = vmatprep.mubr.bf16.mxu0 0
    %6841 = vmatmul.mubr.bf16.gmra.mxu0 %v6580
    %v6842 = vpop.f32.mrf.mxu0
    %v6843 = vadd.f32 0.0, %v6842
    %v6844 = vpop.f32.mrf.mxu0
    %v6845 = vpop.f32.mrf.mxu0
    %v6846 = vadd.f32 0.0, %v6845
    %v6847 = vpop.f32.mrf.mxu0
    %6848 = vmatprep.mubr.bf16.mxu0 0
    %6849 = vmatmul.mubr.bf16.gmra.mxu0 %v6583
    %v6850 = vpop.f32.mrf.mxu0
    %v6851 = vadd.f32 0.0, %v6850
    %v6852 = vpop.f32.mrf.mxu0
    %v6853 = vpop.f32.mrf.mxu0
    %v6854 = vadd.f32 0.0, %v6853
    %v6855 = vpop.f32.mrf.mxu0
    %6856 = vmatprep.mubr.bf16.mxu0 0
    %6857 = vmatmul.mubr.bf16.gmra.mxu0 %v6586
    %v6858 = vpop.f32.mrf.mxu0
    %v6859 = vadd.f32 0.0, %v6858
    %v6860 = vpop.f32.mrf.mxu0
    %v6861 = vpop.f32.mrf.mxu0
    %v6862 = vadd.f32 0.0, %v6861
    %v6863 = vpop.f32.mrf.mxu0
    %6864 = vmatprep.mubr.bf16.mxu0 0
    %6865 = vmatmul.mubr.bf16.gmra.mxu0 %v6589
    %v6866 = vpop.f32.mrf.mxu0
    %v6867 = vadd.f32 0.0, %v6866
    %v6868 = vpop.f32.mrf.mxu0
    %v6869 = vpop.f32.mrf.mxu0
    %v6870 = vadd.f32 0.0, %v6869
    %v6871 = vpop.f32.mrf.mxu0
    %6872 = vmatprep.mubr.bf16.mxu0 0
    %6873 = vmatmul.mubr.bf16.gmra.mxu0 %v6592
    %v6874 = vpop.f32.mrf.mxu0
    %v6875 = vadd.f32 0.0, %v6874
    %v6876 = vpop.f32.mrf.mxu0
    %v6877 = vpop.f32.mrf.mxu0
    %v6878 = vadd.f32 0.0, %v6877
    %v6879 = vpop.f32.mrf.mxu0
    %6880 = vmatprep.mubr.bf16.mxu0 0
    %6881 = vmatmul.mubr.bf16.gmra.mxu0 %v6595
    %v6882 = vpop.f32.mrf.mxu0
    %v6883 = vadd.f32 0.0, %v6882
    %v6884 = vpop.f32.mrf.mxu0
    %v6885 = vpop.f32.mrf.mxu0
    %v6886 = vadd.f32 0.0, %v6885
    %v6887 = vpop.f32.mrf.mxu0
    %6888 = vdwg.mxu0
    %v6889 = vadd.f32 %v6149, %v6635
    %v6890 = vadd.f32 %v6152, %v6638
    %v6891 = vadd.f32 %v6157, %v6643
    %v6892 = vadd.f32 %v6160, %v6646
    %v6893 = vadd.f32 %v6165, %v6651
    %v6894 = vadd.f32 %v6168, %v6654
    %v6895 = vadd.f32 %v6173, %v6659
    %v6896 = vadd.f32 %v6176, %v6662
    %v6897 = vadd.f32 %v6181, %v6667
    %v6898 = vadd.f32 %v6184, %v6670
    %v6899 = vadd.f32 %v6189, %v6675
    %v6900 = vadd.f32 %v6192, %v6678
    %v6901 = vadd.f32 %v6197, %v6683
    %v6902 = vadd.f32 %v6200, %v6686
    %v6903 = vadd.f32 %v6205, %v6691
    %v6904 = vadd.f32 %v6208, %v6694
    %v6905 = vadd.f32 %v6213, %v6699
    %v6906 = vadd.f32 %v6216, %v6702
    %v6907 = vadd.f32 %v6221, %v6707
    %v6908 = vadd.f32 %v6224, %v6710
    %v6909 = vadd.f32 %v6229, %v6715
    %v6910 = vadd.f32 %v6232, %v6718
    %v6911 = vadd.f32 %v6237, %v6723
    %v6912 = vadd.f32 %v6240, %v6726
    %v6913 = vadd.f32 %v6245, %v6731
    %v6914 = vadd.f32 %v6248, %v6734
    %v6915 = vadd.f32 %v6253, %v6739
    %v6916 = vadd.f32 %v6256, %v6742
    %v6917 = vadd.f32 %v6261, %v6747
    %v6918 = vadd.f32 %v6264, %v6750
    %v6919 = vadd.f32 %v6269, %v6755
    %v6920 = vadd.f32 %v6272, %v6758
    %v6921 = vadd.f32 %v6277, %v6763
    %v6922 = vadd.f32 %v6280, %v6766
    %v6923 = vadd.f32 %v6285, %v6771
    %v6924 = vadd.f32 %v6288, %v6774
    %v6925 = vadd.f32 %v6293, %v6779
    %v6926 = vadd.f32 %v6296, %v6782
    %v6927 = vadd.f32 %v6301, %v6787
    %v6928 = vadd.f32 %v6304, %v6790
    %v6929 = vadd.f32 %v6309, %v6795
    %v6930 = vadd.f32 %v6312, %v6798
    %v6931 = vadd.f32 %v6317, %v6803
    %v6932 = vadd.f32 %v6320, %v6806
    %v6933 = vadd.f32 %v6325, %v6811
    %v6934 = vadd.f32 %v6328, %v6814
    %v6935 = vadd.f32 %v6333, %v6819
    %v6936 = vadd.f32 %v6336, %v6822
    %v6937 = vadd.f32 %v6341, %v6827
    %v6938 = vadd.f32 %v6344, %v6830
    %v6939 = vadd.f32 %v6349, %v6835
    %v6940 = vadd.f32 %v6352, %v6838
    %v6941 = vadd.f32 %v6357, %v6843
    %v6942 = vadd.f32 %v6360, %v6846
    %v6943 = vadd.f32 %v6365, %v6851
    %v6944 = vadd.f32 %v6368, %v6854
    %v6945 = vadd.f32 %v6373, %v6859
    %v6946 = vadd.f32 %v6376, %v6862
    %v6947 = vadd.f32 %v6381, %v6867
    %v6948 = vadd.f32 %v6384, %v6870
    %v6949 = vadd.f32 %v6389, %v6875
    %v6950 = vadd.f32 %v6392, %v6878
    %v6951 = vadd.f32 %v6397, %v6883
    %v6952 = vadd.f32 %v6400, %v6886
    %v6953 = vld [vmem:[%s5366] sm:$0xff]
    %v6954 = vld [vmem:[%s5366 + $0x8] sm:$0xff]
    %v6955 = vld [vmem:[%s5366 + $0x18] sm:$0xff]
    %v6956 = vld [vmem:[%s5366 + $0x20] sm:$0xff]
    %v6957 = vld [vmem:[%s5366 + $0x30] sm:$0xff]
    %v6958 = vld [vmem:[%s5366 + $0x38] sm:$0xff]
    %v6959 = vld [vmem:[%s5366 + $0x48] sm:$0xff]
    %v6960 = vld [vmem:[%s5366 + $0x50] sm:$0xff]
    %v6961 = vld [vmem:[%s5366 + $0x60] sm:$0xff]
    %v6962 = vld [vmem:[%s5366 + $0x68] sm:$0xff]
    %v6963 = vld [vmem:[%s5366 + $0x78] sm:$0xff]
    %v6964 = vld [vmem:[%s5366 + $0x80] sm:$0xff]
    %v6965 = vld [vmem:[%s5366 + $0x90] sm:$0xff]
    %v6966 = vld [vmem:[%s5366 + $0x98] sm:$0xff]
    %v6967 = vld [vmem:[%s5366 + $0xa8] sm:$0xff]
    %v6968 = vld [vmem:[%s5366 + $0xb0] sm:$0xff]
    %v6969 = vld [vmem:[%s5366 + $0xc0] sm:$0xff]
    %v6970 = vld [vmem:[%s5366 + $0xc8] sm:$0xff]
    %v6971 = vld [vmem:[%s5366 + $0xd8] sm:$0xff]
    %v6972 = vld [vmem:[%s5366 + $0xe0] sm:$0xff]
    %v6973 = vld [vmem:[%s5366 + $0xf0] sm:$0xff]
    %v6974 = vld [vmem:[%s5366 + $0xf8] sm:$0xff]
    %v6975 = vld [vmem:[%s5366 + $0x108] sm:$0xff]
    %v6976 = vld [vmem:[%s5366 + $0x110] sm:$0xff]
    %v6977 = vld [vmem:[%s5366 + $0x120] sm:$0xff]
    %v6978 = vld [vmem:[%s5366 + $0x128] sm:$0xff]
    %v6979 = vld [vmem:[%s5366 + $0x138] sm:$0xff]
    %v6980 = vld [vmem:[%s5366 + $0x140] sm:$0xff]
    %v6981 = vld [vmem:[%s5366 + $0x150] sm:$0xff]
    %v6982 = vld [vmem:[%s5366 + $0x158] sm:$0xff]
    %v6983 = vld [vmem:[%s5366 + $0x168] sm:$0xff]
    %v6984 = vld [vmem:[%s5366 + $0x170] sm:$0xff]
    %v6985 = vld [vmem:[%s5366 + $0x1b0] sm:$0xff]
    %v6986 = vld [vmem:[%s5366 + $0x1b8] sm:$0xff]
    %v6987 = vld [vmem:[%s5366 + $0x1c8] sm:$0xff]
    %v6988 = vld [vmem:[%s5366 + $0x1d0] sm:$0xff]
    %v6989 = vld [vmem:[%s5366 + $0x1e0] sm:$0xff]
    %v6990 = vld [vmem:[%s5366 + $0x1e8] sm:$0xff]
    %v6991 = vld [vmem:[%s5366 + $0x1f8] sm:$0xff]
    %v6992 = vld [vmem:[%s5366 + $0x200] sm:$0xff]
    %v6993 = vld [vmem:[%s5366 + $0x210] sm:$0xff]
    %v6994 = vld [vmem:[%s5366 + $0x218] sm:$0xff]
    %v6995 = vld [vmem:[%s5366 + $0x228] sm:$0xff]
    %v6996 = vld [vmem:[%s5366 + $0x230] sm:$0xff]
    %v6997 = vld [vmem:[%s5366 + $0x240] sm:$0xff]
    %v6998 = vld [vmem:[%s5366 + $0x248] sm:$0xff]
    %v6999 = vld [vmem:[%s5366 + $0x258] sm:$0xff]
    %v7000 = vld [vmem:[%s5366 + $0x260] sm:$0xff]
    %v7001 = vld [vmem:[%s5366 + $0x270] sm:$0xff]
    %v7002 = vld [vmem:[%s5366 + $0x278] sm:$0xff]
    %v7003 = vld [vmem:[%s5366 + $0x288] sm:$0xff]
    %v7004 = vld [vmem:[%s5366 + $0x290] sm:$0xff]
    %v7005 = vld [vmem:[%s5366 + $0x2a0] sm:$0xff]
    %v7006 = vld [vmem:[%s5366 + $0x2a8] sm:$0xff]
    %v7007 = vld [vmem:[%s5366 + $0x2b8] sm:$0xff]
    %v7008 = vld [vmem:[%s5366 + $0x2c0] sm:$0xff]
    %v7009 = vld [vmem:[%s5366 + $0x2d0] sm:$0xff]
    %v7010 = vld [vmem:[%s5366 + $0x2d8] sm:$0xff]
    %v7011 = vld [vmem:[%s5366 + $0x2e8] sm:$0xff]
    %v7012 = vld [vmem:[%s5366 + $0x2f0] sm:$0xff]
    %v7013 = vld [vmem:[%s5366 + $0x300] sm:$0xff]
    %v7014 = vld [vmem:[%s5366 + $0x308] sm:$0xff]
    %v7015 = vld [vmem:[%s5366 + $0x318] sm:$0xff]
    %v7016 = vld [vmem:[%s5366 + $0x320] sm:$0xff]
    %v7017 = vpack.c.bf16 %v6954, %v6953
    %v7018 = vpack.c.bf16 %v6956, %v6955
    %v7019 = vpack.c.bf16 %v6958, %v6957
    %v7020 = vpack.c.bf16 %v6960, %v6959
    %v7021 = vpack.c.bf16 %v6962, %v6961
    %v7022 = vpack.c.bf16 %v6964, %v6963
    %v7023 = vpack.c.bf16 %v6966, %v6965
    %v7024 = vpack.c.bf16 %v6968, %v6967
    %v7025 = vpack.c.bf16 %v6970, %v6969
    %v7026 = vpack.c.bf16 %v6972, %v6971
    %v7027 = vpack.c.bf16 %v6974, %v6973
    %v7028 = vpack.c.bf16 %v6976, %v6975
    %v7029 = vpack.c.bf16 %v6978, %v6977
    %v7030 = vpack.c.bf16 %v6980, %v6979
    %v7031 = vpack.c.bf16 %v6982, %v6981
    %v7032 = vpack.c.bf16 %v6984, %v6983
    %v7033 = vpack.c.bf16 %v6986, %v6985
    %v7034 = vpack.c.bf16 %v6988, %v6987
    %v7035 = vpack.c.bf16 %v6990, %v6989
    %v7036 = vpack.c.bf16 %v6992, %v6991
    %v7037 = vpack.c.bf16 %v6994, %v6993
    %v7038 = vpack.c.bf16 %v6996, %v6995
    %v7039 = vpack.c.bf16 %v6998, %v6997
    %v7040 = vpack.c.bf16 %v7000, %v6999
    %v7041 = vpack.c.bf16 %v7002, %v7001
    %v7042 = vpack.c.bf16 %v7004, %v7003
    %v7043 = vpack.c.bf16 %v7006, %v7005
    %v7044 = vpack.c.bf16 %v7008, %v7007
    %v7045 = vpack.c.bf16 %v7010, %v7009
    %v7046 = vpack.c.bf16 %v7012, %v7011
    %v7047 = vpack.c.bf16 %v7014, %v7013
    %v7048 = vpack.c.bf16 %v7016, %v7015
    %s7049 = scalar_lea.vmem %s4, 12
    %v7050 = vld [vmem:[%s7049] sm:$0xf]
    %v7052 = vsel %vm5278, %v7017, 0
    %v7055 = vsel %vm5278, %v7018, 0
    %v7058 = vsel %vm5278, %v7019, 0
    %v7061 = vsel %vm5278, %v7020, 0
    %v7064 = vsel %vm5278, %v7021, 0
    %v7067 = vsel %vm5278, %v7022, 0
    %v7070 = vsel %vm5278, %v7023, 0
    %v7073 = vsel %vm5278, %v7024, 0
    %v7076 = vsel %vm5278, %v7025, 0
    %v7079 = vsel %vm5278, %v7026, 0
    %v7082 = vsel %vm5278, %v7027, 0
    %v7085 = vsel %vm5278, %v7028, 0
    %v7088 = vsel %vm5278, %v7029, 0
    %v7091 = vsel %vm5278, %v7030, 0
    %v7094 = vsel %vm5278, %v7031, 0
    %v7097 = vsel %vm5278, %v7032, 0
    %v7100 = vsel %vm5278, %v7033, 0
    %v7103 = vsel %vm5278, %v7034, 0
    %v7106 = vsel %vm5278, %v7035, 0
    %v7109 = vsel %vm5278, %v7036, 0
    %v7112 = vsel %vm5278, %v7037, 0
    %v7115 = vsel %vm5278, %v7038, 0
    %v7118 = vsel %vm5278, %v7039, 0
    %v7121 = vsel %vm5278, %v7040, 0
    %v7124 = vsel %vm5278, %v7041, 0
    %v7127 = vsel %vm5278, %v7042, 0
    %v7130 = vsel %vm5278, %v7043, 0
    %v7133 = vsel %vm5278, %v7044, 0
    %v7136 = vsel %vm5278, %v7045, 0
    %v7139 = vsel %vm5278, %v7046, 0
    %v7142 = vsel %vm5278, %v7047, 0
    %v7145 = vsel %vm5278, %v7048, 0
    %v7148 = vsel %vm5722, %v7050, 0
    %7150 = vmatprep.subr.bf16.mxu0 0
    %7151 = vmatpush1.bf16.msra.mxu0 0
    %7152 = vmatprep.subr.bf16.mxu0 0
    %7153 = vmatpush1.bf16.msra.mxu0 0
    %7154 = vmatprep.subr.bf16.mxu0 0
    %7155 = vmatpush1.bf16.msra.mxu0 0
    %7156 = vmatprep.subr.bf16.mxu0 0
    %7157 = vmatpush1.bf16.msra.mxu0 0
    %7158 = vmatprep.subr.bf16.mxu0 0
    %7159 = vmatpush1.bf16.msra.mxu0 0
    %7160 = vmatprep.subr.bf16.mxu0 0
    %7161 = vmatpush1.bf16.msra.mxu0 0
    %7162 = vmatprep.subr.bf16.mxu0 0
    %7163 = vmatpush1.bf16.msra.mxu0 0
    %7164 = vmatprep.subr.bf16.mxu0 0
    %7165 = vmatpush1.bf16.msra.mxu0 %v7148
    %7166 = vmatprep.subr.bf16.mxu0 0
    %7167 = vmatpush2.bf16.msra.mxu0 0
    %7168 = vmatprep.subr.bf16.mxu0 0
    %7169 = vmatpush2.bf16.msra.mxu0 0
    %7170 = vmatprep.subr.bf16.mxu0 0
    %7171 = vmatpush2.bf16.msra.mxu0 0
    %7172 = vmatprep.subr.bf16.mxu0 0
    %7173 = vmatpush2.bf16.msra.mxu0 0
    %7174 = vmatprep.subr.bf16.mxu0 0
    %7175 = vmatpush2.bf16.msra.mxu0 0
    %7176 = vmatprep.subr.bf16.mxu0 0
    %7177 = vmatpush2.bf16.msra.mxu0 0
    %7178 = vmatprep.subr.bf16.mxu0 0
    %7179 = vmatpush2.bf16.msra.mxu0 0
    %7180 = vmatprep.subr.bf16.mxu0 0
    %7181 = vmatpush2.bf16.msra.mxu0 0
    %7182 = vmatprep.mubr.bf16.mxu0 0
    %7183 = vmatmul.mubr.bf16.gmra.mxu0 %v7052
    %v7184 = vpop.f32.mrf.mxu0
    %v7185 = vadd.f32 0.0, %v7184
    %v7186 = vpop.f32.mrf.mxu0
    %v7187 = vpop.f32.mrf.mxu0
    %v7188 = vadd.f32 0.0, %v7187
    %v7189 = vpop.f32.mrf.mxu0
    %7190 = vmatprep.mubr.bf16.mxu0 0
    %7191 = vmatmul.mubr.bf16.gmra.mxu0 %v7055
    %v7192 = vpop.f32.mrf.mxu0
    %v7193 = vadd.f32 0.0, %v7192
    %v7194 = vpop.f32.mrf.mxu0
    %v7195 = vpop.f32.mrf.mxu0
    %v7196 = vadd.f32 0.0, %v7195
    %v7197 = vpop.f32.mrf.mxu0
    %7198 = vmatprep.mubr.bf16.mxu0 0
    %7199 = vmatmul.mubr.bf16.gmra.mxu0 %v7058
    %v7200 = vpop.f32.mrf.mxu0
    %v7201 = vadd.f32 0.0, %v7200
    %v7202 = vpop.f32.mrf.mxu0
    %v7203 = vpop.f32.mrf.mxu0
    %v7204 = vadd.f32 0.0, %v7203
    %v7205 = vpop.f32.mrf.mxu0
    %7206 = vmatprep.mubr.bf16.mxu0 0
    %7207 = vmatmul.mubr.bf16.gmra.mxu0 %v7061
    %v7208 = vpop.f32.mrf.mxu0
    %v7209 = vadd.f32 0.0, %v7208
    %v7210 = vpop.f32.mrf.mxu0
    %v7211 = vpop.f32.mrf.mxu0
    %v7212 = vadd.f32 0.0, %v7211
    %v7213 = vpop.f32.mrf.mxu0
    %7214 = vmatprep.mubr.bf16.mxu0 0
    %7215 = vmatmul.mubr.bf16.gmra.mxu0 %v7064
    %v7216 = vpop.f32.mrf.mxu0
    %v7217 = vadd.f32 0.0, %v7216
    %v7218 = vpop.f32.mrf.mxu0
    %v7219 = vpop.f32.mrf.mxu0
    %v7220 = vadd.f32 0.0, %v7219
    %v7221 = vpop.f32.mrf.mxu0
    %7222 = vmatprep.mubr.bf16.mxu0 0
    %7223 = vmatmul.mubr.bf16.gmra.mxu0 %v7067
    %v7224 = vpop.f32.mrf.mxu0
    %v7225 = vadd.f32 0.0, %v7224
    %v7226 = vpop.f32.mrf.mxu0
    %v7227 = vpop.f32.mrf.mxu0
    %v7228 = vadd.f32 0.0, %v7227
    %v7229 = vpop.f32.mrf.mxu0
    %7230 = vmatprep.mubr.bf16.mxu0 0
    %7231 = vmatmul.mubr.bf16.gmra.mxu0 %v7070
    %v7232 = vpop.f32.mrf.mxu0
    %v7233 = vadd.f32 0.0, %v7232
    %v7234 = vpop.f32.mrf.mxu0
    %v7235 = vpop.f32.mrf.mxu0
    %v7236 = vadd.f32 0.0, %v7235
    %v7237 = vpop.f32.mrf.mxu0
    %7238 = vmatprep.mubr.bf16.mxu0 0
    %7239 = vmatmul.mubr.bf16.gmra.mxu0 %v7073
    %v7240 = vpop.f32.mrf.mxu0
    %v7241 = vadd.f32 0.0, %v7240
    %v7242 = vpop.f32.mrf.mxu0
    %v7243 = vpop.f32.mrf.mxu0
    %v7244 = vadd.f32 0.0, %v7243
    %v7245 = vpop.f32.mrf.mxu0
    %7246 = vmatprep.mubr.bf16.mxu0 0
    %7247 = vmatmul.mubr.bf16.gmra.mxu0 %v7076
    %v7248 = vpop.f32.mrf.mxu0
    %v7249 = vadd.f32 0.0, %v7248
    %v7250 = vpop.f32.mrf.mxu0
    %v7251 = vpop.f32.mrf.mxu0
    %v7252 = vadd.f32 0.0, %v7251
    %v7253 = vpop.f32.mrf.mxu0
    %7254 = vmatprep.mubr.bf16.mxu0 0
    %7255 = vmatmul.mubr.bf16.gmra.mxu0 %v7079
    %v7256 = vpop.f32.mrf.mxu0
    %v7257 = vadd.f32 0.0, %v7256
    %v7258 = vpop.f32.mrf.mxu0
    %v7259 = vpop.f32.mrf.mxu0
    %v7260 = vadd.f32 0.0, %v7259
    %v7261 = vpop.f32.mrf.mxu0
    %7262 = vmatprep.mubr.bf16.mxu0 0
    %7263 = vmatmul.mubr.bf16.gmra.mxu0 %v7082
    %v7264 = vpop.f32.mrf.mxu0
    %v7265 = vadd.f32 0.0, %v7264
    %v7266 = vpop.f32.mrf.mxu0
    %v7267 = vpop.f32.mrf.mxu0
    %v7268 = vadd.f32 0.0, %v7267
    %v7269 = vpop.f32.mrf.mxu0
    %7270 = vmatprep.mubr.bf16.mxu0 0
    %7271 = vmatmul.mubr.bf16.gmra.mxu0 %v7085
    %v7272 = vpop.f32.mrf.mxu0
    %v7273 = vadd.f32 0.0, %v7272
    %v7274 = vpop.f32.mrf.mxu0
    %v7275 = vpop.f32.mrf.mxu0
    %v7276 = vadd.f32 0.0, %v7275
    %v7277 = vpop.f32.mrf.mxu0
    %7278 = vmatprep.mubr.bf16.mxu0 0
    %7279 = vmatmul.mubr.bf16.gmra.mxu0 %v7088
    %v7280 = vpop.f32.mrf.mxu0
    %v7281 = vadd.f32 0.0, %v7280
    %v7282 = vpop.f32.mrf.mxu0
    %v7283 = vpop.f32.mrf.mxu0
    %v7284 = vadd.f32 0.0, %v7283
    %v7285 = vpop.f32.mrf.mxu0
    %7286 = vmatprep.mubr.bf16.mxu0 0
    %7287 = vmatmul.mubr.bf16.gmra.mxu0 %v7091
    %v7288 = vpop.f32.mrf.mxu0
    %v7289 = vadd.f32 0.0, %v7288
    %v7290 = vpop.f32.mrf.mxu0
    %v7291 = vpop.f32.mrf.mxu0
    %v7292 = vadd.f32 0.0, %v7291
    %v7293 = vpop.f32.mrf.mxu0
    %7294 = vmatprep.mubr.bf16.mxu0 0
    %7295 = vmatmul.mubr.bf16.gmra.mxu0 %v7094
    %v7296 = vpop.f32.mrf.mxu0
    %v7297 = vadd.f32 0.0, %v7296
    %v7298 = vpop.f32.mrf.mxu0
    %v7299 = vpop.f32.mrf.mxu0
    %v7300 = vadd.f32 0.0, %v7299
    %v7301 = vpop.f32.mrf.mxu0
    %7302 = vmatprep.mubr.bf16.mxu0 0
    %7303 = vmatmul.mubr.bf16.gmra.mxu0 %v7097
    %v7304 = vpop.f32.mrf.mxu0
    %v7305 = vadd.f32 0.0, %v7304
    %v7306 = vpop.f32.mrf.mxu0
    %v7307 = vpop.f32.mrf.mxu0
    %v7308 = vadd.f32 0.0, %v7307
    %v7309 = vpop.f32.mrf.mxu0
    %7310 = vmatprep.mubr.bf16.mxu0 0
    %7311 = vmatmul.mubr.bf16.gmra.mxu0 %v7100
    %v7312 = vpop.f32.mrf.mxu0
    %v7313 = vadd.f32 0.0, %v7312
    %v7314 = vpop.f32.mrf.mxu0
    %v7315 = vpop.f32.mrf.mxu0
    %v7316 = vadd.f32 0.0, %v7315
    %v7317 = vpop.f32.mrf.mxu0
    %7318 = vmatprep.mubr.bf16.mxu0 0
    %7319 = vmatmul.mubr.bf16.gmra.mxu0 %v7103
    %v7320 = vpop.f32.mrf.mxu0
    %v7321 = vadd.f32 0.0, %v7320
    %v7322 = vpop.f32.mrf.mxu0
    %v7323 = vpop.f32.mrf.mxu0
    %v7324 = vadd.f32 0.0, %v7323
    %v7325 = vpop.f32.mrf.mxu0
    %7326 = vmatprep.mubr.bf16.mxu0 0
    %7327 = vmatmul.mubr.bf16.gmra.mxu0 %v7106
    %v7328 = vpop.f32.mrf.mxu0
    %v7329 = vadd.f32 0.0, %v7328
    %v7330 = vpop.f32.mrf.mxu0
    %v7331 = vpop.f32.mrf.mxu0
    %v7332 = vadd.f32 0.0, %v7331
    %v7333 = vpop.f32.mrf.mxu0
    %7334 = vmatprep.mubr.bf16.mxu0 0
    %7335 = vmatmul.mubr.bf16.gmra.mxu0 %v7109
    %v7336 = vpop.f32.mrf.mxu0
    %v7337 = vadd.f32 0.0, %v7336
    %v7338 = vpop.f32.mrf.mxu0
    %v7339 = vpop.f32.mrf.mxu0
    %v7340 = vadd.f32 0.0, %v7339
    %v7341 = vpop.f32.mrf.mxu0
    %7342 = vmatprep.mubr.bf16.mxu0 0
    %7343 = vmatmul.mubr.bf16.gmra.mxu0 %v7112
    %v7344 = vpop.f32.mrf.mxu0
    %v7345 = vadd.f32 0.0, %v7344
    %v7346 = vpop.f32.mrf.mxu0
    %v7347 = vpop.f32.mrf.mxu0
    %v7348 = vadd.f32 0.0, %v7347
    %v7349 = vpop.f32.mrf.mxu0
    %7350 = vmatprep.mubr.bf16.mxu0 0
    %7351 = vmatmul.mubr.bf16.gmra.mxu0 %v7115
    %v7352 = vpop.f32.mrf.mxu0
    %v7353 = vadd.f32 0.0, %v7352
    %v7354 = vpop.f32.mrf.mxu0
    %v7355 = vpop.f32.mrf.mxu0
    %v7356 = vadd.f32 0.0, %v7355
    %v7357 = vpop.f32.mrf.mxu0
    %7358 = vmatprep.mubr.bf16.mxu0 0
    %7359 = vmatmul.mubr.bf16.gmra.mxu0 %v7118
    %v7360 = vpop.f32.mrf.mxu0
    %v7361 = vadd.f32 0.0, %v7360
    %v7362 = vpop.f32.mrf.mxu0
    %v7363 = vpop.f32.mrf.mxu0
    %v7364 = vadd.f32 0.0, %v7363
    %v7365 = vpop.f32.mrf.mxu0
    %7366 = vmatprep.mubr.bf16.mxu0 0
    %7367 = vmatmul.mubr.bf16.gmra.mxu0 %v7121
    %v7368 = vpop.f32.mrf.mxu0
    %v7369 = vadd.f32 0.0, %v7368
    %v7370 = vpop.f32.mrf.mxu0
    %v7371 = vpop.f32.mrf.mxu0
    %v7372 = vadd.f32 0.0, %v7371
    %v7373 = vpop.f32.mrf.mxu0
    %7374 = vmatprep.mubr.bf16.mxu0 0
    %7375 = vmatmul.mubr.bf16.gmra.mxu0 %v7124
    %v7376 = vpop.f32.mrf.mxu0
    %v7377 = vadd.f32 0.0, %v7376
    %v7378 = vpop.f32.mrf.mxu0
    %v7379 = vpop.f32.mrf.mxu0
    %v7380 = vadd.f32 0.0, %v7379
    %v7381 = vpop.f32.mrf.mxu0
    %7382 = vmatprep.mubr.bf16.mxu0 0
    %7383 = vmatmul.mubr.bf16.gmra.mxu0 %v7127
    %v7384 = vpop.f32.mrf.mxu0
    %v7385 = vadd.f32 0.0, %v7384
    %v7386 = vpop.f32.mrf.mxu0
    %v7387 = vpop.f32.mrf.mxu0
    %v7388 = vadd.f32 0.0, %v7387
    %v7389 = vpop.f32.mrf.mxu0
    %7390 = vmatprep.mubr.bf16.mxu0 0
    %7391 = vmatmul.mubr.bf16.gmra.mxu0 %v7130
    %v7392 = vpop.f32.mrf.mxu0
    %v7393 = vadd.f32 0.0, %v7392
    %v7394 = vpop.f32.mrf.mxu0
    %v7395 = vpop.f32.mrf.mxu0
    %v7396 = vadd.f32 0.0, %v7395
    %v7397 = vpop.f32.mrf.mxu0
    %7398 = vmatprep.mubr.bf16.mxu0 0
    %7399 = vmatmul.mubr.bf16.gmra.mxu0 %v7133
    %v7400 = vpop.f32.mrf.mxu0
    %v7401 = vadd.f32 0.0, %v7400
    %v7402 = vpop.f32.mrf.mxu0
    %v7403 = vpop.f32.mrf.mxu0
    %v7404 = vadd.f32 0.0, %v7403
    %v7405 = vpop.f32.mrf.mxu0
    %7406 = vmatprep.mubr.bf16.mxu0 0
    %7407 = vmatmul.mubr.bf16.gmra.mxu0 %v7136
    %v7408 = vpop.f32.mrf.mxu0
    %v7409 = vadd.f32 0.0, %v7408
    %v7410 = vpop.f32.mrf.mxu0
    %v7411 = vpop.f32.mrf.mxu0
    %v7412 = vadd.f32 0.0, %v7411
    %v7413 = vpop.f32.mrf.mxu0
    %7414 = vmatprep.mubr.bf16.mxu0 0
    %7415 = vmatmul.mubr.bf16.gmra.mxu0 %v7139
    %v7416 = vpop.f32.mrf.mxu0
    %v7417 = vadd.f32 0.0, %v7416
    %v7418 = vpop.f32.mrf.mxu0
    %v7419 = vpop.f32.mrf.mxu0
    %v7420 = vadd.f32 0.0, %v7419
    %v7421 = vpop.f32.mrf.mxu0
    %7422 = vmatprep.mubr.bf16.mxu0 0
    %7423 = vmatmul.mubr.bf16.gmra.mxu0 %v7142
    %v7424 = vpop.f32.mrf.mxu0
    %v7425 = vadd.f32 0.0, %v7424
    %v7426 = vpop.f32.mrf.mxu0
    %v7427 = vpop.f32.mrf.mxu0
    %v7428 = vadd.f32 0.0, %v7427
    %v7429 = vpop.f32.mrf.mxu0
    %7430 = vmatprep.mubr.bf16.mxu0 0
    %7431 = vmatmul.mubr.bf16.gmra.mxu0 %v7145
    %v7432 = vpop.f32.mrf.mxu0
    %v7433 = vadd.f32 0.0, %v7432
    %v7434 = vpop.f32.mrf.mxu0
    %v7435 = vpop.f32.mrf.mxu0
    %v7436 = vadd.f32 0.0, %v7435
    %v7437 = vpop.f32.mrf.mxu0
    %7438 = vdwg.mxu0
    %v7439 = vadd.f32 %v6889, %v7185
    %v7440 = vadd.f32 %v6890, %v7188
    %v7441 = vadd.f32 %v6891, %v7193
    %v7442 = vadd.f32 %v6892, %v7196
    %v7443 = vadd.f32 %v6893, %v7201
    %v7444 = vadd.f32 %v6894, %v7204
    %v7445 = vadd.f32 %v6895, %v7209
    %v7446 = vadd.f32 %v6896, %v7212
    %v7447 = vadd.f32 %v6897, %v7217
    %v7448 = vadd.f32 %v6898, %v7220
    %v7449 = vadd.f32 %v6899, %v7225
    %v7450 = vadd.f32 %v6900, %v7228
    %v7451 = vadd.f32 %v6901, %v7233
    %v7452 = vadd.f32 %v6902, %v7236
    %v7453 = vadd.f32 %v6903, %v7241
    %v7454 = vadd.f32 %v6904, %v7244
    %v7455 = vadd.f32 %v6905, %v7249
    %v7456 = vadd.f32 %v6906, %v7252
    %v7457 = vadd.f32 %v6907, %v7257
    %v7458 = vadd.f32 %v6908, %v7260
    %v7459 = vadd.f32 %v6909, %v7265
    %v7460 = vadd.f32 %v6910, %v7268
    %v7461 = vadd.f32 %v6911, %v7273
    %v7462 = vadd.f32 %v6912, %v7276
    %v7463 = vadd.f32 %v6913, %v7281
    %v7464 = vadd.f32 %v6914, %v7284
    %v7465 = vadd.f32 %v6915, %v7289
    %v7466 = vadd.f32 %v6916, %v7292
    %v7467 = vadd.f32 %v6917, %v7297
    %v7468 = vadd.f32 %v6918, %v7300
    %v7469 = vadd.f32 %v6919, %v7305
    %v7470 = vadd.f32 %v6920, %v7308
    %v7471 = vadd.f32 %v6921, %v7313
    %v7472 = vadd.f32 %v6922, %v7316
    %v7473 = vadd.f32 %v6923, %v7321
    %v7474 = vadd.f32 %v6924, %v7324
    %v7475 = vadd.f32 %v6925, %v7329
    %v7476 = vadd.f32 %v6926, %v7332
    %v7477 = vadd.f32 %v6927, %v7337
    %v7478 = vadd.f32 %v6928, %v7340
    %v7479 = vadd.f32 %v6929, %v7345
    %v7480 = vadd.f32 %v6930, %v7348
    %v7481 = vadd.f32 %v6931, %v7353
    %v7482 = vadd.f32 %v6932, %v7356
    %v7483 = vadd.f32 %v6933, %v7361
    %v7484 = vadd.f32 %v6934, %v7364
    %v7485 = vadd.f32 %v6935, %v7369
    %v7486 = vadd.f32 %v6936, %v7372
    %v7487 = vadd.f32 %v6937, %v7377
    %v7488 = vadd.f32 %v6938, %v7380
    %v7489 = vadd.f32 %v6939, %v7385
    %v7490 = vadd.f32 %v6940, %v7388
    %v7491 = vadd.f32 %v6941, %v7393
    %v7492 = vadd.f32 %v6942, %v7396
    %v7493 = vadd.f32 %v6943, %v7401
    %v7494 = vadd.f32 %v6944, %v7404
    %v7495 = vadd.f32 %v6945, %v7409
    %v7496 = vadd.f32 %v6946, %v7412
    %v7497 = vadd.f32 %v6947, %v7417
    %v7498 = vadd.f32 %v6948, %v7420
    %v7499 = vadd.f32 %v6949, %v7425
    %v7500 = vadd.f32 %v6950, %v7428
    %v7501 = vadd.f32 %v6951, %v7433
    %v7502 = vadd.f32 %v6952, %v7436
    %v7503 = vld [vmem:[%s5366 + $0x1] sm:$0xff]
    %v7504 = vld [vmem:[%s5366 + $0x9] sm:$0xff]
    %v7505 = vld [vmem:[%s5366 + $0x19] sm:$0xff]
    %v7506 = vld [vmem:[%s5366 + $0x21] sm:$0xff]
    %v7507 = vld [vmem:[%s5366 + $0x31] sm:$0xff]
    %v7508 = vld [vmem:[%s5366 + $0x39] sm:$0xff]
    %v7509 = vld [vmem:[%s5366 + $0x49] sm:$0xff]
    %v7510 = vld [vmem:[%s5366 + $0x51] sm:$0xff]
    %v7511 = vld [vmem:[%s5366 + $0x61] sm:$0xff]
    %v7512 = vld [vmem:[%s5366 + $0x69] sm:$0xff]
    %v7513 = vld [vmem:[%s5366 + $0x79] sm:$0xff]
    %v7514 = vld [vmem:[%s5366 + $0x81] sm:$0xff]
    %v7515 = vld [vmem:[%s5366 + $0x91] sm:$0xff]
    %v7516 = vld [vmem:[%s5366 + $0x99] sm:$0xff]
    %v7517 = vld [vmem:[%s5366 + $0xa9] sm:$0xff]
    %v7518 = vld [vmem:[%s5366 + $0xb1] sm:$0xff]
    %v7519 = vld [vmem:[%s5366 + $0xc1] sm:$0xff]
    %v7520 = vld [vmem:[%s5366 + $0xc9] sm:$0xff]
    %v7521 = vld [vmem:[%s5366 + $0xd9] sm:$0xff]
    %v7522 = vld [vmem:[%s5366 + $0xe1] sm:$0xff]
    %v7523 = vld [vmem:[%s5366 + $0xf1] sm:$0xff]
    %v7524 = vld [vmem:[%s5366 + $0xf9] sm:$0xff]
    %v7525 = vld [vmem:[%s5366 + $0x109] sm:$0xff]
    %v7526 = vld [vmem:[%s5366 + $0x111] sm:$0xff]
    %v7527 = vld [vmem:[%s5366 + $0x121] sm:$0xff]
    %v7528 = vld [vmem:[%s5366 + $0x129] sm:$0xff]
    %v7529 = vld [vmem:[%s5366 + $0x139] sm:$0xff]
    %v7530 = vld [vmem:[%s5366 + $0x141] sm:$0xff]
    %v7531 = vld [vmem:[%s5366 + $0x151] sm:$0xff]
    %v7532 = vld [vmem:[%s5366 + $0x159] sm:$0xff]
    %v7533 = vld [vmem:[%s5366 + $0x169] sm:$0xff]
    %v7534 = vld [vmem:[%s5366 + $0x171] sm:$0xff]
    %v7535 = vld [vmem:[%s5366 + $0x1b1] sm:$0xff]
    %v7536 = vld [vmem:[%s5366 + $0x1b9] sm:$0xff]
    %v7537 = vld [vmem:[%s5366 + $0x1c9] sm:$0xff]
    %v7538 = vld [vmem:[%s5366 + $0x1d1] sm:$0xff]
    %v7539 = vld [vmem:[%s5366 + $0x1e1] sm:$0xff]
    %v7540 = vld [vmem:[%s5366 + $0x1e9] sm:$0xff]
    %v7541 = vld [vmem:[%s5366 + $0x1f9] sm:$0xff]
    %v7542 = vld [vmem:[%s5366 + $0x201] sm:$0xff]
    %v7543 = vld [vmem:[%s5366 + $0x211] sm:$0xff]
    %v7544 = vld [vmem:[%s5366 + $0x219] sm:$0xff]
    %v7545 = vld [vmem:[%s5366 + $0x229] sm:$0xff]
    %v7546 = vld [vmem:[%s5366 + $0x231] sm:$0xff]
    %v7547 = vld [vmem:[%s5366 + $0x241] sm:$0xff]
    %v7548 = vld [vmem:[%s5366 + $0x249] sm:$0xff]
    %v7549 = vld [vmem:[%s5366 + $0x259] sm:$0xff]
    %v7550 = vld [vmem:[%s5366 + $0x261] sm:$0xff]
    %v7551 = vld [vmem:[%s5366 + $0x271] sm:$0xff]
    %v7552 = vld [vmem:[%s5366 + $0x279] sm:$0xff]
    %v7553 = vld [vmem:[%s5366 + $0x289] sm:$0xff]
    %v7554 = vld [vmem:[%s5366 + $0x291] sm:$0xff]
    %v7555 = vld [vmem:[%s5366 + $0x2a1] sm:$0xff]
    %v7556 = vld [vmem:[%s5366 + $0x2a9] sm:$0xff]
    %v7557 = vld [vmem:[%s5366 + $0x2b9] sm:$0xff]
    %v7558 = vld [vmem:[%s5366 + $0x2c1] sm:$0xff]
    %v7559 = vld [vmem:[%s5366 + $0x2d1] sm:$0xff]
    %v7560 = vld [vmem:[%s5366 + $0x2d9] sm:$0xff]
    %v7561 = vld [vmem:[%s5366 + $0x2e9] sm:$0xff]
    %v7562 = vld [vmem:[%s5366 + $0x2f1] sm:$0xff]
    %v7563 = vld [vmem:[%s5366 + $0x301] sm:$0xff]
    %v7564 = vld [vmem:[%s5366 + $0x309] sm:$0xff]
    %v7565 = vld [vmem:[%s5366 + $0x319] sm:$0xff]
    %v7566 = vld [vmem:[%s5366 + $0x321] sm:$0xff]
    %v7567 = vpack.c.bf16 %v7504, %v7503
    %v7568 = vpack.c.bf16 %v7506, %v7505
    %v7569 = vpack.c.bf16 %v7508, %v7507
    %v7570 = vpack.c.bf16 %v7510, %v7509
    %v7571 = vpack.c.bf16 %v7512, %v7511
    %v7572 = vpack.c.bf16 %v7514, %v7513
    %v7573 = vpack.c.bf16 %v7516, %v7515
    %v7574 = vpack.c.bf16 %v7518, %v7517
    %v7575 = vpack.c.bf16 %v7520, %v7519
    %v7576 = vpack.c.bf16 %v7522, %v7521
    %v7577 = vpack.c.bf16 %v7524, %v7523
    %v7578 = vpack.c.bf16 %v7526, %v7525
    %v7579 = vpack.c.bf16 %v7528, %v7527
    %v7580 = vpack.c.bf16 %v7530, %v7529
    %v7581 = vpack.c.bf16 %v7532, %v7531
    %v7582 = vpack.c.bf16 %v7534, %v7533
    %v7583 = vpack.c.bf16 %v7536, %v7535
    %v7584 = vpack.c.bf16 %v7538, %v7537
    %v7585 = vpack.c.bf16 %v7540, %v7539
    %v7586 = vpack.c.bf16 %v7542, %v7541
    %v7587 = vpack.c.bf16 %v7544, %v7543
    %v7588 = vpack.c.bf16 %v7546, %v7545
    %v7589 = vpack.c.bf16 %v7548, %v7547
    %v7590 = vpack.c.bf16 %v7550, %v7549
    %v7591 = vpack.c.bf16 %v7552, %v7551
    %v7592 = vpack.c.bf16 %v7554, %v7553
    %v7593 = vpack.c.bf16 %v7556, %v7555
    %v7594 = vpack.c.bf16 %v7558, %v7557
    %v7595 = vpack.c.bf16 %v7560, %v7559
    %v7596 = vpack.c.bf16 %v7562, %v7561
    %v7597 = vpack.c.bf16 %v7564, %v7563
    %v7598 = vpack.c.bf16 %v7566, %v7565
    %s7599 = scalar_lea.vmem %s4, 16
    %v7600 = vld [vmem:[%s7599] sm:$0xf]
    %v7602 = vsel %vm5278, %v7567, 0
    %v7605 = vsel %vm5278, %v7568, 0
    %v7608 = vsel %vm5278, %v7569, 0
    %v7611 = vsel %vm5278, %v7570, 0
    %v7614 = vsel %vm5278, %v7571, 0
    %v7617 = vsel %vm5278, %v7572, 0
    %v7620 = vsel %vm5278, %v7573, 0
    %v7623 = vsel %vm5278, %v7574, 0
    %v7626 = vsel %vm5278, %v7575, 0
    %v7629 = vsel %vm5278, %v7576, 0
    %v7632 = vsel %vm5278, %v7577, 0
    %v7635 = vsel %vm5278, %v7578, 0
    %v7638 = vsel %vm5278, %v7579, 0
    %v7641 = vsel %vm5278, %v7580, 0
    %v7644 = vsel %vm5278, %v7581, 0
    %v7647 = vsel %vm5278, %v7582, 0
    %v7650 = vsel %vm5278, %v7583, 0
    %v7653 = vsel %vm5278, %v7584, 0
    %v7656 = vsel %vm5278, %v7585, 0
    %v7659 = vsel %vm5278, %v7586, 0
    %v7662 = vsel %vm5278, %v7587, 0
    %v7665 = vsel %vm5278, %v7588, 0
    %v7668 = vsel %vm5278, %v7589, 0
    %v7671 = vsel %vm5278, %v7590, 0
    %v7674 = vsel %vm5278, %v7591, 0
    %v7677 = vsel %vm5278, %v7592, 0
    %v7680 = vsel %vm5278, %v7593, 0
    %v7683 = vsel %vm5278, %v7594, 0
    %v7686 = vsel %vm5278, %v7595, 0
    %v7689 = vsel %vm5278, %v7596, 0
    %v7692 = vsel %vm5278, %v7597, 0
    %v7695 = vsel %vm5278, %v7598, 0
    %v7698 = vsel %vm5722, %v7600, 0
    %7700 = vmatprep.subr.bf16.mxu0 0
    %7701 = vmatpush1.bf16.msra.mxu0 0
    %7702 = vmatprep.subr.bf16.mxu0 0
    %7703 = vmatpush1.bf16.msra.mxu0 0
    %7704 = vmatprep.subr.bf16.mxu0 0
    %7705 = vmatpush1.bf16.msra.mxu0 0
    %7706 = vmatprep.subr.bf16.mxu0 0
    %7707 = vmatpush1.bf16.msra.mxu0 0
    %7708 = vmatprep.subr.bf16.mxu0 0
    %7709 = vmatpush1.bf16.msra.mxu0 0
    %7710 = vmatprep.subr.bf16.mxu0 0
    %7711 = vmatpush1.bf16.msra.mxu0 0
    %7712 = vmatprep.subr.bf16.mxu0 0
    %7713 = vmatpush1.bf16.msra.mxu0 0
    %7714 = vmatprep.subr.bf16.mxu0 0
    %7715 = vmatpush1.bf16.msra.mxu0 %v7698
    %7716 = vmatprep.subr.bf16.mxu0 0
    %7717 = vmatpush2.bf16.msra.mxu0 0
    %7718 = vmatprep.subr.bf16.mxu0 0
    %7719 = vmatpush2.bf16.msra.mxu0 0
    %7720 = vmatprep.subr.bf16.mxu0 0
    %7721 = vmatpush2.bf16.msra.mxu0 0
    %7722 = vmatprep.subr.bf16.mxu0 0
    %7723 = vmatpush2.bf16.msra.mxu0 0
    %7724 = vmatprep.subr.bf16.mxu0 0
    %7725 = vmatpush2.bf16.msra.mxu0 0
    %7726 = vmatprep.subr.bf16.mxu0 0
    %7727 = vmatpush2.bf16.msra.mxu0 0
    %7728 = vmatprep.subr.bf16.mxu0 0
    %7729 = vmatpush2.bf16.msra.mxu0 0
    %7730 = vmatprep.subr.bf16.mxu0 0
    %7731 = vmatpush2.bf16.msra.mxu0 0
    %7732 = vmatprep.mubr.bf16.mxu0 0
    %7733 = vmatmul.mubr.bf16.gmra.mxu0 %v7602
    %v7734 = vpop.f32.mrf.mxu0
    %v7735 = vadd.f32 0.0, %v7734
    %v7736 = vpop.f32.mrf.mxu0
    %v7737 = vpop.f32.mrf.mxu0
    %v7738 = vadd.f32 0.0, %v7737
    %v7739 = vpop.f32.mrf.mxu0
    %7740 = vmatprep.mubr.bf16.mxu0 0
    %7741 = vmatmul.mubr.bf16.gmra.mxu0 %v7605
    %v7742 = vpop.f32.mrf.mxu0
    %v7743 = vadd.f32 0.0, %v7742
    %v7744 = vpop.f32.mrf.mxu0
    %v7745 = vpop.f32.mrf.mxu0
    %v7746 = vadd.f32 0.0, %v7745
    %v7747 = vpop.f32.mrf.mxu0
    %7748 = vmatprep.mubr.bf16.mxu0 0
    %7749 = vmatmul.mubr.bf16.gmra.mxu0 %v7608
    %v7750 = vpop.f32.mrf.mxu0
    %v7751 = vadd.f32 0.0, %v7750
    %v7752 = vpop.f32.mrf.mxu0
    %v7753 = vpop.f32.mrf.mxu0
    %v7754 = vadd.f32 0.0, %v7753
    %v7755 = vpop.f32.mrf.mxu0
    %7756 = vmatprep.mubr.bf16.mxu0 0
    %7757 = vmatmul.mubr.bf16.gmra.mxu0 %v7611
    %v7758 = vpop.f32.mrf.mxu0
    %v7759 = vadd.f32 0.0, %v7758
    %v7760 = vpop.f32.mrf.mxu0
    %v7761 = vpop.f32.mrf.mxu0
    %v7762 = vadd.f32 0.0, %v7761
    %v7763 = vpop.f32.mrf.mxu0
    %7764 = vmatprep.mubr.bf16.mxu0 0
    %7765 = vmatmul.mubr.bf16.gmra.mxu0 %v7614
    %v7766 = vpop.f32.mrf.mxu0
    %v7767 = vadd.f32 0.0, %v7766
    %v7768 = vpop.f32.mrf.mxu0
    %v7769 = vpop.f32.mrf.mxu0
    %v7770 = vadd.f32 0.0, %v7769
    %v7771 = vpop.f32.mrf.mxu0
    %7772 = vmatprep.mubr.bf16.mxu0 0
    %7773 = vmatmul.mubr.bf16.gmra.mxu0 %v7617
    %v7774 = vpop.f32.mrf.mxu0
    %v7775 = vadd.f32 0.0, %v7774
    %v7776 = vpop.f32.mrf.mxu0
    %v7777 = vpop.f32.mrf.mxu0
    %v7778 = vadd.f32 0.0, %v7777
    %v7779 = vpop.f32.mrf.mxu0
    %7780 = vmatprep.mubr.bf16.mxu0 0
    %7781 = vmatmul.mubr.bf16.gmra.mxu0 %v7620
    %v7782 = vpop.f32.mrf.mxu0
    %v7783 = vadd.f32 0.0, %v7782
    %v7784 = vpop.f32.mrf.mxu0
    %v7785 = vpop.f32.mrf.mxu0
    %v7786 = vadd.f32 0.0, %v7785
    %v7787 = vpop.f32.mrf.mxu0
    %7788 = vmatprep.mubr.bf16.mxu0 0
    %7789 = vmatmul.mubr.bf16.gmra.mxu0 %v7623
    %v7790 = vpop.f32.mrf.mxu0
    %v7791 = vadd.f32 0.0, %v7790
    %v7792 = vpop.f32.mrf.mxu0
    %v7793 = vpop.f32.mrf.mxu0
    %v7794 = vadd.f32 0.0, %v7793
    %v7795 = vpop.f32.mrf.mxu0
    %7796 = vmatprep.mubr.bf16.mxu0 0
    %7797 = vmatmul.mubr.bf16.gmra.mxu0 %v7626
    %v7798 = vpop.f32.mrf.mxu0
    %v7799 = vadd.f32 0.0, %v7798
    %v7800 = vpop.f32.mrf.mxu0
    %v7801 = vpop.f32.mrf.mxu0
    %v7802 = vadd.f32 0.0, %v7801
    %v7803 = vpop.f32.mrf.mxu0
    %7804 = vmatprep.mubr.bf16.mxu0 0
    %7805 = vmatmul.mubr.bf16.gmra.mxu0 %v7629
    %v7806 = vpop.f32.mrf.mxu0
    %v7807 = vadd.f32 0.0, %v7806
    %v7808 = vpop.f32.mrf.mxu0
    %v7809 = vpop.f32.mrf.mxu0
    %v7810 = vadd.f32 0.0, %v7809
    %v7811 = vpop.f32.mrf.mxu0
    %7812 = vmatprep.mubr.bf16.mxu0 0
    %7813 = vmatmul.mubr.bf16.gmra.mxu0 %v7632
    %v7814 = vpop.f32.mrf.mxu0
    %v7815 = vadd.f32 0.0, %v7814
    %v7816 = vpop.f32.mrf.mxu0
    %v7817 = vpop.f32.mrf.mxu0
    %v7818 = vadd.f32 0.0, %v7817
    %v7819 = vpop.f32.mrf.mxu0
    %7820 = vmatprep.mubr.bf16.mxu0 0
    %7821 = vmatmul.mubr.bf16.gmra.mxu0 %v7635
    %v7822 = vpop.f32.mrf.mxu0
    %v7823 = vadd.f32 0.0, %v7822
    %v7824 = vpop.f32.mrf.mxu0
    %v7825 = vpop.f32.mrf.mxu0
    %v7826 = vadd.f32 0.0, %v7825
    %v7827 = vpop.f32.mrf.mxu0
    %7828 = vmatprep.mubr.bf16.mxu0 0
    %7829 = vmatmul.mubr.bf16.gmra.mxu0 %v7638
    %v7830 = vpop.f32.mrf.mxu0
    %v7831 = vadd.f32 0.0, %v7830
    %v7832 = vpop.f32.mrf.mxu0
    %v7833 = vpop.f32.mrf.mxu0
    %v7834 = vadd.f32 0.0, %v7833
    %v7835 = vpop.f32.mrf.mxu0
    %7836 = vmatprep.mubr.bf16.mxu0 0
    %7837 = vmatmul.mubr.bf16.gmra.mxu0 %v7641
    %v7838 = vpop.f32.mrf.mxu0
    %v7839 = vadd.f32 0.0, %v7838
    %v7840 = vpop.f32.mrf.mxu0
    %v7841 = vpop.f32.mrf.mxu0
    %v7842 = vadd.f32 0.0, %v7841
    %v7843 = vpop.f32.mrf.mxu0
    %7844 = vmatprep.mubr.bf16.mxu0 0
    %7845 = vmatmul.mubr.bf16.gmra.mxu0 %v7644
    %v7846 = vpop.f32.mrf.mxu0
    %v7847 = vadd.f32 0.0, %v7846
    %v7848 = vpop.f32.mrf.mxu0
    %v7849 = vpop.f32.mrf.mxu0
    %v7850 = vadd.f32 0.0, %v7849
    %v7851 = vpop.f32.mrf.mxu0
    %7852 = vmatprep.mubr.bf16.mxu0 0
    %7853 = vmatmul.mubr.bf16.gmra.mxu0 %v7647
    %v7854 = vpop.f32.mrf.mxu0
    %v7855 = vadd.f32 0.0, %v7854
    %v7856 = vpop.f32.mrf.mxu0
    %v7857 = vpop.f32.mrf.mxu0
    %v7858 = vadd.f32 0.0, %v7857
    %v7859 = vpop.f32.mrf.mxu0
    %7860 = vmatprep.mubr.bf16.mxu0 0
    %7861 = vmatmul.mubr.bf16.gmra.mxu0 %v7650
    %v7862 = vpop.f32.mrf.mxu0
    %v7863 = vadd.f32 0.0, %v7862
    %v7864 = vpop.f32.mrf.mxu0
    %v7865 = vpop.f32.mrf.mxu0
    %v7866 = vadd.f32 0.0, %v7865
    %v7867 = vpop.f32.mrf.mxu0
    %7868 = vmatprep.mubr.bf16.mxu0 0
    %7869 = vmatmul.mubr.bf16.gmra.mxu0 %v7653
    %v7870 = vpop.f32.mrf.mxu0
    %v7871 = vadd.f32 0.0, %v7870
    %v7872 = vpop.f32.mrf.mxu0
    %v7873 = vpop.f32.mrf.mxu0
    %v7874 = vadd.f32 0.0, %v7873
    %v7875 = vpop.f32.mrf.mxu0
    %7876 = vmatprep.mubr.bf16.mxu0 0
    %7877 = vmatmul.mubr.bf16.gmra.mxu0 %v7656
    %v7878 = vpop.f32.mrf.mxu0
    %v7879 = vadd.f32 0.0, %v7878
    %v7880 = vpop.f32.mrf.mxu0
    %v7881 = vpop.f32.mrf.mxu0
    %v7882 = vadd.f32 0.0, %v7881
    %v7883 = vpop.f32.mrf.mxu0
    %7884 = vmatprep.mubr.bf16.mxu0 0
    %7885 = vmatmul.mubr.bf16.gmra.mxu0 %v7659
    %v7886 = vpop.f32.mrf.mxu0
    %v7887 = vadd.f32 0.0, %v7886
    %v7888 = vpop.f32.mrf.mxu0
    %v7889 = vpop.f32.mrf.mxu0
    %v7890 = vadd.f32 0.0, %v7889
    %v7891 = vpop.f32.mrf.mxu0
    %7892 = vmatprep.mubr.bf16.mxu0 0
    %7893 = vmatmul.mubr.bf16.gmra.mxu0 %v7662
    %v7894 = vpop.f32.mrf.mxu0
    %v7895 = vadd.f32 0.0, %v7894
    %v7896 = vpop.f32.mrf.mxu0
    %v7897 = vpop.f32.mrf.mxu0
    %v7898 = vadd.f32 0.0, %v7897
    %v7899 = vpop.f32.mrf.mxu0
    %7900 = vmatprep.mubr.bf16.mxu0 0
    %7901 = vmatmul.mubr.bf16.gmra.mxu0 %v7665
    %v7902 = vpop.f32.mrf.mxu0
    %v7903 = vadd.f32 0.0, %v7902
    %v7904 = vpop.f32.mrf.mxu0
    %v7905 = vpop.f32.mrf.mxu0
    %v7906 = vadd.f32 0.0, %v7905
    %v7907 = vpop.f32.mrf.mxu0
    %7908 = vmatprep.mubr.bf16.mxu0 0
    %7909 = vmatmul.mubr.bf16.gmra.mxu0 %v7668
    %v7910 = vpop.f32.mrf.mxu0
    %v7911 = vadd.f32 0.0, %v7910
    %v7912 = vpop.f32.mrf.mxu0
    %v7913 = vpop.f32.mrf.mxu0
    %v7914 = vadd.f32 0.0, %v7913
    %v7915 = vpop.f32.mrf.mxu0
    %7916 = vmatprep.mubr.bf16.mxu0 0
    %7917 = vmatmul.mubr.bf16.gmra.mxu0 %v7671
    %v7918 = vpop.f32.mrf.mxu0
    %v7919 = vadd.f32 0.0, %v7918
    %v7920 = vpop.f32.mrf.mxu0
    %v7921 = vpop.f32.mrf.mxu0
    %v7922 = vadd.f32 0.0, %v7921
    %v7923 = vpop.f32.mrf.mxu0
    %7924 = vmatprep.mubr.bf16.mxu0 0
    %7925 = vmatmul.mubr.bf16.gmra.mxu0 %v7674
    %v7926 = vpop.f32.mrf.mxu0
    %v7927 = vadd.f32 0.0, %v7926
    %v7928 = vpop.f32.mrf.mxu0
    %v7929 = vpop.f32.mrf.mxu0
    %v7930 = vadd.f32 0.0, %v7929
    %v7931 = vpop.f32.mrf.mxu0
    %7932 = vmatprep.mubr.bf16.mxu0 0
    %7933 = vmatmul.mubr.bf16.gmra.mxu0 %v7677
    %v7934 = vpop.f32.mrf.mxu0
    %v7935 = vadd.f32 0.0, %v7934
    %v7936 = vpop.f32.mrf.mxu0
    %v7937 = vpop.f32.mrf.mxu0
    %v7938 = vadd.f32 0.0, %v7937
    %v7939 = vpop.f32.mrf.mxu0
    %7940 = vmatprep.mubr.bf16.mxu0 0
    %7941 = vmatmul.mubr.bf16.gmra.mxu0 %v7680
    %v7942 = vpop.f32.mrf.mxu0
    %v7943 = vadd.f32 0.0, %v7942
    %v7944 = vpop.f32.mrf.mxu0
    %v7945 = vpop.f32.mrf.mxu0
    %v7946 = vadd.f32 0.0, %v7945
    %v7947 = vpop.f32.mrf.mxu0
    %7948 = vmatprep.mubr.bf16.mxu0 0
    %7949 = vmatmul.mubr.bf16.gmra.mxu0 %v7683
    %v7950 = vpop.f32.mrf.mxu0
    %v7951 = vadd.f32 0.0, %v7950
    %v7952 = vpop.f32.mrf.mxu0
    %v7953 = vpop.f32.mrf.mxu0
    %v7954 = vadd.f32 0.0, %v7953
    %v7955 = vpop.f32.mrf.mxu0
    %7956 = vmatprep.mubr.bf16.mxu0 0
    %7957 = vmatmul.mubr.bf16.gmra.mxu0 %v7686
    %v7958 = vpop.f32.mrf.mxu0
    %v7959 = vadd.f32 0.0, %v7958
    %v7960 = vpop.f32.mrf.mxu0
    %v7961 = vpop.f32.mrf.mxu0
    %v7962 = vadd.f32 0.0, %v7961
    %v7963 = vpop.f32.mrf.mxu0
    %7964 = vmatprep.mubr.bf16.mxu0 0
    %7965 = vmatmul.mubr.bf16.gmra.mxu0 %v7689
    %v7966 = vpop.f32.mrf.mxu0
    %v7967 = vadd.f32 0.0, %v7966
    %v7968 = vpop.f32.mrf.mxu0
    %v7969 = vpop.f32.mrf.mxu0
    %v7970 = vadd.f32 0.0, %v7969
    %v7971 = vpop.f32.mrf.mxu0
    %7972 = vmatprep.mubr.bf16.mxu0 0
    %7973 = vmatmul.mubr.bf16.gmra.mxu0 %v7692
    %v7974 = vpop.f32.mrf.mxu0
    %v7975 = vadd.f32 0.0, %v7974
    %v7976 = vpop.f32.mrf.mxu0
    %v7977 = vpop.f32.mrf.mxu0
    %v7978 = vadd.f32 0.0, %v7977
    %v7979 = vpop.f32.mrf.mxu0
    %7980 = vmatprep.mubr.bf16.mxu0 0
    %7981 = vmatmul.mubr.bf16.gmra.mxu0 %v7695
    %v7982 = vpop.f32.mrf.mxu0
    %v7983 = vadd.f32 0.0, %v7982
    %v7984 = vpop.f32.mrf.mxu0
    %v7985 = vpop.f32.mrf.mxu0
    %v7986 = vadd.f32 0.0, %v7985
    %v7987 = vpop.f32.mrf.mxu0
    %7988 = vdwg.mxu0
    %v7989 = vadd.f32 %v7439, %v7735
    %v7990 = vadd.f32 %v7440, %v7738
    %v7991 = vadd.f32 %v7441, %v7743
    %v7992 = vadd.f32 %v7442, %v7746
    %v7993 = vadd.f32 %v7443, %v7751
    %v7994 = vadd.f32 %v7444, %v7754
    %v7995 = vadd.f32 %v7445, %v7759
    %v7996 = vadd.f32 %v7446, %v7762
    %v7997 = vadd.f32 %v7447, %v7767
    %v7998 = vadd.f32 %v7448, %v7770
    %v7999 = vadd.f32 %v7449, %v7775
    %v8000 = vadd.f32 %v7450, %v7778
    %v8001 = vadd.f32 %v7451, %v7783
    %v8002 = vadd.f32 %v7452, %v7786
    %v8003 = vadd.f32 %v7453, %v7791
    %v8004 = vadd.f32 %v7454, %v7794
    %v8005 = vadd.f32 %v7455, %v7799
    %v8006 = vadd.f32 %v7456, %v7802
    %v8007 = vadd.f32 %v7457, %v7807
    %v8008 = vadd.f32 %v7458, %v7810
    %v8009 = vadd.f32 %v7459, %v7815
    %v8010 = vadd.f32 %v7460, %v7818
    %v8011 = vadd.f32 %v7461, %v7823
    %v8012 = vadd.f32 %v7462, %v7826
    %v8013 = vadd.f32 %v7463, %v7831
    %v8014 = vadd.f32 %v7464, %v7834
    %v8015 = vadd.f32 %v7465, %v7839
    %v8016 = vadd.f32 %v7466, %v7842
    %v8017 = vadd.f32 %v7467, %v7847
    %v8018 = vadd.f32 %v7468, %v7850
    %v8019 = vadd.f32 %v7469, %v7855
    %v8020 = vadd.f32 %v7470, %v7858
    %v8021 = vadd.f32 %v7471, %v7863
    %v8022 = vadd.f32 %v7472, %v7866
    %v8023 = vadd.f32 %v7473, %v7871
    %v8024 = vadd.f32 %v7474, %v7874
    %v8025 = vadd.f32 %v7475, %v7879
    %v8026 = vadd.f32 %v7476, %v7882
    %v8027 = vadd.f32 %v7477, %v7887
    %v8028 = vadd.f32 %v7478, %v7890
    %v8029 = vadd.f32 %v7479, %v7895
    %v8030 = vadd.f32 %v7480, %v7898
    %v8031 = vadd.f32 %v7481, %v7903
    %v8032 = vadd.f32 %v7482, %v7906
    %v8033 = vadd.f32 %v7483, %v7911
    %v8034 = vadd.f32 %v7484, %v7914
    %v8035 = vadd.f32 %v7485, %v7919
    %v8036 = vadd.f32 %v7486, %v7922
    %v8037 = vadd.f32 %v7487, %v7927
    %v8038 = vadd.f32 %v7488, %v7930
    %v8039 = vadd.f32 %v7489, %v7935
    %v8040 = vadd.f32 %v7490, %v7938
    %v8041 = vadd.f32 %v7491, %v7943
    %v8042 = vadd.f32 %v7492, %v7946
    %v8043 = vadd.f32 %v7493, %v7951
    %v8044 = vadd.f32 %v7494, %v7954
    %v8045 = vadd.f32 %v7495, %v7959
    %v8046 = vadd.f32 %v7496, %v7962
    %v8047 = vadd.f32 %v7497, %v7967
    %v8048 = vadd.f32 %v7498, %v7970
    %v8049 = vadd.f32 %v7499, %v7975
    %v8050 = vadd.f32 %v7500, %v7978
    %v8051 = vadd.f32 %v7501, %v7983
    %v8052 = vadd.f32 %v7502, %v7986
    %v8053 = vld [vmem:[%s5366 + $0x2] sm:$0xff]
    %v8054 = vld [vmem:[%s5366 + $0xa] sm:$0xff]
    %v8055 = vld [vmem:[%s5366 + $0x1a] sm:$0xff]
    %v8056 = vld [vmem:[%s5366 + $0x22] sm:$0xff]
    %v8057 = vld [vmem:[%s5366 + $0x32] sm:$0xff]
    %v8058 = vld [vmem:[%s5366 + $0x3a] sm:$0xff]
    %v8059 = vld [vmem:[%s5366 + $0x4a] sm:$0xff]
    %v8060 = vld [vmem:[%s5366 + $0x52] sm:$0xff]
    %v8061 = vld [vmem:[%s5366 + $0x62] sm:$0xff]
    %v8062 = vld [vmem:[%s5366 + $0x6a] sm:$0xff]
    %v8063 = vld [vmem:[%s5366 + $0x7a] sm:$0xff]
    %v8064 = vld [vmem:[%s5366 + $0x82] sm:$0xff]
    %v8065 = vld [vmem:[%s5366 + $0x92] sm:$0xff]
    %v8066 = vld [vmem:[%s5366 + $0x9a] sm:$0xff]
    %v8067 = vld [vmem:[%s5366 + $0xaa] sm:$0xff]
    %v8068 = vld [vmem:[%s5366 + $0xb2] sm:$0xff]
    %v8069 = vld [vmem:[%s5366 + $0xc2] sm:$0xff]
    %v8070 = vld [vmem:[%s5366 + $0xca] sm:$0xff]
    %v8071 = vld [vmem:[%s5366 + $0xda] sm:$0xff]
    %v8072 = vld [vmem:[%s5366 + $0xe2] sm:$0xff]
    %v8073 = vld [vmem:[%s5366 + $0xf2] sm:$0xff]
    %v8074 = vld [vmem:[%s5366 + $0xfa] sm:$0xff]
    %v8075 = vld [vmem:[%s5366 + $0x10a] sm:$0xff]
    %v8076 = vld [vmem:[%s5366 + $0x112] sm:$0xff]
    %v8077 = vld [vmem:[%s5366 + $0x122] sm:$0xff]
    %v8078 = vld [vmem:[%s5366 + $0x12a] sm:$0xff]
    %v8079 = vld [vmem:[%s5366 + $0x13a] sm:$0xff]
    %v8080 = vld [vmem:[%s5366 + $0x142] sm:$0xff]
    %v8081 = vld [vmem:[%s5366 + $0x152] sm:$0xff]
    %v8082 = vld [vmem:[%s5366 + $0x15a] sm:$0xff]
    %v8083 = vld [vmem:[%s5366 + $0x16a] sm:$0xff]
    %v8084 = vld [vmem:[%s5366 + $0x172] sm:$0xff]
    %v8085 = vld [vmem:[%s5366 + $0x1b2] sm:$0xff]
    %v8086 = vld [vmem:[%s5366 + $0x1ba] sm:$0xff]
    %v8087 = vld [vmem:[%s5366 + $0x1ca] sm:$0xff]
    %v8088 = vld [vmem:[%s5366 + $0x1d2] sm:$0xff]
    %v8089 = vld [vmem:[%s5366 + $0x1e2] sm:$0xff]
    %v8090 = vld [vmem:[%s5366 + $0x1ea] sm:$0xff]
    %v8091 = vld [vmem:[%s5366 + $0x1fa] sm:$0xff]
    %v8092 = vld [vmem:[%s5366 + $0x202] sm:$0xff]
    %v8093 = vld [vmem:[%s5366 + $0x212] sm:$0xff]
    %v8094 = vld [vmem:[%s5366 + $0x21a] sm:$0xff]
    %v8095 = vld [vmem:[%s5366 + $0x22a] sm:$0xff]
    %v8096 = vld [vmem:[%s5366 + $0x232] sm:$0xff]
    %v8097 = vld [vmem:[%s5366 + $0x242] sm:$0xff]
    %v8098 = vld [vmem:[%s5366 + $0x24a] sm:$0xff]
    %v8099 = vld [vmem:[%s5366 + $0x25a] sm:$0xff]
    %v8100 = vld [vmem:[%s5366 + $0x262] sm:$0xff]
    %v8101 = vld [vmem:[%s5366 + $0x272] sm:$0xff]
    %v8102 = vld [vmem:[%s5366 + $0x27a] sm:$0xff]
    %v8103 = vld [vmem:[%s5366 + $0x28a] sm:$0xff]
    %v8104 = vld [vmem:[%s5366 + $0x292] sm:$0xff]
    %v8105 = vld [vmem:[%s5366 + $0x2a2] sm:$0xff]
    %v8106 = vld [vmem:[%s5366 + $0x2aa] sm:$0xff]
    %v8107 = vld [vmem:[%s5366 + $0x2ba] sm:$0xff]
    %v8108 = vld [vmem:[%s5366 + $0x2c2] sm:$0xff]
    %v8109 = vld [vmem:[%s5366 + $0x2d2] sm:$0xff]
    %v8110 = vld [vmem:[%s5366 + $0x2da] sm:$0xff]
    %v8111 = vld [vmem:[%s5366 + $0x2ea] sm:$0xff]
    %v8112 = vld [vmem:[%s5366 + $0x2f2] sm:$0xff]
    %v8113 = vld [vmem:[%s5366 + $0x302] sm:$0xff]
    %v8114 = vld [vmem:[%s5366 + $0x30a] sm:$0xff]
    %v8115 = vld [vmem:[%s5366 + $0x31a] sm:$0xff]
    %v8116 = vld [vmem:[%s5366 + $0x322] sm:$0xff]
    %v8117 = vpack.c.bf16 %v8054, %v8053
    %v8118 = vpack.c.bf16 %v8056, %v8055
    %v8119 = vpack.c.bf16 %v8058, %v8057
    %v8120 = vpack.c.bf16 %v8060, %v8059
    %v8121 = vpack.c.bf16 %v8062, %v8061
    %v8122 = vpack.c.bf16 %v8064, %v8063
    %v8123 = vpack.c.bf16 %v8066, %v8065
    %v8124 = vpack.c.bf16 %v8068, %v8067
    %v8125 = vpack.c.bf16 %v8070, %v8069
    %v8126 = vpack.c.bf16 %v8072, %v8071
    %v8127 = vpack.c.bf16 %v8074, %v8073
    %v8128 = vpack.c.bf16 %v8076, %v8075
    %v8129 = vpack.c.bf16 %v8078, %v8077
    %v8130 = vpack.c.bf16 %v8080, %v8079
    %v8131 = vpack.c.bf16 %v8082, %v8081
    %v8132 = vpack.c.bf16 %v8084, %v8083
    %v8133 = vpack.c.bf16 %v8086, %v8085
    %v8134 = vpack.c.bf16 %v8088, %v8087
    %v8135 = vpack.c.bf16 %v8090, %v8089
    %v8136 = vpack.c.bf16 %v8092, %v8091
    %v8137 = vpack.c.bf16 %v8094, %v8093
    %v8138 = vpack.c.bf16 %v8096, %v8095
    %v8139 = vpack.c.bf16 %v8098, %v8097
    %v8140 = vpack.c.bf16 %v8100, %v8099
    %v8141 = vpack.c.bf16 %v8102, %v8101
    %v8142 = vpack.c.bf16 %v8104, %v8103
    %v8143 = vpack.c.bf16 %v8106, %v8105
    %v8144 = vpack.c.bf16 %v8108, %v8107
    %v8145 = vpack.c.bf16 %v8110, %v8109
    %v8146 = vpack.c.bf16 %v8112, %v8111
    %v8147 = vpack.c.bf16 %v8114, %v8113
    %v8148 = vpack.c.bf16 %v8116, %v8115
    %s8149 = scalar_lea.vmem %s4, 20
    %v8150 = vld [vmem:[%s8149] sm:$0xf]
    %v8152 = vsel %vm5278, %v8117, 0
    %v8155 = vsel %vm5278, %v8118, 0
    %v8158 = vsel %vm5278, %v8119, 0
    %v8161 = vsel %vm5278, %v8120, 0
    %v8164 = vsel %vm5278, %v8121, 0
    %v8167 = vsel %vm5278, %v8122, 0
    %v8170 = vsel %vm5278, %v8123, 0
    %v8173 = vsel %vm5278, %v8124, 0
    %v8176 = vsel %vm5278, %v8125, 0
    %v8179 = vsel %vm5278, %v8126, 0
    %v8182 = vsel %vm5278, %v8127, 0
    %v8185 = vsel %vm5278, %v8128, 0
    %v8188 = vsel %vm5278, %v8129, 0
    %v8191 = vsel %vm5278, %v8130, 0
    %v8194 = vsel %vm5278, %v8131, 0
    %v8197 = vsel %vm5278, %v8132, 0
    %v8200 = vsel %vm5278, %v8133, 0
    %v8203 = vsel %vm5278, %v8134, 0
    %v8206 = vsel %vm5278, %v8135, 0
    %v8209 = vsel %vm5278, %v8136, 0
    %v8212 = vsel %vm5278, %v8137, 0
    %v8215 = vsel %vm5278, %v8138, 0
    %v8218 = vsel %vm5278, %v8139, 0
    %v8221 = vsel %vm5278, %v8140, 0
    %v8224 = vsel %vm5278, %v8141, 0
    %v8227 = vsel %vm5278, %v8142, 0
    %v8230 = vsel %vm5278, %v8143, 0
    %v8233 = vsel %vm5278, %v8144, 0
    %v8236 = vsel %vm5278, %v8145, 0
    %v8239 = vsel %vm5278, %v8146, 0
    %v8242 = vsel %vm5278, %v8147, 0
    %v8245 = vsel %vm5278, %v8148, 0
    %v8248 = vsel %vm5722, %v8150, 0
    %8250 = vmatprep.subr.bf16.mxu0 0
    %8251 = vmatpush1.bf16.msra.mxu0 0
    %8252 = vmatprep.subr.bf16.mxu0 0
    %8253 = vmatpush1.bf16.msra.mxu0 0
    %8254 = vmatprep.subr.bf16.mxu0 0
    %8255 = vmatpush1.bf16.msra.mxu0 0
    %8256 = vmatprep.subr.bf16.mxu0 0
    %8257 = vmatpush1.bf16.msra.mxu0 0
    %8258 = vmatprep.subr.bf16.mxu0 0
    %8259 = vmatpush1.bf16.msra.mxu0 0
    %8260 = vmatprep.subr.bf16.mxu0 0
    %8261 = vmatpush1.bf16.msra.mxu0 0
    %8262 = vmatprep.subr.bf16.mxu0 0
    %8263 = vmatpush1.bf16.msra.mxu0 0
    %8264 = vmatprep.subr.bf16.mxu0 0
    %8265 = vmatpush1.bf16.msra.mxu0 %v8248
    %8266 = vmatprep.subr.bf16.mxu0 0
    %8267 = vmatpush2.bf16.msra.mxu0 0
    %8268 = vmatprep.subr.bf16.mxu0 0
    %8269 = vmatpush2.bf16.msra.mxu0 0
    %8270 = vmatprep.subr.bf16.mxu0 0
    %8271 = vmatpush2.bf16.msra.mxu0 0
    %8272 = vmatprep.subr.bf16.mxu0 0
    %8273 = vmatpush2.bf16.msra.mxu0 0
    %8274 = vmatprep.subr.bf16.mxu0 0
    %8275 = vmatpush2.bf16.msra.mxu0 0
    %8276 = vmatprep.subr.bf16.mxu0 0
    %8277 = vmatpush2.bf16.msra.mxu0 0
    %8278 = vmatprep.subr.bf16.mxu0 0
    %8279 = vmatpush2.bf16.msra.mxu0 0
    %8280 = vmatprep.subr.bf16.mxu0 0
    %8281 = vmatpush2.bf16.msra.mxu0 0
    %8282 = vmatprep.mubr.bf16.mxu0 0
    %8283 = vmatmul.mubr.bf16.gmra.mxu0 %v8152
    %v8284 = vpop.f32.mrf.mxu0
    %v8285 = vadd.f32 0.0, %v8284
    %v8286 = vpop.f32.mrf.mxu0
    %v8287 = vpop.f32.mrf.mxu0
    %v8288 = vadd.f32 0.0, %v8287
    %v8289 = vpop.f32.mrf.mxu0
    %8290 = vmatprep.mubr.bf16.mxu0 0
    %8291 = vmatmul.mubr.bf16.gmra.mxu0 %v8155
    %v8292 = vpop.f32.mrf.mxu0
    %v8293 = vadd.f32 0.0, %v8292
    %v8294 = vpop.f32.mrf.mxu0
    %v8295 = vpop.f32.mrf.mxu0
    %v8296 = vadd.f32 0.0, %v8295
    %v8297 = vpop.f32.mrf.mxu0
    %8298 = vmatprep.mubr.bf16.mxu0 0
    %8299 = vmatmul.mubr.bf16.gmra.mxu0 %v8158
    %v8300 = vpop.f32.mrf.mxu0
    %v8301 = vadd.f32 0.0, %v8300
    %v8302 = vpop.f32.mrf.mxu0
    %v8303 = vpop.f32.mrf.mxu0
    %v8304 = vadd.f32 0.0, %v8303
    %v8305 = vpop.f32.mrf.mxu0
    %8306 = vmatprep.mubr.bf16.mxu0 0
    %8307 = vmatmul.mubr.bf16.gmra.mxu0 %v8161
    %v8308 = vpop.f32.mrf.mxu0
    %v8309 = vadd.f32 0.0, %v8308
    %v8310 = vpop.f32.mrf.mxu0
    %v8311 = vpop.f32.mrf.mxu0
    %v8312 = vadd.f32 0.0, %v8311
    %v8313 = vpop.f32.mrf.mxu0
    %8314 = vmatprep.mubr.bf16.mxu0 0
    %8315 = vmatmul.mubr.bf16.gmra.mxu0 %v8164
    %v8316 = vpop.f32.mrf.mxu0
    %v8317 = vadd.f32 0.0, %v8316
    %v8318 = vpop.f32.mrf.mxu0
    %v8319 = vpop.f32.mrf.mxu0
    %v8320 = vadd.f32 0.0, %v8319
    %v8321 = vpop.f32.mrf.mxu0
    %8322 = vmatprep.mubr.bf16.mxu0 0
    %8323 = vmatmul.mubr.bf16.gmra.mxu0 %v8167
    %v8324 = vpop.f32.mrf.mxu0
    %v8325 = vadd.f32 0.0, %v8324
    %v8326 = vpop.f32.mrf.mxu0
    %v8327 = vpop.f32.mrf.mxu0
    %v8328 = vadd.f32 0.0, %v8327
    %v8329 = vpop.f32.mrf.mxu0
    %8330 = vmatprep.mubr.bf16.mxu0 0
    %8331 = vmatmul.mubr.bf16.gmra.mxu0 %v8170
    %v8332 = vpop.f32.mrf.mxu0
    %v8333 = vadd.f32 0.0, %v8332
    %v8334 = vpop.f32.mrf.mxu0
    %v8335 = vpop.f32.mrf.mxu0
    %v8336 = vadd.f32 0.0, %v8335
    %v8337 = vpop.f32.mrf.mxu0
    %8338 = vmatprep.mubr.bf16.mxu0 0
    %8339 = vmatmul.mubr.bf16.gmra.mxu0 %v8173
    %v8340 = vpop.f32.mrf.mxu0
    %v8341 = vadd.f32 0.0, %v8340
    %v8342 = vpop.f32.mrf.mxu0
    %v8343 = vpop.f32.mrf.mxu0
    %v8344 = vadd.f32 0.0, %v8343
    %v8345 = vpop.f32.mrf.mxu0
    %8346 = vmatprep.mubr.bf16.mxu0 0
    %8347 = vmatmul.mubr.bf16.gmra.mxu0 %v8176
    %v8348 = vpop.f32.mrf.mxu0
    %v8349 = vadd.f32 0.0, %v8348
    %v8350 = vpop.f32.mrf.mxu0
    %v8351 = vpop.f32.mrf.mxu0
    %v8352 = vadd.f32 0.0, %v8351
    %v8353 = vpop.f32.mrf.mxu0
    %8354 = vmatprep.mubr.bf16.mxu0 0
    %8355 = vmatmul.mubr.bf16.gmra.mxu0 %v8179
    %v8356 = vpop.f32.mrf.mxu0
    %v8357 = vadd.f32 0.0, %v8356
    %v8358 = vpop.f32.mrf.mxu0
    %v8359 = vpop.f32.mrf.mxu0
    %v8360 = vadd.f32 0.0, %v8359
    %v8361 = vpop.f32.mrf.mxu0
    %8362 = vmatprep.mubr.bf16.mxu0 0
    %8363 = vmatmul.mubr.bf16.gmra.mxu0 %v8182
    %v8364 = vpop.f32.mrf.mxu0
    %v8365 = vadd.f32 0.0, %v8364
    %v8366 = vpop.f32.mrf.mxu0
    %v8367 = vpop.f32.mrf.mxu0
    %v8368 = vadd.f32 0.0, %v8367
    %v8369 = vpop.f32.mrf.mxu0
    %8370 = vmatprep.mubr.bf16.mxu0 0
    %8371 = vmatmul.mubr.bf16.gmra.mxu0 %v8185
    %v8372 = vpop.f32.mrf.mxu0
    %v8373 = vadd.f32 0.0, %v8372
    %v8374 = vpop.f32.mrf.mxu0
    %v8375 = vpop.f32.mrf.mxu0
    %v8376 = vadd.f32 0.0, %v8375
    %v8377 = vpop.f32.mrf.mxu0
    %8378 = vmatprep.mubr.bf16.mxu0 0
    %8379 = vmatmul.mubr.bf16.gmra.mxu0 %v8188
    %v8380 = vpop.f32.mrf.mxu0
    %v8381 = vadd.f32 0.0, %v8380
    %v8382 = vpop.f32.mrf.mxu0
    %v8383 = vpop.f32.mrf.mxu0
    %v8384 = vadd.f32 0.0, %v8383
    %v8385 = vpop.f32.mrf.mxu0
    %8386 = vmatprep.mubr.bf16.mxu0 0
    %8387 = vmatmul.mubr.bf16.gmra.mxu0 %v8191
    %v8388 = vpop.f32.mrf.mxu0
    %v8389 = vadd.f32 0.0, %v8388
    %v8390 = vpop.f32.mrf.mxu0
    %v8391 = vpop.f32.mrf.mxu0
    %v8392 = vadd.f32 0.0, %v8391
    %v8393 = vpop.f32.mrf.mxu0
    %8394 = vmatprep.mubr.bf16.mxu0 0
    %8395 = vmatmul.mubr.bf16.gmra.mxu0 %v8194
    %v8396 = vpop.f32.mrf.mxu0
    %v8397 = vadd.f32 0.0, %v8396
    %v8398 = vpop.f32.mrf.mxu0
    %v8399 = vpop.f32.mrf.mxu0
    %v8400 = vadd.f32 0.0, %v8399
    %v8401 = vpop.f32.mrf.mxu0
    %8402 = vmatprep.mubr.bf16.mxu0 0
    %8403 = vmatmul.mubr.bf16.gmra.mxu0 %v8197
    %v8404 = vpop.f32.mrf.mxu0
    %v8405 = vadd.f32 0.0, %v8404
    %v8406 = vpop.f32.mrf.mxu0
    %v8407 = vpop.f32.mrf.mxu0
    %v8408 = vadd.f32 0.0, %v8407
    %v8409 = vpop.f32.mrf.mxu0
    %8410 = vmatprep.mubr.bf16.mxu0 0
    %8411 = vmatmul.mubr.bf16.gmra.mxu0 %v8200
    %v8412 = vpop.f32.mrf.mxu0
    %v8413 = vadd.f32 0.0, %v8412
    %v8414 = vpop.f32.mrf.mxu0
    %v8415 = vpop.f32.mrf.mxu0
    %v8416 = vadd.f32 0.0, %v8415
    %v8417 = vpop.f32.mrf.mxu0
    %8418 = vmatprep.mubr.bf16.mxu0 0
    %8419 = vmatmul.mubr.bf16.gmra.mxu0 %v8203
    %v8420 = vpop.f32.mrf.mxu0
    %v8421 = vadd.f32 0.0, %v8420
    %v8422 = vpop.f32.mrf.mxu0
    %v8423 = vpop.f32.mrf.mxu0
    %v8424 = vadd.f32 0.0, %v8423
    %v8425 = vpop.f32.mrf.mxu0
    %8426 = vmatprep.mubr.bf16.mxu0 0
    %8427 = vmatmul.mubr.bf16.gmra.mxu0 %v8206
    %v8428 = vpop.f32.mrf.mxu0
    %v8429 = vadd.f32 0.0, %v8428
    %v8430 = vpop.f32.mrf.mxu0
    %v8431 = vpop.f32.mrf.mxu0
    %v8432 = vadd.f32 0.0, %v8431
    %v8433 = vpop.f32.mrf.mxu0
    %8434 = vmatprep.mubr.bf16.mxu0 0
    %8435 = vmatmul.mubr.bf16.gmra.mxu0 %v8209
    %v8436 = vpop.f32.mrf.mxu0
    %v8437 = vadd.f32 0.0, %v8436
    %v8438 = vpop.f32.mrf.mxu0
    %v8439 = vpop.f32.mrf.mxu0
    %v8440 = vadd.f32 0.0, %v8439
    %v8441 = vpop.f32.mrf.mxu0
    %8442 = vmatprep.mubr.bf16.mxu0 0
    %8443 = vmatmul.mubr.bf16.gmra.mxu0 %v8212
    %v8444 = vpop.f32.mrf.mxu0
    %v8445 = vadd.f32 0.0, %v8444
    %v8446 = vpop.f32.mrf.mxu0
    %v8447 = vpop.f32.mrf.mxu0
    %v8448 = vadd.f32 0.0, %v8447
    %v8449 = vpop.f32.mrf.mxu0
    %8450 = vmatprep.mubr.bf16.mxu0 0
    %8451 = vmatmul.mubr.bf16.gmra.mxu0 %v8215
    %v8452 = vpop.f32.mrf.mxu0
    %v8453 = vadd.f32 0.0, %v8452
    %v8454 = vpop.f32.mrf.mxu0
    %v8455 = vpop.f32.mrf.mxu0
    %v8456 = vadd.f32 0.0, %v8455
    %v8457 = vpop.f32.mrf.mxu0
    %8458 = vmatprep.mubr.bf16.mxu0 0
    %8459 = vmatmul.mubr.bf16.gmra.mxu0 %v8218
    %v8460 = vpop.f32.mrf.mxu0
    %v8461 = vadd.f32 0.0, %v8460
    %v8462 = vpop.f32.mrf.mxu0
    %v8463 = vpop.f32.mrf.mxu0
    %v8464 = vadd.f32 0.0, %v8463
    %v8465 = vpop.f32.mrf.mxu0
    %8466 = vmatprep.mubr.bf16.mxu0 0
    %8467 = vmatmul.mubr.bf16.gmra.mxu0 %v8221
    %v8468 = vpop.f32.mrf.mxu0
    %v8469 = vadd.f32 0.0, %v8468
    %v8470 = vpop.f32.mrf.mxu0
    %v8471 = vpop.f32.mrf.mxu0
    %v8472 = vadd.f32 0.0, %v8471
    %v8473 = vpop.f32.mrf.mxu0
    %8474 = vmatprep.mubr.bf16.mxu0 0
    %8475 = vmatmul.mubr.bf16.gmra.mxu0 %v8224
    %v8476 = vpop.f32.mrf.mxu0
    %v8477 = vadd.f32 0.0, %v8476
    %v8478 = vpop.f32.mrf.mxu0
    %v8479 = vpop.f32.mrf.mxu0
    %v8480 = vadd.f32 0.0, %v8479
    %v8481 = vpop.f32.mrf.mxu0
    %8482 = vmatprep.mubr.bf16.mxu0 0
    %8483 = vmatmul.mubr.bf16.gmra.mxu0 %v8227
    %v8484 = vpop.f32.mrf.mxu0
    %v8485 = vadd.f32 0.0, %v8484
    %v8486 = vpop.f32.mrf.mxu0
    %v8487 = vpop.f32.mrf.mxu0
    %v8488 = vadd.f32 0.0, %v8487
    %v8489 = vpop.f32.mrf.mxu0
    %8490 = vmatprep.mubr.bf16.mxu0 0
    %8491 = vmatmul.mubr.bf16.gmra.mxu0 %v8230
    %v8492 = vpop.f32.mrf.mxu0
    %v8493 = vadd.f32 0.0, %v8492
    %v8494 = vpop.f32.mrf.mxu0
    %v8495 = vpop.f32.mrf.mxu0
    %v8496 = vadd.f32 0.0, %v8495
    %v8497 = vpop.f32.mrf.mxu0
    %8498 = vmatprep.mubr.bf16.mxu0 0
    %8499 = vmatmul.mubr.bf16.gmra.mxu0 %v8233
    %v8500 = vpop.f32.mrf.mxu0
    %v8501 = vadd.f32 0.0, %v8500
    %v8502 = vpop.f32.mrf.mxu0
    %v8503 = vpop.f32.mrf.mxu0
    %v8504 = vadd.f32 0.0, %v8503
    %v8505 = vpop.f32.mrf.mxu0
    %8506 = vmatprep.mubr.bf16.mxu0 0
    %8507 = vmatmul.mubr.bf16.gmra.mxu0 %v8236
    %v8508 = vpop.f32.mrf.mxu0
    %v8509 = vadd.f32 0.0, %v8508
    %v8510 = vpop.f32.mrf.mxu0
    %v8511 = vpop.f32.mrf.mxu0
    %v8512 = vadd.f32 0.0, %v8511
    %v8513 = vpop.f32.mrf.mxu0
    %8514 = vmatprep.mubr.bf16.mxu0 0
    %8515 = vmatmul.mubr.bf16.gmra.mxu0 %v8239
    %v8516 = vpop.f32.mrf.mxu0
    %v8517 = vadd.f32 0.0, %v8516
    %v8518 = vpop.f32.mrf.mxu0
    %v8519 = vpop.f32.mrf.mxu0
    %v8520 = vadd.f32 0.0, %v8519
    %v8521 = vpop.f32.mrf.mxu0
    %8522 = vmatprep.mubr.bf16.mxu0 0
    %8523 = vmatmul.mubr.bf16.gmra.mxu0 %v8242
    %v8524 = vpop.f32.mrf.mxu0
    %v8525 = vadd.f32 0.0, %v8524
    %v8526 = vpop.f32.mrf.mxu0
    %v8527 = vpop.f32.mrf.mxu0
    %v8528 = vadd.f32 0.0, %v8527
    %v8529 = vpop.f32.mrf.mxu0
    %8530 = vmatprep.mubr.bf16.mxu0 0
    %8531 = vmatmul.mubr.bf16.gmra.mxu0 %v8245
    %v8532 = vpop.f32.mrf.mxu0
    %v8533 = vadd.f32 0.0, %v8532
    %v8534 = vpop.f32.mrf.mxu0
    %v8535 = vpop.f32.mrf.mxu0
    %v8536 = vadd.f32 0.0, %v8535
    %v8537 = vpop.f32.mrf.mxu0
    %8538 = vdwg.mxu0
    %v8539 = vadd.f32 %v7989, %v8285
    %v8540 = vadd.f32 %v7990, %v8288
    %v8541 = vadd.f32 %v7991, %v8293
    %v8542 = vadd.f32 %v7992, %v8296
    %v8543 = vadd.f32 %v7993, %v8301
    %v8544 = vadd.f32 %v7994, %v8304
    %v8545 = vadd.f32 %v7995, %v8309
    %v8546 = vadd.f32 %v7996, %v8312
    %v8547 = vadd.f32 %v7997, %v8317
    %v8548 = vadd.f32 %v7998, %v8320
    %v8549 = vadd.f32 %v7999, %v8325
    %v8550 = vadd.f32 %v8000, %v8328
    %v8551 = vadd.f32 %v8001, %v8333
    %v8552 = vadd.f32 %v8002, %v8336
    %v8553 = vadd.f32 %v8003, %v8341
    %v8554 = vadd.f32 %v8004, %v8344
    %v8555 = vadd.f32 %v8005, %v8349
    %v8556 = vadd.f32 %v8006, %v8352
    %v8557 = vadd.f32 %v8007, %v8357
    %v8558 = vadd.f32 %v8008, %v8360
    %v8559 = vadd.f32 %v8009, %v8365
    %v8560 = vadd.f32 %v8010, %v8368
    %v8561 = vadd.f32 %v8011, %v8373
    %v8562 = vadd.f32 %v8012, %v8376
    %v8563 = vadd.f32 %v8013, %v8381
    %v8564 = vadd.f32 %v8014, %v8384
    %v8565 = vadd.f32 %v8015, %v8389
    %v8566 = vadd.f32 %v8016, %v8392
    %v8567 = vadd.f32 %v8017, %v8397
    %v8568 = vadd.f32 %v8018, %v8400
    %v8569 = vadd.f32 %v8019, %v8405
    %v8570 = vadd.f32 %v8020, %v8408
    %v8571 = vadd.f32 %v8021, %v8413
    %v8572 = vadd.f32 %v8022, %v8416
    %v8573 = vadd.f32 %v8023, %v8421
    %v8574 = vadd.f32 %v8024, %v8424
    %v8575 = vadd.f32 %v8025, %v8429
    %v8576 = vadd.f32 %v8026, %v8432
    %v8577 = vadd.f32 %v8027, %v8437
    %v8578 = vadd.f32 %v8028, %v8440
    %v8579 = vadd.f32 %v8029, %v8445
    %v8580 = vadd.f32 %v8030, %v8448
    %v8581 = vadd.f32 %v8031, %v8453
    %v8582 = vadd.f32 %v8032, %v8456
    %v8583 = vadd.f32 %v8033, %v8461
    %v8584 = vadd.f32 %v8034, %v8464
    %v8585 = vadd.f32 %v8035, %v8469
    %v8586 = vadd.f32 %v8036, %v8472
    %v8587 = vadd.f32 %v8037, %v8477
    %v8588 = vadd.f32 %v8038, %v8480
    %v8589 = vadd.f32 %v8039, %v8485
    %v8590 = vadd.f32 %v8040, %v8488
    %v8591 = vadd.f32 %v8041, %v8493
    %v8592 = vadd.f32 %v8042, %v8496
    %v8593 = vadd.f32 %v8043, %v8501
    %v8594 = vadd.f32 %v8044, %v8504
    %v8595 = vadd.f32 %v8045, %v8509
    %v8596 = vadd.f32 %v8046, %v8512
    %v8597 = vadd.f32 %v8047, %v8517
    %v8598 = vadd.f32 %v8048, %v8520
    %v8599 = vadd.f32 %v8049, %v8525
    %v8600 = vadd.f32 %v8050, %v8528
    %v8601 = vadd.f32 %v8051, %v8533
    %v8602 = vadd.f32 %v8052, %v8536
    %s8603 = scalar_lea.vmem [#allocation2], 48
    %v8604 = vld [vmem:[%s8603] sm:$0xff]
    %v8605 = vld [vmem:[%s8603 + $0x8] sm:$0xff]
    %v8606 = vld [vmem:[%s8603 + $0x18] sm:$0xff]
    %v8607 = vld [vmem:[%s8603 + $0x20] sm:$0xff]
    %v8608 = vld [vmem:[%s8603 + $0x30] sm:$0xff]
    %v8609 = vld [vmem:[%s8603 + $0x38] sm:$0xff]
    %v8610 = vld [vmem:[%s8603 + $0x48] sm:$0xff]
    %v8611 = vld [vmem:[%s8603 + $0x50] sm:$0xff]
    %v8612 = vld [vmem:[%s8603 + $0x60] sm:$0xff]
    %v8613 = vld [vmem:[%s8603 + $0x68] sm:$0xff]
    %v8614 = vld [vmem:[%s8603 + $0x78] sm:$0xff]
    %v8615 = vld [vmem:[%s8603 + $0x80] sm:$0xff]
    %v8616 = vld [vmem:[%s8603 + $0x90] sm:$0xff]
    %v8617 = vld [vmem:[%s8603 + $0x98] sm:$0xff]
    %v8618 = vld [vmem:[%s8603 + $0xa8] sm:$0xff]
    %v8619 = vld [vmem:[%s8603 + $0xb0] sm:$0xff]
    %v8620 = vld [vmem:[%s8603 + $0xc0] sm:$0xff]
    %v8621 = vld [vmem:[%s8603 + $0xc8] sm:$0xff]
    %v8622 = vld [vmem:[%s8603 + $0xd8] sm:$0xff]
    %v8623 = vld [vmem:[%s8603 + $0xe0] sm:$0xff]
    %v8624 = vld [vmem:[%s8603 + $0xf0] sm:$0xff]
    %v8625 = vld [vmem:[%s8603 + $0xf8] sm:$0xff]
    %v8626 = vld [vmem:[%s8603 + $0x108] sm:$0xff]
    %v8627 = vld [vmem:[%s8603 + $0x110] sm:$0xff]
    %v8628 = vld [vmem:[%s8603 + $0x120] sm:$0xff]
    %v8629 = vld [vmem:[%s8603 + $0x128] sm:$0xff]
    %v8630 = vld [vmem:[%s8603 + $0x138] sm:$0xff]
    %v8631 = vld [vmem:[%s8603 + $0x140] sm:$0xff]
    %v8632 = vld [vmem:[%s8603 + $0x150] sm:$0xff]
    %v8633 = vld [vmem:[%s8603 + $0x158] sm:$0xff]
    %v8634 = vld [vmem:[%s8603 + $0x168] sm:$0xff]
    %v8635 = vld [vmem:[%s8603 + $0x170] sm:$0xff]
    %v8636 = vld [vmem:[%s8603 + $0x1b0] sm:$0xff]
    %v8637 = vld [vmem:[%s8603 + $0x1b8] sm:$0xff]
    %v8638 = vld [vmem:[%s8603 + $0x1c8] sm:$0xff]
    %v8639 = vld [vmem:[%s8603 + $0x1d0] sm:$0xff]
    %v8640 = vld [vmem:[%s8603 + $0x1e0] sm:$0xff]
    %v8641 = vld [vmem:[%s8603 + $0x1e8] sm:$0xff]
    %v8642 = vld [vmem:[%s8603 + $0x1f8] sm:$0xff]
    %v8643 = vld [vmem:[%s8603 + $0x200] sm:$0xff]
    %v8644 = vld [vmem:[%s8603 + $0x210] sm:$0xff]
    %v8645 = vld [vmem:[%s8603 + $0x218] sm:$0xff]
    %v8646 = vld [vmem:[%s8603 + $0x228] sm:$0xff]
    %v8647 = vld [vmem:[%s8603 + $0x230] sm:$0xff]
    %v8648 = vld [vmem:[%s8603 + $0x240] sm:$0xff]
    %v8649 = vld [vmem:[%s8603 + $0x248] sm:$0xff]
    %v8650 = vld [vmem:[%s8603 + $0x258] sm:$0xff]
    %v8651 = vld [vmem:[%s8603 + $0x260] sm:$0xff]
    %v8652 = vld [vmem:[%s8603 + $0x270] sm:$0xff]
    %v8653 = vld [vmem:[%s8603 + $0x278] sm:$0xff]
    %v8654 = vld [vmem:[%s8603 + $0x288] sm:$0xff]
    %v8655 = vld [vmem:[%s8603 + $0x290] sm:$0xff]
    %v8656 = vld [vmem:[%s8603 + $0x2a0] sm:$0xff]
    %v8657 = vld [vmem:[%s8603 + $0x2a8] sm:$0xff]
    %v8658 = vld [vmem:[%s8603 + $0x2b8] sm:$0xff]
    %v8659 = vld [vmem:[%s8603 + $0x2c0] sm:$0xff]
    %v8660 = vld [vmem:[%s8603 + $0x2d0] sm:$0xff]
    %v8661 = vld [vmem:[%s8603 + $0x2d8] sm:$0xff]
    %v8662 = vld [vmem:[%s8603 + $0x2e8] sm:$0xff]
    %v8663 = vld [vmem:[%s8603 + $0x2f0] sm:$0xff]
    %v8664 = vld [vmem:[%s8603 + $0x300] sm:$0xff]
    %v8665 = vld [vmem:[%s8603 + $0x308] sm:$0xff]
    %v8666 = vld [vmem:[%s8603 + $0x318] sm:$0xff]
    %v8667 = vld [vmem:[%s8603 + $0x320] sm:$0xff]
    %v8668 = vpack.c.bf16 %v8605, %v8604
    %v8669 = vpack.c.bf16 %v8607, %v8606
    %v8670 = vpack.c.bf16 %v8609, %v8608
    %v8671 = vpack.c.bf16 %v8611, %v8610
    %v8672 = vpack.c.bf16 %v8613, %v8612
    %v8673 = vpack.c.bf16 %v8615, %v8614
    %v8674 = vpack.c.bf16 %v8617, %v8616
    %v8675 = vpack.c.bf16 %v8619, %v8618
    %v8676 = vpack.c.bf16 %v8621, %v8620
    %v8677 = vpack.c.bf16 %v8623, %v8622
    %v8678 = vpack.c.bf16 %v8625, %v8624
    %v8679 = vpack.c.bf16 %v8627, %v8626
    %v8680 = vpack.c.bf16 %v8629, %v8628
    %v8681 = vpack.c.bf16 %v8631, %v8630
    %v8682 = vpack.c.bf16 %v8633, %v8632
    %v8683 = vpack.c.bf16 %v8635, %v8634
    %v8684 = vpack.c.bf16 %v8637, %v8636
    %v8685 = vpack.c.bf16 %v8639, %v8638
    %v8686 = vpack.c.bf16 %v8641, %v8640
    %v8687 = vpack.c.bf16 %v8643, %v8642
    %v8688 = vpack.c.bf16 %v8645, %v8644
    %v8689 = vpack.c.bf16 %v8647, %v8646
    %v8690 = vpack.c.bf16 %v8649, %v8648
    %v8691 = vpack.c.bf16 %v8651, %v8650
    %v8692 = vpack.c.bf16 %v8653, %v8652
    %v8693 = vpack.c.bf16 %v8655, %v8654
    %v8694 = vpack.c.bf16 %v8657, %v8656
    %v8695 = vpack.c.bf16 %v8659, %v8658
    %v8696 = vpack.c.bf16 %v8661, %v8660
    %v8697 = vpack.c.bf16 %v8663, %v8662
    %v8698 = vpack.c.bf16 %v8665, %v8664
    %v8699 = vpack.c.bf16 %v8667, %v8666
    %s8700 = scalar_lea.vmem %s4, 24
    %v8701 = vld [vmem:[%s8700] sm:$0xf]
    %v8703 = vsel %vm5278, %v8668, 0
    %v8706 = vsel %vm5278, %v8669, 0
    %v8709 = vsel %vm5278, %v8670, 0
    %v8712 = vsel %vm5278, %v8671, 0
    %v8715 = vsel %vm5278, %v8672, 0
    %v8718 = vsel %vm5278, %v8673, 0
    %v8721 = vsel %vm5278, %v8674, 0
    %v8724 = vsel %vm5278, %v8675, 0
    %v8727 = vsel %vm5278, %v8676, 0
    %v8730 = vsel %vm5278, %v8677, 0
    %v8733 = vsel %vm5278, %v8678, 0
    %v8736 = vsel %vm5278, %v8679, 0
    %v8739 = vsel %vm5278, %v8680, 0
    %v8742 = vsel %vm5278, %v8681, 0
    %v8745 = vsel %vm5278, %v8682, 0
    %v8748 = vsel %vm5278, %v8683, 0
    %v8751 = vsel %vm5278, %v8684, 0
    %v8754 = vsel %vm5278, %v8685, 0
    %v8757 = vsel %vm5278, %v8686, 0
    %v8760 = vsel %vm5278, %v8687, 0
    %v8763 = vsel %vm5278, %v8688, 0
    %v8766 = vsel %vm5278, %v8689, 0
    %v8769 = vsel %vm5278, %v8690, 0
    %v8772 = vsel %vm5278, %v8691, 0
    %v8775 = vsel %vm5278, %v8692, 0
    %v8778 = vsel %vm5278, %v8693, 0
    %v8781 = vsel %vm5278, %v8694, 0
    %v8784 = vsel %vm5278, %v8695, 0
    %v8787 = vsel %vm5278, %v8696, 0
    %v8790 = vsel %vm5278, %v8697, 0
    %v8793 = vsel %vm5278, %v8698, 0
    %v8796 = vsel %vm5278, %v8699, 0
    %v8799 = vsel %vm5722, %v8701, 0
    %8801 = vmatprep.subr.bf16.mxu0 0
    %8802 = vmatpush1.bf16.msra.mxu0 0
    %8803 = vmatprep.subr.bf16.mxu0 0
    %8804 = vmatpush1.bf16.msra.mxu0 0
    %8805 = vmatprep.subr.bf16.mxu0 0
    %8806 = vmatpush1.bf16.msra.mxu0 0
    %8807 = vmatprep.subr.bf16.mxu0 0
    %8808 = vmatpush1.bf16.msra.mxu0 0
    %8809 = vmatprep.subr.bf16.mxu0 0
    %8810 = vmatpush1.bf16.msra.mxu0 0
    %8811 = vmatprep.subr.bf16.mxu0 0
    %8812 = vmatpush1.bf16.msra.mxu0 0
    %8813 = vmatprep.subr.bf16.mxu0 0
    %8814 = vmatpush1.bf16.msra.mxu0 0
    %8815 = vmatprep.subr.bf16.mxu0 0
    %8816 = vmatpush1.bf16.msra.mxu0 %v8799
    %8817 = vmatprep.subr.bf16.mxu0 0
    %8818 = vmatpush2.bf16.msra.mxu0 0
    %8819 = vmatprep.subr.bf16.mxu0 0
    %8820 = vmatpush2.bf16.msra.mxu0 0
    %8821 = vmatprep.subr.bf16.mxu0 0
    %8822 = vmatpush2.bf16.msra.mxu0 0
    %8823 = vmatprep.subr.bf16.mxu0 0
    %8824 = vmatpush2.bf16.msra.mxu0 0
    %8825 = vmatprep.subr.bf16.mxu0 0
    %8826 = vmatpush2.bf16.msra.mxu0 0
    %8827 = vmatprep.subr.bf16.mxu0 0
    %8828 = vmatpush2.bf16.msra.mxu0 0
    %8829 = vmatprep.subr.bf16.mxu0 0
    %8830 = vmatpush2.bf16.msra.mxu0 0
    %8831 = vmatprep.subr.bf16.mxu0 0
    %8832 = vmatpush2.bf16.msra.mxu0 0
    %8833 = vmatprep.mubr.bf16.mxu0 0
    %8834 = vmatmul.mubr.bf16.gmra.mxu0 %v8703
    %v8835 = vpop.f32.mrf.mxu0
    %v8836 = vadd.f32 0.0, %v8835
    %v8837 = vpop.f32.mrf.mxu0
    %v8838 = vpop.f32.mrf.mxu0
    %v8839 = vadd.f32 0.0, %v8838
    %v8840 = vpop.f32.mrf.mxu0
    %8841 = vmatprep.mubr.bf16.mxu0 0
    %8842 = vmatmul.mubr.bf16.gmra.mxu0 %v8706
    %v8843 = vpop.f32.mrf.mxu0
    %v8844 = vadd.f32 0.0, %v8843
    %v8845 = vpop.f32.mrf.mxu0
    %v8846 = vpop.f32.mrf.mxu0
    %v8847 = vadd.f32 0.0, %v8846
    %v8848 = vpop.f32.mrf.mxu0
    %8849 = vmatprep.mubr.bf16.mxu0 0
    %8850 = vmatmul.mubr.bf16.gmra.mxu0 %v8709
    %v8851 = vpop.f32.mrf.mxu0
    %v8852 = vadd.f32 0.0, %v8851
    %v8853 = vpop.f32.mrf.mxu0
    %v8854 = vpop.f32.mrf.mxu0
    %v8855 = vadd.f32 0.0, %v8854
    %v8856 = vpop.f32.mrf.mxu0
    %8857 = vmatprep.mubr.bf16.mxu0 0
    %8858 = vmatmul.mubr.bf16.gmra.mxu0 %v8712
    %v8859 = vpop.f32.mrf.mxu0
    %v8860 = vadd.f32 0.0, %v8859
    %v8861 = vpop.f32.mrf.mxu0
    %v8862 = vpop.f32.mrf.mxu0
    %v8863 = vadd.f32 0.0, %v8862
    %v8864 = vpop.f32.mrf.mxu0
    %8865 = vmatprep.mubr.bf16.mxu0 0
    %8866 = vmatmul.mubr.bf16.gmra.mxu0 %v8715
    %v8867 = vpop.f32.mrf.mxu0
    %v8868 = vadd.f32 0.0, %v8867
    %v8869 = vpop.f32.mrf.mxu0
    %v8870 = vpop.f32.mrf.mxu0
    %v8871 = vadd.f32 0.0, %v8870
    %v8872 = vpop.f32.mrf.mxu0
    %8873 = vmatprep.mubr.bf16.mxu0 0
    %8874 = vmatmul.mubr.bf16.gmra.mxu0 %v8718
    %v8875 = vpop.f32.mrf.mxu0
    %v8876 = vadd.f32 0.0, %v8875
    %v8877 = vpop.f32.mrf.mxu0
    %v8878 = vpop.f32.mrf.mxu0
    %v8879 = vadd.f32 0.0, %v8878
    %v8880 = vpop.f32.mrf.mxu0
    %8881 = vmatprep.mubr.bf16.mxu0 0
    %8882 = vmatmul.mubr.bf16.gmra.mxu0 %v8721
    %v8883 = vpop.f32.mrf.mxu0
    %v8884 = vadd.f32 0.0, %v8883
    %v8885 = vpop.f32.mrf.mxu0
    %v8886 = vpop.f32.mrf.mxu0
    %v8887 = vadd.f32 0.0, %v8886
    %v8888 = vpop.f32.mrf.mxu0
    %8889 = vmatprep.mubr.bf16.mxu0 0
    %8890 = vmatmul.mubr.bf16.gmra.mxu0 %v8724
    %v8891 = vpop.f32.mrf.mxu0
    %v8892 = vadd.f32 0.0, %v8891
    %v8893 = vpop.f32.mrf.mxu0
    %v8894 = vpop.f32.mrf.mxu0
    %v8895 = vadd.f32 0.0, %v8894
    %v8896 = vpop.f32.mrf.mxu0
    %8897 = vmatprep.mubr.bf16.mxu0 0
    %8898 = vmatmul.mubr.bf16.gmra.mxu0 %v8727
    %v8899 = vpop.f32.mrf.mxu0
    %v8900 = vadd.f32 0.0, %v8899
    %v8901 = vpop.f32.mrf.mxu0
    %v8902 = vpop.f32.mrf.mxu0
    %v8903 = vadd.f32 0.0, %v8902
    %v8904 = vpop.f32.mrf.mxu0
    %8905 = vmatprep.mubr.bf16.mxu0 0
    %8906 = vmatmul.mubr.bf16.gmra.mxu0 %v8730
    %v8907 = vpop.f32.mrf.mxu0
    %v8908 = vadd.f32 0.0, %v8907
    %v8909 = vpop.f32.mrf.mxu0
    %v8910 = vpop.f32.mrf.mxu0
    %v8911 = vadd.f32 0.0, %v8910
    %v8912 = vpop.f32.mrf.mxu0
    %8913 = vmatprep.mubr.bf16.mxu0 0
    %8914 = vmatmul.mubr.bf16.gmra.mxu0 %v8733
    %v8915 = vpop.f32.mrf.mxu0
    %v8916 = vadd.f32 0.0, %v8915
    %v8917 = vpop.f32.mrf.mxu0
    %v8918 = vpop.f32.mrf.mxu0
    %v8919 = vadd.f32 0.0, %v8918
    %v8920 = vpop.f32.mrf.mxu0
    %8921 = vmatprep.mubr.bf16.mxu0 0
    %8922 = vmatmul.mubr.bf16.gmra.mxu0 %v8736
    %v8923 = vpop.f32.mrf.mxu0
    %v8924 = vadd.f32 0.0, %v8923
    %v8925 = vpop.f32.mrf.mxu0
    %v8926 = vpop.f32.mrf.mxu0
    %v8927 = vadd.f32 0.0, %v8926
    %v8928 = vpop.f32.mrf.mxu0
    %8929 = vmatprep.mubr.bf16.mxu0 0
    %8930 = vmatmul.mubr.bf16.gmra.mxu0 %v8739
    %v8931 = vpop.f32.mrf.mxu0
    %v8932 = vadd.f32 0.0, %v8931
    %v8933 = vpop.f32.mrf.mxu0
    %v8934 = vpop.f32.mrf.mxu0
    %v8935 = vadd.f32 0.0, %v8934
    %v8936 = vpop.f32.mrf.mxu0
    %8937 = vmatprep.mubr.bf16.mxu0 0
    %8938 = vmatmul.mubr.bf16.gmra.mxu0 %v8742
    %v8939 = vpop.f32.mrf.mxu0
    %v8940 = vadd.f32 0.0, %v8939
    %v8941 = vpop.f32.mrf.mxu0
    %v8942 = vpop.f32.mrf.mxu0
    %v8943 = vadd.f32 0.0, %v8942
    %v8944 = vpop.f32.mrf.mxu0
    %8945 = vmatprep.mubr.bf16.mxu0 0
    %8946 = vmatmul.mubr.bf16.gmra.mxu0 %v8745
    %v8947 = vpop.f32.mrf.mxu0
    %v8948 = vadd.f32 0.0, %v8947
    %v8949 = vpop.f32.mrf.mxu0
    %v8950 = vpop.f32.mrf.mxu0
    %v8951 = vadd.f32 0.0, %v8950
    %v8952 = vpop.f32.mrf.mxu0
    %8953 = vmatprep.mubr.bf16.mxu0 0
    %8954 = vmatmul.mubr.bf16.gmra.mxu0 %v8748
    %v8955 = vpop.f32.mrf.mxu0
    %v8956 = vadd.f32 0.0, %v8955
    %v8957 = vpop.f32.mrf.mxu0
    %v8958 = vpop.f32.mrf.mxu0
    %v8959 = vadd.f32 0.0, %v8958
    %v8960 = vpop.f32.mrf.mxu0
    %8961 = vmatprep.mubr.bf16.mxu0 0
    %8962 = vmatmul.mubr.bf16.gmra.mxu0 %v8751
    %v8963 = vpop.f32.mrf.mxu0
    %v8964 = vadd.f32 0.0, %v8963
    %v8965 = vpop.f32.mrf.mxu0
    %v8966 = vpop.f32.mrf.mxu0
    %v8967 = vadd.f32 0.0, %v8966
    %v8968 = vpop.f32.mrf.mxu0
    %8969 = vmatprep.mubr.bf16.mxu0 0
    %8970 = vmatmul.mubr.bf16.gmra.mxu0 %v8754
    %v8971 = vpop.f32.mrf.mxu0
    %v8972 = vadd.f32 0.0, %v8971
    %v8973 = vpop.f32.mrf.mxu0
    %v8974 = vpop.f32.mrf.mxu0
    %v8975 = vadd.f32 0.0, %v8974
    %v8976 = vpop.f32.mrf.mxu0
    %8977 = vmatprep.mubr.bf16.mxu0 0
    %8978 = vmatmul.mubr.bf16.gmra.mxu0 %v8757
    %v8979 = vpop.f32.mrf.mxu0
    %v8980 = vadd.f32 0.0, %v8979
    %v8981 = vpop.f32.mrf.mxu0
    %v8982 = vpop.f32.mrf.mxu0
    %v8983 = vadd.f32 0.0, %v8982
    %v8984 = vpop.f32.mrf.mxu0
    %8985 = vmatprep.mubr.bf16.mxu0 0
    %8986 = vmatmul.mubr.bf16.gmra.mxu0 %v8760
    %v8987 = vpop.f32.mrf.mxu0
    %v8988 = vadd.f32 0.0, %v8987
    %v8989 = vpop.f32.mrf.mxu0
    %v8990 = vpop.f32.mrf.mxu0
    %v8991 = vadd.f32 0.0, %v8990
    %v8992 = vpop.f32.mrf.mxu0
    %8993 = vmatprep.mubr.bf16.mxu0 0
    %8994 = vmatmul.mubr.bf16.gmra.mxu0 %v8763
    %v8995 = vpop.f32.mrf.mxu0
    %v8996 = vadd.f32 0.0, %v8995
    %v8997 = vpop.f32.mrf.mxu0
    %v8998 = vpop.f32.mrf.mxu0
    %v8999 = vadd.f32 0.0, %v8998
    %v9000 = vpop.f32.mrf.mxu0
    %9001 = vmatprep.mubr.bf16.mxu0 0
    %9002 = vmatmul.mubr.bf16.gmra.mxu0 %v8766
    %v9003 = vpop.f32.mrf.mxu0
    %v9004 = vadd.f32 0.0, %v9003
    %v9005 = vpop.f32.mrf.mxu0
    %v9006 = vpop.f32.mrf.mxu0
    %v9007 = vadd.f32 0.0, %v9006
    %v9008 = vpop.f32.mrf.mxu0
    %9009 = vmatprep.mubr.bf16.mxu0 0
    %9010 = vmatmul.mubr.bf16.gmra.mxu0 %v8769
    %v9011 = vpop.f32.mrf.mxu0
    %v9012 = vadd.f32 0.0, %v9011
    %v9013 = vpop.f32.mrf.mxu0
    %v9014 = vpop.f32.mrf.mxu0
    %v9015 = vadd.f32 0.0, %v9014
    %v9016 = vpop.f32.mrf.mxu0
    %9017 = vmatprep.mubr.bf16.mxu0 0
    %9018 = vmatmul.mubr.bf16.gmra.mxu0 %v8772
    %v9019 = vpop.f32.mrf.mxu0
    %v9020 = vadd.f32 0.0, %v9019
    %v9021 = vpop.f32.mrf.mxu0
    %v9022 = vpop.f32.mrf.mxu0
    %v9023 = vadd.f32 0.0, %v9022
    %v9024 = vpop.f32.mrf.mxu0
    %9025 = vmatprep.mubr.bf16.mxu0 0
    %9026 = vmatmul.mubr.bf16.gmra.mxu0 %v8775
    %v9027 = vpop.f32.mrf.mxu0
    %v9028 = vadd.f32 0.0, %v9027
    %v9029 = vpop.f32.mrf.mxu0
    %v9030 = vpop.f32.mrf.mxu0
    %v9031 = vadd.f32 0.0, %v9030
    %v9032 = vpop.f32.mrf.mxu0
    %9033 = vmatprep.mubr.bf16.mxu0 0
    %9034 = vmatmul.mubr.bf16.gmra.mxu0 %v8778
    %v9035 = vpop.f32.mrf.mxu0
    %v9036 = vadd.f32 0.0, %v9035
    %v9037 = vpop.f32.mrf.mxu0
    %v9038 = vpop.f32.mrf.mxu0
    %v9039 = vadd.f32 0.0, %v9038
    %v9040 = vpop.f32.mrf.mxu0
    %9041 = vmatprep.mubr.bf16.mxu0 0
    %9042 = vmatmul.mubr.bf16.gmra.mxu0 %v8781
    %v9043 = vpop.f32.mrf.mxu0
    %v9044 = vadd.f32 0.0, %v9043
    %v9045 = vpop.f32.mrf.mxu0
    %v9046 = vpop.f32.mrf.mxu0
    %v9047 = vadd.f32 0.0, %v9046
    %v9048 = vpop.f32.mrf.mxu0
    %9049 = vmatprep.mubr.bf16.mxu0 0
    %9050 = vmatmul.mubr.bf16.gmra.mxu0 %v8784
    %v9051 = vpop.f32.mrf.mxu0
    %v9052 = vadd.f32 0.0, %v9051
    %v9053 = vpop.f32.mrf.mxu0
    %v9054 = vpop.f32.mrf.mxu0
    %v9055 = vadd.f32 0.0, %v9054
    %v9056 = vpop.f32.mrf.mxu0
    %9057 = vmatprep.mubr.bf16.mxu0 0
    %9058 = vmatmul.mubr.bf16.gmra.mxu0 %v8787
    %v9059 = vpop.f32.mrf.mxu0
    %v9060 = vadd.f32 0.0, %v9059
    %v9061 = vpop.f32.mrf.mxu0
    %v9062 = vpop.f32.mrf.mxu0
    %v9063 = vadd.f32 0.0, %v9062
    %v9064 = vpop.f32.mrf.mxu0
    %9065 = vmatprep.mubr.bf16.mxu0 0
    %9066 = vmatmul.mubr.bf16.gmra.mxu0 %v8790
    %v9067 = vpop.f32.mrf.mxu0
    %v9068 = vadd.f32 0.0, %v9067
    %v9069 = vpop.f32.mrf.mxu0
    %v9070 = vpop.f32.mrf.mxu0
    %v9071 = vadd.f32 0.0, %v9070
    %v9072 = vpop.f32.mrf.mxu0
    %9073 = vmatprep.mubr.bf16.mxu0 0
    %9074 = vmatmul.mubr.bf16.gmra.mxu0 %v8793
    %v9075 = vpop.f32.mrf.mxu0
    %v9076 = vadd.f32 0.0, %v9075
    %v9077 = vpop.f32.mrf.mxu0
    %v9078 = vpop.f32.mrf.mxu0
    %v9079 = vadd.f32 0.0, %v9078
    %v9080 = vpop.f32.mrf.mxu0
    %9081 = vmatprep.mubr.bf16.mxu0 0
    %9082 = vmatmul.mubr.bf16.gmra.mxu0 %v8796
    %v9083 = vpop.f32.mrf.mxu0
    %v9084 = vadd.f32 0.0, %v9083
    %v9085 = vpop.f32.mrf.mxu0
    %v9086 = vpop.f32.mrf.mxu0
    %v9087 = vadd.f32 0.0, %v9086
    %v9088 = vpop.f32.mrf.mxu0
    %9089 = vdwg.mxu0
    %v9090 = vadd.f32 %v8539, %v8836
    %v9091 = vadd.f32 %v8540, %v8839
    %v9092 = vadd.f32 %v8541, %v8844
    %v9093 = vadd.f32 %v8542, %v8847
    %v9094 = vadd.f32 %v8543, %v8852
    %v9095 = vadd.f32 %v8544, %v8855
    %v9096 = vadd.f32 %v8545, %v8860
    %v9097 = vadd.f32 %v8546, %v8863
    %v9098 = vadd.f32 %v8547, %v8868
    %v9099 = vadd.f32 %v8548, %v8871
    %v9100 = vadd.f32 %v8549, %v8876
    %v9101 = vadd.f32 %v8550, %v8879
    %v9102 = vadd.f32 %v8551, %v8884
    %v9103 = vadd.f32 %v8552, %v8887
    %v9104 = vadd.f32 %v8553, %v8892
    %v9105 = vadd.f32 %v8554, %v8895
    %v9106 = vadd.f32 %v8555, %v8900
    %v9107 = vadd.f32 %v8556, %v8903
    %v9108 = vadd.f32 %v8557, %v8908
    %v9109 = vadd.f32 %v8558, %v8911
    %v9110 = vadd.f32 %v8559, %v8916
    %v9111 = vadd.f32 %v8560, %v8919
    %v9112 = vadd.f32 %v8561, %v8924
    %v9113 = vadd.f32 %v8562, %v8927
    %v9114 = vadd.f32 %v8563, %v8932
    %v9115 = vadd.f32 %v8564, %v8935
    %v9116 = vadd.f32 %v8565, %v8940
    %v9117 = vadd.f32 %v8566, %v8943
    %v9118 = vadd.f32 %v8567, %v8948
    %v9119 = vadd.f32 %v8568, %v8951
    %v9120 = vadd.f32 %v8569, %v8956
    %v9121 = vadd.f32 %v8570, %v8959
    %v9122 = vadd.f32 %v8571, %v8964
    %v9123 = vadd.f32 %v8572, %v8967
    %v9124 = vadd.f32 %v8573, %v8972
    %v9125 = vadd.f32 %v8574, %v8975
    %v9126 = vadd.f32 %v8575, %v8980
    %v9127 = vadd.f32 %v8576, %v8983
    %v9128 = vadd.f32 %v8577, %v8988
    %v9129 = vadd.f32 %v8578, %v8991
    %v9130 = vadd.f32 %v8579, %v8996
    %v9131 = vadd.f32 %v8580, %v8999
    %v9132 = vadd.f32 %v8581, %v9004
    %v9133 = vadd.f32 %v8582, %v9007
    %v9134 = vadd.f32 %v8583, %v9012
    %v9135 = vadd.f32 %v8584, %v9015
    %v9136 = vadd.f32 %v8585, %v9020
    %v9137 = vadd.f32 %v8586, %v9023
    %v9138 = vadd.f32 %v8587, %v9028
    %v9139 = vadd.f32 %v8588, %v9031
    %v9140 = vadd.f32 %v8589, %v9036
    %v9141 = vadd.f32 %v8590, %v9039
    %v9142 = vadd.f32 %v8591, %v9044
    %v9143 = vadd.f32 %v8592, %v9047
    %v9144 = vadd.f32 %v8593, %v9052
    %v9145 = vadd.f32 %v8594, %v9055
    %v9146 = vadd.f32 %v8595, %v9060
    %v9147 = vadd.f32 %v8596, %v9063
    %v9148 = vadd.f32 %v8597, %v9068
    %v9149 = vadd.f32 %v8598, %v9071
    %v9150 = vadd.f32 %v8599, %v9076
    %v9151 = vadd.f32 %v8600, %v9079
    %v9152 = vadd.f32 %v8601, %v9084
    %v9153 = vadd.f32 %v8602, %v9087
    %v9154 = vld [vmem:[%s8603 + $0x1] sm:$0xff]
    %v9155 = vld [vmem:[%s8603 + $0x9] sm:$0xff]
    %v9156 = vld [vmem:[%s8603 + $0x19] sm:$0xff]
    %v9157 = vld [vmem:[%s8603 + $0x21] sm:$0xff]
    %v9158 = vld [vmem:[%s8603 + $0x31] sm:$0xff]
    %v9159 = vld [vmem:[%s8603 + $0x39] sm:$0xff]
    %v9160 = vld [vmem:[%s8603 + $0x49] sm:$0xff]
    %v9161 = vld [vmem:[%s8603 + $0x51] sm:$0xff]
    %v9162 = vld [vmem:[%s8603 + $0x61] sm:$0xff]
    %v9163 = vld [vmem:[%s8603 + $0x69] sm:$0xff]
    %v9164 = vld [vmem:[%s8603 + $0x79] sm:$0xff]
    %v9165 = vld [vmem:[%s8603 + $0x81] sm:$0xff]
    %v9166 = vld [vmem:[%s8603 + $0x91] sm:$0xff]
    %v9167 = vld [vmem:[%s8603 + $0x99] sm:$0xff]
    %v9168 = vld [vmem:[%s8603 + $0xa9] sm:$0xff]
    %v9169 = vld [vmem:[%s8603 + $0xb1] sm:$0xff]
    %v9170 = vld [vmem:[%s8603 + $0xc1] sm:$0xff]
    %v9171 = vld [vmem:[%s8603 + $0xc9] sm:$0xff]
    %v9172 = vld [vmem:[%s8603 + $0xd9] sm:$0xff]
    %v9173 = vld [vmem:[%s8603 + $0xe1] sm:$0xff]
    %v9174 = vld [vmem:[%s8603 + $0xf1] sm:$0xff]
    %v9175 = vld [vmem:[%s8603 + $0xf9] sm:$0xff]
    %v9176 = vld [vmem:[%s8603 + $0x109] sm:$0xff]
    %v9177 = vld [vmem:[%s8603 + $0x111] sm:$0xff]
    %v9178 = vld [vmem:[%s8603 + $0x121] sm:$0xff]
    %v9179 = vld [vmem:[%s8603 + $0x129] sm:$0xff]
    %v9180 = vld [vmem:[%s8603 + $0x139] sm:$0xff]
    %v9181 = vld [vmem:[%s8603 + $0x141] sm:$0xff]
    %v9182 = vld [vmem:[%s8603 + $0x151] sm:$0xff]
    %v9183 = vld [vmem:[%s8603 + $0x159] sm:$0xff]
    %v9184 = vld [vmem:[%s8603 + $0x169] sm:$0xff]
    %v9185 = vld [vmem:[%s8603 + $0x171] sm:$0xff]
    %v9186 = vld [vmem:[%s8603 + $0x1b1] sm:$0xff]
    %v9187 = vld [vmem:[%s8603 + $0x1b9] sm:$0xff]
    %v9188 = vld [vmem:[%s8603 + $0x1c9] sm:$0xff]
    %v9189 = vld [vmem:[%s8603 + $0x1d1] sm:$0xff]
    %v9190 = vld [vmem:[%s8603 + $0x1e1] sm:$0xff]
    %v9191 = vld [vmem:[%s8603 + $0x1e9] sm:$0xff]
    %v9192 = vld [vmem:[%s8603 + $0x1f9] sm:$0xff]
    %v9193 = vld [vmem:[%s8603 + $0x201] sm:$0xff]
    %v9194 = vld [vmem:[%s8603 + $0x211] sm:$0xff]
    %v9195 = vld [vmem:[%s8603 + $0x219] sm:$0xff]
    %v9196 = vld [vmem:[%s8603 + $0x229] sm:$0xff]
    %v9197 = vld [vmem:[%s8603 + $0x231] sm:$0xff]
    %v9198 = vld [vmem:[%s8603 + $0x241] sm:$0xff]
    %v9199 = vld [vmem:[%s8603 + $0x249] sm:$0xff]
    %v9200 = vld [vmem:[%s8603 + $0x259] sm:$0xff]
    %v9201 = vld [vmem:[%s8603 + $0x261] sm:$0xff]
    %v9202 = vld [vmem:[%s8603 + $0x271] sm:$0xff]
    %v9203 = vld [vmem:[%s8603 + $0x279] sm:$0xff]
    %v9204 = vld [vmem:[%s8603 + $0x289] sm:$0xff]
    %v9205 = vld [vmem:[%s8603 + $0x291] sm:$0xff]
    %v9206 = vld [vmem:[%s8603 + $0x2a1] sm:$0xff]
    %v9207 = vld [vmem:[%s8603 + $0x2a9] sm:$0xff]
    %v9208 = vld [vmem:[%s8603 + $0x2b9] sm:$0xff]
    %v9209 = vld [vmem:[%s8603 + $0x2c1] sm:$0xff]
    %v9210 = vld [vmem:[%s8603 + $0x2d1] sm:$0xff]
    %v9211 = vld [vmem:[%s8603 + $0x2d9] sm:$0xff]
    %v9212 = vld [vmem:[%s8603 + $0x2e9] sm:$0xff]
    %v9213 = vld [vmem:[%s8603 + $0x2f1] sm:$0xff]
    %v9214 = vld [vmem:[%s8603 + $0x301] sm:$0xff]
    %v9215 = vld [vmem:[%s8603 + $0x309] sm:$0xff]
    %v9216 = vld [vmem:[%s8603 + $0x319] sm:$0xff]
    %v9217 = vld [vmem:[%s8603 + $0x321] sm:$0xff]
    %v9218 = vpack.c.bf16 %v9155, %v9154
    %v9219 = vpack.c.bf16 %v9157, %v9156
    %v9220 = vpack.c.bf16 %v9159, %v9158
    %v9221 = vpack.c.bf16 %v9161, %v9160
    %v9222 = vpack.c.bf16 %v9163, %v9162
    %v9223 = vpack.c.bf16 %v9165, %v9164
    %v9224 = vpack.c.bf16 %v9167, %v9166
    %v9225 = vpack.c.bf16 %v9169, %v9168
    %v9226 = vpack.c.bf16 %v9171, %v9170
    %v9227 = vpack.c.bf16 %v9173, %v9172
    %v9228 = vpack.c.bf16 %v9175, %v9174
    %v9229 = vpack.c.bf16 %v9177, %v9176
    %v9230 = vpack.c.bf16 %v9179, %v9178
    %v9231 = vpack.c.bf16 %v9181, %v9180
    %v9232 = vpack.c.bf16 %v9183, %v9182
    %v9233 = vpack.c.bf16 %v9185, %v9184
    %v9234 = vpack.c.bf16 %v9187, %v9186
    %v9235 = vpack.c.bf16 %v9189, %v9188
    %v9236 = vpack.c.bf16 %v9191, %v9190
    %v9237 = vpack.c.bf16 %v9193, %v9192
    %v9238 = vpack.c.bf16 %v9195, %v9194
    %v9239 = vpack.c.bf16 %v9197, %v9196
    %v9240 = vpack.c.bf16 %v9199, %v9198
    %v9241 = vpack.c.bf16 %v9201, %v9200
    %v9242 = vpack.c.bf16 %v9203, %v9202
    %v9243 = vpack.c.bf16 %v9205, %v9204
    %v9244 = vpack.c.bf16 %v9207, %v9206
    %v9245 = vpack.c.bf16 %v9209, %v9208
    %v9246 = vpack.c.bf16 %v9211, %v9210
    %v9247 = vpack.c.bf16 %v9213, %v9212
    %v9248 = vpack.c.bf16 %v9215, %v9214
    %v9249 = vpack.c.bf16 %v9217, %v9216
    %s9250 = scalar_lea.vmem %s4, 28
    %v9251 = vld [vmem:[%s9250] sm:$0xf]
    %v9253 = vsel %vm5278, %v9218, 0
    %v9256 = vsel %vm5278, %v9219, 0
    %v9259 = vsel %vm5278, %v9220, 0
    %v9262 = vsel %vm5278, %v9221, 0
    %v9265 = vsel %vm5278, %v9222, 0
    %v9268 = vsel %vm5278, %v9223, 0
    %v9271 = vsel %vm5278, %v9224, 0
    %v9274 = vsel %vm5278, %v9225, 0
    %v9277 = vsel %vm5278, %v9226, 0
    %v9280 = vsel %vm5278, %v9227, 0
    %v9283 = vsel %vm5278, %v9228, 0
    %v9286 = vsel %vm5278, %v9229, 0
    %v9289 = vsel %vm5278, %v9230, 0
    %v9292 = vsel %vm5278, %v9231, 0
    %v9295 = vsel %vm5278, %v9232, 0
    %v9298 = vsel %vm5278, %v9233, 0
    %v9301 = vsel %vm5278, %v9234, 0
    %v9304 = vsel %vm5278, %v9235, 0
    %v9307 = vsel %vm5278, %v9236, 0
    %v9310 = vsel %vm5278, %v9237, 0
    %v9313 = vsel %vm5278, %v9238, 0
    %v9316 = vsel %vm5278, %v9239, 0
    %v9319 = vsel %vm5278, %v9240, 0
    %v9322 = vsel %vm5278, %v9241, 0
    %v9325 = vsel %vm5278, %v9242, 0
    %v9328 = vsel %vm5278, %v9243, 0
    %v9331 = vsel %vm5278, %v9244, 0
    %v9334 = vsel %vm5278, %v9245, 0
    %v9337 = vsel %vm5278, %v9246, 0
    %v9340 = vsel %vm5278, %v9247, 0
    %v9343 = vsel %vm5278, %v9248, 0
    %v9346 = vsel %vm5278, %v9249, 0
    %v9349 = vsel %vm5722, %v9251, 0
    %9351 = vmatprep.subr.bf16.mxu0 0
    %9352 = vmatpush1.bf16.msra.mxu0 0
    %9353 = vmatprep.subr.bf16.mxu0 0
    %9354 = vmatpush1.bf16.msra.mxu0 0
    %9355 = vmatprep.subr.bf16.mxu0 0
    %9356 = vmatpush1.bf16.msra.mxu0 0
    %9357 = vmatprep.subr.bf16.mxu0 0
    %9358 = vmatpush1.bf16.msra.mxu0 0
    %9359 = vmatprep.subr.bf16.mxu0 0
    %9360 = vmatpush1.bf16.msra.mxu0 0
    %9361 = vmatprep.subr.bf16.mxu0 0
    %9362 = vmatpush1.bf16.msra.mxu0 0
    %9363 = vmatprep.subr.bf16.mxu0 0
    %9364 = vmatpush1.bf16.msra.mxu0 0
    %9365 = vmatprep.subr.bf16.mxu0 0
    %9366 = vmatpush1.bf16.msra.mxu0 %v9349
    %9367 = vmatprep.subr.bf16.mxu0 0
    %9368 = vmatpush2.bf16.msra.mxu0 0
    %9369 = vmatprep.subr.bf16.mxu0 0
    %9370 = vmatpush2.bf16.msra.mxu0 0
    %9371 = vmatprep.subr.bf16.mxu0 0
    %9372 = vmatpush2.bf16.msra.mxu0 0
    %9373 = vmatprep.subr.bf16.mxu0 0
    %9374 = vmatpush2.bf16.msra.mxu0 0
    %9375 = vmatprep.subr.bf16.mxu0 0
    %9376 = vmatpush2.bf16.msra.mxu0 0
    %9377 = vmatprep.subr.bf16.mxu0 0
    %9378 = vmatpush2.bf16.msra.mxu0 0
    %9379 = vmatprep.subr.bf16.mxu0 0
    %9380 = vmatpush2.bf16.msra.mxu0 0
    %9381 = vmatprep.subr.bf16.mxu0 0
    %9382 = vmatpush2.bf16.msra.mxu0 0
    %9383 = vmatprep.mubr.bf16.mxu0 0
    %9384 = vmatmul.mubr.bf16.gmra.mxu0 %v9253
    %v9385 = vpop.f32.mrf.mxu0
    %v9386 = vadd.f32 0.0, %v9385
    %v9387 = vpop.f32.mrf.mxu0
    %v9388 = vpop.f32.mrf.mxu0
    %v9389 = vadd.f32 0.0, %v9388
    %v9390 = vpop.f32.mrf.mxu0
    %9391 = vmatprep.mubr.bf16.mxu0 0
    %9392 = vmatmul.mubr.bf16.gmra.mxu0 %v9256
    %v9393 = vpop.f32.mrf.mxu0
    %v9394 = vadd.f32 0.0, %v9393
    %v9395 = vpop.f32.mrf.mxu0
    %v9396 = vpop.f32.mrf.mxu0
    %v9397 = vadd.f32 0.0, %v9396
    %v9398 = vpop.f32.mrf.mxu0
    %9399 = vmatprep.mubr.bf16.mxu0 0
    %9400 = vmatmul.mubr.bf16.gmra.mxu0 %v9259
    %v9401 = vpop.f32.mrf.mxu0
    %v9402 = vadd.f32 0.0, %v9401
    %v9403 = vpop.f32.mrf.mxu0
    %v9404 = vpop.f32.mrf.mxu0
    %v9405 = vadd.f32 0.0, %v9404
    %v9406 = vpop.f32.mrf.mxu0
    %9407 = vmatprep.mubr.bf16.mxu0 0
    %9408 = vmatmul.mubr.bf16.gmra.mxu0 %v9262
    %v9409 = vpop.f32.mrf.mxu0
    %v9410 = vadd.f32 0.0, %v9409
    %v9411 = vpop.f32.mrf.mxu0
    %v9412 = vpop.f32.mrf.mxu0
    %v9413 = vadd.f32 0.0, %v9412
    %v9414 = vpop.f32.mrf.mxu0
    %9415 = vmatprep.mubr.bf16.mxu0 0
    %9416 = vmatmul.mubr.bf16.gmra.mxu0 %v9265
    %v9417 = vpop.f32.mrf.mxu0
    %v9418 = vadd.f32 0.0, %v9417
    %v9419 = vpop.f32.mrf.mxu0
    %v9420 = vpop.f32.mrf.mxu0
    %v9421 = vadd.f32 0.0, %v9420
    %v9422 = vpop.f32.mrf.mxu0
    %9423 = vmatprep.mubr.bf16.mxu0 0
    %9424 = vmatmul.mubr.bf16.gmra.mxu0 %v9268
    %v9425 = vpop.f32.mrf.mxu0
    %v9426 = vadd.f32 0.0, %v9425
    %v9427 = vpop.f32.mrf.mxu0
    %v9428 = vpop.f32.mrf.mxu0
    %v9429 = vadd.f32 0.0, %v9428
    %v9430 = vpop.f32.mrf.mxu0
    %9431 = vmatprep.mubr.bf16.mxu0 0
    %9432 = vmatmul.mubr.bf16.gmra.mxu0 %v9271
    %v9433 = vpop.f32.mrf.mxu0
    %v9434 = vadd.f32 0.0, %v9433
    %v9435 = vpop.f32.mrf.mxu0
    %v9436 = vpop.f32.mrf.mxu0
    %v9437 = vadd.f32 0.0, %v9436
    %v9438 = vpop.f32.mrf.mxu0
    %9439 = vmatprep.mubr.bf16.mxu0 0
    %9440 = vmatmul.mubr.bf16.gmra.mxu0 %v9274
    %v9441 = vpop.f32.mrf.mxu0
    %v9442 = vadd.f32 0.0, %v9441
    %v9443 = vpop.f32.mrf.mxu0
    %v9444 = vpop.f32.mrf.mxu0
    %v9445 = vadd.f32 0.0, %v9444
    %v9446 = vpop.f32.mrf.mxu0
    %9447 = vmatprep.mubr.bf16.mxu0 0
    %9448 = vmatmul.mubr.bf16.gmra.mxu0 %v9277
    %v9449 = vpop.f32.mrf.mxu0
    %v9450 = vadd.f32 0.0, %v9449
    %v9451 = vpop.f32.mrf.mxu0
    %v9452 = vpop.f32.mrf.mxu0
    %v9453 = vadd.f32 0.0, %v9452
    %v9454 = vpop.f32.mrf.mxu0
    %9455 = vmatprep.mubr.bf16.mxu0 0
    %9456 = vmatmul.mubr.bf16.gmra.mxu0 %v9280
    %v9457 = vpop.f32.mrf.mxu0
    %v9458 = vadd.f32 0.0, %v9457
    %v9459 = vpop.f32.mrf.mxu0
    %v9460 = vpop.f32.mrf.mxu0
    %v9461 = vadd.f32 0.0, %v9460
    %v9462 = vpop.f32.mrf.mxu0
    %9463 = vmatprep.mubr.bf16.mxu0 0
    %9464 = vmatmul.mubr.bf16.gmra.mxu0 %v9283
    %v9465 = vpop.f32.mrf.mxu0
    %v9466 = vadd.f32 0.0, %v9465
    %v9467 = vpop.f32.mrf.mxu0
    %v9468 = vpop.f32.mrf.mxu0
    %v9469 = vadd.f32 0.0, %v9468
    %v9470 = vpop.f32.mrf.mxu0
    %9471 = vmatprep.mubr.bf16.mxu0 0
    %9472 = vmatmul.mubr.bf16.gmra.mxu0 %v9286
    %v9473 = vpop.f32.mrf.mxu0
    %v9474 = vadd.f32 0.0, %v9473
    %v9475 = vpop.f32.mrf.mxu0
    %v9476 = vpop.f32.mrf.mxu0
    %v9477 = vadd.f32 0.0, %v9476
    %v9478 = vpop.f32.mrf.mxu0
    %9479 = vmatprep.mubr.bf16.mxu0 0
    %9480 = vmatmul.mubr.bf16.gmra.mxu0 %v9289
    %v9481 = vpop.f32.mrf.mxu0
    %v9482 = vadd.f32 0.0, %v9481
    %v9483 = vpop.f32.mrf.mxu0
    %v9484 = vpop.f32.mrf.mxu0
    %v9485 = vadd.f32 0.0, %v9484
    %v9486 = vpop.f32.mrf.mxu0
    %9487 = vmatprep.mubr.bf16.mxu0 0
    %9488 = vmatmul.mubr.bf16.gmra.mxu0 %v9292
    %v9489 = vpop.f32.mrf.mxu0
    %v9490 = vadd.f32 0.0, %v9489
    %v9491 = vpop.f32.mrf.mxu0
    %v9492 = vpop.f32.mrf.mxu0
    %v9493 = vadd.f32 0.0, %v9492
    %v9494 = vpop.f32.mrf.mxu0
    %9495 = vmatprep.mubr.bf16.mxu0 0
    %9496 = vmatmul.mubr.bf16.gmra.mxu0 %v9295
    %v9497 = vpop.f32.mrf.mxu0
    %v9498 = vadd.f32 0.0, %v9497
    %v9499 = vpop.f32.mrf.mxu0
    %v9500 = vpop.f32.mrf.mxu0
    %v9501 = vadd.f32 0.0, %v9500
    %v9502 = vpop.f32.mrf.mxu0
    %9503 = vmatprep.mubr.bf16.mxu0 0
    %9504 = vmatmul.mubr.bf16.gmra.mxu0 %v9298
    %v9505 = vpop.f32.mrf.mxu0
    %v9506 = vadd.f32 0.0, %v9505
    %v9507 = vpop.f32.mrf.mxu0
    %v9508 = vpop.f32.mrf.mxu0
    %v9509 = vadd.f32 0.0, %v9508
    %v9510 = vpop.f32.mrf.mxu0
    %9511 = vmatprep.mubr.bf16.mxu0 0
    %9512 = vmatmul.mubr.bf16.gmra.mxu0 %v9301
    %v9513 = vpop.f32.mrf.mxu0
    %v9514 = vadd.f32 0.0, %v9513
    %v9515 = vpop.f32.mrf.mxu0
    %v9516 = vpop.f32.mrf.mxu0
    %v9517 = vadd.f32 0.0, %v9516
    %v9518 = vpop.f32.mrf.mxu0
    %9519 = vmatprep.mubr.bf16.mxu0 0
    %9520 = vmatmul.mubr.bf16.gmra.mxu0 %v9304
    %v9521 = vpop.f32.mrf.mxu0
    %v9522 = vadd.f32 0.0, %v9521
    %v9523 = vpop.f32.mrf.mxu0
    %v9524 = vpop.f32.mrf.mxu0
    %v9525 = vadd.f32 0.0, %v9524
    %v9526 = vpop.f32.mrf.mxu0
    %9527 = vmatprep.mubr.bf16.mxu0 0
    %9528 = vmatmul.mubr.bf16.gmra.mxu0 %v9307
    %v9529 = vpop.f32.mrf.mxu0
    %v9530 = vadd.f32 0.0, %v9529
    %v9531 = vpop.f32.mrf.mxu0
    %v9532 = vpop.f32.mrf.mxu0
    %v9533 = vadd.f32 0.0, %v9532
    %v9534 = vpop.f32.mrf.mxu0
    %9535 = vmatprep.mubr.bf16.mxu0 0
    %9536 = vmatmul.mubr.bf16.gmra.mxu0 %v9310
    %v9537 = vpop.f32.mrf.mxu0
    %v9538 = vadd.f32 0.0, %v9537
    %v9539 = vpop.f32.mrf.mxu0
    %v9540 = vpop.f32.mrf.mxu0
    %v9541 = vadd.f32 0.0, %v9540
    %v9542 = vpop.f32.mrf.mxu0
    %9543 = vmatprep.mubr.bf16.mxu0 0
    %9544 = vmatmul.mubr.bf16.gmra.mxu0 %v9313
    %v9545 = vpop.f32.mrf.mxu0
    %v9546 = vadd.f32 0.0, %v9545
    %v9547 = vpop.f32.mrf.mxu0
    %v9548 = vpop.f32.mrf.mxu0
    %v9549 = vadd.f32 0.0, %v9548
    %v9550 = vpop.f32.mrf.mxu0
    %9551 = vmatprep.mubr.bf16.mxu0 0
    %9552 = vmatmul.mubr.bf16.gmra.mxu0 %v9316
    %v9553 = vpop.f32.mrf.mxu0
    %v9554 = vadd.f32 0.0, %v9553
    %v9555 = vpop.f32.mrf.mxu0
    %v9556 = vpop.f32.mrf.mxu0
    %v9557 = vadd.f32 0.0, %v9556
    %v9558 = vpop.f32.mrf.mxu0
    %9559 = vmatprep.mubr.bf16.mxu0 0
    %9560 = vmatmul.mubr.bf16.gmra.mxu0 %v9319
    %v9561 = vpop.f32.mrf.mxu0
    %v9562 = vadd.f32 0.0, %v9561
    %v9563 = vpop.f32.mrf.mxu0
    %v9564 = vpop.f32.mrf.mxu0
    %v9565 = vadd.f32 0.0, %v9564
    %v9566 = vpop.f32.mrf.mxu0
    %9567 = vmatprep.mubr.bf16.mxu0 0
    %9568 = vmatmul.mubr.bf16.gmra.mxu0 %v9322
    %v9569 = vpop.f32.mrf.mxu0
    %v9570 = vadd.f32 0.0, %v9569
    %v9571 = vpop.f32.mrf.mxu0
    %v9572 = vpop.f32.mrf.mxu0
    %v9573 = vadd.f32 0.0, %v9572
    %v9574 = vpop.f32.mrf.mxu0
    %9575 = vmatprep.mubr.bf16.mxu0 0
    %9576 = vmatmul.mubr.bf16.gmra.mxu0 %v9325
    %v9577 = vpop.f32.mrf.mxu0
    %v9578 = vadd.f32 0.0, %v9577
    %v9579 = vpop.f32.mrf.mxu0
    %v9580 = vpop.f32.mrf.mxu0
    %v9581 = vadd.f32 0.0, %v9580
    %v9582 = vpop.f32.mrf.mxu0
    %9583 = vmatprep.mubr.bf16.mxu0 0
    %9584 = vmatmul.mubr.bf16.gmra.mxu0 %v9328
    %v9585 = vpop.f32.mrf.mxu0
    %v9586 = vadd.f32 0.0, %v9585
    %v9587 = vpop.f32.mrf.mxu0
    %v9588 = vpop.f32.mrf.mxu0
    %v9589 = vadd.f32 0.0, %v9588
    %v9590 = vpop.f32.mrf.mxu0
    %9591 = vmatprep.mubr.bf16.mxu0 0
    %9592 = vmatmul.mubr.bf16.gmra.mxu0 %v9331
    %v9593 = vpop.f32.mrf.mxu0
    %v9594 = vadd.f32 0.0, %v9593
    %v9595 = vpop.f32.mrf.mxu0
    %v9596 = vpop.f32.mrf.mxu0
    %v9597 = vadd.f32 0.0, %v9596
    %v9598 = vpop.f32.mrf.mxu0
    %9599 = vmatprep.mubr.bf16.mxu0 0
    %9600 = vmatmul.mubr.bf16.gmra.mxu0 %v9334
    %v9601 = vpop.f32.mrf.mxu0
    %v9602 = vadd.f32 0.0, %v9601
    %v9603 = vpop.f32.mrf.mxu0
    %v9604 = vpop.f32.mrf.mxu0
    %v9605 = vadd.f32 0.0, %v9604
    %v9606 = vpop.f32.mrf.mxu0
    %9607 = vmatprep.mubr.bf16.mxu0 0
    %9608 = vmatmul.mubr.bf16.gmra.mxu0 %v9337
    %v9609 = vpop.f32.mrf.mxu0
    %v9610 = vadd.f32 0.0, %v9609
    %v9611 = vpop.f32.mrf.mxu0
    %v9612 = vpop.f32.mrf.mxu0
    %v9613 = vadd.f32 0.0, %v9612
    %v9614 = vpop.f32.mrf.mxu0
    %9615 = vmatprep.mubr.bf16.mxu0 0
    %9616 = vmatmul.mubr.bf16.gmra.mxu0 %v9340
    %v9617 = vpop.f32.mrf.mxu0
    %v9618 = vadd.f32 0.0, %v9617
    %v9619 = vpop.f32.mrf.mxu0
    %v9620 = vpop.f32.mrf.mxu0
    %v9621 = vadd.f32 0.0, %v9620
    %v9622 = vpop.f32.mrf.mxu0
    %9623 = vmatprep.mubr.bf16.mxu0 0
    %9624 = vmatmul.mubr.bf16.gmra.mxu0 %v9343
    %v9625 = vpop.f32.mrf.mxu0
    %v9626 = vadd.f32 0.0, %v9625
    %v9627 = vpop.f32.mrf.mxu0
    %v9628 = vpop.f32.mrf.mxu0
    %v9629 = vadd.f32 0.0, %v9628
    %v9630 = vpop.f32.mrf.mxu0
    %9631 = vmatprep.mubr.bf16.mxu0 0
    %9632 = vmatmul.mubr.bf16.gmra.mxu0 %v9346
    %v9633 = vpop.f32.mrf.mxu0
    %v9634 = vadd.f32 0.0, %v9633
    %v9635 = vpop.f32.mrf.mxu0
    %v9636 = vpop.f32.mrf.mxu0
    %v9637 = vadd.f32 0.0, %v9636
    %v9638 = vpop.f32.mrf.mxu0
    %9639 = vdwg.mxu0
    %v9640 = vadd.f32 %v9090, %v9386
    %v9641 = vadd.f32 %v9091, %v9389
    %v9642 = vadd.f32 %v9092, %v9394
    %v9643 = vadd.f32 %v9093, %v9397
    %v9644 = vadd.f32 %v9094, %v9402
    %v9645 = vadd.f32 %v9095, %v9405
    %v9646 = vadd.f32 %v9096, %v9410
    %v9647 = vadd.f32 %v9097, %v9413
    %v9648 = vadd.f32 %v9098, %v9418
    %v9649 = vadd.f32 %v9099, %v9421
    %v9650 = vadd.f32 %v9100, %v9426
    %v9651 = vadd.f32 %v9101, %v9429
    %v9652 = vadd.f32 %v9102, %v9434
    %v9653 = vadd.f32 %v9103, %v9437
    %v9654 = vadd.f32 %v9104, %v9442
    %v9655 = vadd.f32 %v9105, %v9445
    %v9656 = vadd.f32 %v9106, %v9450
    %v9657 = vadd.f32 %v9107, %v9453
    %v9658 = vadd.f32 %v9108, %v9458
    %v9659 = vadd.f32 %v9109, %v9461
    %v9660 = vadd.f32 %v9110, %v9466
    %v9661 = vadd.f32 %v9111, %v9469
    %v9662 = vadd.f32 %v9112, %v9474
    %v9663 = vadd.f32 %v9113, %v9477
    %v9664 = vadd.f32 %v9114, %v9482
    %v9665 = vadd.f32 %v9115, %v9485
    %v9666 = vadd.f32 %v9116, %v9490
    %v9667 = vadd.f32 %v9117, %v9493
    %v9668 = vadd.f32 %v9118, %v9498
    %v9669 = vadd.f32 %v9119, %v9501
    %v9670 = vadd.f32 %v9120, %v9506
    %v9671 = vadd.f32 %v9121, %v9509
    %v9672 = vadd.f32 %v9122, %v9514
    %v9673 = vadd.f32 %v9123, %v9517
    %v9674 = vadd.f32 %v9124, %v9522
    %v9675 = vadd.f32 %v9125, %v9525
    %v9676 = vadd.f32 %v9126, %v9530
    %v9677 = vadd.f32 %v9127, %v9533
    %v9678 = vadd.f32 %v9128, %v9538
    %v9679 = vadd.f32 %v9129, %v9541
    %v9680 = vadd.f32 %v9130, %v9546
    %v9681 = vadd.f32 %v9131, %v9549
    %v9682 = vadd.f32 %v9132, %v9554
    %v9683 = vadd.f32 %v9133, %v9557
    %v9684 = vadd.f32 %v9134, %v9562
    %v9685 = vadd.f32 %v9135, %v9565
    %v9686 = vadd.f32 %v9136, %v9570
    %v9687 = vadd.f32 %v9137, %v9573
    %v9688 = vadd.f32 %v9138, %v9578
    %v9689 = vadd.f32 %v9139, %v9581
    %v9690 = vadd.f32 %v9140, %v9586
    %v9691 = vadd.f32 %v9141, %v9589
    %v9692 = vadd.f32 %v9142, %v9594
    %v9693 = vadd.f32 %v9143, %v9597
    %v9694 = vadd.f32 %v9144, %v9602
    %v9695 = vadd.f32 %v9145, %v9605
    %v9696 = vadd.f32 %v9146, %v9610
    %v9697 = vadd.f32 %v9147, %v9613
    %v9698 = vadd.f32 %v9148, %v9618
    %v9699 = vadd.f32 %v9149, %v9621
    %v9700 = vadd.f32 %v9150, %v9626
    %v9701 = vadd.f32 %v9151, %v9629
    %v9702 = vadd.f32 %v9152, %v9634
    %v9703 = vadd.f32 %v9153, %v9637
    %v9704 = vld [vmem:[%s8603 + $0x2] sm:$0xff]
    %v9705 = vld [vmem:[%s8603 + $0xa] sm:$0xff]
    %v9706 = vld [vmem:[%s8603 + $0x1a] sm:$0xff]
    %v9707 = vld [vmem:[%s8603 + $0x22] sm:$0xff]
    %v9708 = vld [vmem:[%s8603 + $0x32] sm:$0xff]
    %v9709 = vld [vmem:[%s8603 + $0x3a] sm:$0xff]
    %v9710 = vld [vmem:[%s8603 + $0x4a] sm:$0xff]
    %v9711 = vld [vmem:[%s8603 + $0x52] sm:$0xff]
    %v9712 = vld [vmem:[%s8603 + $0x62] sm:$0xff]
    %v9713 = vld [vmem:[%s8603 + $0x6a] sm:$0xff]
    %v9714 = vld [vmem:[%s8603 + $0x7a] sm:$0xff]
    %v9715 = vld [vmem:[%s8603 + $0x82] sm:$0xff]
    %v9716 = vld [vmem:[%s8603 + $0x92] sm:$0xff]
    %v9717 = vld [vmem:[%s8603 + $0x9a] sm:$0xff]
    %v9718 = vld [vmem:[%s8603 + $0xaa] sm:$0xff]
    %v9719 = vld [vmem:[%s8603 + $0xb2] sm:$0xff]
    %v9720 = vld [vmem:[%s8603 + $0xc2] sm:$0xff]
    %v9721 = vld [vmem:[%s8603 + $0xca] sm:$0xff]
    %v9722 = vld [vmem:[%s8603 + $0xda] sm:$0xff]
    %v9723 = vld [vmem:[%s8603 + $0xe2] sm:$0xff]
    %v9724 = vld [vmem:[%s8603 + $0xf2] sm:$0xff]
    %v9725 = vld [vmem:[%s8603 + $0xfa] sm:$0xff]
    %v9726 = vld [vmem:[%s8603 + $0x10a] sm:$0xff]
    %v9727 = vld [vmem:[%s8603 + $0x112] sm:$0xff]
    %v9728 = vld [vmem:[%s8603 + $0x122] sm:$0xff]
    %v9729 = vld [vmem:[%s8603 + $0x12a] sm:$0xff]
    %v9730 = vld [vmem:[%s8603 + $0x13a] sm:$0xff]
    %v9731 = vld [vmem:[%s8603 + $0x142] sm:$0xff]
    %v9732 = vld [vmem:[%s8603 + $0x152] sm:$0xff]
    %v9733 = vld [vmem:[%s8603 + $0x15a] sm:$0xff]
    %v9734 = vld [vmem:[%s8603 + $0x16a] sm:$0xff]
    %v9735 = vld [vmem:[%s8603 + $0x172] sm:$0xff]
    %v9736 = vld [vmem:[%s8603 + $0x1b2] sm:$0xff]
    %v9737 = vld [vmem:[%s8603 + $0x1ba] sm:$0xff]
    %v9738 = vld [vmem:[%s8603 + $0x1ca] sm:$0xff]
    %v9739 = vld [vmem:[%s8603 + $0x1d2] sm:$0xff]
    %v9740 = vld [vmem:[%s8603 + $0x1e2] sm:$0xff]
    %v9741 = vld [vmem:[%s8603 + $0x1ea] sm:$0xff]
    %v9742 = vld [vmem:[%s8603 + $0x1fa] sm:$0xff]
    %v9743 = vld [vmem:[%s8603 + $0x202] sm:$0xff]
    %v9744 = vld [vmem:[%s8603 + $0x212] sm:$0xff]
    %v9745 = vld [vmem:[%s8603 + $0x21a] sm:$0xff]
    %v9746 = vld [vmem:[%s8603 + $0x22a] sm:$0xff]
    %v9747 = vld [vmem:[%s8603 + $0x232] sm:$0xff]
    %v9748 = vld [vmem:[%s8603 + $0x242] sm:$0xff]
    %v9749 = vld [vmem:[%s8603 + $0x24a] sm:$0xff]
    %v9750 = vld [vmem:[%s8603 + $0x25a] sm:$0xff]
    %v9751 = vld [vmem:[%s8603 + $0x262] sm:$0xff]
    %v9752 = vld [vmem:[%s8603 + $0x272] sm:$0xff]
    %v9753 = vld [vmem:[%s8603 + $0x27a] sm:$0xff]
    %v9754 = vld [vmem:[%s8603 + $0x28a] sm:$0xff]
    %v9755 = vld [vmem:[%s8603 + $0x292] sm:$0xff]
    %v9756 = vld [vmem:[%s8603 + $0x2a2] sm:$0xff]
    %v9757 = vld [vmem:[%s8603 + $0x2aa] sm:$0xff]
    %v9758 = vld [vmem:[%s8603 + $0x2ba] sm:$0xff]
    %v9759 = vld [vmem:[%s8603 + $0x2c2] sm:$0xff]
    %v9760 = vld [vmem:[%s8603 + $0x2d2] sm:$0xff]
    %v9761 = vld [vmem:[%s8603 + $0x2da] sm:$0xff]
    %v9762 = vld [vmem:[%s8603 + $0x2ea] sm:$0xff]
    %v9763 = vld [vmem:[%s8603 + $0x2f2] sm:$0xff]
    %v9764 = vld [vmem:[%s8603 + $0x302] sm:$0xff]
    %v9765 = vld [vmem:[%s8603 + $0x30a] sm:$0xff]
    %v9766 = vld [vmem:[%s8603 + $0x31a] sm:$0xff]
    %v9767 = vld [vmem:[%s8603 + $0x322] sm:$0xff]
    %v9768 = vpack.c.bf16 %v9705, %v9704
    %v9769 = vpack.c.bf16 %v9707, %v9706
    %v9770 = vpack.c.bf16 %v9709, %v9708
    %v9771 = vpack.c.bf16 %v9711, %v9710
    %v9772 = vpack.c.bf16 %v9713, %v9712
    %v9773 = vpack.c.bf16 %v9715, %v9714
    %v9774 = vpack.c.bf16 %v9717, %v9716
    %v9775 = vpack.c.bf16 %v9719, %v9718
    %v9776 = vpack.c.bf16 %v9721, %v9720
    %v9777 = vpack.c.bf16 %v9723, %v9722
    %v9778 = vpack.c.bf16 %v9725, %v9724
    %v9779 = vpack.c.bf16 %v9727, %v9726
    %v9780 = vpack.c.bf16 %v9729, %v9728
    %v9781 = vpack.c.bf16 %v9731, %v9730
    %v9782 = vpack.c.bf16 %v9733, %v9732
    %v9783 = vpack.c.bf16 %v9735, %v9734
    %v9784 = vpack.c.bf16 %v9737, %v9736
    %v9785 = vpack.c.bf16 %v9739, %v9738
    %v9786 = vpack.c.bf16 %v9741, %v9740
    %v9787 = vpack.c.bf16 %v9743, %v9742
    %v9788 = vpack.c.bf16 %v9745, %v9744
    %v9789 = vpack.c.bf16 %v9747, %v9746
    %v9790 = vpack.c.bf16 %v9749, %v9748
    %v9791 = vpack.c.bf16 %v9751, %v9750
    %v9792 = vpack.c.bf16 %v9753, %v9752
    %v9793 = vpack.c.bf16 %v9755, %v9754
    %v9794 = vpack.c.bf16 %v9757, %v9756
    %v9795 = vpack.c.bf16 %v9759, %v9758
    %v9796 = vpack.c.bf16 %v9761, %v9760
    %v9797 = vpack.c.bf16 %v9763, %v9762
    %v9798 = vpack.c.bf16 %v9765, %v9764
    %v9799 = vpack.c.bf16 %v9767, %v9766
    %s9800 = scalar_lea.vmem %s4, 32
    %v9801 = vld [vmem:[%s9800] sm:$0xf]
    %v9803 = vsel %vm5278, %v9768, 0
    %v9806 = vsel %vm5278, %v9769, 0
    %v9809 = vsel %vm5278, %v9770, 0
    %v9812 = vsel %vm5278, %v9771, 0
    %v9815 = vsel %vm5278, %v9772, 0
    %v9818 = vsel %vm5278, %v9773, 0
    %v9821 = vsel %vm5278, %v9774, 0
    %v9824 = vsel %vm5278, %v9775, 0
    %v9827 = vsel %vm5278, %v9776, 0
    %v9830 = vsel %vm5278, %v9777, 0
    %v9833 = vsel %vm5278, %v9778, 0
    %v9836 = vsel %vm5278, %v9779, 0
    %v9839 = vsel %vm5278, %v9780, 0
    %v9842 = vsel %vm5278, %v9781, 0
    %v9845 = vsel %vm5278, %v9782, 0
    %v9848 = vsel %vm5278, %v9783, 0
    %v9851 = vsel %vm5278, %v9784, 0
    %v9854 = vsel %vm5278, %v9785, 0
    %v9857 = vsel %vm5278, %v9786, 0
    %v9860 = vsel %vm5278, %v9787, 0
    %v9863 = vsel %vm5278, %v9788, 0
    %v9866 = vsel %vm5278, %v9789, 0
    %v9869 = vsel %vm5278, %v9790, 0
    %v9872 = vsel %vm5278, %v9791, 0
    %v9875 = vsel %vm5278, %v9792, 0
    %v9878 = vsel %vm5278, %v9793, 0
    %v9881 = vsel %vm5278, %v9794, 0
    %v9884 = vsel %vm5278, %v9795, 0
    %v9887 = vsel %vm5278, %v9796, 0
    %v9890 = vsel %vm5278, %v9797, 0
    %v9893 = vsel %vm5278, %v9798, 0
    %v9896 = vsel %vm5278, %v9799, 0
    %v9899 = vsel %vm5722, %v9801, 0
    %9901 = vmatprep.subr.bf16.mxu0 0
    %9902 = vmatpush1.bf16.msra.mxu0 0
    %9903 = vmatprep.subr.bf16.mxu0 0
    %9904 = vmatpush1.bf16.msra.mxu0 0
    %9905 = vmatprep.subr.bf16.mxu0 0
    %9906 = vmatpush1.bf16.msra.mxu0 0
    %9907 = vmatprep.subr.bf16.mxu0 0
    %9908 = vmatpush1.bf16.msra.mxu0 0
    %9909 = vmatprep.subr.bf16.mxu0 0
    %9910 = vmatpush1.bf16.msra.mxu0 0
    %9911 = vmatprep.subr.bf16.mxu0 0
    %9912 = vmatpush1.bf16.msra.mxu0 0
    %9913 = vmatprep.subr.bf16.mxu0 0
    %9914 = vmatpush1.bf16.msra.mxu0 0
    %9915 = vmatprep.subr.bf16.mxu0 0
    %9916 = vmatpush1.bf16.msra.mxu0 %v9899
    %9917 = vmatprep.subr.bf16.mxu0 0
    %9918 = vmatpush2.bf16.msra.mxu0 0
    %9919 = vmatprep.subr.bf16.mxu0 0
    %9920 = vmatpush2.bf16.msra.mxu0 0
    %9921 = vmatprep.subr.bf16.mxu0 0
    %9922 = vmatpush2.bf16.msra.mxu0 0
    %9923 = vmatprep.subr.bf16.mxu0 0
    %9924 = vmatpush2.bf16.msra.mxu0 0
    %9925 = vmatprep.subr.bf16.mxu0 0
    %9926 = vmatpush2.bf16.msra.mxu0 0
    %9927 = vmatprep.subr.bf16.mxu0 0
    %9928 = vmatpush2.bf16.msra.mxu0 0
    %9929 = vmatprep.subr.bf16.mxu0 0
    %9930 = vmatpush2.bf16.msra.mxu0 0
    %9931 = vmatprep.subr.bf16.mxu0 0
    %9932 = vmatpush2.bf16.msra.mxu0 0
    %9933 = vmatprep.mubr.bf16.mxu0 0
    %9934 = vmatmul.mubr.bf16.gmra.mxu0 %v9803
    %v9935 = vpop.f32.mrf.mxu0
    %v9936 = vadd.f32 0.0, %v9935
    %v9937 = vpop.f32.mrf.mxu0
    %v9938 = vpop.f32.mrf.mxu0
    %v9939 = vadd.f32 0.0, %v9938
    %v9940 = vpop.f32.mrf.mxu0
    %9941 = vmatprep.mubr.bf16.mxu0 0
    %9942 = vmatmul.mubr.bf16.gmra.mxu0 %v9806
    %v9943 = vpop.f32.mrf.mxu0
    %v9944 = vadd.f32 0.0, %v9943
    %v9945 = vpop.f32.mrf.mxu0
    %v9946 = vpop.f32.mrf.mxu0
    %v9947 = vadd.f32 0.0, %v9946
    %v9948 = vpop.f32.mrf.mxu0
    %9949 = vmatprep.mubr.bf16.mxu0 0
    %9950 = vmatmul.mubr.bf16.gmra.mxu0 %v9809
    %v9951 = vpop.f32.mrf.mxu0
    %v9952 = vadd.f32 0.0, %v9951
    %v9953 = vpop.f32.mrf.mxu0
    %v9954 = vpop.f32.mrf.mxu0
    %v9955 = vadd.f32 0.0, %v9954
    %v9956 = vpop.f32.mrf.mxu0
    %9957 = vmatprep.mubr.bf16.mxu0 0
    %9958 = vmatmul.mubr.bf16.gmra.mxu0 %v9812
    %v9959 = vpop.f32.mrf.mxu0
    %v9960 = vadd.f32 0.0, %v9959
    %v9961 = vpop.f32.mrf.mxu0
    %v9962 = vpop.f32.mrf.mxu0
    %v9963 = vadd.f32 0.0, %v9962
    %v9964 = vpop.f32.mrf.mxu0
    %9965 = vmatprep.mubr.bf16.mxu0 0
    %9966 = vmatmul.mubr.bf16.gmra.mxu0 %v9815
    %v9967 = vpop.f32.mrf.mxu0
    %v9968 = vadd.f32 0.0, %v9967
    %v9969 = vpop.f32.mrf.mxu0
    %v9970 = vpop.f32.mrf.mxu0
    %v9971 = vadd.f32 0.0, %v9970
    %v9972 = vpop.f32.mrf.mxu0
    %9973 = vmatprep.mubr.bf16.mxu0 0
    %9974 = vmatmul.mubr.bf16.gmra.mxu0 %v9818
    %v9975 = vpop.f32.mrf.mxu0
    %v9976 = vadd.f32 0.0, %v9975
    %v9977 = vpop.f32.mrf.mxu0
    %v9978 = vpop.f32.mrf.mxu0
    %v9979 = vadd.f32 0.0, %v9978
    %v9980 = vpop.f32.mrf.mxu0
    %9981 = vmatprep.mubr.bf16.mxu0 0
    %9982 = vmatmul.mubr.bf16.gmra.mxu0 %v9821
    %v9983 = vpop.f32.mrf.mxu0
    %v9984 = vadd.f32 0.0, %v9983
    %v9985 = vpop.f32.mrf.mxu0
    %v9986 = vpop.f32.mrf.mxu0
    %v9987 = vadd.f32 0.0, %v9986
    %v9988 = vpop.f32.mrf.mxu0
    %9989 = vmatprep.mubr.bf16.mxu0 0
    %9990 = vmatmul.mubr.bf16.gmra.mxu0 %v9824
    %v9991 = vpop.f32.mrf.mxu0
    %v9992 = vadd.f32 0.0, %v9991
    %v9993 = vpop.f32.mrf.mxu0
    %v9994 = vpop.f32.mrf.mxu0
    %v9995 = vadd.f32 0.0, %v9994
    %v9996 = vpop.f32.mrf.mxu0
    %9997 = vmatprep.mubr.bf16.mxu0 0
    %9998 = vmatmul.mubr.bf16.gmra.mxu0 %v9827
    %v9999 = vpop.f32.mrf.mxu0
    %v10000 = vadd.f32 0.0, %v9999
    %v10001 = vpop.f32.mrf.mxu0
    %v10002 = vpop.f32.mrf.mxu0
    %v10003 = vadd.f32 0.0, %v10002
    %v10004 = vpop.f32.mrf.mxu0
    %10005 = vmatprep.mubr.bf16.mxu0 0
    %10006 = vmatmul.mubr.bf16.gmra.mxu0 %v9830
    %v10007 = vpop.f32.mrf.mxu0
    %v10008 = vadd.f32 0.0, %v10007
    %v10009 = vpop.f32.mrf.mxu0
    %v10010 = vpop.f32.mrf.mxu0
    %v10011 = vadd.f32 0.0, %v10010
    %v10012 = vpop.f32.mrf.mxu0
    %10013 = vmatprep.mubr.bf16.mxu0 0
    %10014 = vmatmul.mubr.bf16.gmra.mxu0 %v9833
    %v10015 = vpop.f32.mrf.mxu0
    %v10016 = vadd.f32 0.0, %v10015
    %v10017 = vpop.f32.mrf.mxu0
    %v10018 = vpop.f32.mrf.mxu0
    %v10019 = vadd.f32 0.0, %v10018
    %v10020 = vpop.f32.mrf.mxu0
    %10021 = vmatprep.mubr.bf16.mxu0 0
    %10022 = vmatmul.mubr.bf16.gmra.mxu0 %v9836
    %v10023 = vpop.f32.mrf.mxu0
    %v10024 = vadd.f32 0.0, %v10023
    %v10025 = vpop.f32.mrf.mxu0
    %v10026 = vpop.f32.mrf.mxu0
    %v10027 = vadd.f32 0.0, %v10026
    %v10028 = vpop.f32.mrf.mxu0
    %10029 = vmatprep.mubr.bf16.mxu0 0
    %10030 = vmatmul.mubr.bf16.gmra.mxu0 %v9839
    %v10031 = vpop.f32.mrf.mxu0
    %v10032 = vadd.f32 0.0, %v10031
    %v10033 = vpop.f32.mrf.mxu0
    %v10034 = vpop.f32.mrf.mxu0
    %v10035 = vadd.f32 0.0, %v10034
    %v10036 = vpop.f32.mrf.mxu0
    %10037 = vmatprep.mubr.bf16.mxu0 0
    %10038 = vmatmul.mubr.bf16.gmra.mxu0 %v9842
    %v10039 = vpop.f32.mrf.mxu0
    %v10040 = vadd.f32 0.0, %v10039
    %v10041 = vpop.f32.mrf.mxu0
    %v10042 = vpop.f32.mrf.mxu0
    %v10043 = vadd.f32 0.0, %v10042
    %v10044 = vpop.f32.mrf.mxu0
    %10045 = vmatprep.mubr.bf16.mxu0 0
    %10046 = vmatmul.mubr.bf16.gmra.mxu0 %v9845
    %v10047 = vpop.f32.mrf.mxu0
    %v10048 = vadd.f32 0.0, %v10047
    %v10049 = vpop.f32.mrf.mxu0
    %v10050 = vpop.f32.mrf.mxu0
    %v10051 = vadd.f32 0.0, %v10050
    %v10052 = vpop.f32.mrf.mxu0
    %10053 = vmatprep.mubr.bf16.mxu0 0
    %10054 = vmatmul.mubr.bf16.gmra.mxu0 %v9848
    %v10055 = vpop.f32.mrf.mxu0
    %v10056 = vadd.f32 0.0, %v10055
    %v10057 = vpop.f32.mrf.mxu0
    %v10058 = vpop.f32.mrf.mxu0
    %v10059 = vadd.f32 0.0, %v10058
    %v10060 = vpop.f32.mrf.mxu0
    %10061 = vmatprep.mubr.bf16.mxu0 0
    %10062 = vmatmul.mubr.bf16.gmra.mxu0 %v9851
    %v10063 = vpop.f32.mrf.mxu0
    %v10064 = vadd.f32 0.0, %v10063
    %v10065 = vpop.f32.mrf.mxu0
    %v10066 = vpop.f32.mrf.mxu0
    %v10067 = vadd.f32 0.0, %v10066
    %v10068 = vpop.f32.mrf.mxu0
    %10069 = vmatprep.mubr.bf16.mxu0 0
    %10070 = vmatmul.mubr.bf16.gmra.mxu0 %v9854
    %v10071 = vpop.f32.mrf.mxu0
    %v10072 = vadd.f32 0.0, %v10071
    %v10073 = vpop.f32.mrf.mxu0
    %v10074 = vpop.f32.mrf.mxu0
    %v10075 = vadd.f32 0.0, %v10074
    %v10076 = vpop.f32.mrf.mxu0
    %10077 = vmatprep.mubr.bf16.mxu0 0
    %10078 = vmatmul.mubr.bf16.gmra.mxu0 %v9857
    %v10079 = vpop.f32.mrf.mxu0
    %v10080 = vadd.f32 0.0, %v10079
    %v10081 = vpop.f32.mrf.mxu0
    %v10082 = vpop.f32.mrf.mxu0
    %v10083 = vadd.f32 0.0, %v10082
    %v10084 = vpop.f32.mrf.mxu0
    %10085 = vmatprep.mubr.bf16.mxu0 0
    %10086 = vmatmul.mubr.bf16.gmra.mxu0 %v9860
    %v10087 = vpop.f32.mrf.mxu0
    %v10088 = vadd.f32 0.0, %v10087
    %v10089 = vpop.f32.mrf.mxu0
    %v10090 = vpop.f32.mrf.mxu0
    %v10091 = vadd.f32 0.0, %v10090
    %v10092 = vpop.f32.mrf.mxu0
    %10093 = vmatprep.mubr.bf16.mxu0 0
    %10094 = vmatmul.mubr.bf16.gmra.mxu0 %v9863
    %v10095 = vpop.f32.mrf.mxu0
    %v10096 = vadd.f32 0.0, %v10095
    %v10097 = vpop.f32.mrf.mxu0
    %v10098 = vpop.f32.mrf.mxu0
    %v10099 = vadd.f32 0.0, %v10098
    %v10100 = vpop.f32.mrf.mxu0
    %10101 = vmatprep.mubr.bf16.mxu0 0
    %10102 = vmatmul.mubr.bf16.gmra.mxu0 %v9866
    %v10103 = vpop.f32.mrf.mxu0
    %v10104 = vadd.f32 0.0, %v10103
    %v10105 = vpop.f32.mrf.mxu0
    %v10106 = vpop.f32.mrf.mxu0
    %v10107 = vadd.f32 0.0, %v10106
    %v10108 = vpop.f32.mrf.mxu0
    %10109 = vmatprep.mubr.bf16.mxu0 0
    %10110 = vmatmul.mubr.bf16.gmra.mxu0 %v9869
    %v10111 = vpop.f32.mrf.mxu0
    %v10112 = vadd.f32 0.0, %v10111
    %v10113 = vpop.f32.mrf.mxu0
    %v10114 = vpop.f32.mrf.mxu0
    %v10115 = vadd.f32 0.0, %v10114
    %v10116 = vpop.f32.mrf.mxu0
    %10117 = vmatprep.mubr.bf16.mxu0 0
    %10118 = vmatmul.mubr.bf16.gmra.mxu0 %v9872
    %v10119 = vpop.f32.mrf.mxu0
    %v10120 = vadd.f32 0.0, %v10119
    %v10121 = vpop.f32.mrf.mxu0
    %v10122 = vpop.f32.mrf.mxu0
    %v10123 = vadd.f32 0.0, %v10122
    %v10124 = vpop.f32.mrf.mxu0
    %10125 = vmatprep.mubr.bf16.mxu0 0
    %10126 = vmatmul.mubr.bf16.gmra.mxu0 %v9875
    %v10127 = vpop.f32.mrf.mxu0
    %v10128 = vadd.f32 0.0, %v10127
    %v10129 = vpop.f32.mrf.mxu0
    %v10130 = vpop.f32.mrf.mxu0
    %v10131 = vadd.f32 0.0, %v10130
    %v10132 = vpop.f32.mrf.mxu0
    %10133 = vmatprep.mubr.bf16.mxu0 0
    %10134 = vmatmul.mubr.bf16.gmra.mxu0 %v9878
    %v10135 = vpop.f32.mrf.mxu0
    %v10136 = vadd.f32 0.0, %v10135
    %v10137 = vpop.f32.mrf.mxu0
    %v10138 = vpop.f32.mrf.mxu0
    %v10139 = vadd.f32 0.0, %v10138
    %v10140 = vpop.f32.mrf.mxu0
    %10141 = vmatprep.mubr.bf16.mxu0 0
    %10142 = vmatmul.mubr.bf16.gmra.mxu0 %v9881
    %v10143 = vpop.f32.mrf.mxu0
    %v10144 = vadd.f32 0.0, %v10143
    %v10145 = vpop.f32.mrf.mxu0
    %v10146 = vpop.f32.mrf.mxu0
    %v10147 = vadd.f32 0.0, %v10146
    %v10148 = vpop.f32.mrf.mxu0
    %10149 = vmatprep.mubr.bf16.mxu0 0
    %10150 = vmatmul.mubr.bf16.gmra.mxu0 %v9884
    %v10151 = vpop.f32.mrf.mxu0
    %v10152 = vadd.f32 0.0, %v10151
    %v10153 = vpop.f32.mrf.mxu0
    %v10154 = vpop.f32.mrf.mxu0
    %v10155 = vadd.f32 0.0, %v10154
    %v10156 = vpop.f32.mrf.mxu0
    %10157 = vmatprep.mubr.bf16.mxu0 0
    %10158 = vmatmul.mubr.bf16.gmra.mxu0 %v9887
    %v10159 = vpop.f32.mrf.mxu0
    %v10160 = vadd.f32 0.0, %v10159
    %v10161 = vpop.f32.mrf.mxu0
    %v10162 = vpop.f32.mrf.mxu0
    %v10163 = vadd.f32 0.0, %v10162
    %v10164 = vpop.f32.mrf.mxu0
    %10165 = vmatprep.mubr.bf16.mxu0 0
    %10166 = vmatmul.mubr.bf16.gmra.mxu0 %v9890
    %v10167 = vpop.f32.mrf.mxu0
    %v10168 = vadd.f32 0.0, %v10167
    %v10169 = vpop.f32.mrf.mxu0
    %v10170 = vpop.f32.mrf.mxu0
    %v10171 = vadd.f32 0.0, %v10170
    %v10172 = vpop.f32.mrf.mxu0
    %10173 = vmatprep.mubr.bf16.mxu0 0
    %10174 = vmatmul.mubr.bf16.gmra.mxu0 %v9893
    %v10175 = vpop.f32.mrf.mxu0
    %v10176 = vadd.f32 0.0, %v10175
    %v10177 = vpop.f32.mrf.mxu0
    %v10178 = vpop.f32.mrf.mxu0
    %v10179 = vadd.f32 0.0, %v10178
    %v10180 = vpop.f32.mrf.mxu0
    %10181 = vmatprep.mubr.bf16.mxu0 0
    %10182 = vmatmul.mubr.bf16.gmra.mxu0 %v9896
    %v10183 = vpop.f32.mrf.mxu0
    %v10184 = vadd.f32 0.0, %v10183
    %v10185 = vpop.f32.mrf.mxu0
    %v10186 = vpop.f32.mrf.mxu0
    %v10187 = vadd.f32 0.0, %v10186
    %v10188 = vpop.f32.mrf.mxu0
    %10189 = vdwg.mxu0
    %v10190 = vadd.f32 %v9640, %v9936
    %v10191 = vadd.f32 %v9641, %v9939
    %v10192 = vadd.f32 %v9642, %v9944
    %v10193 = vadd.f32 %v9643, %v9947
    %v10194 = vadd.f32 %v9644, %v9952
    %v10195 = vadd.f32 %v9645, %v9955
    %v10196 = vadd.f32 %v9646, %v9960
    %v10197 = vadd.f32 %v9647, %v9963
    %v10198 = vadd.f32 %v9648, %v9968
    %v10199 = vadd.f32 %v9649, %v9971
    %v10200 = vadd.f32 %v9650, %v9976
    %v10201 = vadd.f32 %v9651, %v9979
    %v10202 = vadd.f32 %v9652, %v9984
    %v10203 = vadd.f32 %v9653, %v9987
    %v10204 = vadd.f32 %v9654, %v9992
    %v10205 = vadd.f32 %v9655, %v9995
    %v10206 = vadd.f32 %v9656, %v10000
    %v10207 = vadd.f32 %v9657, %v10003
    %v10208 = vadd.f32 %v9658, %v10008
    %v10209 = vadd.f32 %v9659, %v10011
    %v10210 = vadd.f32 %v9660, %v10016
    %v10211 = vadd.f32 %v9661, %v10019
    %v10212 = vadd.f32 %v9662, %v10024
    %v10213 = vadd.f32 %v9663, %v10027
    %v10214 = vadd.f32 %v9664, %v10032
    %v10215 = vadd.f32 %v9665, %v10035
    %v10216 = vadd.f32 %v9666, %v10040
    %v10217 = vadd.f32 %v9667, %v10043
    %v10218 = vadd.f32 %v9668, %v10048
    %v10219 = vadd.f32 %v9669, %v10051
    %v10220 = vadd.f32 %v9670, %v10056
    %v10221 = vadd.f32 %v9671, %v10059
    %v10222 = vadd.f32 %v9672, %v10064
    %v10223 = vadd.f32 %v9673, %v10067
    %v10224 = vadd.f32 %v9674, %v10072
    %v10225 = vadd.f32 %v9675, %v10075
    %v10226 = vadd.f32 %v9676, %v10080
    %v10227 = vadd.f32 %v9677, %v10083
    %v10228 = vadd.f32 %v9678, %v10088
    %v10229 = vadd.f32 %v9679, %v10091
    %v10230 = vadd.f32 %v9680, %v10096
    %v10231 = vadd.f32 %v9681, %v10099
    %v10232 = vadd.f32 %v9682, %v10104
    %v10233 = vadd.f32 %v9683, %v10107
    %v10234 = vadd.f32 %v9684, %v10112
    %v10235 = vadd.f32 %v9685, %v10115
    %v10236 = vadd.f32 %v9686, %v10120
    %v10237 = vadd.f32 %v9687, %v10123
    %v10238 = vadd.f32 %v9688, %v10128
    %v10239 = vadd.f32 %v9689, %v10131
    %v10240 = vadd.f32 %v9690, %v10136
    %v10241 = vadd.f32 %v9691, %v10139
    %v10242 = vadd.f32 %v9692, %v10144
    %v10243 = vadd.f32 %v9693, %v10147
    %v10244 = vadd.f32 %v9694, %v10152
    %v10245 = vadd.f32 %v9695, %v10155
    %v10246 = vadd.f32 %v9696, %v10160
    %v10247 = vadd.f32 %v9697, %v10163
    %v10248 = vadd.f32 %v9698, %v10168
    %v10249 = vadd.f32 %v9699, %v10171
    %v10250 = vadd.f32 %v9700, %v10176
    %v10251 = vadd.f32 %v9701, %v10179
    %v10252 = vadd.f32 %v9702, %v10184
    %v10253 = vadd.f32 %v9703, %v10187
    %10254 = vxpose.xlu0.b32.start [1/16] %v10190, 128
    %10255 = vxpose.xlu0.b32.cont [2/16] %v10191, 128
    %10256 = vxpose.xlu0.b32.cont [3/16] %v10192, 128
    %10257 = vxpose.xlu0.b32.cont [4/16] %v10193, 128
    %10258 = vxpose.xlu0.b32.cont [5/16] %v10194, 128
    %10259 = vxpose.xlu0.b32.cont [6/16] %v10195, 128
    %10260 = vxpose.xlu0.b32.cont [7/16] %v10196, 128
    %10261 = vxpose.xlu0.b32.cont [8/16] %v10197, 128
    %10262 = vxpose.xlu0.b32.cont [9/16] %v10198, 128
    %10263 = vxpose.xlu0.b32.cont [10/16] %v10199, 128
    %10264 = vxpose.xlu0.b32.cont [11/16] %v10200, 128
    %10265 = vxpose.xlu0.b32.cont [12/16] %v10201, 128
    %10266 = vxpose.xlu0.b32.cont [13/16] %v10202, 128
    %10267 = vxpose.xlu0.b32.cont [14/16] %v10203, 128
    %10268 = vxpose.xlu0.b32.cont [15/16] %v10204, 128
    %10269 = vxpose.xlu0.b32.end [16/16] %v10205, 128
    %v10270 = vpop.trf.xlu0
    %v10271 = vpop.trf.xlu0
    %v10272 = vpop.trf.xlu0
    %v10273 = vpop.trf.xlu0
    %v10274 = vpop.trf.xlu0
    %v10275 = vpop.trf.xlu0
    %v10276 = vpop.trf.xlu0
    %v10277 = vpop.trf.xlu0
    %v10278 = vpop.trf.xlu0
    %v10279 = vpop.trf.xlu0
    %v10280 = vpop.trf.xlu0
    %v10281 = vpop.trf.xlu0
    %v10282 = vpop.trf.xlu0
    %v10283 = vpop.trf.xlu0
    %v10284 = vpop.trf.xlu0
    %v10285 = vpop.trf.xlu0
    %10286 = vxpose.xlu0.b32.start [1/16] %v10206, 128
    %10287 = vxpose.xlu0.b32.cont [2/16] %v10207, 128
    %10288 = vxpose.xlu0.b32.cont [3/16] %v10208, 128
    %10289 = vxpose.xlu0.b32.cont [4/16] %v10209, 128
    %10290 = vxpose.xlu0.b32.cont [5/16] %v10210, 128
    %10291 = vxpose.xlu0.b32.cont [6/16] %v10211, 128
    %10292 = vxpose.xlu0.b32.cont [7/16] %v10212, 128
    %10293 = vxpose.xlu0.b32.cont [8/16] %v10213, 128
    %10294 = vxpose.xlu0.b32.cont [9/16] %v10214, 128
    %10295 = vxpose.xlu0.b32.cont [10/16] %v10215, 128
    %10296 = vxpose.xlu0.b32.cont [11/16] %v10216, 128
    %10297 = vxpose.xlu0.b32.cont [12/16] %v10217, 128
    %10298 = vxpose.xlu0.b32.cont [13/16] %v10218, 128
    %10299 = vxpose.xlu0.b32.cont [14/16] %v10219, 128
    %10300 = vxpose.xlu0.b32.cont [15/16] %v10220, 128
    %10301 = vxpose.xlu0.b32.end [16/16] %v10221, 128
    %v10302 = vpop.trf.xlu0
    %v10303 = vpop.trf.xlu0
    %v10304 = vpop.trf.xlu0
    %v10305 = vpop.trf.xlu0
    %v10306 = vpop.trf.xlu0
    %v10307 = vpop.trf.xlu0
    %v10308 = vpop.trf.xlu0
    %v10309 = vpop.trf.xlu0
    %v10310 = vpop.trf.xlu0
    %v10311 = vpop.trf.xlu0
    %v10312 = vpop.trf.xlu0
    %v10313 = vpop.trf.xlu0
    %v10314 = vpop.trf.xlu0
    %v10315 = vpop.trf.xlu0
    %v10316 = vpop.trf.xlu0
    %v10317 = vpop.trf.xlu0
    %10318 = vxpose.xlu0.b32.start [1/16] %v10222, 128
    %10319 = vxpose.xlu0.b32.cont [2/16] %v10223, 128
    %10320 = vxpose.xlu0.b32.cont [3/16] %v10224, 128
    %10321 = vxpose.xlu0.b32.cont [4/16] %v10225, 128
    %10322 = vxpose.xlu0.b32.cont [5/16] %v10226, 128
    %10323 = vxpose.xlu0.b32.cont [6/16] %v10227, 128
    %10324 = vxpose.xlu0.b32.cont [7/16] %v10228, 128
    %10325 = vxpose.xlu0.b32.cont [8/16] %v10229, 128
    %10326 = vxpose.xlu0.b32.cont [9/16] %v10230, 128
    %10327 = vxpose.xlu0.b32.cont [10/16] %v10231, 128
    %10328 = vxpose.xlu0.b32.cont [11/16] %v10232, 128
    %10329 = vxpose.xlu0.b32.cont [12/16] %v10233, 128
    %10330 = vxpose.xlu0.b32.cont [13/16] %v10234, 128
    %10331 = vxpose.xlu0.b32.cont [14/16] %v10235, 128
    %10332 = vxpose.xlu0.b32.cont [15/16] %v10236, 128
    %10333 = vxpose.xlu0.b32.end [16/16] %v10237, 128
    %v10334 = vpop.trf.xlu0
    %v10335 = vpop.trf.xlu0
    %v10336 = vpop.trf.xlu0
    %v10337 = vpop.trf.xlu0
    %v10338 = vpop.trf.xlu0
    %v10339 = vpop.trf.xlu0
    %v10340 = vpop.trf.xlu0
    %v10341 = vpop.trf.xlu0
    %v10342 = vpop.trf.xlu0
    %v10343 = vpop.trf.xlu0
    %v10344 = vpop.trf.xlu0
    %v10345 = vpop.trf.xlu0
    %v10346 = vpop.trf.xlu0
    %v10347 = vpop.trf.xlu0
    %v10348 = vpop.trf.xlu0
    %v10349 = vpop.trf.xlu0
    %10350 = vxpose.xlu0.b32.start [1/16] %v10238, 128
    %10351 = vxpose.xlu0.b32.cont [2/16] %v10239, 128
    %10352 = vxpose.xlu0.b32.cont [3/16] %v10240, 128
    %10353 = vxpose.xlu0.b32.cont [4/16] %v10241, 128
    %10354 = vxpose.xlu0.b32.cont [5/16] %v10242, 128
    %10355 = vxpose.xlu0.b32.cont [6/16] %v10243, 128
    %10356 = vxpose.xlu0.b32.cont [7/16] %v10244, 128
    %10357 = vxpose.xlu0.b32.cont [8/16] %v10245, 128
    %10358 = vxpose.xlu0.b32.cont [9/16] %v10246, 128
    %10359 = vxpose.xlu0.b32.cont [10/16] %v10247, 128
    %10360 = vxpose.xlu0.b32.cont [11/16] %v10248, 128
    %10361 = vxpose.xlu0.b32.cont [12/16] %v10249, 128
    %10362 = vxpose.xlu0.b32.cont [13/16] %v10250, 128
    %10363 = vxpose.xlu0.b32.cont [14/16] %v10251, 128
    %10364 = vxpose.xlu0.b32.cont [15/16] %v10252, 128
    %10365 = vxpose.xlu0.b32.end [16/16] %v10253, 128
    %v10366 = vpop.trf.xlu0
    %v10367 = vpop.trf.xlu0
    %v10368 = vpop.trf.xlu0
    %v10369 = vpop.trf.xlu0
    %v10370 = vpop.trf.xlu0
    %v10371 = vpop.trf.xlu0
    %v10372 = vpop.trf.xlu0
    %v10373 = vpop.trf.xlu0
    %v10374 = vpop.trf.xlu0
    %v10375 = vpop.trf.xlu0
    %v10376 = vpop.trf.xlu0
    %v10377 = vpop.trf.xlu0
    %v10378 = vpop.trf.xlu0
    %v10379 = vpop.trf.xlu0
    %v10380 = vpop.trf.xlu0
    %v10381 = vpop.trf.xlu0
    %v10382 = vld [vmem:[%s5] sm:$0xff]
    %v10383 = vld [vmem:[%s6] sm:$0xff]
    %v10384 = vadd.f32 %v10270, %v10302
    %v10385 = vadd.f32 %v10384, %v10334
    %v10386 = vadd.f32 %v10385, %v10366
    %10387 = vadd.xlane.f32.xlu0 %v10386
    %v10388 = vpop.xlane.xlu0 %10387
    %v10389 = vmul.f32 %v10388, 0.001953125
    %v10390 = vsub.f32 %v10270, %v10389
    %v10391 = vsub.f32 %v10302, %v10389
    %v10392 = vsub.f32 %v10334, %v10389
    %v10393 = vsub.f32 %v10366, %v10389
    %v10394 = vmul.f32 %v10390, %v10390
    %v10395 = vmul.f32 %v10391, %v10391
    %v10396 = vmul.f32 %v10392, %v10392
    %v10397 = vmul.f32 %v10393, %v10393
    %v10398 = vadd.f32 %v10394, %v10395
    %v10399 = vadd.f32 %v10398, %v10396
    %v10400 = vadd.f32 %v10399, %v10397
    %10401 = vadd.xlane.f32.xlu0 %v10400
    %v10402 = vpop.xlane.xlu0 %10401
    %v10403 = vmul.f32 %v10402, 0.001953125
    %v10404 = vadd.f32 %v10403, 1e-05
    %v10405 = vrsqrt.pop %v10404
    %v10406 = vmul.f32 %v10382, %v10405
    %v10407 = vmul.f32 %v10389, %v10406
    %v10408 = vsub.f32 %v10383, %v10407
    %10410 = vset.pattern.permute.xlu0 0
    %10411 = vperm.xlu0 %10410, %v10406
    %v10412 = vpop.permute.xlu0 %10411
    %v10414 = vmul.f32 %v10270, %v10412
    %v10415 = vmul.f32 %v10302, %v10412
    %v10416 = vmul.f32 %v10334, %v10412
    %v10417 = vmul.f32 %v10366, %v10412
    %10419 = vset.pattern.permute.xlu0 0
    %10420 = vperm.xlu0 %10419, %v10408
    %v10421 = vpop.permute.xlu0 %10420
    %v10423 = vadd.f32 %v10414, %v10421
    %v10424 = vadd.f32 %v10415, %v10421
    %v10425 = vadd.f32 %v10416, %v10421
    %v10426 = vadd.f32 %v10417, %v10421
    %v10427 = vld [vmem:[%s1557 + $0x1] sm:$0xff]
    %v10428 = vld [vmem:[%s1557 + $0x9] sm:$0xff]
    %v10429 = vld [vmem:[%s1557 + $0x19] sm:$0xff]
    %v10430 = vld [vmem:[%s1557 + $0x21] sm:$0xff]
    %v10431 = vld [vmem:[%s1557 + $0x31] sm:$0xff]
    %v10432 = vld [vmem:[%s1557 + $0x39] sm:$0xff]
    %v10433 = vld [vmem:[%s1557 + $0x49] sm:$0xff]
    %v10434 = vld [vmem:[%s1557 + $0x51] sm:$0xff]
    %v10435 = vld [vmem:[%s1557 + $0x61] sm:$0xff]
    %v10436 = vld [vmem:[%s1557 + $0x69] sm:$0xff]
    %v10437 = vld [vmem:[%s1557 + $0x79] sm:$0xff]
    %v10438 = vld [vmem:[%s1557 + $0x81] sm:$0xff]
    %v10439 = vld [vmem:[%s1557 + $0x91] sm:$0xff]
    %v10440 = vld [vmem:[%s1557 + $0x99] sm:$0xff]
    %v10441 = vld [vmem:[%s1557 + $0xa9] sm:$0xff]
    %v10442 = vld [vmem:[%s1557 + $0xb1] sm:$0xff]
    %v10443 = vld [vmem:[%s1557 + $0xc1] sm:$0xff]
    %v10444 = vld [vmem:[%s1557 + $0xc9] sm:$0xff]
    %v10445 = vld [vmem:[%s1557 + $0xd9] sm:$0xff]
    %v10446 = vld [vmem:[%s1557 + $0xe1] sm:$0xff]
    %v10447 = vld [vmem:[%s1557 + $0xf1] sm:$0xff]
    %v10448 = vld [vmem:[%s1557 + $0xf9] sm:$0xff]
    %v10449 = vld [vmem:[%s1557 + $0x109] sm:$0xff]
    %v10450 = vld [vmem:[%s1557 + $0x111] sm:$0xff]
    %v10451 = vld [vmem:[%s1557 + $0x121] sm:$0xff]
    %v10452 = vld [vmem:[%s1557 + $0x129] sm:$0xff]
    %v10453 = vld [vmem:[%s1557 + $0x139] sm:$0xff]
    %v10454 = vld [vmem:[%s1557 + $0x141] sm:$0xff]
    %v10455 = vld [vmem:[%s1557 + $0x151] sm:$0xff]
    %v10456 = vld [vmem:[%s1557 + $0x159] sm:$0xff]
    %v10457 = vld [vmem:[%s1557 + $0x169] sm:$0xff]
    %v10458 = vld [vmem:[%s1557 + $0x171] sm:$0xff]
    %v10459 = vld [vmem:[%s1557 + $0x1b1] sm:$0xff]
    %v10460 = vld [vmem:[%s1557 + $0x1b9] sm:$0xff]
    %v10461 = vld [vmem:[%s1557 + $0x1c9] sm:$0xff]
    %v10462 = vld [vmem:[%s1557 + $0x1d1] sm:$0xff]
    %v10463 = vld [vmem:[%s1557 + $0x1e1] sm:$0xff]
    %v10464 = vld [vmem:[%s1557 + $0x1e9] sm:$0xff]
    %v10465 = vld [vmem:[%s1557 + $0x1f9] sm:$0xff]
    %v10466 = vld [vmem:[%s1557 + $0x201] sm:$0xff]
    %v10467 = vld [vmem:[%s1557 + $0x211] sm:$0xff]
    %v10468 = vld [vmem:[%s1557 + $0x219] sm:$0xff]
    %v10469 = vld [vmem:[%s1557 + $0x229] sm:$0xff]
    %v10470 = vld [vmem:[%s1557 + $0x231] sm:$0xff]
    %v10471 = vld [vmem:[%s1557 + $0x241] sm:$0xff]
    %v10472 = vld [vmem:[%s1557 + $0x249] sm:$0xff]
    %v10473 = vld [vmem:[%s1557 + $0x259] sm:$0xff]
    %v10474 = vld [vmem:[%s1557 + $0x261] sm:$0xff]
    %v10475 = vld [vmem:[%s1557 + $0x271] sm:$0xff]
    %v10476 = vld [vmem:[%s1557 + $0x279] sm:$0xff]
    %v10477 = vld [vmem:[%s1557 + $0x289] sm:$0xff]
    %v10478 = vld [vmem:[%s1557 + $0x291] sm:$0xff]
    %v10479 = vld [vmem:[%s1557 + $0x2a1] sm:$0xff]
    %v10480 = vld [vmem:[%s1557 + $0x2a9] sm:$0xff]
    %v10481 = vld [vmem:[%s1557 + $0x2b9] sm:$0xff]
    %v10482 = vld [vmem:[%s1557 + $0x2c1] sm:$0xff]
    %v10483 = vld [vmem:[%s1557 + $0x2d1] sm:$0xff]
    %v10484 = vld [vmem:[%s1557 + $0x2d9] sm:$0xff]
    %v10485 = vld [vmem:[%s1557 + $0x2e9] sm:$0xff]
    %v10486 = vld [vmem:[%s1557 + $0x2f1] sm:$0xff]
    %v10487 = vld [vmem:[%s1557 + $0x301] sm:$0xff]
    %v10488 = vld [vmem:[%s1557 + $0x309] sm:$0xff]
    %v10489 = vld [vmem:[%s1557 + $0x319] sm:$0xff]
    %v10490 = vld [vmem:[%s1557 + $0x321] sm:$0xff]
    %10491 = vxpose.xlu0.b32.start [1/16] %v10427, 128
    %10492 = vxpose.xlu0.b32.cont [2/16] %v10428, 128
    %10493 = vxpose.xlu0.b32.cont [3/16] %v10429, 128
    %10494 = vxpose.xlu0.b32.cont [4/16] %v10430, 128
    %10495 = vxpose.xlu0.b32.cont [5/16] %v10431, 128
    %10496 = vxpose.xlu0.b32.cont [6/16] %v10432, 128
    %10497 = vxpose.xlu0.b32.cont [7/16] %v10433, 128
    %10498 = vxpose.xlu0.b32.cont [8/16] %v10434, 128
    %10499 = vxpose.xlu0.b32.cont [9/16] %v10435, 128
    %10500 = vxpose.xlu0.b32.cont [10/16] %v10436, 128
    %10501 = vxpose.xlu0.b32.cont [11/16] %v10437, 128
    %10502 = vxpose.xlu0.b32.cont [12/16] %v10438, 128
    %10503 = vxpose.xlu0.b32.cont [13/16] %v10439, 128
    %10504 = vxpose.xlu0.b32.cont [14/16] %v10440, 128
    %10505 = vxpose.xlu0.b32.cont [15/16] %v10441, 128
    %10506 = vxpose.xlu0.b32.end [16/16] %v10442, 128
    %v10507 = vpop.trf.xlu0
    %v10508 = vpop.trf.xlu0
    %v10509 = vpop.trf.xlu0
    %v10510 = vpop.trf.xlu0
    %v10511 = vpop.trf.xlu0
    %v10512 = vpop.trf.xlu0
    %v10513 = vpop.trf.xlu0
    %v10514 = vpop.trf.xlu0
    %v10515 = vpop.trf.xlu0
    %v10516 = vpop.trf.xlu0
    %v10517 = vpop.trf.xlu0
    %v10518 = vpop.trf.xlu0
    %v10519 = vpop.trf.xlu0
    %v10520 = vpop.trf.xlu0
    %v10521 = vpop.trf.xlu0
    %v10522 = vpop.trf.xlu0
    %10523 = vxpose.xlu0.b32.start [1/16] %v10443, 128
    %10524 = vxpose.xlu0.b32.cont [2/16] %v10444, 128
    %10525 = vxpose.xlu0.b32.cont [3/16] %v10445, 128
    %10526 = vxpose.xlu0.b32.cont [4/16] %v10446, 128
    %10527 = vxpose.xlu0.b32.cont [5/16] %v10447, 128
    %10528 = vxpose.xlu0.b32.cont [6/16] %v10448, 128
    %10529 = vxpose.xlu0.b32.cont [7/16] %v10449, 128
    %10530 = vxpose.xlu0.b32.cont [8/16] %v10450, 128
    %10531 = vxpose.xlu0.b32.cont [9/16] %v10451, 128
    %10532 = vxpose.xlu0.b32.cont [10/16] %v10452, 128
    %10533 = vxpose.xlu0.b32.cont [11/16] %v10453, 128
    %10534 = vxpose.xlu0.b32.cont [12/16] %v10454, 128
    %10535 = vxpose.xlu0.b32.cont [13/16] %v10455, 128
    %10536 = vxpose.xlu0.b32.cont [14/16] %v10456, 128
    %10537 = vxpose.xlu0.b32.cont [15/16] %v10457, 128
    %10538 = vxpose.xlu0.b32.end [16/16] %v10458, 128
    %v10539 = vpop.trf.xlu0
    %v10540 = vpop.trf.xlu0
    %v10541 = vpop.trf.xlu0
    %v10542 = vpop.trf.xlu0
    %v10543 = vpop.trf.xlu0
    %v10544 = vpop.trf.xlu0
    %v10545 = vpop.trf.xlu0
    %v10546 = vpop.trf.xlu0
    %v10547 = vpop.trf.xlu0
    %v10548 = vpop.trf.xlu0
    %v10549 = vpop.trf.xlu0
    %v10550 = vpop.trf.xlu0
    %v10551 = vpop.trf.xlu0
    %v10552 = vpop.trf.xlu0
    %v10553 = vpop.trf.xlu0
    %v10554 = vpop.trf.xlu0
    %10555 = vxpose.xlu0.b32.start [1/16] %v10459, 128
    %10556 = vxpose.xlu0.b32.cont [2/16] %v10460, 128
    %10557 = vxpose.xlu0.b32.cont [3/16] %v10461, 128
    %10558 = vxpose.xlu0.b32.cont [4/16] %v10462, 128
    %10559 = vxpose.xlu0.b32.cont [5/16] %v10463, 128
    %10560 = vxpose.xlu0.b32.cont [6/16] %v10464, 128
    %10561 = vxpose.xlu0.b32.cont [7/16] %v10465, 128
    %10562 = vxpose.xlu0.b32.cont [8/16] %v10466, 128
    %10563 = vxpose.xlu0.b32.cont [9/16] %v10467, 128
    %10564 = vxpose.xlu0.b32.cont [10/16] %v10468, 128
    %10565 = vxpose.xlu0.b32.cont [11/16] %v10469, 128
    %10566 = vxpose.xlu0.b32.cont [12/16] %v10470, 128
    %10567 = vxpose.xlu0.b32.cont [13/16] %v10471, 128
    %10568 = vxpose.xlu0.b32.cont [14/16] %v10472, 128
    %10569 = vxpose.xlu0.b32.cont [15/16] %v10473, 128
    %10570 = vxpose.xlu0.b32.end [16/16] %v10474, 128
    %v10571 = vpop.trf.xlu0
    %v10572 = vpop.trf.xlu0
    %v10573 = vpop.trf.xlu0
    %v10574 = vpop.trf.xlu0
    %v10575 = vpop.trf.xlu0
    %v10576 = vpop.trf.xlu0
    %v10577 = vpop.trf.xlu0
    %v10578 = vpop.trf.xlu0
    %v10579 = vpop.trf.xlu0
    %v10580 = vpop.trf.xlu0
    %v10581 = vpop.trf.xlu0
    %v10582 = vpop.trf.xlu0
    %v10583 = vpop.trf.xlu0
    %v10584 = vpop.trf.xlu0
    %v10585 = vpop.trf.xlu0
    %v10586 = vpop.trf.xlu0
    %10587 = vxpose.xlu0.b32.start [1/16] %v10475, 128
    %10588 = vxpose.xlu0.b32.cont [2/16] %v10476, 128
    %10589 = vxpose.xlu0.b32.cont [3/16] %v10477, 128
    %10590 = vxpose.xlu0.b32.cont [4/16] %v10478, 128
    %10591 = vxpose.xlu0.b32.cont [5/16] %v10479, 128
    %10592 = vxpose.xlu0.b32.cont [6/16] %v10480, 128
    %10593 = vxpose.xlu0.b32.cont [7/16] %v10481, 128
    %10594 = vxpose.xlu0.b32.cont [8/16] %v10482, 128
    %10595 = vxpose.xlu0.b32.cont [9/16] %v10483, 128
    %10596 = vxpose.xlu0.b32.cont [10/16] %v10484, 128
    %10597 = vxpose.xlu0.b32.cont [11/16] %v10485, 128
    %10598 = vxpose.xlu0.b32.cont [12/16] %v10486, 128
    %10599 = vxpose.xlu0.b32.cont [13/16] %v10487, 128
    %10600 = vxpose.xlu0.b32.cont [14/16] %v10488, 128
    %10601 = vxpose.xlu0.b32.cont [15/16] %v10489, 128
    %10602 = vxpose.xlu0.b32.end [16/16] %v10490, 128
    %v10603 = vpop.trf.xlu0
    %v10604 = vpop.trf.xlu0
    %v10605 = vpop.trf.xlu0
    %v10606 = vpop.trf.xlu0
    %v10607 = vpop.trf.xlu0
    %v10608 = vpop.trf.xlu0
    %v10609 = vpop.trf.xlu0
    %v10610 = vpop.trf.xlu0
    %v10611 = vpop.trf.xlu0
    %v10612 = vpop.trf.xlu0
    %v10613 = vpop.trf.xlu0
    %v10614 = vpop.trf.xlu0
    %v10615 = vpop.trf.xlu0
    %v10616 = vpop.trf.xlu0
    %v10617 = vpop.trf.xlu0
    %v10618 = vpop.trf.xlu0
    %v10619 = vld [vmem:[%s7] sm:$0xff]
    %10621 = vset.pattern.permute.xlu0 0
    %10622 = vperm.xlu0 %10621, %v10619
    %v10623 = vpop.permute.xlu0 %10622
    %v10625 = vlaneseq
    %v10626 = vshrl.u32 %v10625, 7
    %v10627 = vsub.s32 0, %v10626
    %v10628 = vrot.slane %v10507, %v10627
    %v10629 = vlaneseq
    %v10630 = vshrl.u32 %v10629, 7
    %v10631 = vsub.s32 0, %v10630
    %v10632 = vrot.slane %v10539, %v10631
    %v10633 = vlaneseq
    %v10634 = vshrl.u32 %v10633, 7
    %v10635 = vsub.s32 0, %v10634
    %v10636 = vrot.slane %v10571, %v10635
    %v10637 = vlaneseq
    %v10638 = vshrl.u32 %v10637, 7
    %v10639 = vsub.s32 0, %v10638
    %v10640 = vrot.slane %v10603, %v10639
    %v10641 = vmul.f32 %v10623, %v10628
    %v10642 = vmul.f32 %v10623, %v10632
    %v10643 = vmul.f32 %v10623, %v10636
    %v10644 = vmul.f32 %v10623, %v10640
    %v10645 = vld [vmem:[%s8] sm:$0xff]
    %10647 = vset.pattern.permute.xlu0 0
    %10648 = vperm.xlu0 %10647, %v10645
    %v10649 = vpop.permute.xlu0 %10648
    %v10651 = vadd.f32 %v10641, %v10649
    %v10652 = vadd.f32 %v10642, %v10649
    %v10653 = vadd.f32 %v10643, %v10649
    %v10654 = vadd.f32 %v10644, %v10649
    %10655 = vset.pattern.permute.xlu0 1
    %10656 = vperm.xlu0 %10655, %v10619
    %v10657 = vpop.permute.xlu0 %10656
    %v10659 = vlaneseq
    %v10660 = vshrl.u32 %v10659, 7
    %v10661 = vsub.s32 1, %v10660
    %v10662 = vrot.slane %v10507, %v10661
    %v10663 = vlaneseq
    %v10664 = vshrl.u32 %v10663, 7
    %v10665 = vsub.s32 1, %v10664
    %v10666 = vrot.slane %v10539, %v10665
    %v10667 = vlaneseq
    %v10668 = vshrl.u32 %v10667, 7
    %v10669 = vsub.s32 1, %v10668
    %v10670 = vrot.slane %v10571, %v10669
    %v10671 = vlaneseq
    %v10672 = vshrl.u32 %v10671, 7
    %v10673 = vsub.s32 1, %v10672
    %v10674 = vrot.slane %v10603, %v10673
    %v10675 = vmul.f32 %v10657, %v10662
    %v10676 = vmul.f32 %v10657, %v10666
    %v10677 = vmul.f32 %v10657, %v10670
    %v10678 = vmul.f32 %v10657, %v10674
    %v10679 = vadd.f32 %v10651, %v10675
    %v10680 = vadd.f32 %v10652, %v10676
    %v10681 = vadd.f32 %v10653, %v10677
    %v10682 = vadd.f32 %v10654, %v10678
    %10683 = vset.pattern.permute.xlu0 2
    %10684 = vperm.xlu0 %10683, %v10619
    %v10685 = vpop.permute.xlu0 %10684
    %v10687 = vlaneseq
    %v10688 = vshrl.u32 %v10687, 7
    %v10689 = vsub.s32 2, %v10688
    %v10690 = vrot.slane %v10507, %v10689
    %v10691 = vlaneseq
    %v10692 = vshrl.u32 %v10691, 7
    %v10693 = vsub.s32 2, %v10692
    %v10694 = vrot.slane %v10539, %v10693
    %v10695 = vlaneseq
    %v10696 = vshrl.u32 %v10695, 7
    %v10697 = vsub.s32 2, %v10696
    %v10698 = vrot.slane %v10571, %v10697
    %v10699 = vlaneseq
    %v10700 = vshrl.u32 %v10699, 7
    %v10701 = vsub.s32 2, %v10700
    %v10702 = vrot.slane %v10603, %v10701
    %v10703 = vmul.f32 %v10685, %v10690
    %v10704 = vmul.f32 %v10685, %v10694
    %v10705 = vmul.f32 %v10685, %v10698
    %v10706 = vmul.f32 %v10685, %v10702
    %v10707 = vadd.f32 %v10679, %v10703
    %v10708 = vadd.f32 %v10680, %v10704
    %v10709 = vadd.f32 %v10681, %v10705
    %v10710 = vadd.f32 %v10682, %v10706
    %10711 = vset.pattern.permute.xlu0 3
    %10712 = vperm.xlu0 %10711, %v10619
    %v10713 = vpop.permute.xlu0 %10712
    %v10715 = vlaneseq
    %v10716 = vshrl.u32 %v10715, 7
    %v10717 = vsub.s32 3, %v10716
    %v10718 = vrot.slane %v10507, %v10717
    %v10719 = vlaneseq
    %v10720 = vshrl.u32 %v10719, 7
    %v10721 = vsub.s32 3, %v10720
    %v10722 = vrot.slane %v10539, %v10721
    %v10723 = vlaneseq
    %v10724 = vshrl.u32 %v10723, 7
    %v10725 = vsub.s32 3, %v10724
    %v10726 = vrot.slane %v10571, %v10725
    %v10727 = vlaneseq
    %v10728 = vshrl.u32 %v10727, 7
    %v10729 = vsub.s32 3, %v10728
    %v10730 = vrot.slane %v10603, %v10729
    %v10731 = vmul.f32 %v10713, %v10718
    %v10732 = vmul.f32 %v10713, %v10722
    %v10733 = vmul.f32 %v10713, %v10726
    %v10734 = vmul.f32 %v10713, %v10730
    %v10735 = vadd.f32 %v10707, %v10731
    %v10736 = vadd.f32 %v10708, %v10732
    %v10737 = vadd.f32 %v10709, %v10733
    %v10738 = vadd.f32 %v10710, %v10734
    %v10739 = vadd.f32 %v10735, %v10423
    %v10740 = vadd.f32 %v10736, %v10424
    %v10741 = vadd.f32 %v10737, %v10425
    %v10742 = vadd.f32 %v10738, %v10426
    %v10743 = vmax.f32 %v10739, 0.0
    %v10744 = vmax.f32 %v10740, 0.0
    %v10745 = vmax.f32 %v10741, 0.0
    %v10746 = vmax.f32 %v10742, 0.0
    %10747 = vst [vmem:[#allocation3] sm:$0xff] %v10743
    %10748 = vst [vmem:[#allocation3 + $0x8] sm:$0xff] %v10744
    %10749 = vst [vmem:[#allocation3 + $0x10] sm:$0xff] %v10745
    %10750 = vst [vmem:[#allocation3 + $0x18] sm:$0xff] %v10746
    // Predicated region
    $region38: #{tpu_custom_call.1} parent=1 // pred_check
      _
    $region39: #{tpu_custom_call.1} parent=1 // pred_check_branch
      %10752 = sbr.rel (0) target = $region41
    $region40: #{tpu_custom_call.1} parent=1 // pred_region
      %s10754 = ssub.s32 512, 512
      %10755 = vsyncadd [#allocation4], %s10754
      %s10757 = sshll.u32 [#allocation3], 4
      %s10758 = int_to_ptr.vmem [resolvable:$true] %s10757
      %10760 = dma.vmem_to_hbm [thread:$0]  %s10758, 512, %s9, [#allocation4]
    $region41: #{tpu_custom_call.1} parent=1 // pred_fallthru
      _
    // Predicated region
    $region42: #{tpu_custom_call.1} parent=1 // pred_check
      _
    $region43: #{tpu_custom_call.1} parent=1 // pred_check_branch
      %10762 = sbr.rel (0) target = $region45
    $region44: #{tpu_custom_call.1} parent=1 // pred_region
      %10763 = dma.done [#allocation4], 512
    $region45: #{tpu_custom_call.1} parent=1 // pred_fallthru
      _
    %10764 = vsyncpa [#allocation4], 1

</llo_original>
